<compile_context>
chip_gen: v5e
topology: v5e:2x2
jax: 0.10.0
libtpu: 0.0.40
codegen_flags: <defaults>
</compile_context>

<pallas_src>
import functools

import numpy as np
import jax
import jax.numpy as jnp
from jax.experimental import pallas as pl
from jax.experimental.pallas import tpu as pltpu

_EPS = 1e-5  # torch InstanceNorm2d default eps
_TAPS = tuple((kh, kw) for kh in range(2) for kw in range(3))  # 2x3 kernel taps


# ----------------------------- Pallas kernel ------------------------------- #
def _dense_block_kernel(mask_ref, x_ref, w_ref, b_ref, o_ref, feat_ref, *,
                        H, W, cin, g1, bg, dot_precision):
    """One batch group: 4 x (Conv2d(2,3)/pad(1,1) + ELU + InstanceNorm), dense concat.

    Layout: (channels on sublanes, zero-padded flattened spatial * batch on lanes).
    """
    Wp = W + 2
    cpad, nlane = feat_ref.shape          # (C + 3*g1, bg * SPAD)
    co_pad = w_ref.shape[1]
    r_count = (H + 1) * W                 # InstanceNorm support (before the row drop)
    inv_r = 1.0 / r_count

    # Zero only the not-yet-produced channel rows (they meet zero weight columns
    # until their producing layer writes them, and stale VMEM NaN * 0 = NaN).
    # The x rows are fully overwritten below, and every write-back re-zeroes its
    # own border / pad-tail lanes via the interior mask.  Unconditional per step
    # -> safe under megacore "parallel" sharding.
    feat_ref[cin:, :] = jnp.zeros((cpad - cin, nlane), jnp.float32)
    feat_ref[0:cin, :] = x_ref[0]          # already zero-padded + flattened by wrapper

    interior = mask_ref[0:1, :]                                    # (1, N)
    segvalid = [mask_ref[1 + b:2 + b, :] for b in range(bg)]       # each (1, N)

    off = cin
    for l in range(4):
        feat = feat_ref[...]                                       # (cpad, N) f32

        # Six conv taps as static lane rotations of the zero-padded feature slab
        # (XLU), stacked into one (6*cpad, N) operand -> single K=96 GEMM.
        taps = []
        for (kh, kw) in _TAPS:
            delta = (1 - kh) * Wp + (1 - kw)   # output sits at interior coords (+1,+1)
            t = feat if delta == 0 else pltpu.roll(feat, shift=delta % nlane, axis=1)
            taps.append(t)
        xs = jnp.concatenate(taps, axis=0)                         # (6*cpad, N)

        # f32 operands + DEFAULT precision = a single bf16 MXU pass (same numerics
        # as feeding bf16); debug build passes precision=HIGHEST instead.
        acc = jnp.dot(w_ref[l].astype(jnp.float32), xs,
                      preferred_element_type=jnp.float32,
                      precision=dot_precision)                     # (co_pad, N) f32
        y = acc + b_ref[l]

        # ELU(alpha=1)
        y = jnp.where(y > 0.0, y, jnp.exp(jnp.minimum(y, 0.0)) - 1.0)

        # InstanceNorm2d(affine=False): per-(channel, instance) stats over the
        # (H+1)*W valid conv-output lanes (torch normalizes BEFORE the final row
        # drop).  One masked reduction per batch element; scale/shift broadcast
        # back through the same mask, which also zeroes every invalid lane.
        y2 = y * y
        scale_full = jnp.zeros((co_pad, nlane), jnp.float32)
        shift_full = jnp.zeros((co_pad, nlane), jnp.float32)
        for b in range(bg):
            m = segvalid[b]                                        # (1, N)
            s1 = jnp.sum(y * m, axis=1, keepdims=True)             # (co_pad, 1)
            s2 = jnp.sum(y2 * m, axis=1, keepdims=True)
            mean = s1 * inv_r
            var = s2 * inv_r - mean * mean   # one-pass var; fine for post-ELU data
            sc = jax.lax.rsqrt(var + _EPS)
            scale_full = scale_full + m * sc
            shift_full = shift_full - m * (mean * sc)
        y = y * scale_full + shift_full                            # (co_pad, N)

        if l < 3:
            # torch row drop + dense concat: write the g1 valid channels into the
            # next channel rows of the VMEM scratch at the interior lanes; every
            # other lane (padding ring, pad tail, dropped last row) is set to 0.
            feat_ref[off:off + g1, :] = interior * y[:g1, :]
            off += g1
        else:
            o_ref[0] = y.astype(o_ref.dtype)                       # lane-dense store


# ------------------------------ wrapper ------------------------------------ #
def dense_block_forward(x_nchw, w_pack, b_pack, *, g1, g2, batch_per_step=None,
                        debug_precision=False):
    B, C, H, W = x_nchw.shape
    Hp, Wp = H + 2, W + 2
    sp = Hp * Wp
    spad = ((sp + 127) // 128) * 128        # pad flattened spatial to full vregs
    bg = B if batch_per_step is None else batch_per_step
    assert B % bg == 0, "batch_per_step must divide the batch"
    G = B // bg
    nlane = bg * spad
    cpad = C + 3 * g1
    co_pad = max(g1, g2)
    assert w_pack.shape == (4, co_pad, 6 * cpad)

    # ---- tiny host/XLA-side prep ------------------------------------------- #
    # Zero-pad spatially, flatten, pad to a 128-multiple, fold batch into lanes
    # (each element owns one spad-wide lane segment).
    xp = jnp.pad(x_nchw, ((0, 0), (0, 0), (1, 1), (1, 1))).reshape(B, C, sp)
    xp = jnp.pad(xp, ((0, 0), (0, 0), (0, spad - sp)))
    x_lanes = xp.reshape(G, bg, C, spad).transpose(0, 2, 1, 3).reshape(G, C, nlane)

    # Masks (trace-time numpy constants): row 0 = interior lanes (write-back /
    # final output, i.e. valid conv output minus the dropped last row);
    # rows 1..bg = per-element valid conv-output lanes (InstanceNorm support).
    row = np.arange(sp) // Wp
    col = np.arange(sp) % Wp
    valid = (row >= 1) & (row <= H + 1) & (col >= 1) & (col <= W)
    inter = (row >= 1) & (row <= H) & (col >= 1) & (col <= W)
    valid_pad = np.zeros(spad, np.float32); valid_pad[:sp] = valid
    inter_pad = np.zeros(spad, np.float32); inter_pad[:sp] = inter
    masks = np.zeros((1 + bg, nlane), np.float32)
    masks[0] = np.tile(inter_pad, bg)
    for b in range(bg):
        masks[1 + b, b * spad:(b + 1) * spad] = valid_pad
    masks = jnp.asarray(masks)

    if debug_precision:
        w_in, prec = w_pack, jax.lax.Precision.HIGHEST
    else:
        w_in, prec = w_pack.astype(jnp.bfloat16), None   # bf16 halves weight residency

    kernel = functools.partial(_dense_block_kernel, H=H, W=W, cin=C, g1=g1,
                               bg=bg, dot_precision=prec)

    r_count = (H + 1) * W
    cost = pl.CostEstimate(
        flops=2 * B * 4 * co_pad * 6 * cpad * r_count,
        transcendentals=B * 4 * co_pad * r_count,
        bytes_accessed=int(x_lanes.size * 4 + masks.size * 4 + b_pack.size * 4
                           + w_in.size * w_in.dtype.itemsize
                           + G * co_pad * nlane * 4))

    # VMEM per step: scratch 48 KiB + blocks < 150 KiB -- far under every
    # generation's scoped limit.  At real DPARNet spectrogram sizes, tile H per
    # grid step and re-budget against v7x's 64 MiB physical VMEM.
    out = pl.pallas_call(
        kernel,
        out_shape=jax.ShapeDtypeStruct((G, co_pad, nlane), jnp.float32),
        grid=(G,),
        in_specs=[
            pl.BlockSpec((1 + bg, nlane), lambda g: (0, 0)),   # masks: VMEM-resident
            pl.BlockSpec((1, C, nlane), lambda g: (g, 0, 0)),  # per-step input slab
            pl.BlockSpec(w_in.shape, lambda g: (0, 0, 0)),     # weights: VMEM-resident
            pl.BlockSpec(b_pack.shape, lambda g: (0, 0, 0)),
        ],
        out_specs=pl.BlockSpec((1, co_pad, nlane), lambda g: (g, 0, 0)),
        scratch_shapes=[pltpu.VMEM((cpad, nlane), jnp.float32)],
        compiler_params=pltpu.CompilerParams(
            dimension_semantics=("parallel",)),   # batch groups shard over v7x's 2 TCs
        cost_estimate=cost,
    )(masks, x_lanes, w_in, b_pack)

    # Un-fold the batch and slice the interior (this also applies the final row
    # drop).  Output is already channel-major -> NCHW with no big transpose.
    out = out.reshape(G, co_pad, bg, spad).transpose(0, 2, 1, 3).reshape(B, co_pad, spad)
    out = out[:, :g2, :sp].reshape(B, g2, Hp, Wp)
    return out[:, :, 1:H + 1, 1:W + 1]


# ------------------------- deterministic parameters ------------------------- #
def init_params(key, init_ch, g1, g2):
    """Torch-layout Conv2d params: [(w (Cout,Cin,2,3), b (Cout,)), ...]."""
    cins = [init_ch, init_ch + g1, init_ch + 2 * g1, init_ch + 3 * g1]
    couts = [g1, g1, g1, g2]
    params = []
    for i, (ci, co) in enumerate(zip(cins, couts)):
        kw_, kb_ = jax.random.split(jax.random.fold_in(key, i))
        w = jax.random.normal(kw_, (co, ci, 2, 3), jnp.float32) / ((ci * 6) ** 0.5)
        b = jax.random.normal(kb_, (co,), jnp.float32) * 0.01
        params.append((w, b))
    return params


def pack_params(params_oihw, init_ch, g1, g2):
    """Pack torch conv weights into (4, co_pad, 6*cpad) single-GEMM stacks.

    K-axis ordering: k = tap*cpad + cin_index, tap = kh*3 + kw -- matches the
    in-kernel tap stack (concat of six rolled (cpad, N) feature slabs).
    """
    cpad = init_ch + 3 * g1
    co_pad = max(g1, g2)
    w_pack = np.zeros((4, co_pad, 6 * cpad), np.float32)
    b_pack = np.zeros((4, co_pad, 1), np.float32)
    for l, (w, b) in enumerate(params_oihw):
        w = np.asarray(w); b = np.asarray(b)
        cout, cin = w.shape[:2]
        for t, (kh, kw) in enumerate(_TAPS):
            w_pack[l, :cout, t * cpad:t * cpad + cin] = w[:, :, kh, kw]
        b_pack[l, :cout, 0] = b
    return jnp.asarray(w_pack), jnp.asarray(b_pack)


# --------------------------- pure-JAX reference ------------------------------ #
def reference_forward(x_nchw, params_oihw):
    def layer(inp, w, b):
        y = jax.lax.conv_general_dilated(
            inp, w, window_strides=(1, 1), padding=((1, 1), (1, 1)),
            dimension_numbers=("NCHW", "OIHW", "NCHW"),
            precision=jax.lax.Precision.HIGHEST)
        y = y + b.reshape(1, -1, 1, 1)
        y = jnp.where(y > 0.0, y, jnp.exp(jnp.minimum(y, 0.0)) - 1.0)
        mean = jnp.mean(y, axis=(2, 3), keepdims=True)
        var = jnp.mean((y - mean) ** 2, axis=(2, 3), keepdims=True)
        return ((y - mean) / jnp.sqrt(var + _EPS))[:, :, :-1]

    (w1, b1), (w2, b2), (w3, b3), (w4, b4) = params_oihw
    y0 = layer(x_nchw, w1, b1)
    y1 = layer(jnp.concatenate([x_nchw, y0], axis=1), w2, b2)
    y2 = layer(jnp.concatenate([x_nchw, y0, y1], axis=1), w3, b3)
    y3 = layer(jnp.concatenate([x_nchw, y0, y1, y2], axis=1), w4, b4)
    return y3


# ---------------------------------- main ------------------------------------ #
if __name__ == "__main__":
    key = jax.random.PRNGKey(0)
    # DenseBlock's forward requires init_ch == g1 (cat(x, y0) feeds a g1*2-in conv)
    B, init_ch, H, W = 2, 4, 16, 16
    g1, g2 = 4, 8
    assert init_ch == g1

    x = jax.random.normal(jax.random.fold_in(key, 100), (B, init_ch, H, W), jnp.float32)
    params_oihw = init_params(key, init_ch, g1, g2)
    w_pack, b_pack = pack_params(params_oihw, init_ch, g1, g2)

    ref = reference_forward(x, params_oihw)

    # Debug build: f32 GEMM operands + Precision.HIGHEST -> tight tolerance that
    # would catch any tap/offset/mask bug the wide bf16 tolerance could hide.
    dbg = jax.jit(functools.partial(dense_block_forward, g1=g1, g2=g2,
                                    debug_precision=True))
    out_dbg = jax.block_until_ready(dbg(x, w_pack, b_pack))
    err_dbg = float(jnp.max(jnp.abs(out_dbg - ref)))
    assert err_dbg < 2e-3, f"debug-precision max abs error vs reference: {err_dbg}"

    # Fast build: bf16 weights, DEFAULT MXU precision (single bf16 pass).
    fwd = jax.jit(functools.partial(dense_block_forward, g1=g1, g2=g2))
    out = jax.block_until_ready(fwd(x, w_pack, b_pack))
    assert out.shape == (B, g2, H, W), out.shape
    err = float(jnp.max(jnp.abs(out - ref)))
    assert err < 5e-2, f"max abs error vs reference: {err}"
    print("KERNEL_OK")
</pallas_src>

<mosaic_0001>
module attributes {stable_mosaic.version = 11 : i64} {
  func.func @_dense_block_kernel(%arg0: i32, %arg1: memref<3x768xf32, #tpu.memory_space<vmem>>, %arg2: memref<1x4x768xf32, #tpu.memory_space<vmem>>, %arg3: memref<4x8x96xf32, #tpu.memory_space<vmem>>, %arg4: memref<4x8x1xf32, #tpu.memory_space<vmem>>, %arg5: memref<1x8x768xf32, #tpu.memory_space<vmem>>, %arg6: memref<16x768xf32, #tpu.memory_space<vmem>>) attributes {dimension_semantics = [#tpu.dimension_semantics<parallel>], iteration_bounds = array<i64: 1>, scalar_prefetch = 0 : i64, scratch_operands = 1 : i64, tpu.core_type = #tpu.core_type<tc>, window_params = [{pipeline_mode = #tpu.pipeline_mode<synchronous>, transform_indices = @transform_0, window_bounds = array<i64: 3, 768>}, {transform_indices = @transform_1, window_bounds = array<i64: 1, 4, 768>}, {pipeline_mode = #tpu.pipeline_mode<synchronous>, transform_indices = @transform_2, window_bounds = array<i64: 4, 8, 96>}, {pipeline_mode = #tpu.pipeline_mode<synchronous>, transform_indices = @transform_3, window_bounds = array<i64: 4, 8, 1>}, {transform_indices = @transform_4, window_bounds = array<i64: 1, 8, 768>}]} {
    %cst = arith.constant 0.000000e+00 : f32
    %0 = vector.broadcast %cst : f32 to vector<12x768xf32>
    %c4 = arith.constant 4 : index
    %c0 = arith.constant 0 : index
    %1 = vector.load %arg6[%c4, %c0] : memref<16x768xf32, #tpu.memory_space<vmem>>, vector<12x768xf32>
    tpu.vector_store %arg6[%c4, %c0], %0 {strides = array<i32>} : memref<16x768xf32, #tpu.memory_space<vmem>>, vector<12x768xf32>,
    %c0_0 = arith.constant 0 : index
    %c0_1 = arith.constant 0 : index
    %c0_2 = arith.constant 0 : index
    %2 = vector.load %arg2[%c0_0, %c0_1, %c0_2] : memref<1x4x768xf32, #tpu.memory_space<vmem>>, vector<1x4x768xf32>
    %3 = vector.shape_cast %2 : vector<1x4x768xf32> to vector<4x768xf32>
    %c0_3 = arith.constant 0 : index
    %c0_4 = arith.constant 0 : index
    %4 = vector.load %arg6[%c0_3, %c0_4] : memref<16x768xf32, #tpu.memory_space<vmem>>, vector<4x768xf32>
    tpu.vector_store %arg6[%c0_3, %c0_4], %3 {strides = array<i32>} : memref<16x768xf32, #tpu.memory_space<vmem>>, vector<4x768xf32>,
    %c0_5 = arith.constant 0 : index
    %c0_6 = arith.constant 0 : index
    %5 = vector.load %arg1[%c0_5, %c0_6] : memref<3x768xf32, #tpu.memory_space<vmem>>, vector<1x768xf32>
    %c1 = arith.constant 1 : index
    %c0_7 = arith.constant 0 : index
    %6 = vector.load %arg1[%c1, %c0_7] : memref<3x768xf32, #tpu.memory_space<vmem>>, vector<1x768xf32>
    %c2 = arith.constant 2 : index
    %c0_8 = arith.constant 0 : index
    %7 = vector.load %arg1[%c2, %c0_8] : memref<3x768xf32, #tpu.memory_space<vmem>>, vector<1x768xf32>
    %c0_9 = arith.constant 0 : index
    %c0_10 = arith.constant 0 : index
    %8 = vector.load %arg6[%c0_9, %c0_10] : memref<16x768xf32, #tpu.memory_space<vmem>>, vector<16x768xf32>
    %c19_i32 = arith.constant 19 : i32
    %9 = tpu.dynamic_rotate %8 by %c19_i32 dim 1 : vector<16x768xf32>, i32 -> vector<16x768xf32>
    %c18_i32 = arith.constant 18 : i32
    %10 = tpu.dynamic_rotate %8 by %c18_i32 dim 1 : vector<16x768xf32>, i32 -> vector<16x768xf32>
    %c17_i32 = arith.constant 17 : i32
    %11 = tpu.dynamic_rotate %8 by %c17_i32 dim 1 : vector<16x768xf32>, i32 -> vector<16x768xf32>
    %c1_i32 = arith.constant 1 : i32
    %12 = tpu.dynamic_rotate %8 by %c1_i32 dim 1 : vector<16x768xf32>, i32 -> vector<16x768xf32>
    %c767_i32 = arith.constant 767 : i32
    %13 = tpu.dynamic_rotate %8 by %c767_i32 dim 1 : vector<16x768xf32>, i32 -> vector<16x768xf32>
    %14 = tpu.concatenate %9, %10, %11, %12, %8, %13 in 0 : vector<16x768xf32>, vector<16x768xf32>, vector<16x768xf32>, vector<16x768xf32>, vector<16x768xf32>, vector<16x768xf32> -> vector<96x768xf32>
    %c0_11 = arith.constant 0 : index
    %c0_12 = arith.constant 0 : index
    %c0_13 = arith.constant 0 : index
    %15 = vector.load %arg3[%c0_11, %c0_12, %c0_13] : memref<4x8x96xf32, #tpu.memory_space<vmem>>, vector<1x8x96xf32>
    %16 = vector.shape_cast %15 : vector<1x8x96xf32> to vector<8x96xf32>
    %cst_14 = arith.constant dense<0.000000e+00> : vector<8x768xf32>
    %17 = tpu.matmul %16, %14, %cst_14 {dimension_numbers = #tpu.dot_dimension_numbers<[1], [0], [0], [1], [0, 0, 1, 1], [], []>, precision = #tpu.contract_precision<fp32>} : vector<8x96xf32>, vector<96x768xf32>, vector<8x768xf32> -> vector<8x768xf32>
    %c0_15 = arith.constant 0 : index
    %c0_16 = arith.constant 0 : index
    %c0_17 = arith.constant 0 : index
    %18 = vector.load %arg4[%c0_15, %c0_16, %c0_17] : memref<4x8x1xf32, #tpu.memory_space<vmem>>, vector<1x8x1xf32>
    %19 = vector.shape_cast %18 : vector<1x8x1xf32> to vector<8x1xf32>
    %20 = vector.broadcast %19 : vector<8x1xf32> to vector<8x768xf32>
    %21 = arith.addf %17, %20 : vector<8x768xf32>
    %cst_18 = arith.constant 0.000000e+00 : f32
    %22 = vector.broadcast %cst_18 : f32 to vector<8x768xf32>
    %23 = arith.cmpf ogt, %21, %22 : vector<8x768xf32>
    %cst_19 = arith.constant 0.000000e+00 : f32
    %24 = vector.broadcast %cst_19 : f32 to vector<8x768xf32>
    %25 = arith.minimumf %21, %24 : vector<8x768xf32>
    %26 = math.exp %25 : vector<8x768xf32>
    %cst_20 = arith.constant 1.000000e+00 : f32
    %27 = vector.broadcast %cst_20 : f32 to vector<8x768xf32>
    %28 = arith.subf %26, %27 : vector<8x768xf32>
    %29 = arith.select %23, %21, %28 : vector<8x768xi1>, vector<8x768xf32>
    %30 = arith.mulf %29, %29 : vector<8x768xf32>
    %cst_21 = arith.constant 0.000000e+00 : f32
    %31 = vector.broadcast %cst_21 : f32 to vector<8x768xf32>
    %cst_22 = arith.constant 0.000000e+00 : f32
    %32 = vector.broadcast %cst_22 : f32 to vector<8x768xf32>
    %33 = vector.broadcast %6 : vector<1x768xf32> to vector<8x768xf32>
    %34 = arith.mulf %29, %33 : vector<8x768xf32>
    %cst_23 = arith.constant dense<0.000000e+00> : vector<8xf32>
    %35 = vector.multi_reduction <add>, %34, %cst_23 [1] : vector<8x768xf32> to vector<8xf32>
    %36 = vector.shape_cast %35 : vector<8xf32> to vector<8x1xf32>
    %37 = vector.broadcast %6 : vector<1x768xf32> to vector<8x768xf32>
    %38 = arith.mulf %30, %37 : vector<8x768xf32>
    %cst_24 = arith.constant dense<0.000000e+00> : vector<8xf32>
    %39 = vector.multi_reduction <add>, %38, %cst_24 [1] : vector<8x768xf32> to vector<8xf32>
    %40 = vector.shape_cast %39 : vector<8xf32> to vector<8x1xf32>
    %cst_25 = arith.constant 0.0036764706 : f32
    %41 = vector.broadcast %cst_25 : f32 to vector<8x1xf32>
    %42 = arith.mulf %36, %41 : vector<8x1xf32>
    %cst_26 = arith.constant 0.0036764706 : f32
    %43 = vector.broadcast %cst_26 : f32 to vector<8x1xf32>
    %44 = arith.mulf %40, %43 : vector<8x1xf32>
    %45 = arith.mulf %42, %42 : vector<8x1xf32>
    %46 = arith.subf %44, %45 : vector<8x1xf32>
    %cst_27 = arith.constant 9.99999974E-6 : f32
    %47 = vector.broadcast %cst_27 : f32 to vector<8x1xf32>
    %48 = arith.addf %46, %47 : vector<8x1xf32>
    %49 = math.rsqrt %48 : vector<8x1xf32>
    %50 = vector.broadcast %6 : vector<1x768xf32> to vector<8x768xf32>
    %51 = vector.broadcast %49 : vector<8x1xf32> to vector<8x768xf32>
    %52 = arith.mulf %50, %51 : vector<8x768xf32>
    %53 = arith.addf %31, %52 : vector<8x768xf32>
    %54 = arith.mulf %42, %49 : vector<8x1xf32>
    %55 = vector.broadcast %6 : vector<1x768xf32> to vector<8x768xf32>
    %56 = vector.broadcast %54 : vector<8x1xf32> to vector<8x768xf32>
    %57 = arith.mulf %55, %56 : vector<8x768xf32>
    %58 = arith.subf %32, %57 : vector<8x768xf32>
    %59 = vector.broadcast %7 : vector<1x768xf32> to vector<8x768xf32>
    %60 = arith.mulf %29, %59 : vector<8x768xf32>
    %cst_28 = arith.constant dense<0.000000e+00> : vector<8xf32>
    %61 = vector.multi_reduction <add>, %60, %cst_28 [1] : vector<8x768xf32> to vector<8xf32>
    %62 = vector.shape_cast %61 : vector<8xf32> to vector<8x1xf32>
    %63 = vector.broadcast %7 : vector<1x768xf32> to vector<8x768xf32>
    %64 = arith.mulf %30, %63 : vector<8x768xf32>
    %cst_29 = arith.constant dense<0.000000e+00> : vector<8xf32>
    %65 = vector.multi_reduction <add>, %64, %cst_29 [1] : vector<8x768xf32> to vector<8xf32>
    %66 = vector.shape_cast %65 : vector<8xf32> to vector<8x1xf32>
    %cst_30 = arith.constant 0.0036764706 : f32
    %67 = vector.broadcast %cst_30 : f32 to vector<8x1xf32>
    %68 = arith.mulf %62, %67 : vector<8x1xf32>
    %cst_31 = arith.constant 0.0036764706 : f32
    %69 = vector.broadcast %cst_31 : f32 to vector<8x1xf32>
    %70 = arith.mulf %66, %69 : vector<8x1xf32>
    %71 = arith.mulf %68, %68 : vector<8x1xf32>
    %72 = arith.subf %70, %71 : vector<8x1xf32>
    %cst_32 = arith.constant 9.99999974E-6 : f32
    %73 = vector.broadcast %cst_32 : f32 to vector<8x1xf32>
    %74 = arith.addf %72, %73 : vector<8x1xf32>
    %75 = math.rsqrt %74 : vector<8x1xf32>
    %76 = vector.broadcast %7 : vector<1x768xf32> to vector<8x768xf32>
    %77 = vector.broadcast %75 : vector<8x1xf32> to vector<8x768xf32>
    %78 = arith.mulf %76, %77 : vector<8x768xf32>
    %79 = arith.addf %53, %78 : vector<8x768xf32>
    %80 = arith.mulf %68, %75 : vector<8x1xf32>
    %81 = vector.broadcast %7 : vector<1x768xf32> to vector<8x768xf32>
    %82 = vector.broadcast %80 : vector<8x1xf32> to vector<8x768xf32>
    %83 = arith.mulf %81, %82 : vector<8x768xf32>
    %84 = arith.subf %58, %83 : vector<8x768xf32>
    %85 = arith.mulf %29, %79 : vector<8x768xf32>
    %86 = arith.addf %85, %84 : vector<8x768xf32>
    %87 = vector.extract_strided_slice %86 {offsets = [0, 0], sizes = [4, 768], strides = [1, 1]} : vector<8x768xf32> to vector<4x768xf32>
    %88 = vector.broadcast %5 : vector<1x768xf32> to vector<4x768xf32>
    %89 = arith.mulf %88, %87 : vector<4x768xf32>
    %c4_33 = arith.constant 4 : index
    %c0_34 = arith.constant 0 : index
    %90 = vector.load %arg6[%c4_33, %c0_34] : memref<16x768xf32, #tpu.memory_space<vmem>>, vector<4x768xf32>
    tpu.vector_store %arg6[%c4_33, %c0_34], %89 {strides = array<i32>} : memref<16x768xf32, #tpu.memory_space<vmem>>, vector<4x768xf32>,
    %c0_35 = arith.constant 0 : index
    %c0_36 = arith.constant 0 : index
    %91 = vector.load %arg6[%c0_35, %c0_36] : memref<16x768xf32, #tpu.memory_space<vmem>>, vector<16x768xf32>
    %c19_i32_37 = arith.constant 19 : i32
    %92 = tpu.dynamic_rotate %91 by %c19_i32_37 dim 1 : vector<16x768xf32>, i32 -> vector<16x768xf32>
    %c18_i32_38 = arith.constant 18 : i32
    %93 = tpu.dynamic_rotate %91 by %c18_i32_38 dim 1 : vector<16x768xf32>, i32 -> vector<16x768xf32>
    %c17_i32_39 = arith.constant 17 : i32
    %94 = tpu.dynamic_rotate %91 by %c17_i32_39 dim 1 : vector<16x768xf32>, i32 -> vector<16x768xf32>
    %c1_i32_40 = arith.constant 1 : i32
    %95 = tpu.dynamic_rotate %91 by %c1_i32_40 dim 1 : vector<16x768xf32>, i32 -> vector<16x768xf32>
    %c767_i32_41 = arith.constant 767 : i32
    %96 = tpu.dynamic_rotate %91 by %c767_i32_41 dim 1 : vector<16x768xf32>, i32 -> vector<16x768xf32>
    %97 = tpu.concatenate %92, %93, %94, %95, %91, %96 in 0 : vector<16x768xf32>, vector<16x768xf32>, vector<16x768xf32>, vector<16x768xf32>, vector<16x768xf32>, vector<16x768xf32> -> vector<96x768xf32>
    %c1_42 = arith.constant 1 : index
    %c0_43 = arith.constant 0 : index
    %c0_44 = arith.constant 0 : index
    %98 = vector.load %arg3[%c1_42, %c0_43, %c0_44] : memref<4x8x96xf32, #tpu.memory_space<vmem>>, vector<1x8x96xf32>
    %99 = vector.shape_cast %98 : vector<1x8x96xf32> to vector<8x96xf32>
    %cst_45 = arith.constant dense<0.000000e+00> : vector<8x768xf32>
    %100 = tpu.matmul %99, %97, %cst_45 {dimension_numbers = #tpu.dot_dimension_numbers<[1], [0], [0], [1], [0, 0, 1, 1], [], []>, precision = #tpu.contract_precision<fp32>} : vector<8x96xf32>, vector<96x768xf32>, vector<8x768xf32> -> vector<8x768xf32>
    %c1_46 = arith.constant 1 : index
    %c0_47 = arith.constant 0 : index
    %c0_48 = arith.constant 0 : index
    %101 = vector.load %arg4[%c1_46, %c0_47, %c0_48] : memref<4x8x1xf32, #tpu.memory_space<vmem>>, vector<1x8x1xf32>
    %102 = vector.shape_cast %101 : vector<1x8x1xf32> to vector<8x1xf32>
    %103 = vector.broadcast %102 : vector<8x1xf32> to vector<8x768xf32>
    %104 = arith.addf %100, %103 : vector<8x768xf32>
    %cst_49 = arith.constant 0.000000e+00 : f32
    %105 = vector.broadcast %cst_49 : f32 to vector<8x768xf32>
    %106 = arith.cmpf ogt, %104, %105 : vector<8x768xf32>
    %cst_50 = arith.constant 0.000000e+00 : f32
    %107 = vector.broadcast %cst_50 : f32 to vector<8x768xf32>
    %108 = arith.minimumf %104, %107 : vector<8x768xf32>
    %109 = math.exp %108 : vector<8x768xf32>
    %cst_51 = arith.constant 1.000000e+00 : f32
    %110 = vector.broadcast %cst_51 : f32 to vector<8x768xf32>
    %111 = arith.subf %109, %110 : vector<8x768xf32>
    %112 = arith.select %106, %104, %111 : vector<8x768xi1>, vector<8x768xf32>
    %113 = arith.mulf %112, %112 : vector<8x768xf32>
    %cst_52 = arith.constant 0.000000e+00 : f32
    %114 = vector.broadcast %cst_52 : f32 to vector<8x768xf32>
    %cst_53 = arith.constant 0.000000e+00 : f32
    %115 = vector.broadcast %cst_53 : f32 to vector<8x768xf32>
    %116 = vector.broadcast %6 : vector<1x768xf32> to vector<8x768xf32>
    %117 = arith.mulf %112, %116 : vector<8x768xf32>
    %cst_54 = arith.constant dense<0.000000e+00> : vector<8xf32>
    %118 = vector.multi_reduction <add>, %117, %cst_54 [1] : vector<8x768xf32> to vector<8xf32>
    %119 = vector.shape_cast %118 : vector<8xf32> to vector<8x1xf32>
    %120 = vector.broadcast %6 : vector<1x768xf32> to vector<8x768xf32>
    %121 = arith.mulf %113, %120 : vector<8x768xf32>
    %cst_55 = arith.constant dense<0.000000e+00> : vector<8xf32>
    %122 = vector.multi_reduction <add>, %121, %cst_55 [1] : vector<8x768xf32> to vector<8xf32>
    %123 = vector.shape_cast %122 : vector<8xf32> to vector<8x1xf32>
    %cst_56 = arith.constant 0.0036764706 : f32
    %124 = vector.broadcast %cst_56 : f32 to vector<8x1xf32>
    %125 = arith.mulf %119, %124 : vector<8x1xf32>
    %cst_57 = arith.constant 0.0036764706 : f32
    %126 = vector.broadcast %cst_57 : f32 to vector<8x1xf32>
    %127 = arith.mulf %123, %126 : vector<8x1xf32>
    %128 = arith.mulf %125, %125 : vector<8x1xf32>
    %129 = arith.subf %127, %128 : vector<8x1xf32>
    %cst_58 = arith.constant 9.99999974E-6 : f32
    %130 = vector.broadcast %cst_58 : f32 to vector<8x1xf32>
    %131 = arith.addf %129, %130 : vector<8x1xf32>
    %132 = math.rsqrt %131 : vector<8x1xf32>
    %133 = vector.broadcast %6 : vector<1x768xf32> to vector<8x768xf32>
    %134 = vector.broadcast %132 : vector<8x1xf32> to vector<8x768xf32>
    %135 = arith.mulf %133, %134 : vector<8x768xf32>
    %136 = arith.addf %114, %135 : vector<8x768xf32>
    %137 = arith.mulf %125, %132 : vector<8x1xf32>
    %138 = vector.broadcast %6 : vector<1x768xf32> to vector<8x768xf32>
    %139 = vector.broadcast %137 : vector<8x1xf32> to vector<8x768xf32>
    %140 = arith.mulf %138, %139 : vector<8x768xf32>
    %141 = arith.subf %115, %140 : vector<8x768xf32>
    %142 = vector.broadcast %7 : vector<1x768xf32> to vector<8x768xf32>
    %143 = arith.mulf %112, %142 : vector<8x768xf32>
    %cst_59 = arith.constant dense<0.000000e+00> : vector<8xf32>
    %144 = vector.multi_reduction <add>, %143, %cst_59 [1] : vector<8x768xf32> to vector<8xf32>
    %145 = vector.shape_cast %144 : vector<8xf32> to vector<8x1xf32>
    %146 = vector.broadcast %7 : vector<1x768xf32> to vector<8x768xf32>
    %147 = arith.mulf %113, %146 : vector<8x768xf32>
    %cst_60 = arith.constant dense<0.000000e+00> : vector<8xf32>
    %148 = vector.multi_reduction <add>, %147, %cst_60 [1] : vector<8x768xf32> to vector<8xf32>
    %149 = vector.shape_cast %148 : vector<8xf32> to vector<8x1xf32>
    %cst_61 = arith.constant 0.0036764706 : f32
    %150 = vector.broadcast %cst_61 : f32 to vector<8x1xf32>
    %151 = arith.mulf %145, %150 : vector<8x1xf32>
    %cst_62 = arith.constant 0.0036764706 : f32
    %152 = vector.broadcast %cst_62 : f32 to vector<8x1xf32>
    %153 = arith.mulf %149, %152 : vector<8x1xf32>
    %154 = arith.mulf %151, %151 : vector<8x1xf32>
    %155 = arith.subf %153, %154 : vector<8x1xf32>
    %cst_63 = arith.constant 9.99999974E-6 : f32
    %156 = vector.broadcast %cst_63 : f32 to vector<8x1xf32>
    %157 = arith.addf %155, %156 : vector<8x1xf32>
    %158 = math.rsqrt %157 : vector<8x1xf32>
    %159 = vector.broadcast %7 : vector<1x768xf32> to vector<8x768xf32>
    %160 = vector.broadcast %158 : vector<8x1xf32> to vector<8x768xf32>
    %161 = arith.mulf %159, %160 : vector<8x768xf32>
    %162 = arith.addf %136, %161 : vector<8x768xf32>
    %163 = arith.mulf %151, %158 : vector<8x1xf32>
    %164 = vector.broadcast %7 : vector<1x768xf32> to vector<8x768xf32>
    %165 = vector.broadcast %163 : vector<8x1xf32> to vector<8x768xf32>
    %166 = arith.mulf %164, %165 : vector<8x768xf32>
    %167 = arith.subf %141, %166 : vector<8x768xf32>
    %168 = arith.mulf %112, %162 : vector<8x768xf32>
    %169 = arith.addf %168, %167 : vector<8x768xf32>
    %170 = vector.extract_strided_slice %169 {offsets = [0, 0], sizes = [4, 768], strides = [1, 1]} : vector<8x768xf32> to vector<4x768xf32>
    %171 = vector.broadcast %5 : vector<1x768xf32> to vector<4x768xf32>
    %172 = arith.mulf %171, %170 : vector<4x768xf32>
    %c8 = arith.constant 8 : index
    %c0_64 = arith.constant 0 : index
    %173 = vector.load %arg6[%c8, %c0_64] : memref<16x768xf32, #tpu.memory_space<vmem>>, vector<4x768xf32>
    tpu.vector_store %arg6[%c8, %c0_64], %172 {strides = array<i32>} : memref<16x768xf32, #tpu.memory_space<vmem>>, vector<4x768xf32>,
    %c0_65 = arith.constant 0 : index
    %c0_66 = arith.constant 0 : index
    %174 = vector.load %arg6[%c0_65, %c0_66] : memref<16x768xf32, #tpu.memory_space<vmem>>, vector<16x768xf32>
    %c19_i32_67 = arith.constant 19 : i32
    %175 = tpu.dynamic_rotate %174 by %c19_i32_67 dim 1 : vector<16x768xf32>, i32 -> vector<16x768xf32>
    %c18_i32_68 = arith.constant 18 : i32
    %176 = tpu.dynamic_rotate %174 by %c18_i32_68 dim 1 : vector<16x768xf32>, i32 -> vector<16x768xf32>
    %c17_i32_69 = arith.constant 17 : i32
    %177 = tpu.dynamic_rotate %174 by %c17_i32_69 dim 1 : vector<16x768xf32>, i32 -> vector<16x768xf32>
    %c1_i32_70 = arith.constant 1 : i32
    %178 = tpu.dynamic_rotate %174 by %c1_i32_70 dim 1 : vector<16x768xf32>, i32 -> vector<16x768xf32>
    %c767_i32_71 = arith.constant 767 : i32
    %179 = tpu.dynamic_rotate %174 by %c767_i32_71 dim 1 : vector<16x768xf32>, i32 -> vector<16x768xf32>
    %180 = tpu.concatenate %175, %176, %177, %178, %174, %179 in 0 : vector<16x768xf32>, vector<16x768xf32>, vector<16x768xf32>, vector<16x768xf32>, vector<16x768xf32>, vector<16x768xf32> -> vector<96x768xf32>
    %c2_72 = arith.constant 2 : index
    %c0_73 = arith.constant 0 : index
    %c0_74 = arith.constant 0 : index
    %181 = vector.load %arg3[%c2_72, %c0_73, %c0_74] : memref<4x8x96xf32, #tpu.memory_space<vmem>>, vector<1x8x96xf32>
    %182 = vector.shape_cast %181 : vector<1x8x96xf32> to vector<8x96xf32>
    %cst_75 = arith.constant dense<0.000000e+00> : vector<8x768xf32>
    %183 = tpu.matmul %182, %180, %cst_75 {dimension_numbers = #tpu.dot_dimension_numbers<[1], [0], [0], [1], [0, 0, 1, 1], [], []>, precision = #tpu.contract_precision<fp32>} : vector<8x96xf32>, vector<96x768xf32>, vector<8x768xf32> -> vector<8x768xf32>
    %c2_76 = arith.constant 2 : index
    %c0_77 = arith.constant 0 : index
    %c0_78 = arith.constant 0 : index
    %184 = vector.load %arg4[%c2_76, %c0_77, %c0_78] : memref<4x8x1xf32, #tpu.memory_space<vmem>>, vector<1x8x1xf32>
    %185 = vector.shape_cast %184 : vector<1x8x1xf32> to vector<8x1xf32>
    %186 = vector.broadcast %185 : vector<8x1xf32> to vector<8x768xf32>
    %187 = arith.addf %183, %186 : vector<8x768xf32>
    %cst_79 = arith.constant 0.000000e+00 : f32
    %188 = vector.broadcast %cst_79 : f32 to vector<8x768xf32>
    %189 = arith.cmpf ogt, %187, %188 : vector<8x768xf32>
    %cst_80 = arith.constant 0.000000e+00 : f32
    %190 = vector.broadcast %cst_80 : f32 to vector<8x768xf32>
    %191 = arith.minimumf %187, %190 : vector<8x768xf32>
    %192 = math.exp %191 : vector<8x768xf32>
    %cst_81 = arith.constant 1.000000e+00 : f32
    %193 = vector.broadcast %cst_81 : f32 to vector<8x768xf32>
    %194 = arith.subf %192, %193 : vector<8x768xf32>
    %195 = arith.select %189, %187, %194 : vector<8x768xi1>, vector<8x768xf32>
    %196 = arith.mulf %195, %195 : vector<8x768xf32>
    %cst_82 = arith.constant 0.000000e+00 : f32
    %197 = vector.broadcast %cst_82 : f32 to vector<8x768xf32>
    %cst_83 = arith.constant 0.000000e+00 : f32
    %198 = vector.broadcast %cst_83 : f32 to vector<8x768xf32>
    %199 = vector.broadcast %6 : vector<1x768xf32> to vector<8x768xf32>
    %200 = arith.mulf %195, %199 : vector<8x768xf32>
    %cst_84 = arith.constant dense<0.000000e+00> : vector<8xf32>
    %201 = vector.multi_reduction <add>, %200, %cst_84 [1] : vector<8x768xf32> to vector<8xf32>
    %202 = vector.shape_cast %201 : vector<8xf32> to vector<8x1xf32>
    %203 = vector.broadcast %6 : vector<1x768xf32> to vector<8x768xf32>
    %204 = arith.mulf %196, %203 : vector<8x768xf32>
    %cst_85 = arith.constant dense<0.000000e+00> : vector<8xf32>
    %205 = vector.multi_reduction <add>, %204, %cst_85 [1] : vector<8x768xf32> to vector<8xf32>
    %206 = vector.shape_cast %205 : vector<8xf32> to vector<8x1xf32>
    %cst_86 = arith.constant 0.0036764706 : f32
    %207 = vector.broadcast %cst_86 : f32 to vector<8x1xf32>
    %208 = arith.mulf %202, %207 : vector<8x1xf32>
    %cst_87 = arith.constant 0.0036764706 : f32
    %209 = vector.broadcast %cst_87 : f32 to vector<8x1xf32>
    %210 = arith.mulf %206, %209 : vector<8x1xf32>
    %211 = arith.mulf %208, %208 : vector<8x1xf32>
    %212 = arith.subf %210, %211 : vector<8x1xf32>
    %cst_88 = arith.constant 9.99999974E-6 : f32
    %213 = vector.broadcast %cst_88 : f32 to vector<8x1xf32>
    %214 = arith.addf %212, %213 : vector<8x1xf32>
    %215 = math.rsqrt %214 : vector<8x1xf32>
    %216 = vector.broadcast %6 : vector<1x768xf32> to vector<8x768xf32>
    %217 = vector.broadcast %215 : vector<8x1xf32> to vector<8x768xf32>
    %218 = arith.mulf %216, %217 : vector<8x768xf32>
    %219 = arith.addf %197, %218 : vector<8x768xf32>
    %220 = arith.mulf %208, %215 : vector<8x1xf32>
    %221 = vector.broadcast %6 : vector<1x768xf32> to vector<8x768xf32>
    %222 = vector.broadcast %220 : vector<8x1xf32> to vector<8x768xf32>
    %223 = arith.mulf %221, %222 : vector<8x768xf32>
    %224 = arith.subf %198, %223 : vector<8x768xf32>
    %225 = vector.broadcast %7 : vector<1x768xf32> to vector<8x768xf32>
    %226 = arith.mulf %195, %225 : vector<8x768xf32>
    %cst_89 = arith.constant dense<0.000000e+00> : vector<8xf32>
    %227 = vector.multi_reduction <add>, %226, %cst_89 [1] : vector<8x768xf32> to vector<8xf32>
    %228 = vector.shape_cast %227 : vector<8xf32> to vector<8x1xf32>
    %229 = vector.broadcast %7 : vector<1x768xf32> to vector<8x768xf32>
    %230 = arith.mulf %196, %229 : vector<8x768xf32>
    %cst_90 = arith.constant dense<0.000000e+00> : vector<8xf32>
    %231 = vector.multi_reduction <add>, %230, %cst_90 [1] : vector<8x768xf32> to vector<8xf32>
    %232 = vector.shape_cast %231 : vector<8xf32> to vector<8x1xf32>
    %cst_91 = arith.constant 0.0036764706 : f32
    %233 = vector.broadcast %cst_91 : f32 to vector<8x1xf32>
    %234 = arith.mulf %228, %233 : vector<8x1xf32>
    %cst_92 = arith.constant 0.0036764706 : f32
    %235 = vector.broadcast %cst_92 : f32 to vector<8x1xf32>
    %236 = arith.mulf %232, %235 : vector<8x1xf32>
    %237 = arith.mulf %234, %234 : vector<8x1xf32>
    %238 = arith.subf %236, %237 : vector<8x1xf32>
    %cst_93 = arith.constant 9.99999974E-6 : f32
    %239 = vector.broadcast %cst_93 : f32 to vector<8x1xf32>
    %240 = arith.addf %238, %239 : vector<8x1xf32>
    %241 = math.rsqrt %240 : vector<8x1xf32>
    %242 = vector.broadcast %7 : vector<1x768xf32> to vector<8x768xf32>
    %243 = vector.broadcast %241 : vector<8x1xf32> to vector<8x768xf32>
    %244 = arith.mulf %242, %243 : vector<8x768xf32>
    %245 = arith.addf %219, %244 : vector<8x768xf32>
    %246 = arith.mulf %234, %241 : vector<8x1xf32>
    %247 = vector.broadcast %7 : vector<1x768xf32> to vector<8x768xf32>
    %248 = vector.broadcast %246 : vector<8x1xf32> to vector<8x768xf32>
    %249 = arith.mulf %247, %248 : vector<8x768xf32>
    %250 = arith.subf %224, %249 : vector<8x768xf32>
    %251 = arith.mulf %195, %245 : vector<8x768xf32>
    %252 = arith.addf %251, %250 : vector<8x768xf32>
    %253 = vector.extract_strided_slice %252 {offsets = [0, 0], sizes = [4, 768], strides = [1, 1]} : vector<8x768xf32> to vector<4x768xf32>
    %254 = vector.broadcast %5 : vector<1x768xf32> to vector<4x768xf32>
    %255 = arith.mulf %254, %253 : vector<4x768xf32>
    %c12 = arith.constant 12 : index
    %c0_94 = arith.constant 0 : index
    %256 = vector.load %arg6[%c12, %c0_94] : memref<16x768xf32, #tpu.memory_space<vmem>>, vector<4x768xf32>
    tpu.vector_store %arg6[%c12, %c0_94], %255 {strides = array<i32>} : memref<16x768xf32, #tpu.memory_space<vmem>>, vector<4x768xf32>,
    %c0_95 = arith.constant 0 : index
    %c0_96 = arith.constant 0 : index
    %257 = vector.load %arg6[%c0_95, %c0_96] : memref<16x768xf32, #tpu.memory_space<vmem>>, vector<16x768xf32>
    %c19_i32_97 = arith.constant 19 : i32
    %258 = tpu.dynamic_rotate %257 by %c19_i32_97 dim 1 : vector<16x768xf32>, i32 -> vector<16x768xf32>
    %c18_i32_98 = arith.constant 18 : i32
    %259 = tpu.dynamic_rotate %257 by %c18_i32_98 dim 1 : vector<16x768xf32>, i32 -> vector<16x768xf32>
    %c17_i32_99 = arith.constant 17 : i32
    %260 = tpu.dynamic_rotate %257 by %c17_i32_99 dim 1 : vector<16x768xf32>, i32 -> vector<16x768xf32>
    %c1_i32_100 = arith.constant 1 : i32
    %261 = tpu.dynamic_rotate %257 by %c1_i32_100 dim 1 : vector<16x768xf32>, i32 -> vector<16x768xf32>
    %c767_i32_101 = arith.constant 767 : i32
    %262 = tpu.dynamic_rotate %257 by %c767_i32_101 dim 1 : vector<16x768xf32>, i32 -> vector<16x768xf32>
    %263 = tpu.concatenate %258, %259, %260, %261, %257, %262 in 0 : vector<16x768xf32>, vector<16x768xf32>, vector<16x768xf32>, vector<16x768xf32>, vector<16x768xf32>, vector<16x768xf32> -> vector<96x768xf32>
    %c3 = arith.constant 3 : index
    %c0_102 = arith.constant 0 : index
    %c0_103 = arith.constant 0 : index
    %264 = vector.load %arg3[%c3, %c0_102, %c0_103] : memref<4x8x96xf32, #tpu.memory_space<vmem>>, vector<1x8x96xf32>
    %265 = vector.shape_cast %264 : vector<1x8x96xf32> to vector<8x96xf32>
    %cst_104 = arith.constant dense<0.000000e+00> : vector<8x768xf32>
    %266 = tpu.matmul %265, %263, %cst_104 {dimension_numbers = #tpu.dot_dimension_numbers<[1], [0], [0], [1], [0, 0, 1, 1], [], []>, precision = #tpu.contract_precision<fp32>} : vector<8x96xf32>, vector<96x768xf32>, vector<8x768xf32> -> vector<8x768xf32>
    %c3_105 = arith.constant 3 : index
    %c0_106 = arith.constant 0 : index
    %c0_107 = arith.constant 0 : index
    %267 = vector.load %arg4[%c3_105, %c0_106, %c0_107] : memref<4x8x1xf32, #tpu.memory_space<vmem>>, vector<1x8x1xf32>
    %268 = vector.shape_cast %267 : vector<1x8x1xf32> to vector<8x1xf32>
    %269 = vector.broadcast %268 : vector<8x1xf32> to vector<8x768xf32>
    %270 = arith.addf %266, %269 : vector<8x768xf32>
    %cst_108 = arith.constant 0.000000e+00 : f32
    %271 = vector.broadcast %cst_108 : f32 to vector<8x768xf32>
    %272 = arith.cmpf ogt, %270, %271 : vector<8x768xf32>
    %cst_109 = arith.constant 0.000000e+00 : f32
    %273 = vector.broadcast %cst_109 : f32 to vector<8x768xf32>
    %274 = arith.minimumf %270, %273 : vector<8x768xf32>
    %275 = math.exp %274 : vector<8x768xf32>
    %cst_110 = arith.constant 1.000000e+00 : f32
    %276 = vector.broadcast %cst_110 : f32 to vector<8x768xf32>
    %277 = arith.subf %275, %276 : vector<8x768xf32>
    %278 = arith.select %272, %270, %277 : vector<8x768xi1>, vector<8x768xf32>
    %279 = arith.mulf %278, %278 : vector<8x768xf32>
    %cst_111 = arith.constant 0.000000e+00 : f32
    %280 = vector.broadcast %cst_111 : f32 to vector<8x768xf32>
    %cst_112 = arith.constant 0.000000e+00 : f32
    %281 = vector.broadcast %cst_112 : f32 to vector<8x768xf32>
    %282 = vector.broadcast %6 : vector<1x768xf32> to vector<8x768xf32>
    %283 = arith.mulf %278, %282 : vector<8x768xf32>
    %cst_113 = arith.constant dense<0.000000e+00> : vector<8xf32>
    %284 = vector.multi_reduction <add>, %283, %cst_113 [1] : vector<8x768xf32> to vector<8xf32>
    %285 = vector.shape_cast %284 : vector<8xf32> to vector<8x1xf32>
    %286 = vector.broadcast %6 : vector<1x768xf32> to vector<8x768xf32>
    %287 = arith.mulf %279, %286 : vector<8x768xf32>
    %cst_114 = arith.constant dense<0.000000e+00> : vector<8xf32>
    %288 = vector.multi_reduction <add>, %287, %cst_114 [1] : vector<8x768xf32> to vector<8xf32>
    %289 = vector.shape_cast %288 : vector<8xf32> to vector<8x1xf32>
    %cst_115 = arith.constant 0.0036764706 : f32
    %290 = vector.broadcast %cst_115 : f32 to vector<8x1xf32>
    %291 = arith.mulf %285, %290 : vector<8x1xf32>
    %cst_116 = arith.constant 0.0036764706 : f32
    %292 = vector.broadcast %cst_116 : f32 to vector<8x1xf32>
    %293 = arith.mulf %289, %292 : vector<8x1xf32>
    %294 = arith.mulf %291, %291 : vector<8x1xf32>
    %295 = arith.subf %293, %294 : vector<8x1xf32>
    %cst_117 = arith.constant 9.99999974E-6 : f32
    %296 = vector.broadcast %cst_117 : f32 to vector<8x1xf32>
    %297 = arith.addf %295, %296 : vector<8x1xf32>
    %298 = math.rsqrt %297 : vector<8x1xf32>
    %299 = vector.broadcast %6 : vector<1x768xf32> to vector<8x768xf32>
    %300 = vector.broadcast %298 : vector<8x1xf32> to vector<8x768xf32>
    %301 = arith.mulf %299, %300 : vector<8x768xf32>
    %302 = arith.addf %280, %301 : vector<8x768xf32>
    %303 = arith.mulf %291, %298 : vector<8x1xf32>
    %304 = vector.broadcast %6 : vector<1x768xf32> to vector<8x768xf32>
    %305 = vector.broadcast %303 : vector<8x1xf32> to vector<8x768xf32>
    %306 = arith.mulf %304, %305 : vector<8x768xf32>
    %307 = arith.subf %281, %306 : vector<8x768xf32>
    %308 = vector.broadcast %7 : vector<1x768xf32> to vector<8x768xf32>
    %309 = arith.mulf %278, %308 : vector<8x768xf32>
    %cst_118 = arith.constant dense<0.000000e+00> : vector<8xf32>
    %310 = vector.multi_reduction <add>, %309, %cst_118 [1] : vector<8x768xf32> to vector<8xf32>
    %311 = vector.shape_cast %310 : vector<8xf32> to vector<8x1xf32>
    %312 = vector.broadcast %7 : vector<1x768xf32> to vector<8x768xf32>
    %313 = arith.mulf %279, %312 : vector<8x768xf32>
    %cst_119 = arith.constant dense<0.000000e+00> : vector<8xf32>
    %314 = vector.multi_reduction <add>, %313, %cst_119 [1] : vector<8x768xf32> to vector<8xf32>
    %315 = vector.shape_cast %314 : vector<8xf32> to vector<8x1xf32>
    %cst_120 = arith.constant 0.0036764706 : f32
    %316 = vector.broadcast %cst_120 : f32 to vector<8x1xf32>
    %317 = arith.mulf %311, %316 : vector<8x1xf32>
    %cst_121 = arith.constant 0.0036764706 : f32
    %318 = vector.broadcast %cst_121 : f32 to vector<8x1xf32>
    %319 = arith.mulf %315, %318 : vector<8x1xf32>
    %320 = arith.mulf %317, %317 : vector<8x1xf32>
    %321 = arith.subf %319, %320 : vector<8x1xf32>
    %cst_122 = arith.constant 9.99999974E-6 : f32
    %322 = vector.broadcast %cst_122 : f32 to vector<8x1xf32>
    %323 = arith.addf %321, %322 : vector<8x1xf32>
    %324 = math.rsqrt %323 : vector<8x1xf32>
    %325 = vector.broadcast %7 : vector<1x768xf32> to vector<8x768xf32>
    %326 = vector.broadcast %324 : vector<8x1xf32> to vector<8x768xf32>
    %327 = arith.mulf %325, %326 : vector<8x768xf32>
    %328 = arith.addf %302, %327 : vector<8x768xf32>
    %329 = arith.mulf %317, %324 : vector<8x1xf32>
    %330 = vector.broadcast %7 : vector<1x768xf32> to vector<8x768xf32>
    %331 = vector.broadcast %329 : vector<8x1xf32> to vector<8x768xf32>
    %332 = arith.mulf %330, %331 : vector<8x768xf32>
    %333 = arith.subf %307, %332 : vector<8x768xf32>
    %334 = arith.mulf %278, %328 : vector<8x768xf32>
    %335 = arith.addf %334, %333 : vector<8x768xf32>
    %c0_123 = arith.constant 0 : index
    %c0_124 = arith.constant 0 : index
    %c0_125 = arith.constant 0 : index
    %336 = vector.load %arg5[%c0_123, %c0_124, %c0_125] : memref<1x8x768xf32, #tpu.memory_space<vmem>>, vector<1x8x768xf32>
    %337 = vector.shape_cast %336 : vector<1x8x768xf32> to vector<8x768xf32>
    %338 = vector.shape_cast %335 : vector<8x768xf32> to vector<1x8x768xf32>
    tpu.vector_store %arg5[%c0_123, %c0_124, %c0_125], %338 {strides = array<i32>} : memref<1x8x768xf32, #tpu.memory_space<vmem>>, vector<1x8x768xf32>,
    return
  }
  func.func @transform_0(%arg0: i32) -> (i32, i32) {
    %c0_i32 = arith.constant 0 : i32
    %c0_i32_0 = arith.constant 0 : i32
    %c0_i32_1 = arith.constant 0 : i32
    return %c0_i32, %c0_i32_0 : i32, i32
  }
  func.func @transform_1(%arg0: i32) -> (i32, i32, i32) {
    %c0_i32 = arith.constant 0 : i32
    %c0_i32_0 = arith.constant 0 : i32
    %c0_i32_1 = arith.constant 0 : i32
    return %arg0, %c0_i32, %c0_i32_0 : i32, i32, i32
  }
  func.func @transform_2(%arg0: i32) -> (i32, i32, i32) {
    %c0_i32 = arith.constant 0 : i32
    %c0_i32_0 = arith.constant 0 : i32
    %c0_i32_1 = arith.constant 0 : i32
    %c0_i32_2 = arith.constant 0 : i32
    return %c0_i32, %c0_i32_0, %c0_i32_1 : i32, i32, i32
  }
  func.func @transform_3(%arg0: i32) -> (i32, i32, i32) {
    %c0_i32 = arith.constant 0 : i32
    %c0_i32_0 = arith.constant 0 : i32
    %c0_i32_1 = arith.constant 0 : i32
    %c0_i32_2 = arith.constant 0 : i32
    return %c0_i32, %c0_i32_0, %c0_i32_1 : i32, i32, i32
  }
  func.func @transform_4(%arg0: i32) -> (i32, i32, i32) {
    %c0_i32 = arith.constant 0 : i32
    %c0_i32_0 = arith.constant 0 : i32
    %c0_i32_1 = arith.constant 0 : i32
    return %arg0, %c0_i32, %c0_i32_0 : i32, i32, i32
  }
}

</mosaic_0001>

<llo_original>
// kernel: dense_block_forward.1
$region0: #{dense_block_forward.1}
  #allocation0 [shape = 'u32[]', space=smem, size = 0x4, offset = 0x4, fixed_abs, tag = 'smem constant byte address 0x4 - core index']
  #allocation1 [shape = 'u32[72,128]{1,0:T(1,128)}', space=vmem, size = 0x9000, scoped, tag = 'internal scratch']
  #allocation2 [shape = 'f32[16,768]{1,0:T(8,128)}', space=vmem, size = 0xc000, scoped, tag = 'scratch operand']
  %s0 = inlined_call_operand.vmem [shape: f32[3,768], index: 0, kind: input, shape index: {}]
  %s1 = inlined_call_operand.vmem [shape: f32[1,4,768], index: 1, kind: input, shape index: {}]
  %s2 = inlined_call_operand.vmem [shape: f32[4,8,96], index: 2, kind: input, shape index: {}]
  %s3 = inlined_call_operand.vmem [shape: f32[4,8,1], index: 3, kind: input, shape index: {}]
  %s4 = inlined_call_operand.vmem [shape: f32[1,8,768], index: 4, kind: output, shape index: {}]
  %s5 = sld [smem:[#allocation0]]
  $region26: #{dense_block_forward.1} parent=0
    _
  %s7 = ssub.s32 1, %s5
  %s8 = scalar_select 0, %s7, %s5
  // Predicated region
  $region2: #{dense_block_forward.1} parent=0 // pred_check
    _
  $region3: #{dense_block_forward.1} parent=0 // pred_check_branch
    %10 = sbr.rel (0) target = $region5
  $region4: #{dense_block_forward.1} parent=0 // pred_region
    _
  $region5: #{dense_block_forward.1} parent=0 // pred_fallthru
    _
  // Predicated region
  $region6: #{dense_block_forward.1} parent=0 // pred_check
    _
  $region7: #{dense_block_forward.1} parent=0 // pred_check_branch
    %12 = sbr.rel (0) target = $region9
  $region8: #{dense_block_forward.1} parent=0 // pred_region
    _
  $region9: #{dense_block_forward.1} parent=0 // pred_fallthru
    _
  // Predicated region
  $region10: #{dense_block_forward.1} parent=0 // pred_check
    _
  $region11: #{dense_block_forward.1} parent=0 // pred_check_branch
    %14 = sbr.rel (0) target = $region13
  $region12: #{dense_block_forward.1} parent=0 // pred_region
    _
  $region13: #{dense_block_forward.1} parent=0 // pred_fallthru
    _
  // Predicated region
  $region14: #{dense_block_forward.1} parent=0 // pred_check
    _
  $region15: #{dense_block_forward.1} parent=0 // pred_check_branch
    %16 = sbr.rel (0) target = $region17
  $region16: #{dense_block_forward.1} parent=0 // pred_region
    _
  $region17: #{dense_block_forward.1} parent=0 // pred_fallthru
    _
  %17 = vst [vmem:[#allocation2] sm:$0xf0] 0.0
  %18 = vst [vmem:[#allocation2 + $0x8] sm:$0xf0] 0.0
  %19 = vst [vmem:[#allocation2 + $0x10] sm:$0xf0] 0.0
  %20 = vst [vmem:[#allocation2 + $0x18] sm:$0xf0] 0.0
  %21 = vst [vmem:[#allocation2 + $0x20] sm:$0xf0] 0.0
  %22 = vst [vmem:[#allocation2 + $0x28] sm:$0xf0] 0.0
  %23 = vst [vmem:[#allocation2 + $0x30] sm:$0xff] 0.0
  %24 = vst [vmem:[#allocation2 + $0x38] sm:$0xff] 0.0
  %25 = vst [vmem:[#allocation2 + $0x40] sm:$0xff] 0.0
  %26 = vst [vmem:[#allocation2 + $0x48] sm:$0xff] 0.0
  %27 = vst [vmem:[#allocation2 + $0x50] sm:$0xff] 0.0
  %28 = vst [vmem:[#allocation2 + $0x58] sm:$0xff] 0.0
  %v29 = vld [vmem:[%s1] sm:$0xff]
  %v30 = vld [vmem:[%s1 + $0x8] sm:$0xff]
  %v31 = vld [vmem:[%s1 + $0x10] sm:$0xff]
  %35 = vst [vmem:[#allocation1] ss:$2 sm:$0xff] %v29
  %s36 = scalar_lea.vmem [#allocation1], 16
  %37 = vst [vmem:[%s36] ss:$2 sm:$0xff] %v30
  %s38 = scalar_lea.vmem [#allocation1], 32
  %39 = vst [vmem:[%s38] ss:$2 sm:$0xff] %v31
  %v40 = vld.sshfl [vmem:[#allocation1] sm:$0xff pattern:$0x75316420]
  %v41 = vld.sshfl [vmem:[#allocation1 + $0x8] sm:$0xff pattern:$0x75316420]
  %v42 = vld.sshfl [vmem:[#allocation1 + $0x10] sm:$0xff pattern:$0x75316420]
  %v43 = vld.sshfl [vmem:[#allocation1 + $0x18] sm:$0xff pattern:$0x75316420]
  %v44 = vld.sshfl [vmem:[#allocation1 + $0x20] sm:$0xff pattern:$0x75316420]
  %v45 = vld.sshfl [vmem:[#allocation1 + $0x28] sm:$0xff pattern:$0x75316420]
  %52 = vst [vmem:[#allocation2] sm:$0xf] %v40
  %53 = vst [vmem:[#allocation2 + $0x8] sm:$0xf] %v41
  %54 = vst [vmem:[#allocation2 + $0x10] sm:$0xf] %v42
  %55 = vst [vmem:[#allocation2 + $0x18] sm:$0xf] %v43
  %56 = vst [vmem:[#allocation2 + $0x20] sm:$0xf] %v44
  %57 = vst [vmem:[#allocation2 + $0x28] sm:$0xf] %v45
  %v58 = vld [vmem:[%s0] ss:$4 sm:$0x3f]
  %s59 = scalar_lea.vmem %s0, 1
  %v60 = vld [vmem:[%s59] ss:$4 sm:$0x3f]
  %s61 = scalar_lea.vmem %s0, 2
  %v62 = vld [vmem:[%s61] ss:$4 sm:$0x3f]
  %v63 = vld [vmem:[#allocation2] sm:$0xff]
  %v64 = vld [vmem:[#allocation2 + $0x8] sm:$0xff]
  %v65 = vld [vmem:[#allocation2 + $0x10] sm:$0xff]
  %v66 = vld [vmem:[#allocation2 + $0x18] sm:$0xff]
  %v67 = vld [vmem:[#allocation2 + $0x20] sm:$0xff]
  %v68 = vld [vmem:[#allocation2 + $0x28] sm:$0xff]
  %v69 = vld [vmem:[#allocation2 + $0x30] sm:$0xff]
  %v70 = vld [vmem:[#allocation2 + $0x38] sm:$0xff]
  %v71 = vld [vmem:[#allocation2 + $0x40] sm:$0xff]
  %v72 = vld [vmem:[#allocation2 + $0x48] sm:$0xff]
  %v73 = vld [vmem:[#allocation2 + $0x50] sm:$0xff]
  %v74 = vld [vmem:[#allocation2 + $0x58] sm:$0xff]
  %75 = vrot.lane.b32.xlu0 %v63, 19
  %v76 = vpop.permute.xlu0 %75
  %77 = vrot.lane.b32.xlu0 %v69, 19
  %v78 = vpop.permute.xlu0 %77
  %79 = vrot.lane.b32.xlu0 %v64, 19
  %v80 = vpop.permute.xlu0 %79
  %81 = vrot.lane.b32.xlu0 %v70, 19
  %v82 = vpop.permute.xlu0 %81
  %83 = vrot.lane.b32.xlu0 %v65, 19
  %v84 = vpop.permute.xlu0 %83
  %85 = vrot.lane.b32.xlu0 %v71, 19
  %v86 = vpop.permute.xlu0 %85
  %87 = vrot.lane.b32.xlu0 %v66, 19
  %v88 = vpop.permute.xlu0 %87
  %89 = vrot.lane.b32.xlu0 %v72, 19
  %v90 = vpop.permute.xlu0 %89
  %91 = vrot.lane.b32.xlu0 %v67, 19
  %v92 = vpop.permute.xlu0 %91
  %93 = vrot.lane.b32.xlu0 %v73, 19
  %v94 = vpop.permute.xlu0 %93
  %95 = vrot.lane.b32.xlu0 %v68, 19
  %v96 = vpop.permute.xlu0 %95
  %97 = vrot.lane.b32.xlu0 %v74, 19
  %v98 = vpop.permute.xlu0 %97
  %v99 = vlaneseq
  %v100 = vand.u32 %v99, 127
  %vm101 = vcmp.lt.s32.totalorder %v100, 19
  %v102 = vsel %vm101, %v92, %v96
  %v103 = vsel %vm101, %v94, %v98
  %v104 = vsel %vm101, %v88, %v92
  %v105 = vsel %vm101, %v90, %v94
  %v106 = vsel %vm101, %v84, %v88
  %v107 = vsel %vm101, %v86, %v90
  %v108 = vsel %vm101, %v80, %v84
  %v109 = vsel %vm101, %v82, %v86
  %v110 = vsel %vm101, %v76, %v80
  %v111 = vsel %vm101, %v78, %v82
  %v112 = vsel %vm101, %v96, %v76
  %v113 = vsel %vm101, %v98, %v78
  %114 = vrot.lane.b32.xlu0 %v63, 18
  %v115 = vpop.permute.xlu0 %114
  %116 = vrot.lane.b32.xlu0 %v69, 18
  %v117 = vpop.permute.xlu0 %116
  %118 = vrot.lane.b32.xlu0 %v64, 18
  %v119 = vpop.permute.xlu0 %118
  %120 = vrot.lane.b32.xlu0 %v70, 18
  %v121 = vpop.permute.xlu0 %120
  %122 = vrot.lane.b32.xlu0 %v65, 18
  %v123 = vpop.permute.xlu0 %122
  %124 = vrot.lane.b32.xlu0 %v71, 18
  %v125 = vpop.permute.xlu0 %124
  %126 = vrot.lane.b32.xlu0 %v66, 18
  %v127 = vpop.permute.xlu0 %126
  %128 = vrot.lane.b32.xlu0 %v72, 18
  %v129 = vpop.permute.xlu0 %128
  %130 = vrot.lane.b32.xlu0 %v67, 18
  %v131 = vpop.permute.xlu0 %130
  %132 = vrot.lane.b32.xlu0 %v73, 18
  %v133 = vpop.permute.xlu0 %132
  %134 = vrot.lane.b32.xlu0 %v68, 18
  %v135 = vpop.permute.xlu0 %134
  %136 = vrot.lane.b32.xlu0 %v74, 18
  %v137 = vpop.permute.xlu0 %136
  %vm138 = vcmp.lt.s32.totalorder %v100, 18
  %v139 = vsel %vm138, %v131, %v135
  %v140 = vsel %vm138, %v133, %v137
  %v141 = vsel %vm138, %v127, %v131
  %v142 = vsel %vm138, %v129, %v133
  %v143 = vsel %vm138, %v123, %v127
  %v144 = vsel %vm138, %v125, %v129
  %v145 = vsel %vm138, %v119, %v123
  %v146 = vsel %vm138, %v121, %v125
  %v147 = vsel %vm138, %v115, %v119
  %v148 = vsel %vm138, %v117, %v121
  %v149 = vsel %vm138, %v135, %v115
  %v150 = vsel %vm138, %v137, %v117
  %151 = vrot.lane.b32.xlu0 %v63, 17
  %v152 = vpop.permute.xlu0 %151
  %153 = vrot.lane.b32.xlu0 %v69, 17
  %v154 = vpop.permute.xlu0 %153
  %155 = vrot.lane.b32.xlu0 %v64, 17
  %v156 = vpop.permute.xlu0 %155
  %157 = vrot.lane.b32.xlu0 %v70, 17
  %v158 = vpop.permute.xlu0 %157
  %159 = vrot.lane.b32.xlu0 %v65, 17
  %v160 = vpop.permute.xlu0 %159
  %161 = vrot.lane.b32.xlu0 %v71, 17
  %v162 = vpop.permute.xlu0 %161
  %163 = vrot.lane.b32.xlu0 %v66, 17
  %v164 = vpop.permute.xlu0 %163
  %165 = vrot.lane.b32.xlu0 %v72, 17
  %v166 = vpop.permute.xlu0 %165
  %167 = vrot.lane.b32.xlu0 %v67, 17
  %v168 = vpop.permute.xlu0 %167
  %169 = vrot.lane.b32.xlu0 %v73, 17
  %v170 = vpop.permute.xlu0 %169
  %171 = vrot.lane.b32.xlu0 %v68, 17
  %v172 = vpop.permute.xlu0 %171
  %173 = vrot.lane.b32.xlu0 %v74, 17
  %v174 = vpop.permute.xlu0 %173
  %vm175 = vcmp.lt.s32.totalorder %v100, 17
  %v176 = vsel %vm175, %v168, %v172
  %v177 = vsel %vm175, %v170, %v174
  %v178 = vsel %vm175, %v164, %v168
  %v179 = vsel %vm175, %v166, %v170
  %v180 = vsel %vm175, %v160, %v164
  %v181 = vsel %vm175, %v162, %v166
  %v182 = vsel %vm175, %v156, %v160
  %v183 = vsel %vm175, %v158, %v162
  %v184 = vsel %vm175, %v152, %v156
  %v185 = vsel %vm175, %v154, %v158
  %v186 = vsel %vm175, %v172, %v152
  %v187 = vsel %vm175, %v174, %v154
  %188 = vrot.lane.b32.xlu0 %v63, 1
  %v189 = vpop.permute.xlu0 %188
  %190 = vrot.lane.b32.xlu0 %v69, 1
  %v191 = vpop.permute.xlu0 %190
  %192 = vrot.lane.b32.xlu0 %v64, 1
  %v193 = vpop.permute.xlu0 %192
  %194 = vrot.lane.b32.xlu0 %v70, 1
  %v195 = vpop.permute.xlu0 %194
  %196 = vrot.lane.b32.xlu0 %v65, 1
  %v197 = vpop.permute.xlu0 %196
  %198 = vrot.lane.b32.xlu0 %v71, 1
  %v199 = vpop.permute.xlu0 %198
  %200 = vrot.lane.b32.xlu0 %v66, 1
  %v201 = vpop.permute.xlu0 %200
  %202 = vrot.lane.b32.xlu0 %v72, 1
  %v203 = vpop.permute.xlu0 %202
  %204 = vrot.lane.b32.xlu0 %v67, 1
  %v205 = vpop.permute.xlu0 %204
  %206 = vrot.lane.b32.xlu0 %v73, 1
  %v207 = vpop.permute.xlu0 %206
  %208 = vrot.lane.b32.xlu0 %v68, 1
  %v209 = vpop.permute.xlu0 %208
  %210 = vrot.lane.b32.xlu0 %v74, 1
  %v211 = vpop.permute.xlu0 %210
  %vm212 = vcmp.lt.s32.totalorder %v100, 1
  %v213 = vsel %vm212, %v205, %v209
  %v214 = vsel %vm212, %v207, %v211
  %v215 = vsel %vm212, %v201, %v205
  %v216 = vsel %vm212, %v203, %v207
  %v217 = vsel %vm212, %v197, %v201
  %v218 = vsel %vm212, %v199, %v203
  %v219 = vsel %vm212, %v193, %v197
  %v220 = vsel %vm212, %v195, %v199
  %v221 = vsel %vm212, %v189, %v193
  %v222 = vsel %vm212, %v191, %v195
  %v223 = vsel %vm212, %v209, %v189
  %v224 = vsel %vm212, %v211, %v191
  %225 = vrot.lane.b32.xlu0 %v63, 127
  %v226 = vpop.permute.xlu0 %225
  %227 = vrot.lane.b32.xlu0 %v69, 127
  %v228 = vpop.permute.xlu0 %227
  %229 = vrot.lane.b32.xlu0 %v64, 127
  %v230 = vpop.permute.xlu0 %229
  %231 = vrot.lane.b32.xlu0 %v70, 127
  %v232 = vpop.permute.xlu0 %231
  %233 = vrot.lane.b32.xlu0 %v65, 127
  %v234 = vpop.permute.xlu0 %233
  %235 = vrot.lane.b32.xlu0 %v71, 127
  %v236 = vpop.permute.xlu0 %235
  %237 = vrot.lane.b32.xlu0 %v66, 127
  %v238 = vpop.permute.xlu0 %237
  %239 = vrot.lane.b32.xlu0 %v72, 127
  %v240 = vpop.permute.xlu0 %239
  %241 = vrot.lane.b32.xlu0 %v67, 127
  %v242 = vpop.permute.xlu0 %241
  %243 = vrot.lane.b32.xlu0 %v73, 127
  %v244 = vpop.permute.xlu0 %243
  %245 = vrot.lane.b32.xlu0 %v68, 127
  %v246 = vpop.permute.xlu0 %245
  %247 = vrot.lane.b32.xlu0 %v74, 127
  %v248 = vpop.permute.xlu0 %247
  %vm249 = vcmp.lt.s32.totalorder %v100, 127
  %v250 = vsel %vm249, %v242, %v246
  %v251 = vsel %vm249, %v244, %v248
  %v252 = vsel %vm249, %v238, %v242
  %v253 = vsel %vm249, %v240, %v244
  %v254 = vsel %vm249, %v234, %v238
  %v255 = vsel %vm249, %v236, %v240
  %v256 = vsel %vm249, %v230, %v234
  %v257 = vsel %vm249, %v232, %v236
  %v258 = vsel %vm249, %v226, %v230
  %v259 = vsel %vm249, %v228, %v232
  %v260 = vsel %vm249, %v246, %v226
  %v261 = vsel %vm249, %v248, %v228
  %v262 = vld [vmem:[%s2] sm:$0xff]
  %v263 = vld [vmem:[%s3] sm:$0xff]
  %265 = vset.pattern.permute.xlu0 0
  %266 = vperm.xlu0 %265, %v263
  %v267 = vpop.permute.xlu0 %266
  %vm269 = vcmask 785408
  %v271 = vsel %vm269, %v262, 0
  %273 = vmatpush.msra.mxu0 0.0
  %274 = vmatpush.msra.mxu0 0.0
  %275 = vmatpush.msra.mxu0 0.0
  %276 = vmatpush.msra.mxu0 0.0
  %v277 = vand.u32 %v259, 4294901760
  %278 = vmatpush.msra.mxu0 %v277
  %v279 = vand.u32 %v258, 4294901760
  %280 = vmatpush.msra.mxu0 %v279
  %v281 = vand.u32 %v69, 4294901760
  %282 = vmatpush.msra.mxu0 %v281
  %v283 = vand.u32 %v63, 4294901760
  %284 = vmatpush.msra.mxu0 %v283
  %v285 = vand.u32 %v224, 4294901760
  %286 = vmatpush.msra.mxu0 %v285
  %v287 = vand.u32 %v223, 4294901760
  %288 = vmatpush.msra.mxu0 %v287
  %v289 = vand.u32 %v187, 4294901760
  %290 = vmatpush.msra.mxu0 %v289
  %v291 = vand.u32 %v186, 4294901760
  %292 = vmatpush.msra.mxu0 %v291
  %v293 = vand.u32 %v150, 4294901760
  %294 = vmatpush.msra.mxu0 %v293
  %v295 = vand.u32 %v149, 4294901760
  %296 = vmatpush.msra.mxu0 %v295
  %v297 = vand.u32 %v113, 4294901760
  %298 = vmatpush.msra.mxu0 %v297
  %v299 = vand.u32 %v112, 4294901760
  %300 = vmatpush.msra.mxu0 %v299
  %v301 = vand.u32 %v271, 4294901760
  %v302 = vsub.f32 %v271, %v301
  %v303 = vand.u32 %v302, 4294901760
  %v304 = vsub.f32 %v302, %v303
  %v305 = vand.u32 %v304, 4294901760
  %306 = vmatmul.f32.gmra.mxu0 %v305
  %v307 = vpop.f32.mrf.mxu0
  %v308 = vadd.f32 %v267, %v307
  %309 = vdwg.mxu0
  %310 = vmatpush.msra.mxu0 0.0
  %311 = vmatpush.msra.mxu0 0.0
  %312 = vmatpush.msra.mxu0 0.0
  %313 = vmatpush.msra.mxu0 0.0
  %v314 = vand.u32 %v259, 4294901760
  %v315 = vsub.f32 %v259, %v314
  %v316 = vand.u32 %v315, 4294901760
  %v317 = vsub.f32 %v315, %v316
  %v318 = vand.u32 %v317, 4294901760
  %319 = vmatpush.msra.mxu0 %v318
  %v320 = vand.u32 %v258, 4294901760
  %v321 = vsub.f32 %v258, %v320
  %v322 = vand.u32 %v321, 4294901760
  %v323 = vsub.f32 %v321, %v322
  %v324 = vand.u32 %v323, 4294901760
  %325 = vmatpush.msra.mxu0 %v324
  %v326 = vand.u32 %v69, 4294901760
  %v327 = vsub.f32 %v69, %v326
  %v328 = vand.u32 %v327, 4294901760
  %v329 = vsub.f32 %v327, %v328
  %v330 = vand.u32 %v329, 4294901760
  %331 = vmatpush.msra.mxu0 %v330
  %v332 = vand.u32 %v63, 4294901760
  %v333 = vsub.f32 %v63, %v332
  %v334 = vand.u32 %v333, 4294901760
  %v335 = vsub.f32 %v333, %v334
  %v336 = vand.u32 %v335, 4294901760
  %337 = vmatpush.msra.mxu0 %v336
  %v338 = vand.u32 %v224, 4294901760
  %v339 = vsub.f32 %v224, %v338
  %v340 = vand.u32 %v339, 4294901760
  %v341 = vsub.f32 %v339, %v340
  %v342 = vand.u32 %v341, 4294901760
  %343 = vmatpush.msra.mxu0 %v342
  %v344 = vand.u32 %v223, 4294901760
  %v345 = vsub.f32 %v223, %v344
  %v346 = vand.u32 %v345, 4294901760
  %v347 = vsub.f32 %v345, %v346
  %v348 = vand.u32 %v347, 4294901760
  %349 = vmatpush.msra.mxu0 %v348
  %v350 = vand.u32 %v187, 4294901760
  %v351 = vsub.f32 %v187, %v350
  %v352 = vand.u32 %v351, 4294901760
  %v353 = vsub.f32 %v351, %v352
  %v354 = vand.u32 %v353, 4294901760
  %355 = vmatpush.msra.mxu0 %v354
  %v356 = vand.u32 %v186, 4294901760
  %v357 = vsub.f32 %v186, %v356
  %v358 = vand.u32 %v357, 4294901760
  %v359 = vsub.f32 %v357, %v358
  %v360 = vand.u32 %v359, 4294901760
  %361 = vmatpush.msra.mxu0 %v360
  %v362 = vand.u32 %v150, 4294901760
  %v363 = vsub.f32 %v150, %v362
  %v364 = vand.u32 %v363, 4294901760
  %v365 = vsub.f32 %v363, %v364
  %v366 = vand.u32 %v365, 4294901760
  %367 = vmatpush.msra.mxu0 %v366
  %v368 = vand.u32 %v149, 4294901760
  %v369 = vsub.f32 %v149, %v368
  %v370 = vand.u32 %v369, 4294901760
  %v371 = vsub.f32 %v369, %v370
  %v372 = vand.u32 %v371, 4294901760
  %373 = vmatpush.msra.mxu0 %v372
  %v374 = vand.u32 %v113, 4294901760
  %v375 = vsub.f32 %v113, %v374
  %v376 = vand.u32 %v375, 4294901760
  %v377 = vsub.f32 %v375, %v376
  %v378 = vand.u32 %v377, 4294901760
  %379 = vmatpush.msra.mxu0 %v378
  %v380 = vand.u32 %v112, 4294901760
  %v381 = vsub.f32 %v112, %v380
  %v382 = vand.u32 %v381, 4294901760
  %v383 = vsub.f32 %v381, %v382
  %v384 = vand.u32 %v383, 4294901760
  %385 = vmatpush.msra.mxu0 %v384
  %v386 = vand.u32 %v271, 4294901760
  %387 = vmatmul.f32.gmra.mxu0 %v386
  %v388 = vpop.f32.mrf.mxu0
  %v389 = vadd.f32 %v308, %v388
  %390 = vdwg.mxu0
  %391 = vmatpush.msra.mxu0 0.0
  %392 = vmatpush.msra.mxu0 0.0
  %393 = vmatpush.msra.mxu0 0.0
  %394 = vmatpush.msra.mxu0 0.0
  %v395 = vand.u32 %v259, 4294901760
  %v396 = vsub.f32 %v259, %v395
  %397 = vmatpush.msra.mxu0 %v396
  %v398 = vand.u32 %v258, 4294901760
  %v399 = vsub.f32 %v258, %v398
  %400 = vmatpush.msra.mxu0 %v399
  %v401 = vand.u32 %v69, 4294901760
  %v402 = vsub.f32 %v69, %v401
  %403 = vmatpush.msra.mxu0 %v402
  %v404 = vand.u32 %v63, 4294901760
  %v405 = vsub.f32 %v63, %v404
  %406 = vmatpush.msra.mxu0 %v405
  %v407 = vand.u32 %v224, 4294901760
  %v408 = vsub.f32 %v224, %v407
  %409 = vmatpush.msra.mxu0 %v408
  %v410 = vand.u32 %v223, 4294901760
  %v411 = vsub.f32 %v223, %v410
  %412 = vmatpush.msra.mxu0 %v411
  %v413 = vand.u32 %v187, 4294901760
  %v414 = vsub.f32 %v187, %v413
  %415 = vmatpush.msra.mxu0 %v414
  %v416 = vand.u32 %v186, 4294901760
  %v417 = vsub.f32 %v186, %v416
  %418 = vmatpush.msra.mxu0 %v417
  %v419 = vand.u32 %v150, 4294901760
  %v420 = vsub.f32 %v150, %v419
  %421 = vmatpush.msra.mxu0 %v420
  %v422 = vand.u32 %v149, 4294901760
  %v423 = vsub.f32 %v149, %v422
  %424 = vmatpush.msra.mxu0 %v423
  %v425 = vand.u32 %v113, 4294901760
  %v426 = vsub.f32 %v113, %v425
  %427 = vmatpush.msra.mxu0 %v426
  %v428 = vand.u32 %v112, 4294901760
  %v429 = vsub.f32 %v112, %v428
  %430 = vmatpush.msra.mxu0 %v429
  %v431 = vand.u32 %v271, 4294901760
  %v432 = vsub.f32 %v271, %v431
  %433 = vmatmul.f32.gmra.mxu0 %v432
  %v434 = vpop.f32.mrf.mxu0
  %v435 = vadd.f32 %v389, %v434
  %436 = vdwg.mxu0
  %437 = vmatpush.msra.mxu0 0.0
  %438 = vmatpush.msra.mxu0 0.0
  %439 = vmatpush.msra.mxu0 0.0
  %440 = vmatpush.msra.mxu0 0.0
  %v441 = vand.u32 %v259, 4294901760
  %442 = vmatpush.msra.mxu0 %v441
  %v443 = vand.u32 %v258, 4294901760
  %444 = vmatpush.msra.mxu0 %v443
  %v445 = vand.u32 %v69, 4294901760
  %446 = vmatpush.msra.mxu0 %v445
  %v447 = vand.u32 %v63, 4294901760
  %448 = vmatpush.msra.mxu0 %v447
  %v449 = vand.u32 %v224, 4294901760
  %450 = vmatpush.msra.mxu0 %v449
  %v451 = vand.u32 %v223, 4294901760
  %452 = vmatpush.msra.mxu0 %v451
  %v453 = vand.u32 %v187, 4294901760
  %454 = vmatpush.msra.mxu0 %v453
  %v455 = vand.u32 %v186, 4294901760
  %456 = vmatpush.msra.mxu0 %v455
  %v457 = vand.u32 %v150, 4294901760
  %458 = vmatpush.msra.mxu0 %v457
  %v459 = vand.u32 %v149, 4294901760
  %460 = vmatpush.msra.mxu0 %v459
  %v461 = vand.u32 %v113, 4294901760
  %462 = vmatpush.msra.mxu0 %v461
  %v463 = vand.u32 %v112, 4294901760
  %464 = vmatpush.msra.mxu0 %v463
  %v465 = vand.u32 %v271, 4294901760
  %v466 = vsub.f32 %v271, %v465
  %v467 = vand.u32 %v466, 4294901760
  %468 = vmatmul.f32.gmra.mxu0 %v467
  %v469 = vpop.f32.mrf.mxu0
  %v470 = vadd.f32 %v435, %v469
  %471 = vdwg.mxu0
  %472 = vmatpush.msra.mxu0 0.0
  %473 = vmatpush.msra.mxu0 0.0
  %474 = vmatpush.msra.mxu0 0.0
  %475 = vmatpush.msra.mxu0 0.0
  %v476 = vand.u32 %v259, 4294901760
  %v477 = vsub.f32 %v259, %v476
  %v478 = vand.u32 %v477, 4294901760
  %479 = vmatpush.msra.mxu0 %v478
  %v480 = vand.u32 %v258, 4294901760
  %v481 = vsub.f32 %v258, %v480
  %v482 = vand.u32 %v481, 4294901760
  %483 = vmatpush.msra.mxu0 %v482
  %v484 = vand.u32 %v69, 4294901760
  %v485 = vsub.f32 %v69, %v484
  %v486 = vand.u32 %v485, 4294901760
  %487 = vmatpush.msra.mxu0 %v486
  %v488 = vand.u32 %v63, 4294901760
  %v489 = vsub.f32 %v63, %v488
  %v490 = vand.u32 %v489, 4294901760
  %491 = vmatpush.msra.mxu0 %v490
  %v492 = vand.u32 %v224, 4294901760
  %v493 = vsub.f32 %v224, %v492
  %v494 = vand.u32 %v493, 4294901760
  %495 = vmatpush.msra.mxu0 %v494
  %v496 = vand.u32 %v223, 4294901760
  %v497 = vsub.f32 %v223, %v496
  %v498 = vand.u32 %v497, 4294901760
  %499 = vmatpush.msra.mxu0 %v498
  %v500 = vand.u32 %v187, 4294901760
  %v501 = vsub.f32 %v187, %v500
  %v502 = vand.u32 %v501, 4294901760
  %503 = vmatpush.msra.mxu0 %v502
  %v504 = vand.u32 %v186, 4294901760
  %v505 = vsub.f32 %v186, %v504
  %v506 = vand.u32 %v505, 4294901760
  %507 = vmatpush.msra.mxu0 %v506
  %v508 = vand.u32 %v150, 4294901760
  %v509 = vsub.f32 %v150, %v508
  %v510 = vand.u32 %v509, 4294901760
  %511 = vmatpush.msra.mxu0 %v510
  %v512 = vand.u32 %v149, 4294901760
  %v513 = vsub.f32 %v149, %v512
  %v514 = vand.u32 %v513, 4294901760
  %515 = vmatpush.msra.mxu0 %v514
  %v516 = vand.u32 %v113, 4294901760
  %v517 = vsub.f32 %v113, %v516
  %v518 = vand.u32 %v517, 4294901760
  %519 = vmatpush.msra.mxu0 %v518
  %v520 = vand.u32 %v112, 4294901760
  %v521 = vsub.f32 %v112, %v520
  %v522 = vand.u32 %v521, 4294901760
  %523 = vmatpush.msra.mxu0 %v522
  %v524 = vand.u32 %v271, 4294901760
  %525 = vmatmul.f32.gmra.mxu0 %v524
  %v526 = vpop.f32.mrf.mxu0
  %v527 = vadd.f32 %v470, %v526
  %528 = vdwg.mxu0
  %529 = vmatpush.msra.mxu0 0.0
  %530 = vmatpush.msra.mxu0 0.0
  %531 = vmatpush.msra.mxu0 0.0
  %532 = vmatpush.msra.mxu0 0.0
  %v533 = vand.u32 %v259, 4294901760
  %534 = vmatpush.msra.mxu0 %v533
  %v535 = vand.u32 %v258, 4294901760
  %536 = vmatpush.msra.mxu0 %v535
  %v537 = vand.u32 %v69, 4294901760
  %538 = vmatpush.msra.mxu0 %v537
  %v539 = vand.u32 %v63, 4294901760
  %540 = vmatpush.msra.mxu0 %v539
  %v541 = vand.u32 %v224, 4294901760
  %542 = vmatpush.msra.mxu0 %v541
  %v543 = vand.u32 %v223, 4294901760
  %544 = vmatpush.msra.mxu0 %v543
  %v545 = vand.u32 %v187, 4294901760
  %546 = vmatpush.msra.mxu0 %v545
  %v547 = vand.u32 %v186, 4294901760
  %548 = vmatpush.msra.mxu0 %v547
  %v549 = vand.u32 %v150, 4294901760
  %550 = vmatpush.msra.mxu0 %v549
  %v551 = vand.u32 %v149, 4294901760
  %552 = vmatpush.msra.mxu0 %v551
  %v553 = vand.u32 %v113, 4294901760
  %554 = vmatpush.msra.mxu0 %v553
  %v555 = vand.u32 %v112, 4294901760
  %556 = vmatpush.msra.mxu0 %v555
  %v557 = vand.u32 %v271, 4294901760
  %558 = vmatmul.f32.gmra.mxu0 %v557
  %v559 = vpop.f32.mrf.mxu0
  %v560 = vadd.f32 %v527, %v559
  %561 = vdwg.mxu0
  %562 = vmatpush.msra.mxu0 0.0
  %563 = vmatpush.msra.mxu0 0.0
  %564 = vmatpush.msra.mxu0 0.0
  %565 = vmatpush.msra.mxu0 0.0
  %v566 = vand.u32 %v257, 4294901760
  %567 = vmatpush.msra.mxu0 %v566
  %v568 = vand.u32 %v256, 4294901760
  %569 = vmatpush.msra.mxu0 %v568
  %v570 = vand.u32 %v70, 4294901760
  %571 = vmatpush.msra.mxu0 %v570
  %v572 = vand.u32 %v64, 4294901760
  %573 = vmatpush.msra.mxu0 %v572
  %v574 = vand.u32 %v222, 4294901760
  %575 = vmatpush.msra.mxu0 %v574
  %v576 = vand.u32 %v221, 4294901760
  %577 = vmatpush.msra.mxu0 %v576
  %v578 = vand.u32 %v185, 4294901760
  %579 = vmatpush.msra.mxu0 %v578
  %v580 = vand.u32 %v184, 4294901760
  %581 = vmatpush.msra.mxu0 %v580
  %v582 = vand.u32 %v148, 4294901760
  %583 = vmatpush.msra.mxu0 %v582
  %v584 = vand.u32 %v147, 4294901760
  %585 = vmatpush.msra.mxu0 %v584
  %v586 = vand.u32 %v111, 4294901760
  %587 = vmatpush.msra.mxu0 %v586
  %v588 = vand.u32 %v110, 4294901760
  %589 = vmatpush.msra.mxu0 %v588
  %v590 = vand.u32 %v271, 4294901760
  %v591 = vsub.f32 %v271, %v590
  %v592 = vand.u32 %v591, 4294901760
  %v593 = vsub.f32 %v591, %v592
  %v594 = vand.u32 %v593, 4294901760
  %595 = vmatmul.f32.gmra.mxu0 %v594
  %v596 = vpop.f32.mrf.mxu0
  %v597 = vadd.f32 %v267, %v596
  %598 = vdwg.mxu0
  %599 = vmatpush.msra.mxu0 0.0
  %600 = vmatpush.msra.mxu0 0.0
  %601 = vmatpush.msra.mxu0 0.0
  %602 = vmatpush.msra.mxu0 0.0
  %v603 = vand.u32 %v257, 4294901760
  %v604 = vsub.f32 %v257, %v603
  %v605 = vand.u32 %v604, 4294901760
  %v606 = vsub.f32 %v604, %v605
  %v607 = vand.u32 %v606, 4294901760
  %608 = vmatpush.msra.mxu0 %v607
  %v609 = vand.u32 %v256, 4294901760
  %v610 = vsub.f32 %v256, %v609
  %v611 = vand.u32 %v610, 4294901760
  %v612 = vsub.f32 %v610, %v611
  %v613 = vand.u32 %v612, 4294901760
  %614 = vmatpush.msra.mxu0 %v613
  %v615 = vand.u32 %v70, 4294901760
  %v616 = vsub.f32 %v70, %v615
  %v617 = vand.u32 %v616, 4294901760
  %v618 = vsub.f32 %v616, %v617
  %v619 = vand.u32 %v618, 4294901760
  %620 = vmatpush.msra.mxu0 %v619
  %v621 = vand.u32 %v64, 4294901760
  %v622 = vsub.f32 %v64, %v621
  %v623 = vand.u32 %v622, 4294901760
  %v624 = vsub.f32 %v622, %v623
  %v625 = vand.u32 %v624, 4294901760
  %626 = vmatpush.msra.mxu0 %v625
  %v627 = vand.u32 %v222, 4294901760
  %v628 = vsub.f32 %v222, %v627
  %v629 = vand.u32 %v628, 4294901760
  %v630 = vsub.f32 %v628, %v629
  %v631 = vand.u32 %v630, 4294901760
  %632 = vmatpush.msra.mxu0 %v631
  %v633 = vand.u32 %v221, 4294901760
  %v634 = vsub.f32 %v221, %v633
  %v635 = vand.u32 %v634, 4294901760
  %v636 = vsub.f32 %v634, %v635
  %v637 = vand.u32 %v636, 4294901760
  %638 = vmatpush.msra.mxu0 %v637
  %v639 = vand.u32 %v185, 4294901760
  %v640 = vsub.f32 %v185, %v639
  %v641 = vand.u32 %v640, 4294901760
  %v642 = vsub.f32 %v640, %v641
  %v643 = vand.u32 %v642, 4294901760
  %644 = vmatpush.msra.mxu0 %v643
  %v645 = vand.u32 %v184, 4294901760
  %v646 = vsub.f32 %v184, %v645
  %v647 = vand.u32 %v646, 4294901760
  %v648 = vsub.f32 %v646, %v647
  %v649 = vand.u32 %v648, 4294901760
  %650 = vmatpush.msra.mxu0 %v649
  %v651 = vand.u32 %v148, 4294901760
  %v652 = vsub.f32 %v148, %v651
  %v653 = vand.u32 %v652, 4294901760
  %v654 = vsub.f32 %v652, %v653
  %v655 = vand.u32 %v654, 4294901760
  %656 = vmatpush.msra.mxu0 %v655
  %v657 = vand.u32 %v147, 4294901760
  %v658 = vsub.f32 %v147, %v657
  %v659 = vand.u32 %v658, 4294901760
  %v660 = vsub.f32 %v658, %v659
  %v661 = vand.u32 %v660, 4294901760
  %662 = vmatpush.msra.mxu0 %v661
  %v663 = vand.u32 %v111, 4294901760
  %v664 = vsub.f32 %v111, %v663
  %v665 = vand.u32 %v664, 4294901760
  %v666 = vsub.f32 %v664, %v665
  %v667 = vand.u32 %v666, 4294901760
  %668 = vmatpush.msra.mxu0 %v667
  %v669 = vand.u32 %v110, 4294901760
  %v670 = vsub.f32 %v110, %v669
  %v671 = vand.u32 %v670, 4294901760
  %v672 = vsub.f32 %v670, %v671
  %v673 = vand.u32 %v672, 4294901760
  %674 = vmatpush.msra.mxu0 %v673
  %v675 = vand.u32 %v271, 4294901760
  %676 = vmatmul.f32.gmra.mxu0 %v675
  %v677 = vpop.f32.mrf.mxu0
  %v678 = vadd.f32 %v597, %v677
  %679 = vdwg.mxu0
  %680 = vmatpush.msra.mxu0 0.0
  %681 = vmatpush.msra.mxu0 0.0
  %682 = vmatpush.msra.mxu0 0.0
  %683 = vmatpush.msra.mxu0 0.0
  %v684 = vand.u32 %v257, 4294901760
  %v685 = vsub.f32 %v257, %v684
  %686 = vmatpush.msra.mxu0 %v685
  %v687 = vand.u32 %v256, 4294901760
  %v688 = vsub.f32 %v256, %v687
  %689 = vmatpush.msra.mxu0 %v688
  %v690 = vand.u32 %v70, 4294901760
  %v691 = vsub.f32 %v70, %v690
  %692 = vmatpush.msra.mxu0 %v691
  %v693 = vand.u32 %v64, 4294901760
  %v694 = vsub.f32 %v64, %v693
  %695 = vmatpush.msra.mxu0 %v694
  %v696 = vand.u32 %v222, 4294901760
  %v697 = vsub.f32 %v222, %v696
  %698 = vmatpush.msra.mxu0 %v697
  %v699 = vand.u32 %v221, 4294901760
  %v700 = vsub.f32 %v221, %v699
  %701 = vmatpush.msra.mxu0 %v700
  %v702 = vand.u32 %v185, 4294901760
  %v703 = vsub.f32 %v185, %v702
  %704 = vmatpush.msra.mxu0 %v703
  %v705 = vand.u32 %v184, 4294901760
  %v706 = vsub.f32 %v184, %v705
  %707 = vmatpush.msra.mxu0 %v706
  %v708 = vand.u32 %v148, 4294901760
  %v709 = vsub.f32 %v148, %v708
  %710 = vmatpush.msra.mxu0 %v709
  %v711 = vand.u32 %v147, 4294901760
  %v712 = vsub.f32 %v147, %v711
  %713 = vmatpush.msra.mxu0 %v712
  %v714 = vand.u32 %v111, 4294901760
  %v715 = vsub.f32 %v111, %v714
  %716 = vmatpush.msra.mxu0 %v715
  %v717 = vand.u32 %v110, 4294901760
  %v718 = vsub.f32 %v110, %v717
  %719 = vmatpush.msra.mxu0 %v718
  %v720 = vand.u32 %v271, 4294901760
  %v721 = vsub.f32 %v271, %v720
  %722 = vmatmul.f32.gmra.mxu0 %v721
  %v723 = vpop.f32.mrf.mxu0
  %v724 = vadd.f32 %v678, %v723
  %725 = vdwg.mxu0
  %726 = vmatpush.msra.mxu0 0.0
  %727 = vmatpush.msra.mxu0 0.0
  %728 = vmatpush.msra.mxu0 0.0
  %729 = vmatpush.msra.mxu0 0.0
  %v730 = vand.u32 %v257, 4294901760
  %731 = vmatpush.msra.mxu0 %v730
  %v732 = vand.u32 %v256, 4294901760
  %733 = vmatpush.msra.mxu0 %v732
  %v734 = vand.u32 %v70, 4294901760
  %735 = vmatpush.msra.mxu0 %v734
  %v736 = vand.u32 %v64, 4294901760
  %737 = vmatpush.msra.mxu0 %v736
  %v738 = vand.u32 %v222, 4294901760
  %739 = vmatpush.msra.mxu0 %v738
  %v740 = vand.u32 %v221, 4294901760
  %741 = vmatpush.msra.mxu0 %v740
  %v742 = vand.u32 %v185, 4294901760
  %743 = vmatpush.msra.mxu0 %v742
  %v744 = vand.u32 %v184, 4294901760
  %745 = vmatpush.msra.mxu0 %v744
  %v746 = vand.u32 %v148, 4294901760
  %747 = vmatpush.msra.mxu0 %v746
  %v748 = vand.u32 %v147, 4294901760
  %749 = vmatpush.msra.mxu0 %v748
  %v750 = vand.u32 %v111, 4294901760
  %751 = vmatpush.msra.mxu0 %v750
  %v752 = vand.u32 %v110, 4294901760
  %753 = vmatpush.msra.mxu0 %v752
  %v754 = vand.u32 %v271, 4294901760
  %v755 = vsub.f32 %v271, %v754
  %v756 = vand.u32 %v755, 4294901760
  %757 = vmatmul.f32.gmra.mxu0 %v756
  %v758 = vpop.f32.mrf.mxu0
  %v759 = vadd.f32 %v724, %v758
  %760 = vdwg.mxu0
  %761 = vmatpush.msra.mxu0 0.0
  %762 = vmatpush.msra.mxu0 0.0
  %763 = vmatpush.msra.mxu0 0.0
  %764 = vmatpush.msra.mxu0 0.0
  %v765 = vand.u32 %v257, 4294901760
  %v766 = vsub.f32 %v257, %v765
  %v767 = vand.u32 %v766, 4294901760
  %768 = vmatpush.msra.mxu0 %v767
  %v769 = vand.u32 %v256, 4294901760
  %v770 = vsub.f32 %v256, %v769
  %v771 = vand.u32 %v770, 4294901760
  %772 = vmatpush.msra.mxu0 %v771
  %v773 = vand.u32 %v70, 4294901760
  %v774 = vsub.f32 %v70, %v773
  %v775 = vand.u32 %v774, 4294901760
  %776 = vmatpush.msra.mxu0 %v775
  %v777 = vand.u32 %v64, 4294901760
  %v778 = vsub.f32 %v64, %v777
  %v779 = vand.u32 %v778, 4294901760
  %780 = vmatpush.msra.mxu0 %v779
  %v781 = vand.u32 %v222, 4294901760
  %v782 = vsub.f32 %v222, %v781
  %v783 = vand.u32 %v782, 4294901760
  %784 = vmatpush.msra.mxu0 %v783
  %v785 = vand.u32 %v221, 4294901760
  %v786 = vsub.f32 %v221, %v785
  %v787 = vand.u32 %v786, 4294901760
  %788 = vmatpush.msra.mxu0 %v787
  %v789 = vand.u32 %v185, 4294901760
  %v790 = vsub.f32 %v185, %v789
  %v791 = vand.u32 %v790, 4294901760
  %792 = vmatpush.msra.mxu0 %v791
  %v793 = vand.u32 %v184, 4294901760
  %v794 = vsub.f32 %v184, %v793
  %v795 = vand.u32 %v794, 4294901760
  %796 = vmatpush.msra.mxu0 %v795
  %v797 = vand.u32 %v148, 4294901760
  %v798 = vsub.f32 %v148, %v797
  %v799 = vand.u32 %v798, 4294901760
  %800 = vmatpush.msra.mxu0 %v799
  %v801 = vand.u32 %v147, 4294901760
  %v802 = vsub.f32 %v147, %v801
  %v803 = vand.u32 %v802, 4294901760
  %804 = vmatpush.msra.mxu0 %v803
  %v805 = vand.u32 %v111, 4294901760
  %v806 = vsub.f32 %v111, %v805
  %v807 = vand.u32 %v806, 4294901760
  %808 = vmatpush.msra.mxu0 %v807
  %v809 = vand.u32 %v110, 4294901760
  %v810 = vsub.f32 %v110, %v809
  %v811 = vand.u32 %v810, 4294901760
  %812 = vmatpush.msra.mxu0 %v811
  %v813 = vand.u32 %v271, 4294901760
  %814 = vmatmul.f32.gmra.mxu0 %v813
  %v815 = vpop.f32.mrf.mxu0
  %v816 = vadd.f32 %v759, %v815
  %817 = vdwg.mxu0
  %818 = vmatpush.msra.mxu0 0.0
  %819 = vmatpush.msra.mxu0 0.0
  %820 = vmatpush.msra.mxu0 0.0
  %821 = vmatpush.msra.mxu0 0.0
  %v822 = vand.u32 %v257, 4294901760
  %823 = vmatpush.msra.mxu0 %v822
  %v824 = vand.u32 %v256, 4294901760
  %825 = vmatpush.msra.mxu0 %v824
  %v826 = vand.u32 %v70, 4294901760
  %827 = vmatpush.msra.mxu0 %v826
  %v828 = vand.u32 %v64, 4294901760
  %829 = vmatpush.msra.mxu0 %v828
  %v830 = vand.u32 %v222, 4294901760
  %831 = vmatpush.msra.mxu0 %v830
  %v832 = vand.u32 %v221, 4294901760
  %833 = vmatpush.msra.mxu0 %v832
  %v834 = vand.u32 %v185, 4294901760
  %835 = vmatpush.msra.mxu0 %v834
  %v836 = vand.u32 %v184, 4294901760
  %837 = vmatpush.msra.mxu0 %v836
  %v838 = vand.u32 %v148, 4294901760
  %839 = vmatpush.msra.mxu0 %v838
  %v840 = vand.u32 %v147, 4294901760
  %841 = vmatpush.msra.mxu0 %v840
  %v842 = vand.u32 %v111, 4294901760
  %843 = vmatpush.msra.mxu0 %v842
  %v844 = vand.u32 %v110, 4294901760
  %845 = vmatpush.msra.mxu0 %v844
  %v846 = vand.u32 %v271, 4294901760
  %847 = vmatmul.f32.gmra.mxu0 %v846
  %v848 = vpop.f32.mrf.mxu0
  %v849 = vadd.f32 %v816, %v848
  %850 = vdwg.mxu0
  %851 = vmatpush.msra.mxu0 0.0
  %852 = vmatpush.msra.mxu0 0.0
  %853 = vmatpush.msra.mxu0 0.0
  %854 = vmatpush.msra.mxu0 0.0
  %v855 = vand.u32 %v255, 4294901760
  %856 = vmatpush.msra.mxu0 %v855
  %v857 = vand.u32 %v254, 4294901760
  %858 = vmatpush.msra.mxu0 %v857
  %v859 = vand.u32 %v71, 4294901760
  %860 = vmatpush.msra.mxu0 %v859
  %v861 = vand.u32 %v65, 4294901760
  %862 = vmatpush.msra.mxu0 %v861
  %v863 = vand.u32 %v220, 4294901760
  %864 = vmatpush.msra.mxu0 %v863
  %v865 = vand.u32 %v219, 4294901760
  %866 = vmatpush.msra.mxu0 %v865
  %v867 = vand.u32 %v183, 4294901760
  %868 = vmatpush.msra.mxu0 %v867
  %v869 = vand.u32 %v182, 4294901760
  %870 = vmatpush.msra.mxu0 %v869
  %v871 = vand.u32 %v146, 4294901760
  %872 = vmatpush.msra.mxu0 %v871
  %v873 = vand.u32 %v145, 4294901760
  %874 = vmatpush.msra.mxu0 %v873
  %v875 = vand.u32 %v109, 4294901760
  %876 = vmatpush.msra.mxu0 %v875
  %v877 = vand.u32 %v108, 4294901760
  %878 = vmatpush.msra.mxu0 %v877
  %v879 = vand.u32 %v271, 4294901760
  %v880 = vsub.f32 %v271, %v879
  %v881 = vand.u32 %v880, 4294901760
  %v882 = vsub.f32 %v880, %v881
  %v883 = vand.u32 %v882, 4294901760
  %884 = vmatmul.f32.gmra.mxu0 %v883
  %v885 = vpop.f32.mrf.mxu0
  %v886 = vadd.f32 %v267, %v885
  %887 = vdwg.mxu0
  %888 = vmatpush.msra.mxu0 0.0
  %889 = vmatpush.msra.mxu0 0.0
  %890 = vmatpush.msra.mxu0 0.0
  %891 = vmatpush.msra.mxu0 0.0
  %v892 = vand.u32 %v255, 4294901760
  %v893 = vsub.f32 %v255, %v892
  %v894 = vand.u32 %v893, 4294901760
  %v895 = vsub.f32 %v893, %v894
  %v896 = vand.u32 %v895, 4294901760
  %897 = vmatpush.msra.mxu0 %v896
  %v898 = vand.u32 %v254, 4294901760
  %v899 = vsub.f32 %v254, %v898
  %v900 = vand.u32 %v899, 4294901760
  %v901 = vsub.f32 %v899, %v900
  %v902 = vand.u32 %v901, 4294901760
  %903 = vmatpush.msra.mxu0 %v902
  %v904 = vand.u32 %v71, 4294901760
  %v905 = vsub.f32 %v71, %v904
  %v906 = vand.u32 %v905, 4294901760
  %v907 = vsub.f32 %v905, %v906
  %v908 = vand.u32 %v907, 4294901760
  %909 = vmatpush.msra.mxu0 %v908
  %v910 = vand.u32 %v65, 4294901760
  %v911 = vsub.f32 %v65, %v910
  %v912 = vand.u32 %v911, 4294901760
  %v913 = vsub.f32 %v911, %v912
  %v914 = vand.u32 %v913, 4294901760
  %915 = vmatpush.msra.mxu0 %v914
  %v916 = vand.u32 %v220, 4294901760
  %v917 = vsub.f32 %v220, %v916
  %v918 = vand.u32 %v917, 4294901760
  %v919 = vsub.f32 %v917, %v918
  %v920 = vand.u32 %v919, 4294901760
  %921 = vmatpush.msra.mxu0 %v920
  %v922 = vand.u32 %v219, 4294901760
  %v923 = vsub.f32 %v219, %v922
  %v924 = vand.u32 %v923, 4294901760
  %v925 = vsub.f32 %v923, %v924
  %v926 = vand.u32 %v925, 4294901760
  %927 = vmatpush.msra.mxu0 %v926
  %v928 = vand.u32 %v183, 4294901760
  %v929 = vsub.f32 %v183, %v928
  %v930 = vand.u32 %v929, 4294901760
  %v931 = vsub.f32 %v929, %v930
  %v932 = vand.u32 %v931, 4294901760
  %933 = vmatpush.msra.mxu0 %v932
  %v934 = vand.u32 %v182, 4294901760
  %v935 = vsub.f32 %v182, %v934
  %v936 = vand.u32 %v935, 4294901760
  %v937 = vsub.f32 %v935, %v936
  %v938 = vand.u32 %v937, 4294901760
  %939 = vmatpush.msra.mxu0 %v938
  %v940 = vand.u32 %v146, 4294901760
  %v941 = vsub.f32 %v146, %v940
  %v942 = vand.u32 %v941, 4294901760
  %v943 = vsub.f32 %v941, %v942
  %v944 = vand.u32 %v943, 4294901760
  %945 = vmatpush.msra.mxu0 %v944
  %v946 = vand.u32 %v145, 4294901760
  %v947 = vsub.f32 %v145, %v946
  %v948 = vand.u32 %v947, 4294901760
  %v949 = vsub.f32 %v947, %v948
  %v950 = vand.u32 %v949, 4294901760
  %951 = vmatpush.msra.mxu0 %v950
  %v952 = vand.u32 %v109, 4294901760
  %v953 = vsub.f32 %v109, %v952
  %v954 = vand.u32 %v953, 4294901760
  %v955 = vsub.f32 %v953, %v954
  %v956 = vand.u32 %v955, 4294901760
  %957 = vmatpush.msra.mxu0 %v956
  %v958 = vand.u32 %v108, 4294901760
  %v959 = vsub.f32 %v108, %v958
  %v960 = vand.u32 %v959, 4294901760
  %v961 = vsub.f32 %v959, %v960
  %v962 = vand.u32 %v961, 4294901760
  %963 = vmatpush.msra.mxu0 %v962
  %v964 = vand.u32 %v271, 4294901760
  %965 = vmatmul.f32.gmra.mxu0 %v964
  %v966 = vpop.f32.mrf.mxu0
  %v967 = vadd.f32 %v886, %v966
  %968 = vdwg.mxu0
  %969 = vmatpush.msra.mxu0 0.0
  %970 = vmatpush.msra.mxu0 0.0
  %971 = vmatpush.msra.mxu0 0.0
  %972 = vmatpush.msra.mxu0 0.0
  %v973 = vand.u32 %v255, 4294901760
  %v974 = vsub.f32 %v255, %v973
  %975 = vmatpush.msra.mxu0 %v974
  %v976 = vand.u32 %v254, 4294901760
  %v977 = vsub.f32 %v254, %v976
  %978 = vmatpush.msra.mxu0 %v977
  %v979 = vand.u32 %v71, 4294901760
  %v980 = vsub.f32 %v71, %v979
  %981 = vmatpush.msra.mxu0 %v980
  %v982 = vand.u32 %v65, 4294901760
  %v983 = vsub.f32 %v65, %v982
  %984 = vmatpush.msra.mxu0 %v983
  %v985 = vand.u32 %v220, 4294901760
  %v986 = vsub.f32 %v220, %v985
  %987 = vmatpush.msra.mxu0 %v986
  %v988 = vand.u32 %v219, 4294901760
  %v989 = vsub.f32 %v219, %v988
  %990 = vmatpush.msra.mxu0 %v989
  %v991 = vand.u32 %v183, 4294901760
  %v992 = vsub.f32 %v183, %v991
  %993 = vmatpush.msra.mxu0 %v992
  %v994 = vand.u32 %v182, 4294901760
  %v995 = vsub.f32 %v182, %v994
  %996 = vmatpush.msra.mxu0 %v995
  %v997 = vand.u32 %v146, 4294901760
  %v998 = vsub.f32 %v146, %v997
  %999 = vmatpush.msra.mxu0 %v998
  %v1000 = vand.u32 %v145, 4294901760
  %v1001 = vsub.f32 %v145, %v1000
  %1002 = vmatpush.msra.mxu0 %v1001
  %v1003 = vand.u32 %v109, 4294901760
  %v1004 = vsub.f32 %v109, %v1003
  %1005 = vmatpush.msra.mxu0 %v1004
  %v1006 = vand.u32 %v108, 4294901760
  %v1007 = vsub.f32 %v108, %v1006
  %1008 = vmatpush.msra.mxu0 %v1007
  %v1009 = vand.u32 %v271, 4294901760
  %v1010 = vsub.f32 %v271, %v1009
  %1011 = vmatmul.f32.gmra.mxu0 %v1010
  %v1012 = vpop.f32.mrf.mxu0
  %v1013 = vadd.f32 %v967, %v1012
  %1014 = vdwg.mxu0
  %1015 = vmatpush.msra.mxu0 0.0
  %1016 = vmatpush.msra.mxu0 0.0
  %1017 = vmatpush.msra.mxu0 0.0
  %1018 = vmatpush.msra.mxu0 0.0
  %v1019 = vand.u32 %v255, 4294901760
  %1020 = vmatpush.msra.mxu0 %v1019
  %v1021 = vand.u32 %v254, 4294901760
  %1022 = vmatpush.msra.mxu0 %v1021
  %v1023 = vand.u32 %v71, 4294901760
  %1024 = vmatpush.msra.mxu0 %v1023
  %v1025 = vand.u32 %v65, 4294901760
  %1026 = vmatpush.msra.mxu0 %v1025
  %v1027 = vand.u32 %v220, 4294901760
  %1028 = vmatpush.msra.mxu0 %v1027
  %v1029 = vand.u32 %v219, 4294901760
  %1030 = vmatpush.msra.mxu0 %v1029
  %v1031 = vand.u32 %v183, 4294901760
  %1032 = vmatpush.msra.mxu0 %v1031
  %v1033 = vand.u32 %v182, 4294901760
  %1034 = vmatpush.msra.mxu0 %v1033
  %v1035 = vand.u32 %v146, 4294901760
  %1036 = vmatpush.msra.mxu0 %v1035
  %v1037 = vand.u32 %v145, 4294901760
  %1038 = vmatpush.msra.mxu0 %v1037
  %v1039 = vand.u32 %v109, 4294901760
  %1040 = vmatpush.msra.mxu0 %v1039
  %v1041 = vand.u32 %v108, 4294901760
  %1042 = vmatpush.msra.mxu0 %v1041
  %v1043 = vand.u32 %v271, 4294901760
  %v1044 = vsub.f32 %v271, %v1043
  %v1045 = vand.u32 %v1044, 4294901760
  %1046 = vmatmul.f32.gmra.mxu0 %v1045
  %v1047 = vpop.f32.mrf.mxu0
  %v1048 = vadd.f32 %v1013, %v1047
  %1049 = vdwg.mxu0
  %1050 = vmatpush.msra.mxu0 0.0
  %1051 = vmatpush.msra.mxu0 0.0
  %1052 = vmatpush.msra.mxu0 0.0
  %1053 = vmatpush.msra.mxu0 0.0
  %v1054 = vand.u32 %v255, 4294901760
  %v1055 = vsub.f32 %v255, %v1054
  %v1056 = vand.u32 %v1055, 4294901760
  %1057 = vmatpush.msra.mxu0 %v1056
  %v1058 = vand.u32 %v254, 4294901760
  %v1059 = vsub.f32 %v254, %v1058
  %v1060 = vand.u32 %v1059, 4294901760
  %1061 = vmatpush.msra.mxu0 %v1060
  %v1062 = vand.u32 %v71, 4294901760
  %v1063 = vsub.f32 %v71, %v1062
  %v1064 = vand.u32 %v1063, 4294901760
  %1065 = vmatpush.msra.mxu0 %v1064
  %v1066 = vand.u32 %v65, 4294901760
  %v1067 = vsub.f32 %v65, %v1066
  %v1068 = vand.u32 %v1067, 4294901760
  %1069 = vmatpush.msra.mxu0 %v1068
  %v1070 = vand.u32 %v220, 4294901760
  %v1071 = vsub.f32 %v220, %v1070
  %v1072 = vand.u32 %v1071, 4294901760
  %1073 = vmatpush.msra.mxu0 %v1072
  %v1074 = vand.u32 %v219, 4294901760
  %v1075 = vsub.f32 %v219, %v1074
  %v1076 = vand.u32 %v1075, 4294901760
  %1077 = vmatpush.msra.mxu0 %v1076
  %v1078 = vand.u32 %v183, 4294901760
  %v1079 = vsub.f32 %v183, %v1078
  %v1080 = vand.u32 %v1079, 4294901760
  %1081 = vmatpush.msra.mxu0 %v1080
  %v1082 = vand.u32 %v182, 4294901760
  %v1083 = vsub.f32 %v182, %v1082
  %v1084 = vand.u32 %v1083, 4294901760
  %1085 = vmatpush.msra.mxu0 %v1084
  %v1086 = vand.u32 %v146, 4294901760
  %v1087 = vsub.f32 %v146, %v1086
  %v1088 = vand.u32 %v1087, 4294901760
  %1089 = vmatpush.msra.mxu0 %v1088
  %v1090 = vand.u32 %v145, 4294901760
  %v1091 = vsub.f32 %v145, %v1090
  %v1092 = vand.u32 %v1091, 4294901760
  %1093 = vmatpush.msra.mxu0 %v1092
  %v1094 = vand.u32 %v109, 4294901760
  %v1095 = vsub.f32 %v109, %v1094
  %v1096 = vand.u32 %v1095, 4294901760
  %1097 = vmatpush.msra.mxu0 %v1096
  %v1098 = vand.u32 %v108, 4294901760
  %v1099 = vsub.f32 %v108, %v1098
  %v1100 = vand.u32 %v1099, 4294901760
  %1101 = vmatpush.msra.mxu0 %v1100
  %v1102 = vand.u32 %v271, 4294901760
  %1103 = vmatmul.f32.gmra.mxu0 %v1102
  %v1104 = vpop.f32.mrf.mxu0
  %v1105 = vadd.f32 %v1048, %v1104
  %1106 = vdwg.mxu0
  %1107 = vmatpush.msra.mxu0 0.0
  %1108 = vmatpush.msra.mxu0 0.0
  %1109 = vmatpush.msra.mxu0 0.0
  %1110 = vmatpush.msra.mxu0 0.0
  %v1111 = vand.u32 %v255, 4294901760
  %1112 = vmatpush.msra.mxu0 %v1111
  %v1113 = vand.u32 %v254, 4294901760
  %1114 = vmatpush.msra.mxu0 %v1113
  %v1115 = vand.u32 %v71, 4294901760
  %1116 = vmatpush.msra.mxu0 %v1115
  %v1117 = vand.u32 %v65, 4294901760
  %1118 = vmatpush.msra.mxu0 %v1117
  %v1119 = vand.u32 %v220, 4294901760
  %1120 = vmatpush.msra.mxu0 %v1119
  %v1121 = vand.u32 %v219, 4294901760
  %1122 = vmatpush.msra.mxu0 %v1121
  %v1123 = vand.u32 %v183, 4294901760
  %1124 = vmatpush.msra.mxu0 %v1123
  %v1125 = vand.u32 %v182, 4294901760
  %1126 = vmatpush.msra.mxu0 %v1125
  %v1127 = vand.u32 %v146, 4294901760
  %1128 = vmatpush.msra.mxu0 %v1127
  %v1129 = vand.u32 %v145, 4294901760
  %1130 = vmatpush.msra.mxu0 %v1129
  %v1131 = vand.u32 %v109, 4294901760
  %1132 = vmatpush.msra.mxu0 %v1131
  %v1133 = vand.u32 %v108, 4294901760
  %1134 = vmatpush.msra.mxu0 %v1133
  %v1135 = vand.u32 %v271, 4294901760
  %1136 = vmatmul.f32.gmra.mxu0 %v1135
  %v1137 = vpop.f32.mrf.mxu0
  %v1138 = vadd.f32 %v1105, %v1137
  %1139 = vdwg.mxu0
  %1140 = vmatpush.msra.mxu0 0.0
  %1141 = vmatpush.msra.mxu0 0.0
  %1142 = vmatpush.msra.mxu0 0.0
  %1143 = vmatpush.msra.mxu0 0.0
  %v1144 = vand.u32 %v253, 4294901760
  %1145 = vmatpush.msra.mxu0 %v1144
  %v1146 = vand.u32 %v252, 4294901760
  %1147 = vmatpush.msra.mxu0 %v1146
  %v1148 = vand.u32 %v72, 4294901760
  %1149 = vmatpush.msra.mxu0 %v1148
  %v1150 = vand.u32 %v66, 4294901760
  %1151 = vmatpush.msra.mxu0 %v1150
  %v1152 = vand.u32 %v218, 4294901760
  %1153 = vmatpush.msra.mxu0 %v1152
  %v1154 = vand.u32 %v217, 4294901760
  %1155 = vmatpush.msra.mxu0 %v1154
  %v1156 = vand.u32 %v181, 4294901760
  %1157 = vmatpush.msra.mxu0 %v1156
  %v1158 = vand.u32 %v180, 4294901760
  %1159 = vmatpush.msra.mxu0 %v1158
  %v1160 = vand.u32 %v144, 4294901760
  %1161 = vmatpush.msra.mxu0 %v1160
  %v1162 = vand.u32 %v143, 4294901760
  %1163 = vmatpush.msra.mxu0 %v1162
  %v1164 = vand.u32 %v107, 4294901760
  %1165 = vmatpush.msra.mxu0 %v1164
  %v1166 = vand.u32 %v106, 4294901760
  %1167 = vmatpush.msra.mxu0 %v1166
  %v1168 = vand.u32 %v271, 4294901760
  %v1169 = vsub.f32 %v271, %v1168
  %v1170 = vand.u32 %v1169, 4294901760
  %v1171 = vsub.f32 %v1169, %v1170
  %v1172 = vand.u32 %v1171, 4294901760
  %1173 = vmatmul.f32.gmra.mxu0 %v1172
  %v1174 = vpop.f32.mrf.mxu0
  %v1175 = vadd.f32 %v267, %v1174
  %1176 = vdwg.mxu0
  %1177 = vmatpush.msra.mxu0 0.0
  %1178 = vmatpush.msra.mxu0 0.0
  %1179 = vmatpush.msra.mxu0 0.0
  %1180 = vmatpush.msra.mxu0 0.0
  %v1181 = vand.u32 %v253, 4294901760
  %v1182 = vsub.f32 %v253, %v1181
  %v1183 = vand.u32 %v1182, 4294901760
  %v1184 = vsub.f32 %v1182, %v1183
  %v1185 = vand.u32 %v1184, 4294901760
  %1186 = vmatpush.msra.mxu0 %v1185
  %v1187 = vand.u32 %v252, 4294901760
  %v1188 = vsub.f32 %v252, %v1187
  %v1189 = vand.u32 %v1188, 4294901760
  %v1190 = vsub.f32 %v1188, %v1189
  %v1191 = vand.u32 %v1190, 4294901760
  %1192 = vmatpush.msra.mxu0 %v1191
  %v1193 = vand.u32 %v72, 4294901760
  %v1194 = vsub.f32 %v72, %v1193
  %v1195 = vand.u32 %v1194, 4294901760
  %v1196 = vsub.f32 %v1194, %v1195
  %v1197 = vand.u32 %v1196, 4294901760
  %1198 = vmatpush.msra.mxu0 %v1197
  %v1199 = vand.u32 %v66, 4294901760
  %v1200 = vsub.f32 %v66, %v1199
  %v1201 = vand.u32 %v1200, 4294901760
  %v1202 = vsub.f32 %v1200, %v1201
  %v1203 = vand.u32 %v1202, 4294901760
  %1204 = vmatpush.msra.mxu0 %v1203
  %v1205 = vand.u32 %v218, 4294901760
  %v1206 = vsub.f32 %v218, %v1205
  %v1207 = vand.u32 %v1206, 4294901760
  %v1208 = vsub.f32 %v1206, %v1207
  %v1209 = vand.u32 %v1208, 4294901760
  %1210 = vmatpush.msra.mxu0 %v1209
  %v1211 = vand.u32 %v217, 4294901760
  %v1212 = vsub.f32 %v217, %v1211
  %v1213 = vand.u32 %v1212, 4294901760
  %v1214 = vsub.f32 %v1212, %v1213
  %v1215 = vand.u32 %v1214, 4294901760
  %1216 = vmatpush.msra.mxu0 %v1215
  %v1217 = vand.u32 %v181, 4294901760
  %v1218 = vsub.f32 %v181, %v1217
  %v1219 = vand.u32 %v1218, 4294901760
  %v1220 = vsub.f32 %v1218, %v1219
  %v1221 = vand.u32 %v1220, 4294901760
  %1222 = vmatpush.msra.mxu0 %v1221
  %v1223 = vand.u32 %v180, 4294901760
  %v1224 = vsub.f32 %v180, %v1223
  %v1225 = vand.u32 %v1224, 4294901760
  %v1226 = vsub.f32 %v1224, %v1225
  %v1227 = vand.u32 %v1226, 4294901760
  %1228 = vmatpush.msra.mxu0 %v1227
  %v1229 = vand.u32 %v144, 4294901760
  %v1230 = vsub.f32 %v144, %v1229
  %v1231 = vand.u32 %v1230, 4294901760
  %v1232 = vsub.f32 %v1230, %v1231
  %v1233 = vand.u32 %v1232, 4294901760
  %1234 = vmatpush.msra.mxu0 %v1233
  %v1235 = vand.u32 %v143, 4294901760
  %v1236 = vsub.f32 %v143, %v1235
  %v1237 = vand.u32 %v1236, 4294901760
  %v1238 = vsub.f32 %v1236, %v1237
  %v1239 = vand.u32 %v1238, 4294901760
  %1240 = vmatpush.msra.mxu0 %v1239
  %v1241 = vand.u32 %v107, 4294901760
  %v1242 = vsub.f32 %v107, %v1241
  %v1243 = vand.u32 %v1242, 4294901760
  %v1244 = vsub.f32 %v1242, %v1243
  %v1245 = vand.u32 %v1244, 4294901760
  %1246 = vmatpush.msra.mxu0 %v1245
  %v1247 = vand.u32 %v106, 4294901760
  %v1248 = vsub.f32 %v106, %v1247
  %v1249 = vand.u32 %v1248, 4294901760
  %v1250 = vsub.f32 %v1248, %v1249
  %v1251 = vand.u32 %v1250, 4294901760
  %1252 = vmatpush.msra.mxu0 %v1251
  %v1253 = vand.u32 %v271, 4294901760
  %1254 = vmatmul.f32.gmra.mxu0 %v1253
  %v1255 = vpop.f32.mrf.mxu0
  %v1256 = vadd.f32 %v1175, %v1255
  %1257 = vdwg.mxu0
  %1258 = vmatpush.msra.mxu0 0.0
  %1259 = vmatpush.msra.mxu0 0.0
  %1260 = vmatpush.msra.mxu0 0.0
  %1261 = vmatpush.msra.mxu0 0.0
  %v1262 = vand.u32 %v253, 4294901760
  %v1263 = vsub.f32 %v253, %v1262
  %1264 = vmatpush.msra.mxu0 %v1263
  %v1265 = vand.u32 %v252, 4294901760
  %v1266 = vsub.f32 %v252, %v1265
  %1267 = vmatpush.msra.mxu0 %v1266
  %v1268 = vand.u32 %v72, 4294901760
  %v1269 = vsub.f32 %v72, %v1268
  %1270 = vmatpush.msra.mxu0 %v1269
  %v1271 = vand.u32 %v66, 4294901760
  %v1272 = vsub.f32 %v66, %v1271
  %1273 = vmatpush.msra.mxu0 %v1272
  %v1274 = vand.u32 %v218, 4294901760
  %v1275 = vsub.f32 %v218, %v1274
  %1276 = vmatpush.msra.mxu0 %v1275
  %v1277 = vand.u32 %v217, 4294901760
  %v1278 = vsub.f32 %v217, %v1277
  %1279 = vmatpush.msra.mxu0 %v1278
  %v1280 = vand.u32 %v181, 4294901760
  %v1281 = vsub.f32 %v181, %v1280
  %1282 = vmatpush.msra.mxu0 %v1281
  %v1283 = vand.u32 %v180, 4294901760
  %v1284 = vsub.f32 %v180, %v1283
  %1285 = vmatpush.msra.mxu0 %v1284
  %v1286 = vand.u32 %v144, 4294901760
  %v1287 = vsub.f32 %v144, %v1286
  %1288 = vmatpush.msra.mxu0 %v1287
  %v1289 = vand.u32 %v143, 4294901760
  %v1290 = vsub.f32 %v143, %v1289
  %1291 = vmatpush.msra.mxu0 %v1290
  %v1292 = vand.u32 %v107, 4294901760
  %v1293 = vsub.f32 %v107, %v1292
  %1294 = vmatpush.msra.mxu0 %v1293
  %v1295 = vand.u32 %v106, 4294901760
  %v1296 = vsub.f32 %v106, %v1295
  %1297 = vmatpush.msra.mxu0 %v1296
  %v1298 = vand.u32 %v271, 4294901760
  %v1299 = vsub.f32 %v271, %v1298
  %1300 = vmatmul.f32.gmra.mxu0 %v1299
  %v1301 = vpop.f32.mrf.mxu0
  %v1302 = vadd.f32 %v1256, %v1301
  %1303 = vdwg.mxu0
  %1304 = vmatpush.msra.mxu0 0.0
  %1305 = vmatpush.msra.mxu0 0.0
  %1306 = vmatpush.msra.mxu0 0.0
  %1307 = vmatpush.msra.mxu0 0.0
  %v1308 = vand.u32 %v253, 4294901760
  %1309 = vmatpush.msra.mxu0 %v1308
  %v1310 = vand.u32 %v252, 4294901760
  %1311 = vmatpush.msra.mxu0 %v1310
  %v1312 = vand.u32 %v72, 4294901760
  %1313 = vmatpush.msra.mxu0 %v1312
  %v1314 = vand.u32 %v66, 4294901760
  %1315 = vmatpush.msra.mxu0 %v1314
  %v1316 = vand.u32 %v218, 4294901760
  %1317 = vmatpush.msra.mxu0 %v1316
  %v1318 = vand.u32 %v217, 4294901760
  %1319 = vmatpush.msra.mxu0 %v1318
  %v1320 = vand.u32 %v181, 4294901760
  %1321 = vmatpush.msra.mxu0 %v1320
  %v1322 = vand.u32 %v180, 4294901760
  %1323 = vmatpush.msra.mxu0 %v1322
  %v1324 = vand.u32 %v144, 4294901760
  %1325 = vmatpush.msra.mxu0 %v1324
  %v1326 = vand.u32 %v143, 4294901760
  %1327 = vmatpush.msra.mxu0 %v1326
  %v1328 = vand.u32 %v107, 4294901760
  %1329 = vmatpush.msra.mxu0 %v1328
  %v1330 = vand.u32 %v106, 4294901760
  %1331 = vmatpush.msra.mxu0 %v1330
  %v1332 = vand.u32 %v271, 4294901760
  %v1333 = vsub.f32 %v271, %v1332
  %v1334 = vand.u32 %v1333, 4294901760
  %1335 = vmatmul.f32.gmra.mxu0 %v1334
  %v1336 = vpop.f32.mrf.mxu0
  %v1337 = vadd.f32 %v1302, %v1336
  %1338 = vdwg.mxu0
  %1339 = vmatpush.msra.mxu0 0.0
  %1340 = vmatpush.msra.mxu0 0.0
  %1341 = vmatpush.msra.mxu0 0.0
  %1342 = vmatpush.msra.mxu0 0.0
  %v1343 = vand.u32 %v253, 4294901760
  %v1344 = vsub.f32 %v253, %v1343
  %v1345 = vand.u32 %v1344, 4294901760
  %1346 = vmatpush.msra.mxu0 %v1345
  %v1347 = vand.u32 %v252, 4294901760
  %v1348 = vsub.f32 %v252, %v1347
  %v1349 = vand.u32 %v1348, 4294901760
  %1350 = vmatpush.msra.mxu0 %v1349
  %v1351 = vand.u32 %v72, 4294901760
  %v1352 = vsub.f32 %v72, %v1351
  %v1353 = vand.u32 %v1352, 4294901760
  %1354 = vmatpush.msra.mxu0 %v1353
  %v1355 = vand.u32 %v66, 4294901760
  %v1356 = vsub.f32 %v66, %v1355
  %v1357 = vand.u32 %v1356, 4294901760
  %1358 = vmatpush.msra.mxu0 %v1357
  %v1359 = vand.u32 %v218, 4294901760
  %v1360 = vsub.f32 %v218, %v1359
  %v1361 = vand.u32 %v1360, 4294901760
  %1362 = vmatpush.msra.mxu0 %v1361
  %v1363 = vand.u32 %v217, 4294901760
  %v1364 = vsub.f32 %v217, %v1363
  %v1365 = vand.u32 %v1364, 4294901760
  %1366 = vmatpush.msra.mxu0 %v1365
  %v1367 = vand.u32 %v181, 4294901760
  %v1368 = vsub.f32 %v181, %v1367
  %v1369 = vand.u32 %v1368, 4294901760
  %1370 = vmatpush.msra.mxu0 %v1369
  %v1371 = vand.u32 %v180, 4294901760
  %v1372 = vsub.f32 %v180, %v1371
  %v1373 = vand.u32 %v1372, 4294901760
  %1374 = vmatpush.msra.mxu0 %v1373
  %v1375 = vand.u32 %v144, 4294901760
  %v1376 = vsub.f32 %v144, %v1375
  %v1377 = vand.u32 %v1376, 4294901760
  %1378 = vmatpush.msra.mxu0 %v1377
  %v1379 = vand.u32 %v143, 4294901760
  %v1380 = vsub.f32 %v143, %v1379
  %v1381 = vand.u32 %v1380, 4294901760
  %1382 = vmatpush.msra.mxu0 %v1381
  %v1383 = vand.u32 %v107, 4294901760
  %v1384 = vsub.f32 %v107, %v1383
  %v1385 = vand.u32 %v1384, 4294901760
  %1386 = vmatpush.msra.mxu0 %v1385
  %v1387 = vand.u32 %v106, 4294901760
  %v1388 = vsub.f32 %v106, %v1387
  %v1389 = vand.u32 %v1388, 4294901760
  %1390 = vmatpush.msra.mxu0 %v1389
  %v1391 = vand.u32 %v271, 4294901760
  %1392 = vmatmul.f32.gmra.mxu0 %v1391
  %v1393 = vpop.f32.mrf.mxu0
  %v1394 = vadd.f32 %v1337, %v1393
  %1395 = vdwg.mxu0
  %1396 = vmatpush.msra.mxu0 0.0
  %1397 = vmatpush.msra.mxu0 0.0
  %1398 = vmatpush.msra.mxu0 0.0
  %1399 = vmatpush.msra.mxu0 0.0
  %v1400 = vand.u32 %v253, 4294901760
  %1401 = vmatpush.msra.mxu0 %v1400
  %v1402 = vand.u32 %v252, 4294901760
  %1403 = vmatpush.msra.mxu0 %v1402
  %v1404 = vand.u32 %v72, 4294901760
  %1405 = vmatpush.msra.mxu0 %v1404
  %v1406 = vand.u32 %v66, 4294901760
  %1407 = vmatpush.msra.mxu0 %v1406
  %v1408 = vand.u32 %v218, 4294901760
  %1409 = vmatpush.msra.mxu0 %v1408
  %v1410 = vand.u32 %v217, 4294901760
  %1411 = vmatpush.msra.mxu0 %v1410
  %v1412 = vand.u32 %v181, 4294901760
  %1413 = vmatpush.msra.mxu0 %v1412
  %v1414 = vand.u32 %v180, 4294901760
  %1415 = vmatpush.msra.mxu0 %v1414
  %v1416 = vand.u32 %v144, 4294901760
  %1417 = vmatpush.msra.mxu0 %v1416
  %v1418 = vand.u32 %v143, 4294901760
  %1419 = vmatpush.msra.mxu0 %v1418
  %v1420 = vand.u32 %v107, 4294901760
  %1421 = vmatpush.msra.mxu0 %v1420
  %v1422 = vand.u32 %v106, 4294901760
  %1423 = vmatpush.msra.mxu0 %v1422
  %v1424 = vand.u32 %v271, 4294901760
  %1425 = vmatmul.f32.gmra.mxu0 %v1424
  %v1426 = vpop.f32.mrf.mxu0
  %v1427 = vadd.f32 %v1394, %v1426
  %1428 = vdwg.mxu0
  %1429 = vmatpush.msra.mxu0 0.0
  %1430 = vmatpush.msra.mxu0 0.0
  %1431 = vmatpush.msra.mxu0 0.0
  %1432 = vmatpush.msra.mxu0 0.0
  %v1433 = vand.u32 %v251, 4294901760
  %1434 = vmatpush.msra.mxu0 %v1433
  %v1435 = vand.u32 %v250, 4294901760
  %1436 = vmatpush.msra.mxu0 %v1435
  %v1437 = vand.u32 %v73, 4294901760
  %1438 = vmatpush.msra.mxu0 %v1437
  %v1439 = vand.u32 %v67, 4294901760
  %1440 = vmatpush.msra.mxu0 %v1439
  %v1441 = vand.u32 %v216, 4294901760
  %1442 = vmatpush.msra.mxu0 %v1441
  %v1443 = vand.u32 %v215, 4294901760
  %1444 = vmatpush.msra.mxu0 %v1443
  %v1445 = vand.u32 %v179, 4294901760
  %1446 = vmatpush.msra.mxu0 %v1445
  %v1447 = vand.u32 %v178, 4294901760
  %1448 = vmatpush.msra.mxu0 %v1447
  %v1449 = vand.u32 %v142, 4294901760
  %1450 = vmatpush.msra.mxu0 %v1449
  %v1451 = vand.u32 %v141, 4294901760
  %1452 = vmatpush.msra.mxu0 %v1451
  %v1453 = vand.u32 %v105, 4294901760
  %1454 = vmatpush.msra.mxu0 %v1453
  %v1455 = vand.u32 %v104, 4294901760
  %1456 = vmatpush.msra.mxu0 %v1455
  %v1457 = vand.u32 %v271, 4294901760
  %v1458 = vsub.f32 %v271, %v1457
  %v1459 = vand.u32 %v1458, 4294901760
  %v1460 = vsub.f32 %v1458, %v1459
  %v1461 = vand.u32 %v1460, 4294901760
  %1462 = vmatmul.f32.gmra.mxu0 %v1461
  %v1463 = vpop.f32.mrf.mxu0
  %v1464 = vadd.f32 %v267, %v1463
  %1465 = vdwg.mxu0
  %1466 = vmatpush.msra.mxu0 0.0
  %1467 = vmatpush.msra.mxu0 0.0
  %1468 = vmatpush.msra.mxu0 0.0
  %1469 = vmatpush.msra.mxu0 0.0
  %v1470 = vand.u32 %v251, 4294901760
  %v1471 = vsub.f32 %v251, %v1470
  %v1472 = vand.u32 %v1471, 4294901760
  %v1473 = vsub.f32 %v1471, %v1472
  %v1474 = vand.u32 %v1473, 4294901760
  %1475 = vmatpush.msra.mxu0 %v1474
  %v1476 = vand.u32 %v250, 4294901760
  %v1477 = vsub.f32 %v250, %v1476
  %v1478 = vand.u32 %v1477, 4294901760
  %v1479 = vsub.f32 %v1477, %v1478
  %v1480 = vand.u32 %v1479, 4294901760
  %1481 = vmatpush.msra.mxu0 %v1480
  %v1482 = vand.u32 %v73, 4294901760
  %v1483 = vsub.f32 %v73, %v1482
  %v1484 = vand.u32 %v1483, 4294901760
  %v1485 = vsub.f32 %v1483, %v1484
  %v1486 = vand.u32 %v1485, 4294901760
  %1487 = vmatpush.msra.mxu0 %v1486
  %v1488 = vand.u32 %v67, 4294901760
  %v1489 = vsub.f32 %v67, %v1488
  %v1490 = vand.u32 %v1489, 4294901760
  %v1491 = vsub.f32 %v1489, %v1490
  %v1492 = vand.u32 %v1491, 4294901760
  %1493 = vmatpush.msra.mxu0 %v1492
  %v1494 = vand.u32 %v216, 4294901760
  %v1495 = vsub.f32 %v216, %v1494
  %v1496 = vand.u32 %v1495, 4294901760
  %v1497 = vsub.f32 %v1495, %v1496
  %v1498 = vand.u32 %v1497, 4294901760
  %1499 = vmatpush.msra.mxu0 %v1498
  %v1500 = vand.u32 %v215, 4294901760
  %v1501 = vsub.f32 %v215, %v1500
  %v1502 = vand.u32 %v1501, 4294901760
  %v1503 = vsub.f32 %v1501, %v1502
  %v1504 = vand.u32 %v1503, 4294901760
  %1505 = vmatpush.msra.mxu0 %v1504
  %v1506 = vand.u32 %v179, 4294901760
  %v1507 = vsub.f32 %v179, %v1506
  %v1508 = vand.u32 %v1507, 4294901760
  %v1509 = vsub.f32 %v1507, %v1508
  %v1510 = vand.u32 %v1509, 4294901760
  %1511 = vmatpush.msra.mxu0 %v1510
  %v1512 = vand.u32 %v178, 4294901760
  %v1513 = vsub.f32 %v178, %v1512
  %v1514 = vand.u32 %v1513, 4294901760
  %v1515 = vsub.f32 %v1513, %v1514
  %v1516 = vand.u32 %v1515, 4294901760
  %1517 = vmatpush.msra.mxu0 %v1516
  %v1518 = vand.u32 %v142, 4294901760
  %v1519 = vsub.f32 %v142, %v1518
  %v1520 = vand.u32 %v1519, 4294901760
  %v1521 = vsub.f32 %v1519, %v1520
  %v1522 = vand.u32 %v1521, 4294901760
  %1523 = vmatpush.msra.mxu0 %v1522
  %v1524 = vand.u32 %v141, 4294901760
  %v1525 = vsub.f32 %v141, %v1524
  %v1526 = vand.u32 %v1525, 4294901760
  %v1527 = vsub.f32 %v1525, %v1526
  %v1528 = vand.u32 %v1527, 4294901760
  %1529 = vmatpush.msra.mxu0 %v1528
  %v1530 = vand.u32 %v105, 4294901760
  %v1531 = vsub.f32 %v105, %v1530
  %v1532 = vand.u32 %v1531, 4294901760
  %v1533 = vsub.f32 %v1531, %v1532
  %v1534 = vand.u32 %v1533, 4294901760
  %1535 = vmatpush.msra.mxu0 %v1534
  %v1536 = vand.u32 %v104, 4294901760
  %v1537 = vsub.f32 %v104, %v1536
  %v1538 = vand.u32 %v1537, 4294901760
  %v1539 = vsub.f32 %v1537, %v1538
  %v1540 = vand.u32 %v1539, 4294901760
  %1541 = vmatpush.msra.mxu0 %v1540
  %v1542 = vand.u32 %v271, 4294901760
  %1543 = vmatmul.f32.gmra.mxu0 %v1542
  %v1544 = vpop.f32.mrf.mxu0
  %v1545 = vadd.f32 %v1464, %v1544
  %1546 = vdwg.mxu0
  %1547 = vmatpush.msra.mxu0 0.0
  %1548 = vmatpush.msra.mxu0 0.0
  %1549 = vmatpush.msra.mxu0 0.0
  %1550 = vmatpush.msra.mxu0 0.0
  %v1551 = vand.u32 %v251, 4294901760
  %v1552 = vsub.f32 %v251, %v1551
  %1553 = vmatpush.msra.mxu0 %v1552
  %v1554 = vand.u32 %v250, 4294901760
  %v1555 = vsub.f32 %v250, %v1554
  %1556 = vmatpush.msra.mxu0 %v1555
  %v1557 = vand.u32 %v73, 4294901760
  %v1558 = vsub.f32 %v73, %v1557
  %1559 = vmatpush.msra.mxu0 %v1558
  %v1560 = vand.u32 %v67, 4294901760
  %v1561 = vsub.f32 %v67, %v1560
  %1562 = vmatpush.msra.mxu0 %v1561
  %v1563 = vand.u32 %v216, 4294901760
  %v1564 = vsub.f32 %v216, %v1563
  %1565 = vmatpush.msra.mxu0 %v1564
  %v1566 = vand.u32 %v215, 4294901760
  %v1567 = vsub.f32 %v215, %v1566
  %1568 = vmatpush.msra.mxu0 %v1567
  %v1569 = vand.u32 %v179, 4294901760
  %v1570 = vsub.f32 %v179, %v1569
  %1571 = vmatpush.msra.mxu0 %v1570
  %v1572 = vand.u32 %v178, 4294901760
  %v1573 = vsub.f32 %v178, %v1572
  %1574 = vmatpush.msra.mxu0 %v1573
  %v1575 = vand.u32 %v142, 4294901760
  %v1576 = vsub.f32 %v142, %v1575
  %1577 = vmatpush.msra.mxu0 %v1576
  %v1578 = vand.u32 %v141, 4294901760
  %v1579 = vsub.f32 %v141, %v1578
  %1580 = vmatpush.msra.mxu0 %v1579
  %v1581 = vand.u32 %v105, 4294901760
  %v1582 = vsub.f32 %v105, %v1581
  %1583 = vmatpush.msra.mxu0 %v1582
  %v1584 = vand.u32 %v104, 4294901760
  %v1585 = vsub.f32 %v104, %v1584
  %1586 = vmatpush.msra.mxu0 %v1585
  %v1587 = vand.u32 %v271, 4294901760
  %v1588 = vsub.f32 %v271, %v1587
  %1589 = vmatmul.f32.gmra.mxu0 %v1588
  %v1590 = vpop.f32.mrf.mxu0
  %v1591 = vadd.f32 %v1545, %v1590
  %1592 = vdwg.mxu0
  %1593 = vmatpush.msra.mxu0 0.0
  %1594 = vmatpush.msra.mxu0 0.0
  %1595 = vmatpush.msra.mxu0 0.0
  %1596 = vmatpush.msra.mxu0 0.0
  %v1597 = vand.u32 %v251, 4294901760
  %1598 = vmatpush.msra.mxu0 %v1597
  %v1599 = vand.u32 %v250, 4294901760
  %1600 = vmatpush.msra.mxu0 %v1599
  %v1601 = vand.u32 %v73, 4294901760
  %1602 = vmatpush.msra.mxu0 %v1601
  %v1603 = vand.u32 %v67, 4294901760
  %1604 = vmatpush.msra.mxu0 %v1603
  %v1605 = vand.u32 %v216, 4294901760
  %1606 = vmatpush.msra.mxu0 %v1605
  %v1607 = vand.u32 %v215, 4294901760
  %1608 = vmatpush.msra.mxu0 %v1607
  %v1609 = vand.u32 %v179, 4294901760
  %1610 = vmatpush.msra.mxu0 %v1609
  %v1611 = vand.u32 %v178, 4294901760
  %1612 = vmatpush.msra.mxu0 %v1611
  %v1613 = vand.u32 %v142, 4294901760
  %1614 = vmatpush.msra.mxu0 %v1613
  %v1615 = vand.u32 %v141, 4294901760
  %1616 = vmatpush.msra.mxu0 %v1615
  %v1617 = vand.u32 %v105, 4294901760
  %1618 = vmatpush.msra.mxu0 %v1617
  %v1619 = vand.u32 %v104, 4294901760
  %1620 = vmatpush.msra.mxu0 %v1619
  %v1621 = vand.u32 %v271, 4294901760
  %v1622 = vsub.f32 %v271, %v1621
  %v1623 = vand.u32 %v1622, 4294901760
  %1624 = vmatmul.f32.gmra.mxu0 %v1623
  %v1625 = vpop.f32.mrf.mxu0
  %v1626 = vadd.f32 %v1591, %v1625
  %1627 = vdwg.mxu0
  %1628 = vmatpush.msra.mxu0 0.0
  %1629 = vmatpush.msra.mxu0 0.0
  %1630 = vmatpush.msra.mxu0 0.0
  %1631 = vmatpush.msra.mxu0 0.0
  %v1632 = vand.u32 %v251, 4294901760
  %v1633 = vsub.f32 %v251, %v1632
  %v1634 = vand.u32 %v1633, 4294901760
  %1635 = vmatpush.msra.mxu0 %v1634
  %v1636 = vand.u32 %v250, 4294901760
  %v1637 = vsub.f32 %v250, %v1636
  %v1638 = vand.u32 %v1637, 4294901760
  %1639 = vmatpush.msra.mxu0 %v1638
  %v1640 = vand.u32 %v73, 4294901760
  %v1641 = vsub.f32 %v73, %v1640
  %v1642 = vand.u32 %v1641, 4294901760
  %1643 = vmatpush.msra.mxu0 %v1642
  %v1644 = vand.u32 %v67, 4294901760
  %v1645 = vsub.f32 %v67, %v1644
  %v1646 = vand.u32 %v1645, 4294901760
  %1647 = vmatpush.msra.mxu0 %v1646
  %v1648 = vand.u32 %v216, 4294901760
  %v1649 = vsub.f32 %v216, %v1648
  %v1650 = vand.u32 %v1649, 4294901760
  %1651 = vmatpush.msra.mxu0 %v1650
  %v1652 = vand.u32 %v215, 4294901760
  %v1653 = vsub.f32 %v215, %v1652
  %v1654 = vand.u32 %v1653, 4294901760
  %1655 = vmatpush.msra.mxu0 %v1654
  %v1656 = vand.u32 %v179, 4294901760
  %v1657 = vsub.f32 %v179, %v1656
  %v1658 = vand.u32 %v1657, 4294901760
  %1659 = vmatpush.msra.mxu0 %v1658
  %v1660 = vand.u32 %v178, 4294901760
  %v1661 = vsub.f32 %v178, %v1660
  %v1662 = vand.u32 %v1661, 4294901760
  %1663 = vmatpush.msra.mxu0 %v1662
  %v1664 = vand.u32 %v142, 4294901760
  %v1665 = vsub.f32 %v142, %v1664
  %v1666 = vand.u32 %v1665, 4294901760
  %1667 = vmatpush.msra.mxu0 %v1666
  %v1668 = vand.u32 %v141, 4294901760
  %v1669 = vsub.f32 %v141, %v1668
  %v1670 = vand.u32 %v1669, 4294901760
  %1671 = vmatpush.msra.mxu0 %v1670
  %v1672 = vand.u32 %v105, 4294901760
  %v1673 = vsub.f32 %v105, %v1672
  %v1674 = vand.u32 %v1673, 4294901760
  %1675 = vmatpush.msra.mxu0 %v1674
  %v1676 = vand.u32 %v104, 4294901760
  %v1677 = vsub.f32 %v104, %v1676
  %v1678 = vand.u32 %v1677, 4294901760
  %1679 = vmatpush.msra.mxu0 %v1678
  %v1680 = vand.u32 %v271, 4294901760
  %1681 = vmatmul.f32.gmra.mxu0 %v1680
  %v1682 = vpop.f32.mrf.mxu0
  %v1683 = vadd.f32 %v1626, %v1682
  %1684 = vdwg.mxu0
  %1685 = vmatpush.msra.mxu0 0.0
  %1686 = vmatpush.msra.mxu0 0.0
  %1687 = vmatpush.msra.mxu0 0.0
  %1688 = vmatpush.msra.mxu0 0.0
  %v1689 = vand.u32 %v251, 4294901760
  %1690 = vmatpush.msra.mxu0 %v1689
  %v1691 = vand.u32 %v250, 4294901760
  %1692 = vmatpush.msra.mxu0 %v1691
  %v1693 = vand.u32 %v73, 4294901760
  %1694 = vmatpush.msra.mxu0 %v1693
  %v1695 = vand.u32 %v67, 4294901760
  %1696 = vmatpush.msra.mxu0 %v1695
  %v1697 = vand.u32 %v216, 4294901760
  %1698 = vmatpush.msra.mxu0 %v1697
  %v1699 = vand.u32 %v215, 4294901760
  %1700 = vmatpush.msra.mxu0 %v1699
  %v1701 = vand.u32 %v179, 4294901760
  %1702 = vmatpush.msra.mxu0 %v1701
  %v1703 = vand.u32 %v178, 4294901760
  %1704 = vmatpush.msra.mxu0 %v1703
  %v1705 = vand.u32 %v142, 4294901760
  %1706 = vmatpush.msra.mxu0 %v1705
  %v1707 = vand.u32 %v141, 4294901760
  %1708 = vmatpush.msra.mxu0 %v1707
  %v1709 = vand.u32 %v105, 4294901760
  %1710 = vmatpush.msra.mxu0 %v1709
  %v1711 = vand.u32 %v104, 4294901760
  %1712 = vmatpush.msra.mxu0 %v1711
  %v1713 = vand.u32 %v271, 4294901760
  %1714 = vmatmul.f32.gmra.mxu0 %v1713
  %v1715 = vpop.f32.mrf.mxu0
  %v1716 = vadd.f32 %v1683, %v1715
  %1717 = vdwg.mxu0
  %1718 = vmatpush.msra.mxu0 0.0
  %1719 = vmatpush.msra.mxu0 0.0
  %1720 = vmatpush.msra.mxu0 0.0
  %1721 = vmatpush.msra.mxu0 0.0
  %v1722 = vand.u32 %v261, 4294901760
  %1723 = vmatpush.msra.mxu0 %v1722
  %v1724 = vand.u32 %v260, 4294901760
  %1725 = vmatpush.msra.mxu0 %v1724
  %v1726 = vand.u32 %v74, 4294901760
  %1727 = vmatpush.msra.mxu0 %v1726
  %v1728 = vand.u32 %v68, 4294901760
  %1729 = vmatpush.msra.mxu0 %v1728
  %v1730 = vand.u32 %v214, 4294901760
  %1731 = vmatpush.msra.mxu0 %v1730
  %v1732 = vand.u32 %v213, 4294901760
  %1733 = vmatpush.msra.mxu0 %v1732
  %v1734 = vand.u32 %v177, 4294901760
  %1735 = vmatpush.msra.mxu0 %v1734
  %v1736 = vand.u32 %v176, 4294901760
  %1737 = vmatpush.msra.mxu0 %v1736
  %v1738 = vand.u32 %v140, 4294901760
  %1739 = vmatpush.msra.mxu0 %v1738
  %v1740 = vand.u32 %v139, 4294901760
  %1741 = vmatpush.msra.mxu0 %v1740
  %v1742 = vand.u32 %v103, 4294901760
  %1743 = vmatpush.msra.mxu0 %v1742
  %v1744 = vand.u32 %v102, 4294901760
  %1745 = vmatpush.msra.mxu0 %v1744
  %v1746 = vand.u32 %v271, 4294901760
  %v1747 = vsub.f32 %v271, %v1746
  %v1748 = vand.u32 %v1747, 4294901760
  %v1749 = vsub.f32 %v1747, %v1748
  %v1750 = vand.u32 %v1749, 4294901760
  %1751 = vmatmul.f32.gmra.mxu0 %v1750
  %v1752 = vpop.f32.mrf.mxu0
  %v1753 = vadd.f32 %v267, %v1752
  %1754 = vdwg.mxu0
  %1755 = vmatpush.msra.mxu0 0.0
  %1756 = vmatpush.msra.mxu0 0.0
  %1757 = vmatpush.msra.mxu0 0.0
  %1758 = vmatpush.msra.mxu0 0.0
  %v1759 = vand.u32 %v261, 4294901760
  %v1760 = vsub.f32 %v261, %v1759
  %v1761 = vand.u32 %v1760, 4294901760
  %v1762 = vsub.f32 %v1760, %v1761
  %v1763 = vand.u32 %v1762, 4294901760
  %1764 = vmatpush.msra.mxu0 %v1763
  %v1765 = vand.u32 %v260, 4294901760
  %v1766 = vsub.f32 %v260, %v1765
  %v1767 = vand.u32 %v1766, 4294901760
  %v1768 = vsub.f32 %v1766, %v1767
  %v1769 = vand.u32 %v1768, 4294901760
  %1770 = vmatpush.msra.mxu0 %v1769
  %v1771 = vand.u32 %v74, 4294901760
  %v1772 = vsub.f32 %v74, %v1771
  %v1773 = vand.u32 %v1772, 4294901760
  %v1774 = vsub.f32 %v1772, %v1773
  %v1775 = vand.u32 %v1774, 4294901760
  %1776 = vmatpush.msra.mxu0 %v1775
  %v1777 = vand.u32 %v68, 4294901760
  %v1778 = vsub.f32 %v68, %v1777
  %v1779 = vand.u32 %v1778, 4294901760
  %v1780 = vsub.f32 %v1778, %v1779
  %v1781 = vand.u32 %v1780, 4294901760
  %1782 = vmatpush.msra.mxu0 %v1781
  %v1783 = vand.u32 %v214, 4294901760
  %v1784 = vsub.f32 %v214, %v1783
  %v1785 = vand.u32 %v1784, 4294901760
  %v1786 = vsub.f32 %v1784, %v1785
  %v1787 = vand.u32 %v1786, 4294901760
  %1788 = vmatpush.msra.mxu0 %v1787
  %v1789 = vand.u32 %v213, 4294901760
  %v1790 = vsub.f32 %v213, %v1789
  %v1791 = vand.u32 %v1790, 4294901760
  %v1792 = vsub.f32 %v1790, %v1791
  %v1793 = vand.u32 %v1792, 4294901760
  %1794 = vmatpush.msra.mxu0 %v1793
  %v1795 = vand.u32 %v177, 4294901760
  %v1796 = vsub.f32 %v177, %v1795
  %v1797 = vand.u32 %v1796, 4294901760
  %v1798 = vsub.f32 %v1796, %v1797
  %v1799 = vand.u32 %v1798, 4294901760
  %1800 = vmatpush.msra.mxu0 %v1799
  %v1801 = vand.u32 %v176, 4294901760
  %v1802 = vsub.f32 %v176, %v1801
  %v1803 = vand.u32 %v1802, 4294901760
  %v1804 = vsub.f32 %v1802, %v1803
  %v1805 = vand.u32 %v1804, 4294901760
  %1806 = vmatpush.msra.mxu0 %v1805
  %v1807 = vand.u32 %v140, 4294901760
  %v1808 = vsub.f32 %v140, %v1807
  %v1809 = vand.u32 %v1808, 4294901760
  %v1810 = vsub.f32 %v1808, %v1809
  %v1811 = vand.u32 %v1810, 4294901760
  %1812 = vmatpush.msra.mxu0 %v1811
  %v1813 = vand.u32 %v139, 4294901760
  %v1814 = vsub.f32 %v139, %v1813
  %v1815 = vand.u32 %v1814, 4294901760
  %v1816 = vsub.f32 %v1814, %v1815
  %v1817 = vand.u32 %v1816, 4294901760
  %1818 = vmatpush.msra.mxu0 %v1817
  %v1819 = vand.u32 %v103, 4294901760
  %v1820 = vsub.f32 %v103, %v1819
  %v1821 = vand.u32 %v1820, 4294901760
  %v1822 = vsub.f32 %v1820, %v1821
  %v1823 = vand.u32 %v1822, 4294901760
  %1824 = vmatpush.msra.mxu0 %v1823
  %v1825 = vand.u32 %v102, 4294901760
  %v1826 = vsub.f32 %v102, %v1825
  %v1827 = vand.u32 %v1826, 4294901760
  %v1828 = vsub.f32 %v1826, %v1827
  %v1829 = vand.u32 %v1828, 4294901760
  %1830 = vmatpush.msra.mxu0 %v1829
  %v1831 = vand.u32 %v271, 4294901760
  %1832 = vmatmul.f32.gmra.mxu0 %v1831
  %v1833 = vpop.f32.mrf.mxu0
  %v1834 = vadd.f32 %v1753, %v1833
  %1835 = vdwg.mxu0
  %1836 = vmatpush.msra.mxu0 0.0
  %1837 = vmatpush.msra.mxu0 0.0
  %1838 = vmatpush.msra.mxu0 0.0
  %1839 = vmatpush.msra.mxu0 0.0
  %v1840 = vand.u32 %v261, 4294901760
  %v1841 = vsub.f32 %v261, %v1840
  %1842 = vmatpush.msra.mxu0 %v1841
  %v1843 = vand.u32 %v260, 4294901760
  %v1844 = vsub.f32 %v260, %v1843
  %1845 = vmatpush.msra.mxu0 %v1844
  %v1846 = vand.u32 %v74, 4294901760
  %v1847 = vsub.f32 %v74, %v1846
  %1848 = vmatpush.msra.mxu0 %v1847
  %v1849 = vand.u32 %v68, 4294901760
  %v1850 = vsub.f32 %v68, %v1849
  %1851 = vmatpush.msra.mxu0 %v1850
  %v1852 = vand.u32 %v214, 4294901760
  %v1853 = vsub.f32 %v214, %v1852
  %1854 = vmatpush.msra.mxu0 %v1853
  %v1855 = vand.u32 %v213, 4294901760
  %v1856 = vsub.f32 %v213, %v1855
  %1857 = vmatpush.msra.mxu0 %v1856
  %v1858 = vand.u32 %v177, 4294901760
  %v1859 = vsub.f32 %v177, %v1858
  %1860 = vmatpush.msra.mxu0 %v1859
  %v1861 = vand.u32 %v176, 4294901760
  %v1862 = vsub.f32 %v176, %v1861
  %1863 = vmatpush.msra.mxu0 %v1862
  %v1864 = vand.u32 %v140, 4294901760
  %v1865 = vsub.f32 %v140, %v1864
  %1866 = vmatpush.msra.mxu0 %v1865
  %v1867 = vand.u32 %v139, 4294901760
  %v1868 = vsub.f32 %v139, %v1867
  %1869 = vmatpush.msra.mxu0 %v1868
  %v1870 = vand.u32 %v103, 4294901760
  %v1871 = vsub.f32 %v103, %v1870
  %1872 = vmatpush.msra.mxu0 %v1871
  %v1873 = vand.u32 %v102, 4294901760
  %v1874 = vsub.f32 %v102, %v1873
  %1875 = vmatpush.msra.mxu0 %v1874
  %v1876 = vand.u32 %v271, 4294901760
  %v1877 = vsub.f32 %v271, %v1876
  %1878 = vmatmul.f32.gmra.mxu0 %v1877
  %v1879 = vpop.f32.mrf.mxu0
  %v1880 = vadd.f32 %v1834, %v1879
  %1881 = vdwg.mxu0
  %1882 = vmatpush.msra.mxu0 0.0
  %1883 = vmatpush.msra.mxu0 0.0
  %1884 = vmatpush.msra.mxu0 0.0
  %1885 = vmatpush.msra.mxu0 0.0
  %v1886 = vand.u32 %v261, 4294901760
  %1887 = vmatpush.msra.mxu0 %v1886
  %v1888 = vand.u32 %v260, 4294901760
  %1889 = vmatpush.msra.mxu0 %v1888
  %v1890 = vand.u32 %v74, 4294901760
  %1891 = vmatpush.msra.mxu0 %v1890
  %v1892 = vand.u32 %v68, 4294901760
  %1893 = vmatpush.msra.mxu0 %v1892
  %v1894 = vand.u32 %v214, 4294901760
  %1895 = vmatpush.msra.mxu0 %v1894
  %v1896 = vand.u32 %v213, 4294901760
  %1897 = vmatpush.msra.mxu0 %v1896
  %v1898 = vand.u32 %v177, 4294901760
  %1899 = vmatpush.msra.mxu0 %v1898
  %v1900 = vand.u32 %v176, 4294901760
  %1901 = vmatpush.msra.mxu0 %v1900
  %v1902 = vand.u32 %v140, 4294901760
  %1903 = vmatpush.msra.mxu0 %v1902
  %v1904 = vand.u32 %v139, 4294901760
  %1905 = vmatpush.msra.mxu0 %v1904
  %v1906 = vand.u32 %v103, 4294901760
  %1907 = vmatpush.msra.mxu0 %v1906
  %v1908 = vand.u32 %v102, 4294901760
  %1909 = vmatpush.msra.mxu0 %v1908
  %v1910 = vand.u32 %v271, 4294901760
  %v1911 = vsub.f32 %v271, %v1910
  %v1912 = vand.u32 %v1911, 4294901760
  %1913 = vmatmul.f32.gmra.mxu0 %v1912
  %v1914 = vpop.f32.mrf.mxu0
  %v1915 = vadd.f32 %v1880, %v1914
  %1916 = vdwg.mxu0
  %1917 = vmatpush.msra.mxu0 0.0
  %1918 = vmatpush.msra.mxu0 0.0
  %1919 = vmatpush.msra.mxu0 0.0
  %1920 = vmatpush.msra.mxu0 0.0
  %v1921 = vand.u32 %v261, 4294901760
  %v1922 = vsub.f32 %v261, %v1921
  %v1923 = vand.u32 %v1922, 4294901760
  %1924 = vmatpush.msra.mxu0 %v1923
  %v1925 = vand.u32 %v260, 4294901760
  %v1926 = vsub.f32 %v260, %v1925
  %v1927 = vand.u32 %v1926, 4294901760
  %1928 = vmatpush.msra.mxu0 %v1927
  %v1929 = vand.u32 %v74, 4294901760
  %v1930 = vsub.f32 %v74, %v1929
  %v1931 = vand.u32 %v1930, 4294901760
  %1932 = vmatpush.msra.mxu0 %v1931
  %v1933 = vand.u32 %v68, 4294901760
  %v1934 = vsub.f32 %v68, %v1933
  %v1935 = vand.u32 %v1934, 4294901760
  %1936 = vmatpush.msra.mxu0 %v1935
  %v1937 = vand.u32 %v214, 4294901760
  %v1938 = vsub.f32 %v214, %v1937
  %v1939 = vand.u32 %v1938, 4294901760
  %1940 = vmatpush.msra.mxu0 %v1939
  %v1941 = vand.u32 %v213, 4294901760
  %v1942 = vsub.f32 %v213, %v1941
  %v1943 = vand.u32 %v1942, 4294901760
  %1944 = vmatpush.msra.mxu0 %v1943
  %v1945 = vand.u32 %v177, 4294901760
  %v1946 = vsub.f32 %v177, %v1945
  %v1947 = vand.u32 %v1946, 4294901760
  %1948 = vmatpush.msra.mxu0 %v1947
  %v1949 = vand.u32 %v176, 4294901760
  %v1950 = vsub.f32 %v176, %v1949
  %v1951 = vand.u32 %v1950, 4294901760
  %1952 = vmatpush.msra.mxu0 %v1951
  %v1953 = vand.u32 %v140, 4294901760
  %v1954 = vsub.f32 %v140, %v1953
  %v1955 = vand.u32 %v1954, 4294901760
  %1956 = vmatpush.msra.mxu0 %v1955
  %v1957 = vand.u32 %v139, 4294901760
  %v1958 = vsub.f32 %v139, %v1957
  %v1959 = vand.u32 %v1958, 4294901760
  %1960 = vmatpush.msra.mxu0 %v1959
  %v1961 = vand.u32 %v103, 4294901760
  %v1962 = vsub.f32 %v103, %v1961
  %v1963 = vand.u32 %v1962, 4294901760
  %1964 = vmatpush.msra.mxu0 %v1963
  %v1965 = vand.u32 %v102, 4294901760
  %v1966 = vsub.f32 %v102, %v1965
  %v1967 = vand.u32 %v1966, 4294901760
  %1968 = vmatpush.msra.mxu0 %v1967
  %v1969 = vand.u32 %v271, 4294901760
  %1970 = vmatmul.f32.gmra.mxu0 %v1969
  %v1971 = vpop.f32.mrf.mxu0
  %v1972 = vadd.f32 %v1915, %v1971
  %1973 = vdwg.mxu0
  %1974 = vmatpush.msra.mxu0 0.0
  %1975 = vmatpush.msra.mxu0 0.0
  %1976 = vmatpush.msra.mxu0 0.0
  %1977 = vmatpush.msra.mxu0 0.0
  %v1978 = vand.u32 %v261, 4294901760
  %1979 = vmatpush.msra.mxu0 %v1978
  %v1980 = vand.u32 %v260, 4294901760
  %1981 = vmatpush.msra.mxu0 %v1980
  %v1982 = vand.u32 %v74, 4294901760
  %1983 = vmatpush.msra.mxu0 %v1982
  %v1984 = vand.u32 %v68, 4294901760
  %1985 = vmatpush.msra.mxu0 %v1984
  %v1986 = vand.u32 %v214, 4294901760
  %1987 = vmatpush.msra.mxu0 %v1986
  %v1988 = vand.u32 %v213, 4294901760
  %1989 = vmatpush.msra.mxu0 %v1988
  %v1990 = vand.u32 %v177, 4294901760
  %1991 = vmatpush.msra.mxu0 %v1990
  %v1992 = vand.u32 %v176, 4294901760
  %1993 = vmatpush.msra.mxu0 %v1992
  %v1994 = vand.u32 %v140, 4294901760
  %1995 = vmatpush.msra.mxu0 %v1994
  %v1996 = vand.u32 %v139, 4294901760
  %1997 = vmatpush.msra.mxu0 %v1996
  %v1998 = vand.u32 %v103, 4294901760
  %1999 = vmatpush.msra.mxu0 %v1998
  %v2000 = vand.u32 %v102, 4294901760
  %2001 = vmatpush.msra.mxu0 %v2000
  %v2002 = vand.u32 %v271, 4294901760
  %2003 = vmatmul.f32.gmra.mxu0 %v2002
  %v2004 = vpop.f32.mrf.mxu0
  %v2005 = vadd.f32 %v1972, %v2004
  %2006 = vdwg.mxu0
  %vm2007 = vcmp.gt.f32.partialorder %v560, 0.0
  %vm2008 = vcmp.gt.f32.partialorder %v849, 0.0
  %vm2009 = vcmp.gt.f32.partialorder %v1138, 0.0
  %vm2010 = vcmp.gt.f32.partialorder %v1427, 0.0
  %vm2011 = vcmp.gt.f32.partialorder %v1716, 0.0
  %vm2012 = vcmp.gt.f32.partialorder %v2005, 0.0
  %v2013 = vmin.f32 %v560, 0.0
  %v2014 = vmin.f32 %v849, 0.0
  %v2015 = vmin.f32 %v1138, 0.0
  %v2016 = vmin.f32 %v1427, 0.0
  %v2017 = vmin.f32 %v1716, 0.0
  %v2018 = vmin.f32 %v2005, 0.0
  %v2019 = vmul.f32 %v2013, 1.442695
  %v2020 = vpow.pop %v2019
  %v2021 = vmul.f32 %v2014, 1.442695
  %v2022 = vpow.pop %v2021
  %v2023 = vmul.f32 %v2015, 1.442695
  %v2024 = vpow.pop %v2023
  %v2025 = vmul.f32 %v2016, 1.442695
  %v2026 = vpow.pop %v2025
  %v2027 = vmul.f32 %v2017, 1.442695
  %v2028 = vpow.pop %v2027
  %v2029 = vmul.f32 %v2018, 1.442695
  %v2030 = vpow.pop %v2029
  %v2031 = vsub.f32 %v2020, 1.0
  %v2032 = vsub.f32 %v2022, 1.0
  %v2033 = vsub.f32 %v2024, 1.0
  %v2034 = vsub.f32 %v2026, 1.0
  %v2035 = vsub.f32 %v2028, 1.0
  %v2036 = vsub.f32 %v2030, 1.0
  %v2037 = vsel %vm2007, %v560, %v2031
  %v2038 = vsel %vm2008, %v849, %v2032
  %v2039 = vsel %vm2009, %v1138, %v2033
  %v2040 = vsel %vm2010, %v1427, %v2034
  %v2041 = vsel %vm2011, %v1716, %v2035
  %v2042 = vsel %vm2012, %v2005, %v2036
  %v2043 = vmul.f32 %v2037, %v2037
  %v2044 = vmul.f32 %v2038, %v2038
  %v2045 = vmul.f32 %v2039, %v2039
  %v2046 = vmul.f32 %v2040, %v2040
  %v2047 = vmul.f32 %v2041, %v2041
  %v2048 = vmul.f32 %v2042, %v2042
  %v2050 = vperm.slane %v60, 0
  %v2051 = vperm.slane %v60, 1
  %v2052 = vperm.slane %v60, 2
  %v2053 = vperm.slane %v60, 3
  %v2054 = vperm.slane %v60, 4
  %v2055 = vperm.slane %v60, 5
  %v2062 = vmul.f32 %v2037, %v2050
  %v2063 = vmul.f32 %v2038, %v2051
  %v2064 = vmul.f32 %v2039, %v2052
  %v2065 = vmul.f32 %v2040, %v2053
  %v2066 = vmul.f32 %v2041, %v2054
  %v2067 = vmul.f32 %v2042, %v2055
  %v2068 = vadd.f32 %v2062, %v2063
  %v2069 = vadd.f32 %v2068, %v2064
  %v2070 = vadd.f32 %v2069, %v2065
  %v2071 = vadd.f32 %v2070, %v2066
  %v2072 = vadd.f32 %v2071, %v2067
  %2073 = vadd.xlane.f32.xlu0 %v2072
  %v2074 = vpop.xlane.xlu0 %2073
  %v2075 = vmul.f32 %v2043, %v2050
  %v2076 = vmul.f32 %v2044, %v2051
  %v2077 = vmul.f32 %v2045, %v2052
  %v2078 = vmul.f32 %v2046, %v2053
  %v2079 = vmul.f32 %v2047, %v2054
  %v2080 = vmul.f32 %v2048, %v2055
  %v2081 = vadd.f32 %v2075, %v2076
  %v2082 = vadd.f32 %v2081, %v2077
  %v2083 = vadd.f32 %v2082, %v2078
  %v2084 = vadd.f32 %v2083, %v2079
  %v2085 = vadd.f32 %v2084, %v2080
  %2086 = vadd.xlane.f32.xlu0 %v2085
  %v2087 = vpop.xlane.xlu0 %2086
  %v2088 = vmul.f32 %v2074, 0.0036764706
  %v2089 = vmul.f32 %v2087, 0.0036764706
  %v2090 = vmul.f32 %v2088, %v2088
  %v2091 = vsub.f32 %v2089, %v2090
  %v2092 = vadd.f32 %v2091, 1e-05
  %v2093 = vrsqrt.pop %v2092
  %v2094 = vmul.f32 %v2093, %v2092
  %v2095 = vmul.f32 %v2094, %v2093
  %v2096 = vmul.f32 0.5, %v2095
  %v2097 = vsub.f32 1.5, %v2096
  %v2098 = vmul.f32 %v2093, %v2097
  %vm2099 = vweird.f32 %v2092
  %vm2100 = vweird.f32 %v2093
  %vm2101 = vmor %vm2099, %vm2100
  %v2102 = vsel %vm2101, %v2093, %v2098
  %v2103 = vmul.f32 %v2050, %v2102
  %v2104 = vmul.f32 %v2051, %v2102
  %v2105 = vmul.f32 %v2052, %v2102
  %v2106 = vmul.f32 %v2053, %v2102
  %v2107 = vmul.f32 %v2054, %v2102
  %v2108 = vmul.f32 %v2055, %v2102
  %v2109 = vadd.f32 %v2103, 0.0
  %v2110 = vadd.f32 %v2104, 0.0
  %v2111 = vadd.f32 %v2105, 0.0
  %v2112 = vadd.f32 %v2106, 0.0
  %v2113 = vadd.f32 %v2107, 0.0
  %v2114 = vadd.f32 %v2108, 0.0
  %v2115 = vmul.f32 %v2088, %v2102
  %v2116 = vmul.f32 %v2050, %v2115
  %v2117 = vmul.f32 %v2051, %v2115
  %v2118 = vmul.f32 %v2052, %v2115
  %v2119 = vmul.f32 %v2053, %v2115
  %v2120 = vmul.f32 %v2054, %v2115
  %v2121 = vmul.f32 %v2055, %v2115
  %v2122 = vsub.f32 0.0, %v2116
  %v2123 = vsub.f32 0.0, %v2117
  %v2124 = vsub.f32 0.0, %v2118
  %v2125 = vsub.f32 0.0, %v2119
  %v2126 = vsub.f32 0.0, %v2120
  %v2127 = vsub.f32 0.0, %v2121
  %v2129 = vperm.slane %v62, 0
  %v2130 = vperm.slane %v62, 1
  %v2131 = vperm.slane %v62, 2
  %v2132 = vperm.slane %v62, 3
  %v2133 = vperm.slane %v62, 4
  %v2134 = vperm.slane %v62, 5
  %v2141 = vmul.f32 %v2037, %v2129
  %v2142 = vmul.f32 %v2038, %v2130
  %v2143 = vmul.f32 %v2039, %v2131
  %v2144 = vmul.f32 %v2040, %v2132
  %v2145 = vmul.f32 %v2041, %v2133
  %v2146 = vmul.f32 %v2042, %v2134
  %v2147 = vadd.f32 %v2141, %v2142
  %v2148 = vadd.f32 %v2147, %v2143
  %v2149 = vadd.f32 %v2148, %v2144
  %v2150 = vadd.f32 %v2149, %v2145
  %v2151 = vadd.f32 %v2150, %v2146
  %2152 = vadd.xlane.f32.xlu0 %v2151
  %v2153 = vpop.xlane.xlu0 %2152
  %v2154 = vmul.f32 %v2043, %v2129
  %v2155 = vmul.f32 %v2044, %v2130
  %v2156 = vmul.f32 %v2045, %v2131
  %v2157 = vmul.f32 %v2046, %v2132
  %v2158 = vmul.f32 %v2047, %v2133
  %v2159 = vmul.f32 %v2048, %v2134
  %v2160 = vadd.f32 %v2154, %v2155
  %v2161 = vadd.f32 %v2160, %v2156
  %v2162 = vadd.f32 %v2161, %v2157
  %v2163 = vadd.f32 %v2162, %v2158
  %v2164 = vadd.f32 %v2163, %v2159
  %2165 = vadd.xlane.f32.xlu0 %v2164
  %v2166 = vpop.xlane.xlu0 %2165
  %v2167 = vmul.f32 %v2153, 0.0036764706
  %v2168 = vmul.f32 %v2166, 0.0036764706
  %v2169 = vmul.f32 %v2167, %v2167
  %v2170 = vsub.f32 %v2168, %v2169
  %v2171 = vadd.f32 %v2170, 1e-05
  %v2172 = vrsqrt.pop %v2171
  %v2173 = vmul.f32 %v2172, %v2171
  %v2174 = vmul.f32 %v2173, %v2172
  %v2175 = vmul.f32 0.5, %v2174
  %v2176 = vsub.f32 1.5, %v2175
  %v2177 = vmul.f32 %v2172, %v2176
  %vm2178 = vweird.f32 %v2171
  %vm2179 = vweird.f32 %v2172
  %vm2180 = vmor %vm2178, %vm2179
  %v2181 = vsel %vm2180, %v2172, %v2177
  %v2182 = vmul.f32 %v2129, %v2181
  %v2183 = vmul.f32 %v2130, %v2181
  %v2184 = vmul.f32 %v2131, %v2181
  %v2185 = vmul.f32 %v2132, %v2181
  %v2186 = vmul.f32 %v2133, %v2181
  %v2187 = vmul.f32 %v2134, %v2181
  %v2188 = vadd.f32 %v2109, %v2182
  %v2189 = vadd.f32 %v2110, %v2183
  %v2190 = vadd.f32 %v2111, %v2184
  %v2191 = vadd.f32 %v2112, %v2185
  %v2192 = vadd.f32 %v2113, %v2186
  %v2193 = vadd.f32 %v2114, %v2187
  %v2194 = vmul.f32 %v2167, %v2181
  %v2195 = vmul.f32 %v2129, %v2194
  %v2196 = vmul.f32 %v2130, %v2194
  %v2197 = vmul.f32 %v2131, %v2194
  %v2198 = vmul.f32 %v2132, %v2194
  %v2199 = vmul.f32 %v2133, %v2194
  %v2200 = vmul.f32 %v2134, %v2194
  %v2201 = vsub.f32 %v2122, %v2195
  %v2202 = vsub.f32 %v2123, %v2196
  %v2203 = vsub.f32 %v2124, %v2197
  %v2204 = vsub.f32 %v2125, %v2198
  %v2205 = vsub.f32 %v2126, %v2199
  %v2206 = vsub.f32 %v2127, %v2200
  %v2207 = vmul.f32 %v2037, %v2188
  %v2208 = vmul.f32 %v2038, %v2189
  %v2209 = vmul.f32 %v2039, %v2190
  %v2210 = vmul.f32 %v2040, %v2191
  %v2211 = vmul.f32 %v2041, %v2192
  %v2212 = vmul.f32 %v2042, %v2193
  %v2213 = vadd.f32 %v2207, %v2201
  %v2214 = vadd.f32 %v2208, %v2202
  %v2215 = vadd.f32 %v2209, %v2203
  %v2216 = vadd.f32 %v2210, %v2204
  %v2217 = vadd.f32 %v2211, %v2205
  %v2218 = vadd.f32 %v2212, %v2206
  %v2220 = vperm.slane %v58, 0
  %v2221 = vperm.slane %v58, 1
  %v2222 = vperm.slane %v58, 2
  %v2223 = vperm.slane %v58, 3
  %v2224 = vperm.slane %v58, 4
  %v2225 = vperm.slane %v58, 5
  %v2232 = vmul.f32 %v2220, %v2213
  %v2233 = vmul.f32 %v2221, %v2214
  %v2234 = vmul.f32 %v2222, %v2215
  %v2235 = vmul.f32 %v2223, %v2216
  %v2236 = vmul.f32 %v2224, %v2217
  %v2237 = vmul.f32 %v2225, %v2218
  %v2244 = vrot.slane %v2232, 4
  %v2245 = vrot.slane %v2233, 4
  %v2246 = vrot.slane %v2234, 4
  %v2247 = vrot.slane %v2235, 4
  %v2248 = vrot.slane %v2236, 4
  %v2249 = vrot.slane %v2237, 4
  %2256 = vst [vmem:[#allocation2] sm:$0xf0] %v2244
  %2257 = vst [vmem:[#allocation2 + $0x8] sm:$0xf0] %v2245
  %2258 = vst [vmem:[#allocation2 + $0x10] sm:$0xf0] %v2246
  %2259 = vst [vmem:[#allocation2 + $0x18] sm:$0xf0] %v2247
  %2260 = vst [vmem:[#allocation2 + $0x20] sm:$0xf0] %v2248
  %2261 = vst [vmem:[#allocation2 + $0x28] sm:$0xf0] %v2249
  %v2262 = vld [vmem:[#allocation2] sm:$0xff]
  %v2263 = vld [vmem:[#allocation2 + $0x8] sm:$0xff]
  %v2264 = vld [vmem:[#allocation2 + $0x10] sm:$0xff]
  %v2265 = vld [vmem:[#allocation2 + $0x18] sm:$0xff]
  %v2266 = vld [vmem:[#allocation2 + $0x20] sm:$0xff]
  %v2267 = vld [vmem:[#allocation2 + $0x28] sm:$0xff]
  %v2268 = vld [vmem:[#allocation2 + $0x30] sm:$0xff]
  %v2269 = vld [vmem:[#allocation2 + $0x38] sm:$0xff]
  %v2270 = vld [vmem:[#allocation2 + $0x40] sm:$0xff]
  %v2271 = vld [vmem:[#allocation2 + $0x48] sm:$0xff]
  %v2272 = vld [vmem:[#allocation2 + $0x50] sm:$0xff]
  %v2273 = vld [vmem:[#allocation2 + $0x58] sm:$0xff]
  %2274 = vrot.lane.b32.xlu0 %v2262, 19
  %v2275 = vpop.permute.xlu0 %2274
  %2276 = vrot.lane.b32.xlu0 %v2268, 19
  %v2277 = vpop.permute.xlu0 %2276
  %2278 = vrot.lane.b32.xlu0 %v2263, 19
  %v2279 = vpop.permute.xlu0 %2278
  %2280 = vrot.lane.b32.xlu0 %v2269, 19
  %v2281 = vpop.permute.xlu0 %2280
  %2282 = vrot.lane.b32.xlu0 %v2264, 19
  %v2283 = vpop.permute.xlu0 %2282
  %2284 = vrot.lane.b32.xlu0 %v2270, 19
  %v2285 = vpop.permute.xlu0 %2284
  %2286 = vrot.lane.b32.xlu0 %v2265, 19
  %v2287 = vpop.permute.xlu0 %2286
  %2288 = vrot.lane.b32.xlu0 %v2271, 19
  %v2289 = vpop.permute.xlu0 %2288
  %2290 = vrot.lane.b32.xlu0 %v2266, 19
  %v2291 = vpop.permute.xlu0 %2290
  %2292 = vrot.lane.b32.xlu0 %v2272, 19
  %v2293 = vpop.permute.xlu0 %2292
  %2294 = vrot.lane.b32.xlu0 %v2267, 19
  %v2295 = vpop.permute.xlu0 %2294
  %2296 = vrot.lane.b32.xlu0 %v2273, 19
  %v2297 = vpop.permute.xlu0 %2296
  %v2298 = vsel %vm101, %v2291, %v2295
  %v2299 = vsel %vm101, %v2293, %v2297
  %v2300 = vsel %vm101, %v2287, %v2291
  %v2301 = vsel %vm101, %v2289, %v2293
  %v2302 = vsel %vm101, %v2283, %v2287
  %v2303 = vsel %vm101, %v2285, %v2289
  %v2304 = vsel %vm101, %v2279, %v2283
  %v2305 = vsel %vm101, %v2281, %v2285
  %v2306 = vsel %vm101, %v2275, %v2279
  %v2307 = vsel %vm101, %v2277, %v2281
  %v2308 = vsel %vm101, %v2295, %v2275
  %v2309 = vsel %vm101, %v2297, %v2277
  %2310 = vrot.lane.b32.xlu0 %v2262, 18
  %v2311 = vpop.permute.xlu0 %2310
  %2312 = vrot.lane.b32.xlu0 %v2268, 18
  %v2313 = vpop.permute.xlu0 %2312
  %2314 = vrot.lane.b32.xlu0 %v2263, 18
  %v2315 = vpop.permute.xlu0 %2314
  %2316 = vrot.lane.b32.xlu0 %v2269, 18
  %v2317 = vpop.permute.xlu0 %2316
  %2318 = vrot.lane.b32.xlu0 %v2264, 18
  %v2319 = vpop.permute.xlu0 %2318
  %2320 = vrot.lane.b32.xlu0 %v2270, 18
  %v2321 = vpop.permute.xlu0 %2320
  %2322 = vrot.lane.b32.xlu0 %v2265, 18
  %v2323 = vpop.permute.xlu0 %2322
  %2324 = vrot.lane.b32.xlu0 %v2271, 18
  %v2325 = vpop.permute.xlu0 %2324
  %2326 = vrot.lane.b32.xlu0 %v2266, 18
  %v2327 = vpop.permute.xlu0 %2326
  %2328 = vrot.lane.b32.xlu0 %v2272, 18
  %v2329 = vpop.permute.xlu0 %2328
  %2330 = vrot.lane.b32.xlu0 %v2267, 18
  %v2331 = vpop.permute.xlu0 %2330
  %2332 = vrot.lane.b32.xlu0 %v2273, 18
  %v2333 = vpop.permute.xlu0 %2332
  %v2334 = vsel %vm138, %v2327, %v2331
  %v2335 = vsel %vm138, %v2329, %v2333
  %v2336 = vsel %vm138, %v2323, %v2327
  %v2337 = vsel %vm138, %v2325, %v2329
  %v2338 = vsel %vm138, %v2319, %v2323
  %v2339 = vsel %vm138, %v2321, %v2325
  %v2340 = vsel %vm138, %v2315, %v2319
  %v2341 = vsel %vm138, %v2317, %v2321
  %v2342 = vsel %vm138, %v2311, %v2315
  %v2343 = vsel %vm138, %v2313, %v2317
  %v2344 = vsel %vm138, %v2331, %v2311
  %v2345 = vsel %vm138, %v2333, %v2313
  %2346 = vrot.lane.b32.xlu0 %v2262, 17
  %v2347 = vpop.permute.xlu0 %2346
  %2348 = vrot.lane.b32.xlu0 %v2268, 17
  %v2349 = vpop.permute.xlu0 %2348
  %2350 = vrot.lane.b32.xlu0 %v2263, 17
  %v2351 = vpop.permute.xlu0 %2350
  %2352 = vrot.lane.b32.xlu0 %v2269, 17
  %v2353 = vpop.permute.xlu0 %2352
  %2354 = vrot.lane.b32.xlu0 %v2264, 17
  %v2355 = vpop.permute.xlu0 %2354
  %2356 = vrot.lane.b32.xlu0 %v2270, 17
  %v2357 = vpop.permute.xlu0 %2356
  %2358 = vrot.lane.b32.xlu0 %v2265, 17
  %v2359 = vpop.permute.xlu0 %2358
  %2360 = vrot.lane.b32.xlu0 %v2271, 17
  %v2361 = vpop.permute.xlu0 %2360
  %2362 = vrot.lane.b32.xlu0 %v2266, 17
  %v2363 = vpop.permute.xlu0 %2362
  %2364 = vrot.lane.b32.xlu0 %v2272, 17
  %v2365 = vpop.permute.xlu0 %2364
  %2366 = vrot.lane.b32.xlu0 %v2267, 17
  %v2367 = vpop.permute.xlu0 %2366
  %2368 = vrot.lane.b32.xlu0 %v2273, 17
  %v2369 = vpop.permute.xlu0 %2368
  %v2370 = vsel %vm175, %v2363, %v2367
  %v2371 = vsel %vm175, %v2365, %v2369
  %v2372 = vsel %vm175, %v2359, %v2363
  %v2373 = vsel %vm175, %v2361, %v2365
  %v2374 = vsel %vm175, %v2355, %v2359
  %v2375 = vsel %vm175, %v2357, %v2361
  %v2376 = vsel %vm175, %v2351, %v2355
  %v2377 = vsel %vm175, %v2353, %v2357
  %v2378 = vsel %vm175, %v2347, %v2351
  %v2379 = vsel %vm175, %v2349, %v2353
  %v2380 = vsel %vm175, %v2367, %v2347
  %v2381 = vsel %vm175, %v2369, %v2349
  %2382 = vrot.lane.b32.xlu0 %v2262, 1
  %v2383 = vpop.permute.xlu0 %2382
  %2384 = vrot.lane.b32.xlu0 %v2268, 1
  %v2385 = vpop.permute.xlu0 %2384
  %2386 = vrot.lane.b32.xlu0 %v2263, 1
  %v2387 = vpop.permute.xlu0 %2386
  %2388 = vrot.lane.b32.xlu0 %v2269, 1
  %v2389 = vpop.permute.xlu0 %2388
  %2390 = vrot.lane.b32.xlu0 %v2264, 1
  %v2391 = vpop.permute.xlu0 %2390
  %2392 = vrot.lane.b32.xlu0 %v2270, 1
  %v2393 = vpop.permute.xlu0 %2392
  %2394 = vrot.lane.b32.xlu0 %v2265, 1
  %v2395 = vpop.permute.xlu0 %2394
  %2396 = vrot.lane.b32.xlu0 %v2271, 1
  %v2397 = vpop.permute.xlu0 %2396
  %2398 = vrot.lane.b32.xlu0 %v2266, 1
  %v2399 = vpop.permute.xlu0 %2398
  %2400 = vrot.lane.b32.xlu0 %v2272, 1
  %v2401 = vpop.permute.xlu0 %2400
  %2402 = vrot.lane.b32.xlu0 %v2267, 1
  %v2403 = vpop.permute.xlu0 %2402
  %2404 = vrot.lane.b32.xlu0 %v2273, 1
  %v2405 = vpop.permute.xlu0 %2404
  %v2406 = vsel %vm212, %v2399, %v2403
  %v2407 = vsel %vm212, %v2401, %v2405
  %v2408 = vsel %vm212, %v2395, %v2399
  %v2409 = vsel %vm212, %v2397, %v2401
  %v2410 = vsel %vm212, %v2391, %v2395
  %v2411 = vsel %vm212, %v2393, %v2397
  %v2412 = vsel %vm212, %v2387, %v2391
  %v2413 = vsel %vm212, %v2389, %v2393
  %v2414 = vsel %vm212, %v2383, %v2387
  %v2415 = vsel %vm212, %v2385, %v2389
  %v2416 = vsel %vm212, %v2403, %v2383
  %v2417 = vsel %vm212, %v2405, %v2385
  %2418 = vrot.lane.b32.xlu0 %v2262, 127
  %v2419 = vpop.permute.xlu0 %2418
  %2420 = vrot.lane.b32.xlu0 %v2268, 127
  %v2421 = vpop.permute.xlu0 %2420
  %2422 = vrot.lane.b32.xlu0 %v2263, 127
  %v2423 = vpop.permute.xlu0 %2422
  %2424 = vrot.lane.b32.xlu0 %v2269, 127
  %v2425 = vpop.permute.xlu0 %2424
  %2426 = vrot.lane.b32.xlu0 %v2264, 127
  %v2427 = vpop.permute.xlu0 %2426
  %2428 = vrot.lane.b32.xlu0 %v2270, 127
  %v2429 = vpop.permute.xlu0 %2428
  %2430 = vrot.lane.b32.xlu0 %v2265, 127
  %v2431 = vpop.permute.xlu0 %2430
  %2432 = vrot.lane.b32.xlu0 %v2271, 127
  %v2433 = vpop.permute.xlu0 %2432
  %2434 = vrot.lane.b32.xlu0 %v2266, 127
  %v2435 = vpop.permute.xlu0 %2434
  %2436 = vrot.lane.b32.xlu0 %v2272, 127
  %v2437 = vpop.permute.xlu0 %2436
  %2438 = vrot.lane.b32.xlu0 %v2267, 127
  %v2439 = vpop.permute.xlu0 %2438
  %2440 = vrot.lane.b32.xlu0 %v2273, 127
  %v2441 = vpop.permute.xlu0 %2440
  %v2442 = vsel %vm249, %v2435, %v2439
  %v2443 = vsel %vm249, %v2437, %v2441
  %v2444 = vsel %vm249, %v2431, %v2435
  %v2445 = vsel %vm249, %v2433, %v2437
  %v2446 = vsel %vm249, %v2427, %v2431
  %v2447 = vsel %vm249, %v2429, %v2433
  %v2448 = vsel %vm249, %v2423, %v2427
  %v2449 = vsel %vm249, %v2425, %v2429
  %v2450 = vsel %vm249, %v2419, %v2423
  %v2451 = vsel %vm249, %v2421, %v2425
  %v2452 = vsel %vm249, %v2439, %v2419
  %v2453 = vsel %vm249, %v2441, %v2421
  %s2454 = scalar_lea.vmem %s2, 8
  %v2455 = vld [vmem:[%s2454] sm:$0xff]
  %s2456 = scalar_lea.vmem %s3, 8
  %v2457 = vld [vmem:[%s2456] sm:$0xff]
  %2459 = vset.pattern.permute.xlu0 0
  %2460 = vperm.xlu0 %2459, %v2457
  %v2461 = vpop.permute.xlu0 %2460
  %v2464 = vsel %vm269, %v2455, 0
  %2466 = vmatpush.msra.mxu0 0.0
  %2467 = vmatpush.msra.mxu0 0.0
  %2468 = vmatpush.msra.mxu0 0.0
  %2469 = vmatpush.msra.mxu0 0.0
  %v2470 = vand.u32 %v2451, 4294901760
  %2471 = vmatpush.msra.mxu0 %v2470
  %v2472 = vand.u32 %v2450, 4294901760
  %2473 = vmatpush.msra.mxu0 %v2472
  %v2474 = vand.u32 %v2268, 4294901760
  %2475 = vmatpush.msra.mxu0 %v2474
  %v2476 = vand.u32 %v2262, 4294901760
  %2477 = vmatpush.msra.mxu0 %v2476
  %v2478 = vand.u32 %v2417, 4294901760
  %2479 = vmatpush.msra.mxu0 %v2478
  %v2480 = vand.u32 %v2416, 4294901760
  %2481 = vmatpush.msra.mxu0 %v2480
  %v2482 = vand.u32 %v2381, 4294901760
  %2483 = vmatpush.msra.mxu0 %v2482
  %v2484 = vand.u32 %v2380, 4294901760
  %2485 = vmatpush.msra.mxu0 %v2484
  %v2486 = vand.u32 %v2345, 4294901760
  %2487 = vmatpush.msra.mxu0 %v2486
  %v2488 = vand.u32 %v2344, 4294901760
  %2489 = vmatpush.msra.mxu0 %v2488
  %v2490 = vand.u32 %v2309, 4294901760
  %2491 = vmatpush.msra.mxu0 %v2490
  %v2492 = vand.u32 %v2308, 4294901760
  %2493 = vmatpush.msra.mxu0 %v2492
  %v2494 = vand.u32 %v2464, 4294901760
  %v2495 = vsub.f32 %v2464, %v2494
  %v2496 = vand.u32 %v2495, 4294901760
  %v2497 = vsub.f32 %v2495, %v2496
  %v2498 = vand.u32 %v2497, 4294901760
  %2499 = vmatmul.f32.gmra.mxu0 %v2498
  %v2500 = vpop.f32.mrf.mxu0
  %v2501 = vadd.f32 %v2461, %v2500
  %2502 = vdwg.mxu0
  %2503 = vmatpush.msra.mxu0 0.0
  %2504 = vmatpush.msra.mxu0 0.0
  %2505 = vmatpush.msra.mxu0 0.0
  %2506 = vmatpush.msra.mxu0 0.0
  %v2507 = vand.u32 %v2451, 4294901760
  %v2508 = vsub.f32 %v2451, %v2507
  %v2509 = vand.u32 %v2508, 4294901760
  %v2510 = vsub.f32 %v2508, %v2509
  %v2511 = vand.u32 %v2510, 4294901760
  %2512 = vmatpush.msra.mxu0 %v2511
  %v2513 = vand.u32 %v2450, 4294901760
  %v2514 = vsub.f32 %v2450, %v2513
  %v2515 = vand.u32 %v2514, 4294901760
  %v2516 = vsub.f32 %v2514, %v2515
  %v2517 = vand.u32 %v2516, 4294901760
  %2518 = vmatpush.msra.mxu0 %v2517
  %v2519 = vand.u32 %v2268, 4294901760
  %v2520 = vsub.f32 %v2268, %v2519
  %v2521 = vand.u32 %v2520, 4294901760
  %v2522 = vsub.f32 %v2520, %v2521
  %v2523 = vand.u32 %v2522, 4294901760
  %2524 = vmatpush.msra.mxu0 %v2523
  %v2525 = vand.u32 %v2262, 4294901760
  %v2526 = vsub.f32 %v2262, %v2525
  %v2527 = vand.u32 %v2526, 4294901760
  %v2528 = vsub.f32 %v2526, %v2527
  %v2529 = vand.u32 %v2528, 4294901760
  %2530 = vmatpush.msra.mxu0 %v2529
  %v2531 = vand.u32 %v2417, 4294901760
  %v2532 = vsub.f32 %v2417, %v2531
  %v2533 = vand.u32 %v2532, 4294901760
  %v2534 = vsub.f32 %v2532, %v2533
  %v2535 = vand.u32 %v2534, 4294901760
  %2536 = vmatpush.msra.mxu0 %v2535
  %v2537 = vand.u32 %v2416, 4294901760
  %v2538 = vsub.f32 %v2416, %v2537
  %v2539 = vand.u32 %v2538, 4294901760
  %v2540 = vsub.f32 %v2538, %v2539
  %v2541 = vand.u32 %v2540, 4294901760
  %2542 = vmatpush.msra.mxu0 %v2541
  %v2543 = vand.u32 %v2381, 4294901760
  %v2544 = vsub.f32 %v2381, %v2543
  %v2545 = vand.u32 %v2544, 4294901760
  %v2546 = vsub.f32 %v2544, %v2545
  %v2547 = vand.u32 %v2546, 4294901760
  %2548 = vmatpush.msra.mxu0 %v2547
  %v2549 = vand.u32 %v2380, 4294901760
  %v2550 = vsub.f32 %v2380, %v2549
  %v2551 = vand.u32 %v2550, 4294901760
  %v2552 = vsub.f32 %v2550, %v2551
  %v2553 = vand.u32 %v2552, 4294901760
  %2554 = vmatpush.msra.mxu0 %v2553
  %v2555 = vand.u32 %v2345, 4294901760
  %v2556 = vsub.f32 %v2345, %v2555
  %v2557 = vand.u32 %v2556, 4294901760
  %v2558 = vsub.f32 %v2556, %v2557
  %v2559 = vand.u32 %v2558, 4294901760
  %2560 = vmatpush.msra.mxu0 %v2559
  %v2561 = vand.u32 %v2344, 4294901760
  %v2562 = vsub.f32 %v2344, %v2561
  %v2563 = vand.u32 %v2562, 4294901760
  %v2564 = vsub.f32 %v2562, %v2563
  %v2565 = vand.u32 %v2564, 4294901760
  %2566 = vmatpush.msra.mxu0 %v2565
  %v2567 = vand.u32 %v2309, 4294901760
  %v2568 = vsub.f32 %v2309, %v2567
  %v2569 = vand.u32 %v2568, 4294901760
  %v2570 = vsub.f32 %v2568, %v2569
  %v2571 = vand.u32 %v2570, 4294901760
  %2572 = vmatpush.msra.mxu0 %v2571
  %v2573 = vand.u32 %v2308, 4294901760
  %v2574 = vsub.f32 %v2308, %v2573
  %v2575 = vand.u32 %v2574, 4294901760
  %v2576 = vsub.f32 %v2574, %v2575
  %v2577 = vand.u32 %v2576, 4294901760
  %2578 = vmatpush.msra.mxu0 %v2577
  %v2579 = vand.u32 %v2464, 4294901760
  %2580 = vmatmul.f32.gmra.mxu0 %v2579
  %v2581 = vpop.f32.mrf.mxu0
  %v2582 = vadd.f32 %v2501, %v2581
  %2583 = vdwg.mxu0
  %2584 = vmatpush.msra.mxu0 0.0
  %2585 = vmatpush.msra.mxu0 0.0
  %2586 = vmatpush.msra.mxu0 0.0
  %2587 = vmatpush.msra.mxu0 0.0
  %v2588 = vand.u32 %v2451, 4294901760
  %v2589 = vsub.f32 %v2451, %v2588
  %2590 = vmatpush.msra.mxu0 %v2589
  %v2591 = vand.u32 %v2450, 4294901760
  %v2592 = vsub.f32 %v2450, %v2591
  %2593 = vmatpush.msra.mxu0 %v2592
  %v2594 = vand.u32 %v2268, 4294901760
  %v2595 = vsub.f32 %v2268, %v2594
  %2596 = vmatpush.msra.mxu0 %v2595
  %v2597 = vand.u32 %v2262, 4294901760
  %v2598 = vsub.f32 %v2262, %v2597
  %2599 = vmatpush.msra.mxu0 %v2598
  %v2600 = vand.u32 %v2417, 4294901760
  %v2601 = vsub.f32 %v2417, %v2600
  %2602 = vmatpush.msra.mxu0 %v2601
  %v2603 = vand.u32 %v2416, 4294901760
  %v2604 = vsub.f32 %v2416, %v2603
  %2605 = vmatpush.msra.mxu0 %v2604
  %v2606 = vand.u32 %v2381, 4294901760
  %v2607 = vsub.f32 %v2381, %v2606
  %2608 = vmatpush.msra.mxu0 %v2607
  %v2609 = vand.u32 %v2380, 4294901760
  %v2610 = vsub.f32 %v2380, %v2609
  %2611 = vmatpush.msra.mxu0 %v2610
  %v2612 = vand.u32 %v2345, 4294901760
  %v2613 = vsub.f32 %v2345, %v2612
  %2614 = vmatpush.msra.mxu0 %v2613
  %v2615 = vand.u32 %v2344, 4294901760
  %v2616 = vsub.f32 %v2344, %v2615
  %2617 = vmatpush.msra.mxu0 %v2616
  %v2618 = vand.u32 %v2309, 4294901760
  %v2619 = vsub.f32 %v2309, %v2618
  %2620 = vmatpush.msra.mxu0 %v2619
  %v2621 = vand.u32 %v2308, 4294901760
  %v2622 = vsub.f32 %v2308, %v2621
  %2623 = vmatpush.msra.mxu0 %v2622
  %v2624 = vand.u32 %v2464, 4294901760
  %v2625 = vsub.f32 %v2464, %v2624
  %2626 = vmatmul.f32.gmra.mxu0 %v2625
  %v2627 = vpop.f32.mrf.mxu0
  %v2628 = vadd.f32 %v2582, %v2627
  %2629 = vdwg.mxu0
  %2630 = vmatpush.msra.mxu0 0.0
  %2631 = vmatpush.msra.mxu0 0.0
  %2632 = vmatpush.msra.mxu0 0.0
  %2633 = vmatpush.msra.mxu0 0.0
  %v2634 = vand.u32 %v2451, 4294901760
  %2635 = vmatpush.msra.mxu0 %v2634
  %v2636 = vand.u32 %v2450, 4294901760
  %2637 = vmatpush.msra.mxu0 %v2636
  %v2638 = vand.u32 %v2268, 4294901760
  %2639 = vmatpush.msra.mxu0 %v2638
  %v2640 = vand.u32 %v2262, 4294901760
  %2641 = vmatpush.msra.mxu0 %v2640
  %v2642 = vand.u32 %v2417, 4294901760
  %2643 = vmatpush.msra.mxu0 %v2642
  %v2644 = vand.u32 %v2416, 4294901760
  %2645 = vmatpush.msra.mxu0 %v2644
  %v2646 = vand.u32 %v2381, 4294901760
  %2647 = vmatpush.msra.mxu0 %v2646
  %v2648 = vand.u32 %v2380, 4294901760
  %2649 = vmatpush.msra.mxu0 %v2648
  %v2650 = vand.u32 %v2345, 4294901760
  %2651 = vmatpush.msra.mxu0 %v2650
  %v2652 = vand.u32 %v2344, 4294901760
  %2653 = vmatpush.msra.mxu0 %v2652
  %v2654 = vand.u32 %v2309, 4294901760
  %2655 = vmatpush.msra.mxu0 %v2654
  %v2656 = vand.u32 %v2308, 4294901760
  %2657 = vmatpush.msra.mxu0 %v2656
  %v2658 = vand.u32 %v2464, 4294901760
  %v2659 = vsub.f32 %v2464, %v2658
  %v2660 = vand.u32 %v2659, 4294901760
  %2661 = vmatmul.f32.gmra.mxu0 %v2660
  %v2662 = vpop.f32.mrf.mxu0
  %v2663 = vadd.f32 %v2628, %v2662
  %2664 = vdwg.mxu0
  %2665 = vmatpush.msra.mxu0 0.0
  %2666 = vmatpush.msra.mxu0 0.0
  %2667 = vmatpush.msra.mxu0 0.0
  %2668 = vmatpush.msra.mxu0 0.0
  %v2669 = vand.u32 %v2451, 4294901760
  %v2670 = vsub.f32 %v2451, %v2669
  %v2671 = vand.u32 %v2670, 4294901760
  %2672 = vmatpush.msra.mxu0 %v2671
  %v2673 = vand.u32 %v2450, 4294901760
  %v2674 = vsub.f32 %v2450, %v2673
  %v2675 = vand.u32 %v2674, 4294901760
  %2676 = vmatpush.msra.mxu0 %v2675
  %v2677 = vand.u32 %v2268, 4294901760
  %v2678 = vsub.f32 %v2268, %v2677
  %v2679 = vand.u32 %v2678, 4294901760
  %2680 = vmatpush.msra.mxu0 %v2679
  %v2681 = vand.u32 %v2262, 4294901760
  %v2682 = vsub.f32 %v2262, %v2681
  %v2683 = vand.u32 %v2682, 4294901760
  %2684 = vmatpush.msra.mxu0 %v2683
  %v2685 = vand.u32 %v2417, 4294901760
  %v2686 = vsub.f32 %v2417, %v2685
  %v2687 = vand.u32 %v2686, 4294901760
  %2688 = vmatpush.msra.mxu0 %v2687
  %v2689 = vand.u32 %v2416, 4294901760
  %v2690 = vsub.f32 %v2416, %v2689
  %v2691 = vand.u32 %v2690, 4294901760
  %2692 = vmatpush.msra.mxu0 %v2691
  %v2693 = vand.u32 %v2381, 4294901760
  %v2694 = vsub.f32 %v2381, %v2693
  %v2695 = vand.u32 %v2694, 4294901760
  %2696 = vmatpush.msra.mxu0 %v2695
  %v2697 = vand.u32 %v2380, 4294901760
  %v2698 = vsub.f32 %v2380, %v2697
  %v2699 = vand.u32 %v2698, 4294901760
  %2700 = vmatpush.msra.mxu0 %v2699
  %v2701 = vand.u32 %v2345, 4294901760
  %v2702 = vsub.f32 %v2345, %v2701
  %v2703 = vand.u32 %v2702, 4294901760
  %2704 = vmatpush.msra.mxu0 %v2703
  %v2705 = vand.u32 %v2344, 4294901760
  %v2706 = vsub.f32 %v2344, %v2705
  %v2707 = vand.u32 %v2706, 4294901760
  %2708 = vmatpush.msra.mxu0 %v2707
  %v2709 = vand.u32 %v2309, 4294901760
  %v2710 = vsub.f32 %v2309, %v2709
  %v2711 = vand.u32 %v2710, 4294901760
  %2712 = vmatpush.msra.mxu0 %v2711
  %v2713 = vand.u32 %v2308, 4294901760
  %v2714 = vsub.f32 %v2308, %v2713
  %v2715 = vand.u32 %v2714, 4294901760
  %2716 = vmatpush.msra.mxu0 %v2715
  %v2717 = vand.u32 %v2464, 4294901760
  %2718 = vmatmul.f32.gmra.mxu0 %v2717
  %v2719 = vpop.f32.mrf.mxu0
  %v2720 = vadd.f32 %v2663, %v2719
  %2721 = vdwg.mxu0
  %2722 = vmatpush.msra.mxu0 0.0
  %2723 = vmatpush.msra.mxu0 0.0
  %2724 = vmatpush.msra.mxu0 0.0
  %2725 = vmatpush.msra.mxu0 0.0
  %v2726 = vand.u32 %v2451, 4294901760
  %2727 = vmatpush.msra.mxu0 %v2726
  %v2728 = vand.u32 %v2450, 4294901760
  %2729 = vmatpush.msra.mxu0 %v2728
  %v2730 = vand.u32 %v2268, 4294901760
  %2731 = vmatpush.msra.mxu0 %v2730
  %v2732 = vand.u32 %v2262, 4294901760
  %2733 = vmatpush.msra.mxu0 %v2732
  %v2734 = vand.u32 %v2417, 4294901760
  %2735 = vmatpush.msra.mxu0 %v2734
  %v2736 = vand.u32 %v2416, 4294901760
  %2737 = vmatpush.msra.mxu0 %v2736
  %v2738 = vand.u32 %v2381, 4294901760
  %2739 = vmatpush.msra.mxu0 %v2738
  %v2740 = vand.u32 %v2380, 4294901760
  %2741 = vmatpush.msra.mxu0 %v2740
  %v2742 = vand.u32 %v2345, 4294901760
  %2743 = vmatpush.msra.mxu0 %v2742
  %v2744 = vand.u32 %v2344, 4294901760
  %2745 = vmatpush.msra.mxu0 %v2744
  %v2746 = vand.u32 %v2309, 4294901760
  %2747 = vmatpush.msra.mxu0 %v2746
  %v2748 = vand.u32 %v2308, 4294901760
  %2749 = vmatpush.msra.mxu0 %v2748
  %v2750 = vand.u32 %v2464, 4294901760
  %2751 = vmatmul.f32.gmra.mxu0 %v2750
  %v2752 = vpop.f32.mrf.mxu0
  %v2753 = vadd.f32 %v2720, %v2752
  %2754 = vdwg.mxu0
  %2755 = vmatpush.msra.mxu0 0.0
  %2756 = vmatpush.msra.mxu0 0.0
  %2757 = vmatpush.msra.mxu0 0.0
  %2758 = vmatpush.msra.mxu0 0.0
  %v2759 = vand.u32 %v2449, 4294901760
  %2760 = vmatpush.msra.mxu0 %v2759
  %v2761 = vand.u32 %v2448, 4294901760
  %2762 = vmatpush.msra.mxu0 %v2761
  %v2763 = vand.u32 %v2269, 4294901760
  %2764 = vmatpush.msra.mxu0 %v2763
  %v2765 = vand.u32 %v2263, 4294901760
  %2766 = vmatpush.msra.mxu0 %v2765
  %v2767 = vand.u32 %v2415, 4294901760
  %2768 = vmatpush.msra.mxu0 %v2767
  %v2769 = vand.u32 %v2414, 4294901760
  %2770 = vmatpush.msra.mxu0 %v2769
  %v2771 = vand.u32 %v2379, 4294901760
  %2772 = vmatpush.msra.mxu0 %v2771
  %v2773 = vand.u32 %v2378, 4294901760
  %2774 = vmatpush.msra.mxu0 %v2773
  %v2775 = vand.u32 %v2343, 4294901760
  %2776 = vmatpush.msra.mxu0 %v2775
  %v2777 = vand.u32 %v2342, 4294901760
  %2778 = vmatpush.msra.mxu0 %v2777
  %v2779 = vand.u32 %v2307, 4294901760
  %2780 = vmatpush.msra.mxu0 %v2779
  %v2781 = vand.u32 %v2306, 4294901760
  %2782 = vmatpush.msra.mxu0 %v2781
  %v2783 = vand.u32 %v2464, 4294901760
  %v2784 = vsub.f32 %v2464, %v2783
  %v2785 = vand.u32 %v2784, 4294901760
  %v2786 = vsub.f32 %v2784, %v2785
  %v2787 = vand.u32 %v2786, 4294901760
  %2788 = vmatmul.f32.gmra.mxu0 %v2787
  %v2789 = vpop.f32.mrf.mxu0
  %v2790 = vadd.f32 %v2461, %v2789
  %2791 = vdwg.mxu0
  %2792 = vmatpush.msra.mxu0 0.0
  %2793 = vmatpush.msra.mxu0 0.0
  %2794 = vmatpush.msra.mxu0 0.0
  %2795 = vmatpush.msra.mxu0 0.0
  %v2796 = vand.u32 %v2449, 4294901760
  %v2797 = vsub.f32 %v2449, %v2796
  %v2798 = vand.u32 %v2797, 4294901760
  %v2799 = vsub.f32 %v2797, %v2798
  %v2800 = vand.u32 %v2799, 4294901760
  %2801 = vmatpush.msra.mxu0 %v2800
  %v2802 = vand.u32 %v2448, 4294901760
  %v2803 = vsub.f32 %v2448, %v2802
  %v2804 = vand.u32 %v2803, 4294901760
  %v2805 = vsub.f32 %v2803, %v2804
  %v2806 = vand.u32 %v2805, 4294901760
  %2807 = vmatpush.msra.mxu0 %v2806
  %v2808 = vand.u32 %v2269, 4294901760
  %v2809 = vsub.f32 %v2269, %v2808
  %v2810 = vand.u32 %v2809, 4294901760
  %v2811 = vsub.f32 %v2809, %v2810
  %v2812 = vand.u32 %v2811, 4294901760
  %2813 = vmatpush.msra.mxu0 %v2812
  %v2814 = vand.u32 %v2263, 4294901760
  %v2815 = vsub.f32 %v2263, %v2814
  %v2816 = vand.u32 %v2815, 4294901760
  %v2817 = vsub.f32 %v2815, %v2816
  %v2818 = vand.u32 %v2817, 4294901760
  %2819 = vmatpush.msra.mxu0 %v2818
  %v2820 = vand.u32 %v2415, 4294901760
  %v2821 = vsub.f32 %v2415, %v2820
  %v2822 = vand.u32 %v2821, 4294901760
  %v2823 = vsub.f32 %v2821, %v2822
  %v2824 = vand.u32 %v2823, 4294901760
  %2825 = vmatpush.msra.mxu0 %v2824
  %v2826 = vand.u32 %v2414, 4294901760
  %v2827 = vsub.f32 %v2414, %v2826
  %v2828 = vand.u32 %v2827, 4294901760
  %v2829 = vsub.f32 %v2827, %v2828
  %v2830 = vand.u32 %v2829, 4294901760
  %2831 = vmatpush.msra.mxu0 %v2830
  %v2832 = vand.u32 %v2379, 4294901760
  %v2833 = vsub.f32 %v2379, %v2832
  %v2834 = vand.u32 %v2833, 4294901760
  %v2835 = vsub.f32 %v2833, %v2834
  %v2836 = vand.u32 %v2835, 4294901760
  %2837 = vmatpush.msra.mxu0 %v2836
  %v2838 = vand.u32 %v2378, 4294901760
  %v2839 = vsub.f32 %v2378, %v2838
  %v2840 = vand.u32 %v2839, 4294901760
  %v2841 = vsub.f32 %v2839, %v2840
  %v2842 = vand.u32 %v2841, 4294901760
  %2843 = vmatpush.msra.mxu0 %v2842
  %v2844 = vand.u32 %v2343, 4294901760
  %v2845 = vsub.f32 %v2343, %v2844
  %v2846 = vand.u32 %v2845, 4294901760
  %v2847 = vsub.f32 %v2845, %v2846
  %v2848 = vand.u32 %v2847, 4294901760
  %2849 = vmatpush.msra.mxu0 %v2848
  %v2850 = vand.u32 %v2342, 4294901760
  %v2851 = vsub.f32 %v2342, %v2850
  %v2852 = vand.u32 %v2851, 4294901760
  %v2853 = vsub.f32 %v2851, %v2852
  %v2854 = vand.u32 %v2853, 4294901760
  %2855 = vmatpush.msra.mxu0 %v2854
  %v2856 = vand.u32 %v2307, 4294901760
  %v2857 = vsub.f32 %v2307, %v2856
  %v2858 = vand.u32 %v2857, 4294901760
  %v2859 = vsub.f32 %v2857, %v2858
  %v2860 = vand.u32 %v2859, 4294901760
  %2861 = vmatpush.msra.mxu0 %v2860
  %v2862 = vand.u32 %v2306, 4294901760
  %v2863 = vsub.f32 %v2306, %v2862
  %v2864 = vand.u32 %v2863, 4294901760
  %v2865 = vsub.f32 %v2863, %v2864
  %v2866 = vand.u32 %v2865, 4294901760
  %2867 = vmatpush.msra.mxu0 %v2866
  %v2868 = vand.u32 %v2464, 4294901760
  %2869 = vmatmul.f32.gmra.mxu0 %v2868
  %v2870 = vpop.f32.mrf.mxu0
  %v2871 = vadd.f32 %v2790, %v2870
  %2872 = vdwg.mxu0
  %2873 = vmatpush.msra.mxu0 0.0
  %2874 = vmatpush.msra.mxu0 0.0
  %2875 = vmatpush.msra.mxu0 0.0
  %2876 = vmatpush.msra.mxu0 0.0
  %v2877 = vand.u32 %v2449, 4294901760
  %v2878 = vsub.f32 %v2449, %v2877
  %2879 = vmatpush.msra.mxu0 %v2878
  %v2880 = vand.u32 %v2448, 4294901760
  %v2881 = vsub.f32 %v2448, %v2880
  %2882 = vmatpush.msra.mxu0 %v2881
  %v2883 = vand.u32 %v2269, 4294901760
  %v2884 = vsub.f32 %v2269, %v2883
  %2885 = vmatpush.msra.mxu0 %v2884
  %v2886 = vand.u32 %v2263, 4294901760
  %v2887 = vsub.f32 %v2263, %v2886
  %2888 = vmatpush.msra.mxu0 %v2887
  %v2889 = vand.u32 %v2415, 4294901760
  %v2890 = vsub.f32 %v2415, %v2889
  %2891 = vmatpush.msra.mxu0 %v2890
  %v2892 = vand.u32 %v2414, 4294901760
  %v2893 = vsub.f32 %v2414, %v2892
  %2894 = vmatpush.msra.mxu0 %v2893
  %v2895 = vand.u32 %v2379, 4294901760
  %v2896 = vsub.f32 %v2379, %v2895
  %2897 = vmatpush.msra.mxu0 %v2896
  %v2898 = vand.u32 %v2378, 4294901760
  %v2899 = vsub.f32 %v2378, %v2898
  %2900 = vmatpush.msra.mxu0 %v2899
  %v2901 = vand.u32 %v2343, 4294901760
  %v2902 = vsub.f32 %v2343, %v2901
  %2903 = vmatpush.msra.mxu0 %v2902
  %v2904 = vand.u32 %v2342, 4294901760
  %v2905 = vsub.f32 %v2342, %v2904
  %2906 = vmatpush.msra.mxu0 %v2905
  %v2907 = vand.u32 %v2307, 4294901760
  %v2908 = vsub.f32 %v2307, %v2907
  %2909 = vmatpush.msra.mxu0 %v2908
  %v2910 = vand.u32 %v2306, 4294901760
  %v2911 = vsub.f32 %v2306, %v2910
  %2912 = vmatpush.msra.mxu0 %v2911
  %v2913 = vand.u32 %v2464, 4294901760
  %v2914 = vsub.f32 %v2464, %v2913
  %2915 = vmatmul.f32.gmra.mxu0 %v2914
  %v2916 = vpop.f32.mrf.mxu0
  %v2917 = vadd.f32 %v2871, %v2916
  %2918 = vdwg.mxu0
  %2919 = vmatpush.msra.mxu0 0.0
  %2920 = vmatpush.msra.mxu0 0.0
  %2921 = vmatpush.msra.mxu0 0.0
  %2922 = vmatpush.msra.mxu0 0.0
  %v2923 = vand.u32 %v2449, 4294901760
  %2924 = vmatpush.msra.mxu0 %v2923
  %v2925 = vand.u32 %v2448, 4294901760
  %2926 = vmatpush.msra.mxu0 %v2925
  %v2927 = vand.u32 %v2269, 4294901760
  %2928 = vmatpush.msra.mxu0 %v2927
  %v2929 = vand.u32 %v2263, 4294901760
  %2930 = vmatpush.msra.mxu0 %v2929
  %v2931 = vand.u32 %v2415, 4294901760
  %2932 = vmatpush.msra.mxu0 %v2931
  %v2933 = vand.u32 %v2414, 4294901760
  %2934 = vmatpush.msra.mxu0 %v2933
  %v2935 = vand.u32 %v2379, 4294901760
  %2936 = vmatpush.msra.mxu0 %v2935
  %v2937 = vand.u32 %v2378, 4294901760
  %2938 = vmatpush.msra.mxu0 %v2937
  %v2939 = vand.u32 %v2343, 4294901760
  %2940 = vmatpush.msra.mxu0 %v2939
  %v2941 = vand.u32 %v2342, 4294901760
  %2942 = vmatpush.msra.mxu0 %v2941
  %v2943 = vand.u32 %v2307, 4294901760
  %2944 = vmatpush.msra.mxu0 %v2943
  %v2945 = vand.u32 %v2306, 4294901760
  %2946 = vmatpush.msra.mxu0 %v2945
  %v2947 = vand.u32 %v2464, 4294901760
  %v2948 = vsub.f32 %v2464, %v2947
  %v2949 = vand.u32 %v2948, 4294901760
  %2950 = vmatmul.f32.gmra.mxu0 %v2949
  %v2951 = vpop.f32.mrf.mxu0
  %v2952 = vadd.f32 %v2917, %v2951
  %2953 = vdwg.mxu0
  %2954 = vmatpush.msra.mxu0 0.0
  %2955 = vmatpush.msra.mxu0 0.0
  %2956 = vmatpush.msra.mxu0 0.0
  %2957 = vmatpush.msra.mxu0 0.0
  %v2958 = vand.u32 %v2449, 4294901760
  %v2959 = vsub.f32 %v2449, %v2958
  %v2960 = vand.u32 %v2959, 4294901760
  %2961 = vmatpush.msra.mxu0 %v2960
  %v2962 = vand.u32 %v2448, 4294901760
  %v2963 = vsub.f32 %v2448, %v2962
  %v2964 = vand.u32 %v2963, 4294901760
  %2965 = vmatpush.msra.mxu0 %v2964
  %v2966 = vand.u32 %v2269, 4294901760
  %v2967 = vsub.f32 %v2269, %v2966
  %v2968 = vand.u32 %v2967, 4294901760
  %2969 = vmatpush.msra.mxu0 %v2968
  %v2970 = vand.u32 %v2263, 4294901760
  %v2971 = vsub.f32 %v2263, %v2970
  %v2972 = vand.u32 %v2971, 4294901760
  %2973 = vmatpush.msra.mxu0 %v2972
  %v2974 = vand.u32 %v2415, 4294901760
  %v2975 = vsub.f32 %v2415, %v2974
  %v2976 = vand.u32 %v2975, 4294901760
  %2977 = vmatpush.msra.mxu0 %v2976
  %v2978 = vand.u32 %v2414, 4294901760
  %v2979 = vsub.f32 %v2414, %v2978
  %v2980 = vand.u32 %v2979, 4294901760
  %2981 = vmatpush.msra.mxu0 %v2980
  %v2982 = vand.u32 %v2379, 4294901760
  %v2983 = vsub.f32 %v2379, %v2982
  %v2984 = vand.u32 %v2983, 4294901760
  %2985 = vmatpush.msra.mxu0 %v2984
  %v2986 = vand.u32 %v2378, 4294901760
  %v2987 = vsub.f32 %v2378, %v2986
  %v2988 = vand.u32 %v2987, 4294901760
  %2989 = vmatpush.msra.mxu0 %v2988
  %v2990 = vand.u32 %v2343, 4294901760
  %v2991 = vsub.f32 %v2343, %v2990
  %v2992 = vand.u32 %v2991, 4294901760
  %2993 = vmatpush.msra.mxu0 %v2992
  %v2994 = vand.u32 %v2342, 4294901760
  %v2995 = vsub.f32 %v2342, %v2994
  %v2996 = vand.u32 %v2995, 4294901760
  %2997 = vmatpush.msra.mxu0 %v2996
  %v2998 = vand.u32 %v2307, 4294901760
  %v2999 = vsub.f32 %v2307, %v2998
  %v3000 = vand.u32 %v2999, 4294901760
  %3001 = vmatpush.msra.mxu0 %v3000
  %v3002 = vand.u32 %v2306, 4294901760
  %v3003 = vsub.f32 %v2306, %v3002
  %v3004 = vand.u32 %v3003, 4294901760
  %3005 = vmatpush.msra.mxu0 %v3004
  %v3006 = vand.u32 %v2464, 4294901760
  %3007 = vmatmul.f32.gmra.mxu0 %v3006
  %v3008 = vpop.f32.mrf.mxu0
  %v3009 = vadd.f32 %v2952, %v3008
  %3010 = vdwg.mxu0
  %3011 = vmatpush.msra.mxu0 0.0
  %3012 = vmatpush.msra.mxu0 0.0
  %3013 = vmatpush.msra.mxu0 0.0
  %3014 = vmatpush.msra.mxu0 0.0
  %v3015 = vand.u32 %v2449, 4294901760
  %3016 = vmatpush.msra.mxu0 %v3015
  %v3017 = vand.u32 %v2448, 4294901760
  %3018 = vmatpush.msra.mxu0 %v3017
  %v3019 = vand.u32 %v2269, 4294901760
  %3020 = vmatpush.msra.mxu0 %v3019
  %v3021 = vand.u32 %v2263, 4294901760
  %3022 = vmatpush.msra.mxu0 %v3021
  %v3023 = vand.u32 %v2415, 4294901760
  %3024 = vmatpush.msra.mxu0 %v3023
  %v3025 = vand.u32 %v2414, 4294901760
  %3026 = vmatpush.msra.mxu0 %v3025
  %v3027 = vand.u32 %v2379, 4294901760
  %3028 = vmatpush.msra.mxu0 %v3027
  %v3029 = vand.u32 %v2378, 4294901760
  %3030 = vmatpush.msra.mxu0 %v3029
  %v3031 = vand.u32 %v2343, 4294901760
  %3032 = vmatpush.msra.mxu0 %v3031
  %v3033 = vand.u32 %v2342, 4294901760
  %3034 = vmatpush.msra.mxu0 %v3033
  %v3035 = vand.u32 %v2307, 4294901760
  %3036 = vmatpush.msra.mxu0 %v3035
  %v3037 = vand.u32 %v2306, 4294901760
  %3038 = vmatpush.msra.mxu0 %v3037
  %v3039 = vand.u32 %v2464, 4294901760
  %3040 = vmatmul.f32.gmra.mxu0 %v3039
  %v3041 = vpop.f32.mrf.mxu0
  %v3042 = vadd.f32 %v3009, %v3041
  %3043 = vdwg.mxu0
  %3044 = vmatpush.msra.mxu0 0.0
  %3045 = vmatpush.msra.mxu0 0.0
  %3046 = vmatpush.msra.mxu0 0.0
  %3047 = vmatpush.msra.mxu0 0.0
  %v3048 = vand.u32 %v2447, 4294901760
  %3049 = vmatpush.msra.mxu0 %v3048
  %v3050 = vand.u32 %v2446, 4294901760
  %3051 = vmatpush.msra.mxu0 %v3050
  %v3052 = vand.u32 %v2270, 4294901760
  %3053 = vmatpush.msra.mxu0 %v3052
  %v3054 = vand.u32 %v2264, 4294901760
  %3055 = vmatpush.msra.mxu0 %v3054
  %v3056 = vand.u32 %v2413, 4294901760
  %3057 = vmatpush.msra.mxu0 %v3056
  %v3058 = vand.u32 %v2412, 4294901760
  %3059 = vmatpush.msra.mxu0 %v3058
  %v3060 = vand.u32 %v2377, 4294901760
  %3061 = vmatpush.msra.mxu0 %v3060
  %v3062 = vand.u32 %v2376, 4294901760
  %3063 = vmatpush.msra.mxu0 %v3062
  %v3064 = vand.u32 %v2341, 4294901760
  %3065 = vmatpush.msra.mxu0 %v3064
  %v3066 = vand.u32 %v2340, 4294901760
  %3067 = vmatpush.msra.mxu0 %v3066
  %v3068 = vand.u32 %v2305, 4294901760
  %3069 = vmatpush.msra.mxu0 %v3068
  %v3070 = vand.u32 %v2304, 4294901760
  %3071 = vmatpush.msra.mxu0 %v3070
  %v3072 = vand.u32 %v2464, 4294901760
  %v3073 = vsub.f32 %v2464, %v3072
  %v3074 = vand.u32 %v3073, 4294901760
  %v3075 = vsub.f32 %v3073, %v3074
  %v3076 = vand.u32 %v3075, 4294901760
  %3077 = vmatmul.f32.gmra.mxu0 %v3076
  %v3078 = vpop.f32.mrf.mxu0
  %v3079 = vadd.f32 %v2461, %v3078
  %3080 = vdwg.mxu0
  %3081 = vmatpush.msra.mxu0 0.0
  %3082 = vmatpush.msra.mxu0 0.0
  %3083 = vmatpush.msra.mxu0 0.0
  %3084 = vmatpush.msra.mxu0 0.0
  %v3085 = vand.u32 %v2447, 4294901760
  %v3086 = vsub.f32 %v2447, %v3085
  %v3087 = vand.u32 %v3086, 4294901760
  %v3088 = vsub.f32 %v3086, %v3087
  %v3089 = vand.u32 %v3088, 4294901760
  %3090 = vmatpush.msra.mxu0 %v3089
  %v3091 = vand.u32 %v2446, 4294901760
  %v3092 = vsub.f32 %v2446, %v3091
  %v3093 = vand.u32 %v3092, 4294901760
  %v3094 = vsub.f32 %v3092, %v3093
  %v3095 = vand.u32 %v3094, 4294901760
  %3096 = vmatpush.msra.mxu0 %v3095
  %v3097 = vand.u32 %v2270, 4294901760
  %v3098 = vsub.f32 %v2270, %v3097
  %v3099 = vand.u32 %v3098, 4294901760
  %v3100 = vsub.f32 %v3098, %v3099
  %v3101 = vand.u32 %v3100, 4294901760
  %3102 = vmatpush.msra.mxu0 %v3101
  %v3103 = vand.u32 %v2264, 4294901760
  %v3104 = vsub.f32 %v2264, %v3103
  %v3105 = vand.u32 %v3104, 4294901760
  %v3106 = vsub.f32 %v3104, %v3105
  %v3107 = vand.u32 %v3106, 4294901760
  %3108 = vmatpush.msra.mxu0 %v3107
  %v3109 = vand.u32 %v2413, 4294901760
  %v3110 = vsub.f32 %v2413, %v3109
  %v3111 = vand.u32 %v3110, 4294901760
  %v3112 = vsub.f32 %v3110, %v3111
  %v3113 = vand.u32 %v3112, 4294901760
  %3114 = vmatpush.msra.mxu0 %v3113
  %v3115 = vand.u32 %v2412, 4294901760
  %v3116 = vsub.f32 %v2412, %v3115
  %v3117 = vand.u32 %v3116, 4294901760
  %v3118 = vsub.f32 %v3116, %v3117
  %v3119 = vand.u32 %v3118, 4294901760
  %3120 = vmatpush.msra.mxu0 %v3119
  %v3121 = vand.u32 %v2377, 4294901760
  %v3122 = vsub.f32 %v2377, %v3121
  %v3123 = vand.u32 %v3122, 4294901760
  %v3124 = vsub.f32 %v3122, %v3123
  %v3125 = vand.u32 %v3124, 4294901760
  %3126 = vmatpush.msra.mxu0 %v3125
  %v3127 = vand.u32 %v2376, 4294901760
  %v3128 = vsub.f32 %v2376, %v3127
  %v3129 = vand.u32 %v3128, 4294901760
  %v3130 = vsub.f32 %v3128, %v3129
  %v3131 = vand.u32 %v3130, 4294901760
  %3132 = vmatpush.msra.mxu0 %v3131
  %v3133 = vand.u32 %v2341, 4294901760
  %v3134 = vsub.f32 %v2341, %v3133
  %v3135 = vand.u32 %v3134, 4294901760
  %v3136 = vsub.f32 %v3134, %v3135
  %v3137 = vand.u32 %v3136, 4294901760
  %3138 = vmatpush.msra.mxu0 %v3137
  %v3139 = vand.u32 %v2340, 4294901760
  %v3140 = vsub.f32 %v2340, %v3139
  %v3141 = vand.u32 %v3140, 4294901760
  %v3142 = vsub.f32 %v3140, %v3141
  %v3143 = vand.u32 %v3142, 4294901760
  %3144 = vmatpush.msra.mxu0 %v3143
  %v3145 = vand.u32 %v2305, 4294901760
  %v3146 = vsub.f32 %v2305, %v3145
  %v3147 = vand.u32 %v3146, 4294901760
  %v3148 = vsub.f32 %v3146, %v3147
  %v3149 = vand.u32 %v3148, 4294901760
  %3150 = vmatpush.msra.mxu0 %v3149
  %v3151 = vand.u32 %v2304, 4294901760
  %v3152 = vsub.f32 %v2304, %v3151
  %v3153 = vand.u32 %v3152, 4294901760
  %v3154 = vsub.f32 %v3152, %v3153
  %v3155 = vand.u32 %v3154, 4294901760
  %3156 = vmatpush.msra.mxu0 %v3155
  %v3157 = vand.u32 %v2464, 4294901760
  %3158 = vmatmul.f32.gmra.mxu0 %v3157
  %v3159 = vpop.f32.mrf.mxu0
  %v3160 = vadd.f32 %v3079, %v3159
  %3161 = vdwg.mxu0
  %3162 = vmatpush.msra.mxu0 0.0
  %3163 = vmatpush.msra.mxu0 0.0
  %3164 = vmatpush.msra.mxu0 0.0
  %3165 = vmatpush.msra.mxu0 0.0
  %v3166 = vand.u32 %v2447, 4294901760
  %v3167 = vsub.f32 %v2447, %v3166
  %3168 = vmatpush.msra.mxu0 %v3167
  %v3169 = vand.u32 %v2446, 4294901760
  %v3170 = vsub.f32 %v2446, %v3169
  %3171 = vmatpush.msra.mxu0 %v3170
  %v3172 = vand.u32 %v2270, 4294901760
  %v3173 = vsub.f32 %v2270, %v3172
  %3174 = vmatpush.msra.mxu0 %v3173
  %v3175 = vand.u32 %v2264, 4294901760
  %v3176 = vsub.f32 %v2264, %v3175
  %3177 = vmatpush.msra.mxu0 %v3176
  %v3178 = vand.u32 %v2413, 4294901760
  %v3179 = vsub.f32 %v2413, %v3178
  %3180 = vmatpush.msra.mxu0 %v3179
  %v3181 = vand.u32 %v2412, 4294901760
  %v3182 = vsub.f32 %v2412, %v3181
  %3183 = vmatpush.msra.mxu0 %v3182
  %v3184 = vand.u32 %v2377, 4294901760
  %v3185 = vsub.f32 %v2377, %v3184
  %3186 = vmatpush.msra.mxu0 %v3185
  %v3187 = vand.u32 %v2376, 4294901760
  %v3188 = vsub.f32 %v2376, %v3187
  %3189 = vmatpush.msra.mxu0 %v3188
  %v3190 = vand.u32 %v2341, 4294901760
  %v3191 = vsub.f32 %v2341, %v3190
  %3192 = vmatpush.msra.mxu0 %v3191
  %v3193 = vand.u32 %v2340, 4294901760
  %v3194 = vsub.f32 %v2340, %v3193
  %3195 = vmatpush.msra.mxu0 %v3194
  %v3196 = vand.u32 %v2305, 4294901760
  %v3197 = vsub.f32 %v2305, %v3196
  %3198 = vmatpush.msra.mxu0 %v3197
  %v3199 = vand.u32 %v2304, 4294901760
  %v3200 = vsub.f32 %v2304, %v3199
  %3201 = vmatpush.msra.mxu0 %v3200
  %v3202 = vand.u32 %v2464, 4294901760
  %v3203 = vsub.f32 %v2464, %v3202
  %3204 = vmatmul.f32.gmra.mxu0 %v3203
  %v3205 = vpop.f32.mrf.mxu0
  %v3206 = vadd.f32 %v3160, %v3205
  %3207 = vdwg.mxu0
  %3208 = vmatpush.msra.mxu0 0.0
  %3209 = vmatpush.msra.mxu0 0.0
  %3210 = vmatpush.msra.mxu0 0.0
  %3211 = vmatpush.msra.mxu0 0.0
  %v3212 = vand.u32 %v2447, 4294901760
  %3213 = vmatpush.msra.mxu0 %v3212
  %v3214 = vand.u32 %v2446, 4294901760
  %3215 = vmatpush.msra.mxu0 %v3214
  %v3216 = vand.u32 %v2270, 4294901760
  %3217 = vmatpush.msra.mxu0 %v3216
  %v3218 = vand.u32 %v2264, 4294901760
  %3219 = vmatpush.msra.mxu0 %v3218
  %v3220 = vand.u32 %v2413, 4294901760
  %3221 = vmatpush.msra.mxu0 %v3220
  %v3222 = vand.u32 %v2412, 4294901760
  %3223 = vmatpush.msra.mxu0 %v3222
  %v3224 = vand.u32 %v2377, 4294901760
  %3225 = vmatpush.msra.mxu0 %v3224
  %v3226 = vand.u32 %v2376, 4294901760
  %3227 = vmatpush.msra.mxu0 %v3226
  %v3228 = vand.u32 %v2341, 4294901760
  %3229 = vmatpush.msra.mxu0 %v3228
  %v3230 = vand.u32 %v2340, 4294901760
  %3231 = vmatpush.msra.mxu0 %v3230
  %v3232 = vand.u32 %v2305, 4294901760
  %3233 = vmatpush.msra.mxu0 %v3232
  %v3234 = vand.u32 %v2304, 4294901760
  %3235 = vmatpush.msra.mxu0 %v3234
  %v3236 = vand.u32 %v2464, 4294901760
  %v3237 = vsub.f32 %v2464, %v3236
  %v3238 = vand.u32 %v3237, 4294901760
  %3239 = vmatmul.f32.gmra.mxu0 %v3238
  %v3240 = vpop.f32.mrf.mxu0
  %v3241 = vadd.f32 %v3206, %v3240
  %3242 = vdwg.mxu0
  %3243 = vmatpush.msra.mxu0 0.0
  %3244 = vmatpush.msra.mxu0 0.0
  %3245 = vmatpush.msra.mxu0 0.0
  %3246 = vmatpush.msra.mxu0 0.0
  %v3247 = vand.u32 %v2447, 4294901760
  %v3248 = vsub.f32 %v2447, %v3247
  %v3249 = vand.u32 %v3248, 4294901760
  %3250 = vmatpush.msra.mxu0 %v3249
  %v3251 = vand.u32 %v2446, 4294901760
  %v3252 = vsub.f32 %v2446, %v3251
  %v3253 = vand.u32 %v3252, 4294901760
  %3254 = vmatpush.msra.mxu0 %v3253
  %v3255 = vand.u32 %v2270, 4294901760
  %v3256 = vsub.f32 %v2270, %v3255
  %v3257 = vand.u32 %v3256, 4294901760
  %3258 = vmatpush.msra.mxu0 %v3257
  %v3259 = vand.u32 %v2264, 4294901760
  %v3260 = vsub.f32 %v2264, %v3259
  %v3261 = vand.u32 %v3260, 4294901760
  %3262 = vmatpush.msra.mxu0 %v3261
  %v3263 = vand.u32 %v2413, 4294901760
  %v3264 = vsub.f32 %v2413, %v3263
  %v3265 = vand.u32 %v3264, 4294901760
  %3266 = vmatpush.msra.mxu0 %v3265
  %v3267 = vand.u32 %v2412, 4294901760
  %v3268 = vsub.f32 %v2412, %v3267
  %v3269 = vand.u32 %v3268, 4294901760
  %3270 = vmatpush.msra.mxu0 %v3269
  %v3271 = vand.u32 %v2377, 4294901760
  %v3272 = vsub.f32 %v2377, %v3271
  %v3273 = vand.u32 %v3272, 4294901760
  %3274 = vmatpush.msra.mxu0 %v3273
  %v3275 = vand.u32 %v2376, 4294901760
  %v3276 = vsub.f32 %v2376, %v3275
  %v3277 = vand.u32 %v3276, 4294901760
  %3278 = vmatpush.msra.mxu0 %v3277
  %v3279 = vand.u32 %v2341, 4294901760
  %v3280 = vsub.f32 %v2341, %v3279
  %v3281 = vand.u32 %v3280, 4294901760
  %3282 = vmatpush.msra.mxu0 %v3281
  %v3283 = vand.u32 %v2340, 4294901760
  %v3284 = vsub.f32 %v2340, %v3283
  %v3285 = vand.u32 %v3284, 4294901760
  %3286 = vmatpush.msra.mxu0 %v3285
  %v3287 = vand.u32 %v2305, 4294901760
  %v3288 = vsub.f32 %v2305, %v3287
  %v3289 = vand.u32 %v3288, 4294901760
  %3290 = vmatpush.msra.mxu0 %v3289
  %v3291 = vand.u32 %v2304, 4294901760
  %v3292 = vsub.f32 %v2304, %v3291
  %v3293 = vand.u32 %v3292, 4294901760
  %3294 = vmatpush.msra.mxu0 %v3293
  %v3295 = vand.u32 %v2464, 4294901760
  %3296 = vmatmul.f32.gmra.mxu0 %v3295
  %v3297 = vpop.f32.mrf.mxu0
  %v3298 = vadd.f32 %v3241, %v3297
  %3299 = vdwg.mxu0
  %3300 = vmatpush.msra.mxu0 0.0
  %3301 = vmatpush.msra.mxu0 0.0
  %3302 = vmatpush.msra.mxu0 0.0
  %3303 = vmatpush.msra.mxu0 0.0
  %v3304 = vand.u32 %v2447, 4294901760
  %3305 = vmatpush.msra.mxu0 %v3304
  %v3306 = vand.u32 %v2446, 4294901760
  %3307 = vmatpush.msra.mxu0 %v3306
  %v3308 = vand.u32 %v2270, 4294901760
  %3309 = vmatpush.msra.mxu0 %v3308
  %v3310 = vand.u32 %v2264, 4294901760
  %3311 = vmatpush.msra.mxu0 %v3310
  %v3312 = vand.u32 %v2413, 4294901760
  %3313 = vmatpush.msra.mxu0 %v3312
  %v3314 = vand.u32 %v2412, 4294901760
  %3315 = vmatpush.msra.mxu0 %v3314
  %v3316 = vand.u32 %v2377, 4294901760
  %3317 = vmatpush.msra.mxu0 %v3316
  %v3318 = vand.u32 %v2376, 4294901760
  %3319 = vmatpush.msra.mxu0 %v3318
  %v3320 = vand.u32 %v2341, 4294901760
  %3321 = vmatpush.msra.mxu0 %v3320
  %v3322 = vand.u32 %v2340, 4294901760
  %3323 = vmatpush.msra.mxu0 %v3322
  %v3324 = vand.u32 %v2305, 4294901760
  %3325 = vmatpush.msra.mxu0 %v3324
  %v3326 = vand.u32 %v2304, 4294901760
  %3327 = vmatpush.msra.mxu0 %v3326
  %v3328 = vand.u32 %v2464, 4294901760
  %3329 = vmatmul.f32.gmra.mxu0 %v3328
  %v3330 = vpop.f32.mrf.mxu0
  %v3331 = vadd.f32 %v3298, %v3330
  %3332 = vdwg.mxu0
  %3333 = vmatpush.msra.mxu0 0.0
  %3334 = vmatpush.msra.mxu0 0.0
  %3335 = vmatpush.msra.mxu0 0.0
  %3336 = vmatpush.msra.mxu0 0.0
  %v3337 = vand.u32 %v2445, 4294901760
  %3338 = vmatpush.msra.mxu0 %v3337
  %v3339 = vand.u32 %v2444, 4294901760
  %3340 = vmatpush.msra.mxu0 %v3339
  %v3341 = vand.u32 %v2271, 4294901760
  %3342 = vmatpush.msra.mxu0 %v3341
  %v3343 = vand.u32 %v2265, 4294901760
  %3344 = vmatpush.msra.mxu0 %v3343
  %v3345 = vand.u32 %v2411, 4294901760
  %3346 = vmatpush.msra.mxu0 %v3345
  %v3347 = vand.u32 %v2410, 4294901760
  %3348 = vmatpush.msra.mxu0 %v3347
  %v3349 = vand.u32 %v2375, 4294901760
  %3350 = vmatpush.msra.mxu0 %v3349
  %v3351 = vand.u32 %v2374, 4294901760
  %3352 = vmatpush.msra.mxu0 %v3351
  %v3353 = vand.u32 %v2339, 4294901760
  %3354 = vmatpush.msra.mxu0 %v3353
  %v3355 = vand.u32 %v2338, 4294901760
  %3356 = vmatpush.msra.mxu0 %v3355
  %v3357 = vand.u32 %v2303, 4294901760
  %3358 = vmatpush.msra.mxu0 %v3357
  %v3359 = vand.u32 %v2302, 4294901760
  %3360 = vmatpush.msra.mxu0 %v3359
  %v3361 = vand.u32 %v2464, 4294901760
  %v3362 = vsub.f32 %v2464, %v3361
  %v3363 = vand.u32 %v3362, 4294901760
  %v3364 = vsub.f32 %v3362, %v3363
  %v3365 = vand.u32 %v3364, 4294901760
  %3366 = vmatmul.f32.gmra.mxu0 %v3365
  %v3367 = vpop.f32.mrf.mxu0
  %v3368 = vadd.f32 %v2461, %v3367
  %3369 = vdwg.mxu0
  %3370 = vmatpush.msra.mxu0 0.0
  %3371 = vmatpush.msra.mxu0 0.0
  %3372 = vmatpush.msra.mxu0 0.0
  %3373 = vmatpush.msra.mxu0 0.0
  %v3374 = vand.u32 %v2445, 4294901760
  %v3375 = vsub.f32 %v2445, %v3374
  %v3376 = vand.u32 %v3375, 4294901760
  %v3377 = vsub.f32 %v3375, %v3376
  %v3378 = vand.u32 %v3377, 4294901760
  %3379 = vmatpush.msra.mxu0 %v3378
  %v3380 = vand.u32 %v2444, 4294901760
  %v3381 = vsub.f32 %v2444, %v3380
  %v3382 = vand.u32 %v3381, 4294901760
  %v3383 = vsub.f32 %v3381, %v3382
  %v3384 = vand.u32 %v3383, 4294901760
  %3385 = vmatpush.msra.mxu0 %v3384
  %v3386 = vand.u32 %v2271, 4294901760
  %v3387 = vsub.f32 %v2271, %v3386
  %v3388 = vand.u32 %v3387, 4294901760
  %v3389 = vsub.f32 %v3387, %v3388
  %v3390 = vand.u32 %v3389, 4294901760
  %3391 = vmatpush.msra.mxu0 %v3390
  %v3392 = vand.u32 %v2265, 4294901760
  %v3393 = vsub.f32 %v2265, %v3392
  %v3394 = vand.u32 %v3393, 4294901760
  %v3395 = vsub.f32 %v3393, %v3394
  %v3396 = vand.u32 %v3395, 4294901760
  %3397 = vmatpush.msra.mxu0 %v3396
  %v3398 = vand.u32 %v2411, 4294901760
  %v3399 = vsub.f32 %v2411, %v3398
  %v3400 = vand.u32 %v3399, 4294901760
  %v3401 = vsub.f32 %v3399, %v3400
  %v3402 = vand.u32 %v3401, 4294901760
  %3403 = vmatpush.msra.mxu0 %v3402
  %v3404 = vand.u32 %v2410, 4294901760
  %v3405 = vsub.f32 %v2410, %v3404
  %v3406 = vand.u32 %v3405, 4294901760
  %v3407 = vsub.f32 %v3405, %v3406
  %v3408 = vand.u32 %v3407, 4294901760
  %3409 = vmatpush.msra.mxu0 %v3408
  %v3410 = vand.u32 %v2375, 4294901760
  %v3411 = vsub.f32 %v2375, %v3410
  %v3412 = vand.u32 %v3411, 4294901760
  %v3413 = vsub.f32 %v3411, %v3412
  %v3414 = vand.u32 %v3413, 4294901760
  %3415 = vmatpush.msra.mxu0 %v3414
  %v3416 = vand.u32 %v2374, 4294901760
  %v3417 = vsub.f32 %v2374, %v3416
  %v3418 = vand.u32 %v3417, 4294901760
  %v3419 = vsub.f32 %v3417, %v3418
  %v3420 = vand.u32 %v3419, 4294901760
  %3421 = vmatpush.msra.mxu0 %v3420
  %v3422 = vand.u32 %v2339, 4294901760
  %v3423 = vsub.f32 %v2339, %v3422
  %v3424 = vand.u32 %v3423, 4294901760
  %v3425 = vsub.f32 %v3423, %v3424
  %v3426 = vand.u32 %v3425, 4294901760
  %3427 = vmatpush.msra.mxu0 %v3426
  %v3428 = vand.u32 %v2338, 4294901760
  %v3429 = vsub.f32 %v2338, %v3428
  %v3430 = vand.u32 %v3429, 4294901760
  %v3431 = vsub.f32 %v3429, %v3430
  %v3432 = vand.u32 %v3431, 4294901760
  %3433 = vmatpush.msra.mxu0 %v3432
  %v3434 = vand.u32 %v2303, 4294901760
  %v3435 = vsub.f32 %v2303, %v3434
  %v3436 = vand.u32 %v3435, 4294901760
  %v3437 = vsub.f32 %v3435, %v3436
  %v3438 = vand.u32 %v3437, 4294901760
  %3439 = vmatpush.msra.mxu0 %v3438
  %v3440 = vand.u32 %v2302, 4294901760
  %v3441 = vsub.f32 %v2302, %v3440
  %v3442 = vand.u32 %v3441, 4294901760
  %v3443 = vsub.f32 %v3441, %v3442
  %v3444 = vand.u32 %v3443, 4294901760
  %3445 = vmatpush.msra.mxu0 %v3444
  %v3446 = vand.u32 %v2464, 4294901760
  %3447 = vmatmul.f32.gmra.mxu0 %v3446
  %v3448 = vpop.f32.mrf.mxu0
  %v3449 = vadd.f32 %v3368, %v3448
  %3450 = vdwg.mxu0
  %3451 = vmatpush.msra.mxu0 0.0
  %3452 = vmatpush.msra.mxu0 0.0
  %3453 = vmatpush.msra.mxu0 0.0
  %3454 = vmatpush.msra.mxu0 0.0
  %v3455 = vand.u32 %v2445, 4294901760
  %v3456 = vsub.f32 %v2445, %v3455
  %3457 = vmatpush.msra.mxu0 %v3456
  %v3458 = vand.u32 %v2444, 4294901760
  %v3459 = vsub.f32 %v2444, %v3458
  %3460 = vmatpush.msra.mxu0 %v3459
  %v3461 = vand.u32 %v2271, 4294901760
  %v3462 = vsub.f32 %v2271, %v3461
  %3463 = vmatpush.msra.mxu0 %v3462
  %v3464 = vand.u32 %v2265, 4294901760
  %v3465 = vsub.f32 %v2265, %v3464
  %3466 = vmatpush.msra.mxu0 %v3465
  %v3467 = vand.u32 %v2411, 4294901760
  %v3468 = vsub.f32 %v2411, %v3467
  %3469 = vmatpush.msra.mxu0 %v3468
  %v3470 = vand.u32 %v2410, 4294901760
  %v3471 = vsub.f32 %v2410, %v3470
  %3472 = vmatpush.msra.mxu0 %v3471
  %v3473 = vand.u32 %v2375, 4294901760
  %v3474 = vsub.f32 %v2375, %v3473
  %3475 = vmatpush.msra.mxu0 %v3474
  %v3476 = vand.u32 %v2374, 4294901760
  %v3477 = vsub.f32 %v2374, %v3476
  %3478 = vmatpush.msra.mxu0 %v3477
  %v3479 = vand.u32 %v2339, 4294901760
  %v3480 = vsub.f32 %v2339, %v3479
  %3481 = vmatpush.msra.mxu0 %v3480
  %v3482 = vand.u32 %v2338, 4294901760
  %v3483 = vsub.f32 %v2338, %v3482
  %3484 = vmatpush.msra.mxu0 %v3483
  %v3485 = vand.u32 %v2303, 4294901760
  %v3486 = vsub.f32 %v2303, %v3485
  %3487 = vmatpush.msra.mxu0 %v3486
  %v3488 = vand.u32 %v2302, 4294901760
  %v3489 = vsub.f32 %v2302, %v3488
  %3490 = vmatpush.msra.mxu0 %v3489
  %v3491 = vand.u32 %v2464, 4294901760
  %v3492 = vsub.f32 %v2464, %v3491
  %3493 = vmatmul.f32.gmra.mxu0 %v3492
  %v3494 = vpop.f32.mrf.mxu0
  %v3495 = vadd.f32 %v3449, %v3494
  %3496 = vdwg.mxu0
  %3497 = vmatpush.msra.mxu0 0.0
  %3498 = vmatpush.msra.mxu0 0.0
  %3499 = vmatpush.msra.mxu0 0.0
  %3500 = vmatpush.msra.mxu0 0.0
  %v3501 = vand.u32 %v2445, 4294901760
  %3502 = vmatpush.msra.mxu0 %v3501
  %v3503 = vand.u32 %v2444, 4294901760
  %3504 = vmatpush.msra.mxu0 %v3503
  %v3505 = vand.u32 %v2271, 4294901760
  %3506 = vmatpush.msra.mxu0 %v3505
  %v3507 = vand.u32 %v2265, 4294901760
  %3508 = vmatpush.msra.mxu0 %v3507
  %v3509 = vand.u32 %v2411, 4294901760
  %3510 = vmatpush.msra.mxu0 %v3509
  %v3511 = vand.u32 %v2410, 4294901760
  %3512 = vmatpush.msra.mxu0 %v3511
  %v3513 = vand.u32 %v2375, 4294901760
  %3514 = vmatpush.msra.mxu0 %v3513
  %v3515 = vand.u32 %v2374, 4294901760
  %3516 = vmatpush.msra.mxu0 %v3515
  %v3517 = vand.u32 %v2339, 4294901760
  %3518 = vmatpush.msra.mxu0 %v3517
  %v3519 = vand.u32 %v2338, 4294901760
  %3520 = vmatpush.msra.mxu0 %v3519
  %v3521 = vand.u32 %v2303, 4294901760
  %3522 = vmatpush.msra.mxu0 %v3521
  %v3523 = vand.u32 %v2302, 4294901760
  %3524 = vmatpush.msra.mxu0 %v3523
  %v3525 = vand.u32 %v2464, 4294901760
  %v3526 = vsub.f32 %v2464, %v3525
  %v3527 = vand.u32 %v3526, 4294901760
  %3528 = vmatmul.f32.gmra.mxu0 %v3527
  %v3529 = vpop.f32.mrf.mxu0
  %v3530 = vadd.f32 %v3495, %v3529
  %3531 = vdwg.mxu0
  %3532 = vmatpush.msra.mxu0 0.0
  %3533 = vmatpush.msra.mxu0 0.0
  %3534 = vmatpush.msra.mxu0 0.0
  %3535 = vmatpush.msra.mxu0 0.0
  %v3536 = vand.u32 %v2445, 4294901760
  %v3537 = vsub.f32 %v2445, %v3536
  %v3538 = vand.u32 %v3537, 4294901760
  %3539 = vmatpush.msra.mxu0 %v3538
  %v3540 = vand.u32 %v2444, 4294901760
  %v3541 = vsub.f32 %v2444, %v3540
  %v3542 = vand.u32 %v3541, 4294901760
  %3543 = vmatpush.msra.mxu0 %v3542
  %v3544 = vand.u32 %v2271, 4294901760
  %v3545 = vsub.f32 %v2271, %v3544
  %v3546 = vand.u32 %v3545, 4294901760
  %3547 = vmatpush.msra.mxu0 %v3546
  %v3548 = vand.u32 %v2265, 4294901760
  %v3549 = vsub.f32 %v2265, %v3548
  %v3550 = vand.u32 %v3549, 4294901760
  %3551 = vmatpush.msra.mxu0 %v3550
  %v3552 = vand.u32 %v2411, 4294901760
  %v3553 = vsub.f32 %v2411, %v3552
  %v3554 = vand.u32 %v3553, 4294901760
  %3555 = vmatpush.msra.mxu0 %v3554
  %v3556 = vand.u32 %v2410, 4294901760
  %v3557 = vsub.f32 %v2410, %v3556
  %v3558 = vand.u32 %v3557, 4294901760
  %3559 = vmatpush.msra.mxu0 %v3558
  %v3560 = vand.u32 %v2375, 4294901760
  %v3561 = vsub.f32 %v2375, %v3560
  %v3562 = vand.u32 %v3561, 4294901760
  %3563 = vmatpush.msra.mxu0 %v3562
  %v3564 = vand.u32 %v2374, 4294901760
  %v3565 = vsub.f32 %v2374, %v3564
  %v3566 = vand.u32 %v3565, 4294901760
  %3567 = vmatpush.msra.mxu0 %v3566
  %v3568 = vand.u32 %v2339, 4294901760
  %v3569 = vsub.f32 %v2339, %v3568
  %v3570 = vand.u32 %v3569, 4294901760
  %3571 = vmatpush.msra.mxu0 %v3570
  %v3572 = vand.u32 %v2338, 4294901760
  %v3573 = vsub.f32 %v2338, %v3572
  %v3574 = vand.u32 %v3573, 4294901760
  %3575 = vmatpush.msra.mxu0 %v3574
  %v3576 = vand.u32 %v2303, 4294901760
  %v3577 = vsub.f32 %v2303, %v3576
  %v3578 = vand.u32 %v3577, 4294901760
  %3579 = vmatpush.msra.mxu0 %v3578
  %v3580 = vand.u32 %v2302, 4294901760
  %v3581 = vsub.f32 %v2302, %v3580
  %v3582 = vand.u32 %v3581, 4294901760
  %3583 = vmatpush.msra.mxu0 %v3582
  %v3584 = vand.u32 %v2464, 4294901760
  %3585 = vmatmul.f32.gmra.mxu0 %v3584
  %v3586 = vpop.f32.mrf.mxu0
  %v3587 = vadd.f32 %v3530, %v3586
  %3588 = vdwg.mxu0
  %3589 = vmatpush.msra.mxu0 0.0
  %3590 = vmatpush.msra.mxu0 0.0
  %3591 = vmatpush.msra.mxu0 0.0
  %3592 = vmatpush.msra.mxu0 0.0
  %v3593 = vand.u32 %v2445, 4294901760
  %3594 = vmatpush.msra.mxu0 %v3593
  %v3595 = vand.u32 %v2444, 4294901760
  %3596 = vmatpush.msra.mxu0 %v3595
  %v3597 = vand.u32 %v2271, 4294901760
  %3598 = vmatpush.msra.mxu0 %v3597
  %v3599 = vand.u32 %v2265, 4294901760
  %3600 = vmatpush.msra.mxu0 %v3599
  %v3601 = vand.u32 %v2411, 4294901760
  %3602 = vmatpush.msra.mxu0 %v3601
  %v3603 = vand.u32 %v2410, 4294901760
  %3604 = vmatpush.msra.mxu0 %v3603
  %v3605 = vand.u32 %v2375, 4294901760
  %3606 = vmatpush.msra.mxu0 %v3605
  %v3607 = vand.u32 %v2374, 4294901760
  %3608 = vmatpush.msra.mxu0 %v3607
  %v3609 = vand.u32 %v2339, 4294901760
  %3610 = vmatpush.msra.mxu0 %v3609
  %v3611 = vand.u32 %v2338, 4294901760
  %3612 = vmatpush.msra.mxu0 %v3611
  %v3613 = vand.u32 %v2303, 4294901760
  %3614 = vmatpush.msra.mxu0 %v3613
  %v3615 = vand.u32 %v2302, 4294901760
  %3616 = vmatpush.msra.mxu0 %v3615
  %v3617 = vand.u32 %v2464, 4294901760
  %3618 = vmatmul.f32.gmra.mxu0 %v3617
  %v3619 = vpop.f32.mrf.mxu0
  %v3620 = vadd.f32 %v3587, %v3619
  %3621 = vdwg.mxu0
  %3622 = vmatpush.msra.mxu0 0.0
  %3623 = vmatpush.msra.mxu0 0.0
  %3624 = vmatpush.msra.mxu0 0.0
  %3625 = vmatpush.msra.mxu0 0.0
  %v3626 = vand.u32 %v2443, 4294901760
  %3627 = vmatpush.msra.mxu0 %v3626
  %v3628 = vand.u32 %v2442, 4294901760
  %3629 = vmatpush.msra.mxu0 %v3628
  %v3630 = vand.u32 %v2272, 4294901760
  %3631 = vmatpush.msra.mxu0 %v3630
  %v3632 = vand.u32 %v2266, 4294901760
  %3633 = vmatpush.msra.mxu0 %v3632
  %v3634 = vand.u32 %v2409, 4294901760
  %3635 = vmatpush.msra.mxu0 %v3634
  %v3636 = vand.u32 %v2408, 4294901760
  %3637 = vmatpush.msra.mxu0 %v3636
  %v3638 = vand.u32 %v2373, 4294901760
  %3639 = vmatpush.msra.mxu0 %v3638
  %v3640 = vand.u32 %v2372, 4294901760
  %3641 = vmatpush.msra.mxu0 %v3640
  %v3642 = vand.u32 %v2337, 4294901760
  %3643 = vmatpush.msra.mxu0 %v3642
  %v3644 = vand.u32 %v2336, 4294901760
  %3645 = vmatpush.msra.mxu0 %v3644
  %v3646 = vand.u32 %v2301, 4294901760
  %3647 = vmatpush.msra.mxu0 %v3646
  %v3648 = vand.u32 %v2300, 4294901760
  %3649 = vmatpush.msra.mxu0 %v3648
  %v3650 = vand.u32 %v2464, 4294901760
  %v3651 = vsub.f32 %v2464, %v3650
  %v3652 = vand.u32 %v3651, 4294901760
  %v3653 = vsub.f32 %v3651, %v3652
  %v3654 = vand.u32 %v3653, 4294901760
  %3655 = vmatmul.f32.gmra.mxu0 %v3654
  %v3656 = vpop.f32.mrf.mxu0
  %v3657 = vadd.f32 %v2461, %v3656
  %3658 = vdwg.mxu0
  %3659 = vmatpush.msra.mxu0 0.0
  %3660 = vmatpush.msra.mxu0 0.0
  %3661 = vmatpush.msra.mxu0 0.0
  %3662 = vmatpush.msra.mxu0 0.0
  %v3663 = vand.u32 %v2443, 4294901760
  %v3664 = vsub.f32 %v2443, %v3663
  %v3665 = vand.u32 %v3664, 4294901760
  %v3666 = vsub.f32 %v3664, %v3665
  %v3667 = vand.u32 %v3666, 4294901760
  %3668 = vmatpush.msra.mxu0 %v3667
  %v3669 = vand.u32 %v2442, 4294901760
  %v3670 = vsub.f32 %v2442, %v3669
  %v3671 = vand.u32 %v3670, 4294901760
  %v3672 = vsub.f32 %v3670, %v3671
  %v3673 = vand.u32 %v3672, 4294901760
  %3674 = vmatpush.msra.mxu0 %v3673
  %v3675 = vand.u32 %v2272, 4294901760
  %v3676 = vsub.f32 %v2272, %v3675
  %v3677 = vand.u32 %v3676, 4294901760
  %v3678 = vsub.f32 %v3676, %v3677
  %v3679 = vand.u32 %v3678, 4294901760
  %3680 = vmatpush.msra.mxu0 %v3679
  %v3681 = vand.u32 %v2266, 4294901760
  %v3682 = vsub.f32 %v2266, %v3681
  %v3683 = vand.u32 %v3682, 4294901760
  %v3684 = vsub.f32 %v3682, %v3683
  %v3685 = vand.u32 %v3684, 4294901760
  %3686 = vmatpush.msra.mxu0 %v3685
  %v3687 = vand.u32 %v2409, 4294901760
  %v3688 = vsub.f32 %v2409, %v3687
  %v3689 = vand.u32 %v3688, 4294901760
  %v3690 = vsub.f32 %v3688, %v3689
  %v3691 = vand.u32 %v3690, 4294901760
  %3692 = vmatpush.msra.mxu0 %v3691
  %v3693 = vand.u32 %v2408, 4294901760
  %v3694 = vsub.f32 %v2408, %v3693
  %v3695 = vand.u32 %v3694, 4294901760
  %v3696 = vsub.f32 %v3694, %v3695
  %v3697 = vand.u32 %v3696, 4294901760
  %3698 = vmatpush.msra.mxu0 %v3697
  %v3699 = vand.u32 %v2373, 4294901760
  %v3700 = vsub.f32 %v2373, %v3699
  %v3701 = vand.u32 %v3700, 4294901760
  %v3702 = vsub.f32 %v3700, %v3701
  %v3703 = vand.u32 %v3702, 4294901760
  %3704 = vmatpush.msra.mxu0 %v3703
  %v3705 = vand.u32 %v2372, 4294901760
  %v3706 = vsub.f32 %v2372, %v3705
  %v3707 = vand.u32 %v3706, 4294901760
  %v3708 = vsub.f32 %v3706, %v3707
  %v3709 = vand.u32 %v3708, 4294901760
  %3710 = vmatpush.msra.mxu0 %v3709
  %v3711 = vand.u32 %v2337, 4294901760
  %v3712 = vsub.f32 %v2337, %v3711
  %v3713 = vand.u32 %v3712, 4294901760
  %v3714 = vsub.f32 %v3712, %v3713
  %v3715 = vand.u32 %v3714, 4294901760
  %3716 = vmatpush.msra.mxu0 %v3715
  %v3717 = vand.u32 %v2336, 4294901760
  %v3718 = vsub.f32 %v2336, %v3717
  %v3719 = vand.u32 %v3718, 4294901760
  %v3720 = vsub.f32 %v3718, %v3719
  %v3721 = vand.u32 %v3720, 4294901760
  %3722 = vmatpush.msra.mxu0 %v3721
  %v3723 = vand.u32 %v2301, 4294901760
  %v3724 = vsub.f32 %v2301, %v3723
  %v3725 = vand.u32 %v3724, 4294901760
  %v3726 = vsub.f32 %v3724, %v3725
  %v3727 = vand.u32 %v3726, 4294901760
  %3728 = vmatpush.msra.mxu0 %v3727
  %v3729 = vand.u32 %v2300, 4294901760
  %v3730 = vsub.f32 %v2300, %v3729
  %v3731 = vand.u32 %v3730, 4294901760
  %v3732 = vsub.f32 %v3730, %v3731
  %v3733 = vand.u32 %v3732, 4294901760
  %3734 = vmatpush.msra.mxu0 %v3733
  %v3735 = vand.u32 %v2464, 4294901760
  %3736 = vmatmul.f32.gmra.mxu0 %v3735
  %v3737 = vpop.f32.mrf.mxu0
  %v3738 = vadd.f32 %v3657, %v3737
  %3739 = vdwg.mxu0
  %3740 = vmatpush.msra.mxu0 0.0
  %3741 = vmatpush.msra.mxu0 0.0
  %3742 = vmatpush.msra.mxu0 0.0
  %3743 = vmatpush.msra.mxu0 0.0
  %v3744 = vand.u32 %v2443, 4294901760
  %v3745 = vsub.f32 %v2443, %v3744
  %3746 = vmatpush.msra.mxu0 %v3745
  %v3747 = vand.u32 %v2442, 4294901760
  %v3748 = vsub.f32 %v2442, %v3747
  %3749 = vmatpush.msra.mxu0 %v3748
  %v3750 = vand.u32 %v2272, 4294901760
  %v3751 = vsub.f32 %v2272, %v3750
  %3752 = vmatpush.msra.mxu0 %v3751
  %v3753 = vand.u32 %v2266, 4294901760
  %v3754 = vsub.f32 %v2266, %v3753
  %3755 = vmatpush.msra.mxu0 %v3754
  %v3756 = vand.u32 %v2409, 4294901760
  %v3757 = vsub.f32 %v2409, %v3756
  %3758 = vmatpush.msra.mxu0 %v3757
  %v3759 = vand.u32 %v2408, 4294901760
  %v3760 = vsub.f32 %v2408, %v3759
  %3761 = vmatpush.msra.mxu0 %v3760
  %v3762 = vand.u32 %v2373, 4294901760
  %v3763 = vsub.f32 %v2373, %v3762
  %3764 = vmatpush.msra.mxu0 %v3763
  %v3765 = vand.u32 %v2372, 4294901760
  %v3766 = vsub.f32 %v2372, %v3765
  %3767 = vmatpush.msra.mxu0 %v3766
  %v3768 = vand.u32 %v2337, 4294901760
  %v3769 = vsub.f32 %v2337, %v3768
  %3770 = vmatpush.msra.mxu0 %v3769
  %v3771 = vand.u32 %v2336, 4294901760
  %v3772 = vsub.f32 %v2336, %v3771
  %3773 = vmatpush.msra.mxu0 %v3772
  %v3774 = vand.u32 %v2301, 4294901760
  %v3775 = vsub.f32 %v2301, %v3774
  %3776 = vmatpush.msra.mxu0 %v3775
  %v3777 = vand.u32 %v2300, 4294901760
  %v3778 = vsub.f32 %v2300, %v3777
  %3779 = vmatpush.msra.mxu0 %v3778
  %v3780 = vand.u32 %v2464, 4294901760
  %v3781 = vsub.f32 %v2464, %v3780
  %3782 = vmatmul.f32.gmra.mxu0 %v3781
  %v3783 = vpop.f32.mrf.mxu0
  %v3784 = vadd.f32 %v3738, %v3783
  %3785 = vdwg.mxu0
  %3786 = vmatpush.msra.mxu0 0.0
  %3787 = vmatpush.msra.mxu0 0.0
  %3788 = vmatpush.msra.mxu0 0.0
  %3789 = vmatpush.msra.mxu0 0.0
  %v3790 = vand.u32 %v2443, 4294901760
  %3791 = vmatpush.msra.mxu0 %v3790
  %v3792 = vand.u32 %v2442, 4294901760
  %3793 = vmatpush.msra.mxu0 %v3792
  %v3794 = vand.u32 %v2272, 4294901760
  %3795 = vmatpush.msra.mxu0 %v3794
  %v3796 = vand.u32 %v2266, 4294901760
  %3797 = vmatpush.msra.mxu0 %v3796
  %v3798 = vand.u32 %v2409, 4294901760
  %3799 = vmatpush.msra.mxu0 %v3798
  %v3800 = vand.u32 %v2408, 4294901760
  %3801 = vmatpush.msra.mxu0 %v3800
  %v3802 = vand.u32 %v2373, 4294901760
  %3803 = vmatpush.msra.mxu0 %v3802
  %v3804 = vand.u32 %v2372, 4294901760
  %3805 = vmatpush.msra.mxu0 %v3804
  %v3806 = vand.u32 %v2337, 4294901760
  %3807 = vmatpush.msra.mxu0 %v3806
  %v3808 = vand.u32 %v2336, 4294901760
  %3809 = vmatpush.msra.mxu0 %v3808
  %v3810 = vand.u32 %v2301, 4294901760
  %3811 = vmatpush.msra.mxu0 %v3810
  %v3812 = vand.u32 %v2300, 4294901760
  %3813 = vmatpush.msra.mxu0 %v3812
  %v3814 = vand.u32 %v2464, 4294901760
  %v3815 = vsub.f32 %v2464, %v3814
  %v3816 = vand.u32 %v3815, 4294901760
  %3817 = vmatmul.f32.gmra.mxu0 %v3816
  %v3818 = vpop.f32.mrf.mxu0
  %v3819 = vadd.f32 %v3784, %v3818
  %3820 = vdwg.mxu0
  %3821 = vmatpush.msra.mxu0 0.0
  %3822 = vmatpush.msra.mxu0 0.0
  %3823 = vmatpush.msra.mxu0 0.0
  %3824 = vmatpush.msra.mxu0 0.0
  %v3825 = vand.u32 %v2443, 4294901760
  %v3826 = vsub.f32 %v2443, %v3825
  %v3827 = vand.u32 %v3826, 4294901760
  %3828 = vmatpush.msra.mxu0 %v3827
  %v3829 = vand.u32 %v2442, 4294901760
  %v3830 = vsub.f32 %v2442, %v3829
  %v3831 = vand.u32 %v3830, 4294901760
  %3832 = vmatpush.msra.mxu0 %v3831
  %v3833 = vand.u32 %v2272, 4294901760
  %v3834 = vsub.f32 %v2272, %v3833
  %v3835 = vand.u32 %v3834, 4294901760
  %3836 = vmatpush.msra.mxu0 %v3835
  %v3837 = vand.u32 %v2266, 4294901760
  %v3838 = vsub.f32 %v2266, %v3837
  %v3839 = vand.u32 %v3838, 4294901760
  %3840 = vmatpush.msra.mxu0 %v3839
  %v3841 = vand.u32 %v2409, 4294901760
  %v3842 = vsub.f32 %v2409, %v3841
  %v3843 = vand.u32 %v3842, 4294901760
  %3844 = vmatpush.msra.mxu0 %v3843
  %v3845 = vand.u32 %v2408, 4294901760
  %v3846 = vsub.f32 %v2408, %v3845
  %v3847 = vand.u32 %v3846, 4294901760
  %3848 = vmatpush.msra.mxu0 %v3847
  %v3849 = vand.u32 %v2373, 4294901760
  %v3850 = vsub.f32 %v2373, %v3849
  %v3851 = vand.u32 %v3850, 4294901760
  %3852 = vmatpush.msra.mxu0 %v3851
  %v3853 = vand.u32 %v2372, 4294901760
  %v3854 = vsub.f32 %v2372, %v3853
  %v3855 = vand.u32 %v3854, 4294901760
  %3856 = vmatpush.msra.mxu0 %v3855
  %v3857 = vand.u32 %v2337, 4294901760
  %v3858 = vsub.f32 %v2337, %v3857
  %v3859 = vand.u32 %v3858, 4294901760
  %3860 = vmatpush.msra.mxu0 %v3859
  %v3861 = vand.u32 %v2336, 4294901760
  %v3862 = vsub.f32 %v2336, %v3861
  %v3863 = vand.u32 %v3862, 4294901760
  %3864 = vmatpush.msra.mxu0 %v3863
  %v3865 = vand.u32 %v2301, 4294901760
  %v3866 = vsub.f32 %v2301, %v3865
  %v3867 = vand.u32 %v3866, 4294901760
  %3868 = vmatpush.msra.mxu0 %v3867
  %v3869 = vand.u32 %v2300, 4294901760
  %v3870 = vsub.f32 %v2300, %v3869
  %v3871 = vand.u32 %v3870, 4294901760
  %3872 = vmatpush.msra.mxu0 %v3871
  %v3873 = vand.u32 %v2464, 4294901760
  %3874 = vmatmul.f32.gmra.mxu0 %v3873
  %v3875 = vpop.f32.mrf.mxu0
  %v3876 = vadd.f32 %v3819, %v3875
  %3877 = vdwg.mxu0
  %3878 = vmatpush.msra.mxu0 0.0
  %3879 = vmatpush.msra.mxu0 0.0
  %3880 = vmatpush.msra.mxu0 0.0
  %3881 = vmatpush.msra.mxu0 0.0
  %v3882 = vand.u32 %v2443, 4294901760
  %3883 = vmatpush.msra.mxu0 %v3882
  %v3884 = vand.u32 %v2442, 4294901760
  %3885 = vmatpush.msra.mxu0 %v3884
  %v3886 = vand.u32 %v2272, 4294901760
  %3887 = vmatpush.msra.mxu0 %v3886
  %v3888 = vand.u32 %v2266, 4294901760
  %3889 = vmatpush.msra.mxu0 %v3888
  %v3890 = vand.u32 %v2409, 4294901760
  %3891 = vmatpush.msra.mxu0 %v3890
  %v3892 = vand.u32 %v2408, 4294901760
  %3893 = vmatpush.msra.mxu0 %v3892
  %v3894 = vand.u32 %v2373, 4294901760
  %3895 = vmatpush.msra.mxu0 %v3894
  %v3896 = vand.u32 %v2372, 4294901760
  %3897 = vmatpush.msra.mxu0 %v3896
  %v3898 = vand.u32 %v2337, 4294901760
  %3899 = vmatpush.msra.mxu0 %v3898
  %v3900 = vand.u32 %v2336, 4294901760
  %3901 = vmatpush.msra.mxu0 %v3900
  %v3902 = vand.u32 %v2301, 4294901760
  %3903 = vmatpush.msra.mxu0 %v3902
  %v3904 = vand.u32 %v2300, 4294901760
  %3905 = vmatpush.msra.mxu0 %v3904
  %v3906 = vand.u32 %v2464, 4294901760
  %3907 = vmatmul.f32.gmra.mxu0 %v3906
  %v3908 = vpop.f32.mrf.mxu0
  %v3909 = vadd.f32 %v3876, %v3908
  %3910 = vdwg.mxu0
  %3911 = vmatpush.msra.mxu0 0.0
  %3912 = vmatpush.msra.mxu0 0.0
  %3913 = vmatpush.msra.mxu0 0.0
  %3914 = vmatpush.msra.mxu0 0.0
  %v3915 = vand.u32 %v2453, 4294901760
  %3916 = vmatpush.msra.mxu0 %v3915
  %v3917 = vand.u32 %v2452, 4294901760
  %3918 = vmatpush.msra.mxu0 %v3917
  %v3919 = vand.u32 %v2273, 4294901760
  %3920 = vmatpush.msra.mxu0 %v3919
  %v3921 = vand.u32 %v2267, 4294901760
  %3922 = vmatpush.msra.mxu0 %v3921
  %v3923 = vand.u32 %v2407, 4294901760
  %3924 = vmatpush.msra.mxu0 %v3923
  %v3925 = vand.u32 %v2406, 4294901760
  %3926 = vmatpush.msra.mxu0 %v3925
  %v3927 = vand.u32 %v2371, 4294901760
  %3928 = vmatpush.msra.mxu0 %v3927
  %v3929 = vand.u32 %v2370, 4294901760
  %3930 = vmatpush.msra.mxu0 %v3929
  %v3931 = vand.u32 %v2335, 4294901760
  %3932 = vmatpush.msra.mxu0 %v3931
  %v3933 = vand.u32 %v2334, 4294901760
  %3934 = vmatpush.msra.mxu0 %v3933
  %v3935 = vand.u32 %v2299, 4294901760
  %3936 = vmatpush.msra.mxu0 %v3935
  %v3937 = vand.u32 %v2298, 4294901760
  %3938 = vmatpush.msra.mxu0 %v3937
  %v3939 = vand.u32 %v2464, 4294901760
  %v3940 = vsub.f32 %v2464, %v3939
  %v3941 = vand.u32 %v3940, 4294901760
  %v3942 = vsub.f32 %v3940, %v3941
  %v3943 = vand.u32 %v3942, 4294901760
  %3944 = vmatmul.f32.gmra.mxu0 %v3943
  %v3945 = vpop.f32.mrf.mxu0
  %v3946 = vadd.f32 %v2461, %v3945
  %3947 = vdwg.mxu0
  %3948 = vmatpush.msra.mxu0 0.0
  %3949 = vmatpush.msra.mxu0 0.0
  %3950 = vmatpush.msra.mxu0 0.0
  %3951 = vmatpush.msra.mxu0 0.0
  %v3952 = vand.u32 %v2453, 4294901760
  %v3953 = vsub.f32 %v2453, %v3952
  %v3954 = vand.u32 %v3953, 4294901760
  %v3955 = vsub.f32 %v3953, %v3954
  %v3956 = vand.u32 %v3955, 4294901760
  %3957 = vmatpush.msra.mxu0 %v3956
  %v3958 = vand.u32 %v2452, 4294901760
  %v3959 = vsub.f32 %v2452, %v3958
  %v3960 = vand.u32 %v3959, 4294901760
  %v3961 = vsub.f32 %v3959, %v3960
  %v3962 = vand.u32 %v3961, 4294901760
  %3963 = vmatpush.msra.mxu0 %v3962
  %v3964 = vand.u32 %v2273, 4294901760
  %v3965 = vsub.f32 %v2273, %v3964
  %v3966 = vand.u32 %v3965, 4294901760
  %v3967 = vsub.f32 %v3965, %v3966
  %v3968 = vand.u32 %v3967, 4294901760
  %3969 = vmatpush.msra.mxu0 %v3968
  %v3970 = vand.u32 %v2267, 4294901760
  %v3971 = vsub.f32 %v2267, %v3970
  %v3972 = vand.u32 %v3971, 4294901760
  %v3973 = vsub.f32 %v3971, %v3972
  %v3974 = vand.u32 %v3973, 4294901760
  %3975 = vmatpush.msra.mxu0 %v3974
  %v3976 = vand.u32 %v2407, 4294901760
  %v3977 = vsub.f32 %v2407, %v3976
  %v3978 = vand.u32 %v3977, 4294901760
  %v3979 = vsub.f32 %v3977, %v3978
  %v3980 = vand.u32 %v3979, 4294901760
  %3981 = vmatpush.msra.mxu0 %v3980
  %v3982 = vand.u32 %v2406, 4294901760
  %v3983 = vsub.f32 %v2406, %v3982
  %v3984 = vand.u32 %v3983, 4294901760
  %v3985 = vsub.f32 %v3983, %v3984
  %v3986 = vand.u32 %v3985, 4294901760
  %3987 = vmatpush.msra.mxu0 %v3986
  %v3988 = vand.u32 %v2371, 4294901760
  %v3989 = vsub.f32 %v2371, %v3988
  %v3990 = vand.u32 %v3989, 4294901760
  %v3991 = vsub.f32 %v3989, %v3990
  %v3992 = vand.u32 %v3991, 4294901760
  %3993 = vmatpush.msra.mxu0 %v3992
  %v3994 = vand.u32 %v2370, 4294901760
  %v3995 = vsub.f32 %v2370, %v3994
  %v3996 = vand.u32 %v3995, 4294901760
  %v3997 = vsub.f32 %v3995, %v3996
  %v3998 = vand.u32 %v3997, 4294901760
  %3999 = vmatpush.msra.mxu0 %v3998
  %v4000 = vand.u32 %v2335, 4294901760
  %v4001 = vsub.f32 %v2335, %v4000
  %v4002 = vand.u32 %v4001, 4294901760
  %v4003 = vsub.f32 %v4001, %v4002
  %v4004 = vand.u32 %v4003, 4294901760
  %4005 = vmatpush.msra.mxu0 %v4004
  %v4006 = vand.u32 %v2334, 4294901760
  %v4007 = vsub.f32 %v2334, %v4006
  %v4008 = vand.u32 %v4007, 4294901760
  %v4009 = vsub.f32 %v4007, %v4008
  %v4010 = vand.u32 %v4009, 4294901760
  %4011 = vmatpush.msra.mxu0 %v4010
  %v4012 = vand.u32 %v2299, 4294901760
  %v4013 = vsub.f32 %v2299, %v4012
  %v4014 = vand.u32 %v4013, 4294901760
  %v4015 = vsub.f32 %v4013, %v4014
  %v4016 = vand.u32 %v4015, 4294901760
  %4017 = vmatpush.msra.mxu0 %v4016
  %v4018 = vand.u32 %v2298, 4294901760
  %v4019 = vsub.f32 %v2298, %v4018
  %v4020 = vand.u32 %v4019, 4294901760
  %v4021 = vsub.f32 %v4019, %v4020
  %v4022 = vand.u32 %v4021, 4294901760
  %4023 = vmatpush.msra.mxu0 %v4022
  %v4024 = vand.u32 %v2464, 4294901760
  %4025 = vmatmul.f32.gmra.mxu0 %v4024
  %v4026 = vpop.f32.mrf.mxu0
  %v4027 = vadd.f32 %v3946, %v4026
  %4028 = vdwg.mxu0
  %4029 = vmatpush.msra.mxu0 0.0
  %4030 = vmatpush.msra.mxu0 0.0
  %4031 = vmatpush.msra.mxu0 0.0
  %4032 = vmatpush.msra.mxu0 0.0
  %v4033 = vand.u32 %v2453, 4294901760
  %v4034 = vsub.f32 %v2453, %v4033
  %4035 = vmatpush.msra.mxu0 %v4034
  %v4036 = vand.u32 %v2452, 4294901760
  %v4037 = vsub.f32 %v2452, %v4036
  %4038 = vmatpush.msra.mxu0 %v4037
  %v4039 = vand.u32 %v2273, 4294901760
  %v4040 = vsub.f32 %v2273, %v4039
  %4041 = vmatpush.msra.mxu0 %v4040
  %v4042 = vand.u32 %v2267, 4294901760
  %v4043 = vsub.f32 %v2267, %v4042
  %4044 = vmatpush.msra.mxu0 %v4043
  %v4045 = vand.u32 %v2407, 4294901760
  %v4046 = vsub.f32 %v2407, %v4045
  %4047 = vmatpush.msra.mxu0 %v4046
  %v4048 = vand.u32 %v2406, 4294901760
  %v4049 = vsub.f32 %v2406, %v4048
  %4050 = vmatpush.msra.mxu0 %v4049
  %v4051 = vand.u32 %v2371, 4294901760
  %v4052 = vsub.f32 %v2371, %v4051
  %4053 = vmatpush.msra.mxu0 %v4052
  %v4054 = vand.u32 %v2370, 4294901760
  %v4055 = vsub.f32 %v2370, %v4054
  %4056 = vmatpush.msra.mxu0 %v4055
  %v4057 = vand.u32 %v2335, 4294901760
  %v4058 = vsub.f32 %v2335, %v4057
  %4059 = vmatpush.msra.mxu0 %v4058
  %v4060 = vand.u32 %v2334, 4294901760
  %v4061 = vsub.f32 %v2334, %v4060
  %4062 = vmatpush.msra.mxu0 %v4061
  %v4063 = vand.u32 %v2299, 4294901760
  %v4064 = vsub.f32 %v2299, %v4063
  %4065 = vmatpush.msra.mxu0 %v4064
  %v4066 = vand.u32 %v2298, 4294901760
  %v4067 = vsub.f32 %v2298, %v4066
  %4068 = vmatpush.msra.mxu0 %v4067
  %v4069 = vand.u32 %v2464, 4294901760
  %v4070 = vsub.f32 %v2464, %v4069
  %4071 = vmatmul.f32.gmra.mxu0 %v4070
  %v4072 = vpop.f32.mrf.mxu0
  %v4073 = vadd.f32 %v4027, %v4072
  %4074 = vdwg.mxu0
  %4075 = vmatpush.msra.mxu0 0.0
  %4076 = vmatpush.msra.mxu0 0.0
  %4077 = vmatpush.msra.mxu0 0.0
  %4078 = vmatpush.msra.mxu0 0.0
  %v4079 = vand.u32 %v2453, 4294901760
  %4080 = vmatpush.msra.mxu0 %v4079
  %v4081 = vand.u32 %v2452, 4294901760
  %4082 = vmatpush.msra.mxu0 %v4081
  %v4083 = vand.u32 %v2273, 4294901760
  %4084 = vmatpush.msra.mxu0 %v4083
  %v4085 = vand.u32 %v2267, 4294901760
  %4086 = vmatpush.msra.mxu0 %v4085
  %v4087 = vand.u32 %v2407, 4294901760
  %4088 = vmatpush.msra.mxu0 %v4087
  %v4089 = vand.u32 %v2406, 4294901760
  %4090 = vmatpush.msra.mxu0 %v4089
  %v4091 = vand.u32 %v2371, 4294901760
  %4092 = vmatpush.msra.mxu0 %v4091
  %v4093 = vand.u32 %v2370, 4294901760
  %4094 = vmatpush.msra.mxu0 %v4093
  %v4095 = vand.u32 %v2335, 4294901760
  %4096 = vmatpush.msra.mxu0 %v4095
  %v4097 = vand.u32 %v2334, 4294901760
  %4098 = vmatpush.msra.mxu0 %v4097
  %v4099 = vand.u32 %v2299, 4294901760
  %4100 = vmatpush.msra.mxu0 %v4099
  %v4101 = vand.u32 %v2298, 4294901760
  %4102 = vmatpush.msra.mxu0 %v4101
  %v4103 = vand.u32 %v2464, 4294901760
  %v4104 = vsub.f32 %v2464, %v4103
  %v4105 = vand.u32 %v4104, 4294901760
  %4106 = vmatmul.f32.gmra.mxu0 %v4105
  %v4107 = vpop.f32.mrf.mxu0
  %v4108 = vadd.f32 %v4073, %v4107
  %4109 = vdwg.mxu0
  %4110 = vmatpush.msra.mxu0 0.0
  %4111 = vmatpush.msra.mxu0 0.0
  %4112 = vmatpush.msra.mxu0 0.0
  %4113 = vmatpush.msra.mxu0 0.0
  %v4114 = vand.u32 %v2453, 4294901760
  %v4115 = vsub.f32 %v2453, %v4114
  %v4116 = vand.u32 %v4115, 4294901760
  %4117 = vmatpush.msra.mxu0 %v4116
  %v4118 = vand.u32 %v2452, 4294901760
  %v4119 = vsub.f32 %v2452, %v4118
  %v4120 = vand.u32 %v4119, 4294901760
  %4121 = vmatpush.msra.mxu0 %v4120
  %v4122 = vand.u32 %v2273, 4294901760
  %v4123 = vsub.f32 %v2273, %v4122
  %v4124 = vand.u32 %v4123, 4294901760
  %4125 = vmatpush.msra.mxu0 %v4124
  %v4126 = vand.u32 %v2267, 4294901760
  %v4127 = vsub.f32 %v2267, %v4126
  %v4128 = vand.u32 %v4127, 4294901760
  %4129 = vmatpush.msra.mxu0 %v4128
  %v4130 = vand.u32 %v2407, 4294901760
  %v4131 = vsub.f32 %v2407, %v4130
  %v4132 = vand.u32 %v4131, 4294901760
  %4133 = vmatpush.msra.mxu0 %v4132
  %v4134 = vand.u32 %v2406, 4294901760
  %v4135 = vsub.f32 %v2406, %v4134
  %v4136 = vand.u32 %v4135, 4294901760
  %4137 = vmatpush.msra.mxu0 %v4136
  %v4138 = vand.u32 %v2371, 4294901760
  %v4139 = vsub.f32 %v2371, %v4138
  %v4140 = vand.u32 %v4139, 4294901760
  %4141 = vmatpush.msra.mxu0 %v4140
  %v4142 = vand.u32 %v2370, 4294901760
  %v4143 = vsub.f32 %v2370, %v4142
  %v4144 = vand.u32 %v4143, 4294901760
  %4145 = vmatpush.msra.mxu0 %v4144
  %v4146 = vand.u32 %v2335, 4294901760
  %v4147 = vsub.f32 %v2335, %v4146
  %v4148 = vand.u32 %v4147, 4294901760
  %4149 = vmatpush.msra.mxu0 %v4148
  %v4150 = vand.u32 %v2334, 4294901760
  %v4151 = vsub.f32 %v2334, %v4150
  %v4152 = vand.u32 %v4151, 4294901760
  %4153 = vmatpush.msra.mxu0 %v4152
  %v4154 = vand.u32 %v2299, 4294901760
  %v4155 = vsub.f32 %v2299, %v4154
  %v4156 = vand.u32 %v4155, 4294901760
  %4157 = vmatpush.msra.mxu0 %v4156
  %v4158 = vand.u32 %v2298, 4294901760
  %v4159 = vsub.f32 %v2298, %v4158
  %v4160 = vand.u32 %v4159, 4294901760
  %4161 = vmatpush.msra.mxu0 %v4160
  %v4162 = vand.u32 %v2464, 4294901760
  %4163 = vmatmul.f32.gmra.mxu0 %v4162
  %v4164 = vpop.f32.mrf.mxu0
  %v4165 = vadd.f32 %v4108, %v4164
  %4166 = vdwg.mxu0
  %4167 = vmatpush.msra.mxu0 0.0
  %4168 = vmatpush.msra.mxu0 0.0
  %4169 = vmatpush.msra.mxu0 0.0
  %4170 = vmatpush.msra.mxu0 0.0
  %v4171 = vand.u32 %v2453, 4294901760
  %4172 = vmatpush.msra.mxu0 %v4171
  %v4173 = vand.u32 %v2452, 4294901760
  %4174 = vmatpush.msra.mxu0 %v4173
  %v4175 = vand.u32 %v2273, 4294901760
  %4176 = vmatpush.msra.mxu0 %v4175
  %v4177 = vand.u32 %v2267, 4294901760
  %4178 = vmatpush.msra.mxu0 %v4177
  %v4179 = vand.u32 %v2407, 4294901760
  %4180 = vmatpush.msra.mxu0 %v4179
  %v4181 = vand.u32 %v2406, 4294901760
  %4182 = vmatpush.msra.mxu0 %v4181
  %v4183 = vand.u32 %v2371, 4294901760
  %4184 = vmatpush.msra.mxu0 %v4183
  %v4185 = vand.u32 %v2370, 4294901760
  %4186 = vmatpush.msra.mxu0 %v4185
  %v4187 = vand.u32 %v2335, 4294901760
  %4188 = vmatpush.msra.mxu0 %v4187
  %v4189 = vand.u32 %v2334, 4294901760
  %4190 = vmatpush.msra.mxu0 %v4189
  %v4191 = vand.u32 %v2299, 4294901760
  %4192 = vmatpush.msra.mxu0 %v4191
  %v4193 = vand.u32 %v2298, 4294901760
  %4194 = vmatpush.msra.mxu0 %v4193
  %v4195 = vand.u32 %v2464, 4294901760
  %4196 = vmatmul.f32.gmra.mxu0 %v4195
  %v4197 = vpop.f32.mrf.mxu0
  %v4198 = vadd.f32 %v4165, %v4197
  %4199 = vdwg.mxu0
  %vm4200 = vcmp.gt.f32.partialorder %v2753, 0.0
  %vm4201 = vcmp.gt.f32.partialorder %v3042, 0.0
  %vm4202 = vcmp.gt.f32.partialorder %v3331, 0.0
  %vm4203 = vcmp.gt.f32.partialorder %v3620, 0.0
  %vm4204 = vcmp.gt.f32.partialorder %v3909, 0.0
  %vm4205 = vcmp.gt.f32.partialorder %v4198, 0.0
  %v4206 = vmin.f32 %v2753, 0.0
  %v4207 = vmin.f32 %v3042, 0.0
  %v4208 = vmin.f32 %v3331, 0.0
  %v4209 = vmin.f32 %v3620, 0.0
  %v4210 = vmin.f32 %v3909, 0.0
  %v4211 = vmin.f32 %v4198, 0.0
  %v4212 = vmul.f32 %v4206, 1.442695
  %v4213 = vpow.pop %v4212
  %v4214 = vmul.f32 %v4207, 1.442695
  %v4215 = vpow.pop %v4214
  %v4216 = vmul.f32 %v4208, 1.442695
  %v4217 = vpow.pop %v4216
  %v4218 = vmul.f32 %v4209, 1.442695
  %v4219 = vpow.pop %v4218
  %v4220 = vmul.f32 %v4210, 1.442695
  %v4221 = vpow.pop %v4220
  %v4222 = vmul.f32 %v4211, 1.442695
  %v4223 = vpow.pop %v4222
  %v4224 = vsub.f32 %v4213, 1.0
  %v4225 = vsub.f32 %v4215, 1.0
  %v4226 = vsub.f32 %v4217, 1.0
  %v4227 = vsub.f32 %v4219, 1.0
  %v4228 = vsub.f32 %v4221, 1.0
  %v4229 = vsub.f32 %v4223, 1.0
  %v4230 = vsel %vm4200, %v2753, %v4224
  %v4231 = vsel %vm4201, %v3042, %v4225
  %v4232 = vsel %vm4202, %v3331, %v4226
  %v4233 = vsel %vm4203, %v3620, %v4227
  %v4234 = vsel %vm4204, %v3909, %v4228
  %v4235 = vsel %vm4205, %v4198, %v4229
  %v4236 = vmul.f32 %v4230, %v4230
  %v4237 = vmul.f32 %v4231, %v4231
  %v4238 = vmul.f32 %v4232, %v4232
  %v4239 = vmul.f32 %v4233, %v4233
  %v4240 = vmul.f32 %v4234, %v4234
  %v4241 = vmul.f32 %v4235, %v4235
  %v4242 = vmul.f32 %v4230, %v2050
  %v4243 = vmul.f32 %v4231, %v2051
  %v4244 = vmul.f32 %v4232, %v2052
  %v4245 = vmul.f32 %v4233, %v2053
  %v4246 = vmul.f32 %v4234, %v2054
  %v4247 = vmul.f32 %v4235, %v2055
  %v4248 = vadd.f32 %v4242, %v4243
  %v4249 = vadd.f32 %v4248, %v4244
  %v4250 = vadd.f32 %v4249, %v4245
  %v4251 = vadd.f32 %v4250, %v4246
  %v4252 = vadd.f32 %v4251, %v4247
  %4253 = vadd.xlane.f32.xlu0 %v4252
  %v4254 = vpop.xlane.xlu0 %4253
  %v4255 = vmul.f32 %v4236, %v2050
  %v4256 = vmul.f32 %v4237, %v2051
  %v4257 = vmul.f32 %v4238, %v2052
  %v4258 = vmul.f32 %v4239, %v2053
  %v4259 = vmul.f32 %v4240, %v2054
  %v4260 = vmul.f32 %v4241, %v2055
  %v4261 = vadd.f32 %v4255, %v4256
  %v4262 = vadd.f32 %v4261, %v4257
  %v4263 = vadd.f32 %v4262, %v4258
  %v4264 = vadd.f32 %v4263, %v4259
  %v4265 = vadd.f32 %v4264, %v4260
  %4266 = vadd.xlane.f32.xlu0 %v4265
  %v4267 = vpop.xlane.xlu0 %4266
  %v4268 = vmul.f32 %v4254, 0.0036764706
  %v4269 = vmul.f32 %v4267, 0.0036764706
  %v4270 = vmul.f32 %v4268, %v4268
  %v4271 = vsub.f32 %v4269, %v4270
  %v4272 = vadd.f32 %v4271, 1e-05
  %v4273 = vrsqrt.pop %v4272
  %v4274 = vmul.f32 %v4273, %v4272
  %v4275 = vmul.f32 %v4274, %v4273
  %v4276 = vmul.f32 0.5, %v4275
  %v4277 = vsub.f32 1.5, %v4276
  %v4278 = vmul.f32 %v4273, %v4277
  %vm4279 = vweird.f32 %v4272
  %vm4280 = vweird.f32 %v4273
  %vm4281 = vmor %vm4279, %vm4280
  %v4282 = vsel %vm4281, %v4273, %v4278
  %v4283 = vmul.f32 %v2050, %v4282
  %v4284 = vmul.f32 %v2051, %v4282
  %v4285 = vmul.f32 %v2052, %v4282
  %v4286 = vmul.f32 %v2053, %v4282
  %v4287 = vmul.f32 %v2054, %v4282
  %v4288 = vmul.f32 %v2055, %v4282
  %v4289 = vadd.f32 %v4283, 0.0
  %v4290 = vadd.f32 %v4284, 0.0
  %v4291 = vadd.f32 %v4285, 0.0
  %v4292 = vadd.f32 %v4286, 0.0
  %v4293 = vadd.f32 %v4287, 0.0
  %v4294 = vadd.f32 %v4288, 0.0
  %v4295 = vmul.f32 %v4268, %v4282
  %v4296 = vmul.f32 %v2050, %v4295
  %v4297 = vmul.f32 %v2051, %v4295
  %v4298 = vmul.f32 %v2052, %v4295
  %v4299 = vmul.f32 %v2053, %v4295
  %v4300 = vmul.f32 %v2054, %v4295
  %v4301 = vmul.f32 %v2055, %v4295
  %v4302 = vsub.f32 0.0, %v4296
  %v4303 = vsub.f32 0.0, %v4297
  %v4304 = vsub.f32 0.0, %v4298
  %v4305 = vsub.f32 0.0, %v4299
  %v4306 = vsub.f32 0.0, %v4300
  %v4307 = vsub.f32 0.0, %v4301
  %v4308 = vmul.f32 %v4230, %v2129
  %v4309 = vmul.f32 %v4231, %v2130
  %v4310 = vmul.f32 %v4232, %v2131
  %v4311 = vmul.f32 %v4233, %v2132
  %v4312 = vmul.f32 %v4234, %v2133
  %v4313 = vmul.f32 %v4235, %v2134
  %v4314 = vadd.f32 %v4308, %v4309
  %v4315 = vadd.f32 %v4314, %v4310
  %v4316 = vadd.f32 %v4315, %v4311
  %v4317 = vadd.f32 %v4316, %v4312
  %v4318 = vadd.f32 %v4317, %v4313
  %4319 = vadd.xlane.f32.xlu0 %v4318
  %v4320 = vpop.xlane.xlu0 %4319
  %v4321 = vmul.f32 %v4236, %v2129
  %v4322 = vmul.f32 %v4237, %v2130
  %v4323 = vmul.f32 %v4238, %v2131
  %v4324 = vmul.f32 %v4239, %v2132
  %v4325 = vmul.f32 %v4240, %v2133
  %v4326 = vmul.f32 %v4241, %v2134
  %v4327 = vadd.f32 %v4321, %v4322
  %v4328 = vadd.f32 %v4327, %v4323
  %v4329 = vadd.f32 %v4328, %v4324
  %v4330 = vadd.f32 %v4329, %v4325
  %v4331 = vadd.f32 %v4330, %v4326
  %4332 = vadd.xlane.f32.xlu0 %v4331
  %v4333 = vpop.xlane.xlu0 %4332
  %v4334 = vmul.f32 %v4320, 0.0036764706
  %v4335 = vmul.f32 %v4333, 0.0036764706
  %v4336 = vmul.f32 %v4334, %v4334
  %v4337 = vsub.f32 %v4335, %v4336
  %v4338 = vadd.f32 %v4337, 1e-05
  %v4339 = vrsqrt.pop %v4338
  %v4340 = vmul.f32 %v4339, %v4338
  %v4341 = vmul.f32 %v4340, %v4339
  %v4342 = vmul.f32 0.5, %v4341
  %v4343 = vsub.f32 1.5, %v4342
  %v4344 = vmul.f32 %v4339, %v4343
  %vm4345 = vweird.f32 %v4338
  %vm4346 = vweird.f32 %v4339
  %vm4347 = vmor %vm4345, %vm4346
  %v4348 = vsel %vm4347, %v4339, %v4344
  %v4349 = vmul.f32 %v2129, %v4348
  %v4350 = vmul.f32 %v2130, %v4348
  %v4351 = vmul.f32 %v2131, %v4348
  %v4352 = vmul.f32 %v2132, %v4348
  %v4353 = vmul.f32 %v2133, %v4348
  %v4354 = vmul.f32 %v2134, %v4348
  %v4355 = vadd.f32 %v4289, %v4349
  %v4356 = vadd.f32 %v4290, %v4350
  %v4357 = vadd.f32 %v4291, %v4351
  %v4358 = vadd.f32 %v4292, %v4352
  %v4359 = vadd.f32 %v4293, %v4353
  %v4360 = vadd.f32 %v4294, %v4354
  %v4361 = vmul.f32 %v4334, %v4348
  %v4362 = vmul.f32 %v2129, %v4361
  %v4363 = vmul.f32 %v2130, %v4361
  %v4364 = vmul.f32 %v2131, %v4361
  %v4365 = vmul.f32 %v2132, %v4361
  %v4366 = vmul.f32 %v2133, %v4361
  %v4367 = vmul.f32 %v2134, %v4361
  %v4368 = vsub.f32 %v4302, %v4362
  %v4369 = vsub.f32 %v4303, %v4363
  %v4370 = vsub.f32 %v4304, %v4364
  %v4371 = vsub.f32 %v4305, %v4365
  %v4372 = vsub.f32 %v4306, %v4366
  %v4373 = vsub.f32 %v4307, %v4367
  %v4374 = vmul.f32 %v4230, %v4355
  %v4375 = vmul.f32 %v4231, %v4356
  %v4376 = vmul.f32 %v4232, %v4357
  %v4377 = vmul.f32 %v4233, %v4358
  %v4378 = vmul.f32 %v4234, %v4359
  %v4379 = vmul.f32 %v4235, %v4360
  %v4380 = vadd.f32 %v4374, %v4368
  %v4381 = vadd.f32 %v4375, %v4369
  %v4382 = vadd.f32 %v4376, %v4370
  %v4383 = vadd.f32 %v4377, %v4371
  %v4384 = vadd.f32 %v4378, %v4372
  %v4385 = vadd.f32 %v4379, %v4373
  %v4386 = vmul.f32 %v2220, %v4380
  %v4387 = vmul.f32 %v2221, %v4381
  %v4388 = vmul.f32 %v2222, %v4382
  %v4389 = vmul.f32 %v2223, %v4383
  %v4390 = vmul.f32 %v2224, %v4384
  %v4391 = vmul.f32 %v2225, %v4385
  %4392 = vst [vmem:[#allocation2 + $0x30] sm:$0xf] %v4386
  %4393 = vst [vmem:[#allocation2 + $0x38] sm:$0xf] %v4387
  %4394 = vst [vmem:[#allocation2 + $0x40] sm:$0xf] %v4388
  %4395 = vst [vmem:[#allocation2 + $0x48] sm:$0xf] %v4389
  %4396 = vst [vmem:[#allocation2 + $0x50] sm:$0xf] %v4390
  %4397 = vst [vmem:[#allocation2 + $0x58] sm:$0xf] %v4391
  %v4398 = vld [vmem:[#allocation2] sm:$0xff]
  %v4399 = vld [vmem:[#allocation2 + $0x8] sm:$0xff]
  %v4400 = vld [vmem:[#allocation2 + $0x10] sm:$0xff]
  %v4401 = vld [vmem:[#allocation2 + $0x18] sm:$0xff]
  %v4402 = vld [vmem:[#allocation2 + $0x20] sm:$0xff]
  %v4403 = vld [vmem:[#allocation2 + $0x28] sm:$0xff]
  %v4404 = vld [vmem:[#allocation2 + $0x30] sm:$0xff]
  %v4405 = vld [vmem:[#allocation2 + $0x38] sm:$0xff]
  %v4406 = vld [vmem:[#allocation2 + $0x40] sm:$0xff]
  %v4407 = vld [vmem:[#allocation2 + $0x48] sm:$0xff]
  %v4408 = vld [vmem:[#allocation2 + $0x50] sm:$0xff]
  %v4409 = vld [vmem:[#allocation2 + $0x58] sm:$0xff]
  %4410 = vrot.lane.b32.xlu0 %v4398, 19
  %v4411 = vpop.permute.xlu0 %4410
  %4412 = vrot.lane.b32.xlu0 %v4404, 19
  %v4413 = vpop.permute.xlu0 %4412
  %4414 = vrot.lane.b32.xlu0 %v4399, 19
  %v4415 = vpop.permute.xlu0 %4414
  %4416 = vrot.lane.b32.xlu0 %v4405, 19
  %v4417 = vpop.permute.xlu0 %4416
  %4418 = vrot.lane.b32.xlu0 %v4400, 19
  %v4419 = vpop.permute.xlu0 %4418
  %4420 = vrot.lane.b32.xlu0 %v4406, 19
  %v4421 = vpop.permute.xlu0 %4420
  %4422 = vrot.lane.b32.xlu0 %v4401, 19
  %v4423 = vpop.permute.xlu0 %4422
  %4424 = vrot.lane.b32.xlu0 %v4407, 19
  %v4425 = vpop.permute.xlu0 %4424
  %4426 = vrot.lane.b32.xlu0 %v4402, 19
  %v4427 = vpop.permute.xlu0 %4426
  %4428 = vrot.lane.b32.xlu0 %v4408, 19
  %v4429 = vpop.permute.xlu0 %4428
  %4430 = vrot.lane.b32.xlu0 %v4403, 19
  %v4431 = vpop.permute.xlu0 %4430
  %4432 = vrot.lane.b32.xlu0 %v4409, 19
  %v4433 = vpop.permute.xlu0 %4432
  %v4434 = vsel %vm101, %v4427, %v4431
  %v4435 = vsel %vm101, %v4429, %v4433
  %v4436 = vsel %vm101, %v4423, %v4427
  %v4437 = vsel %vm101, %v4425, %v4429
  %v4438 = vsel %vm101, %v4419, %v4423
  %v4439 = vsel %vm101, %v4421, %v4425
  %v4440 = vsel %vm101, %v4415, %v4419
  %v4441 = vsel %vm101, %v4417, %v4421
  %v4442 = vsel %vm101, %v4411, %v4415
  %v4443 = vsel %vm101, %v4413, %v4417
  %v4444 = vsel %vm101, %v4431, %v4411
  %v4445 = vsel %vm101, %v4433, %v4413
  %4446 = vrot.lane.b32.xlu0 %v4398, 18
  %v4447 = vpop.permute.xlu0 %4446
  %4448 = vrot.lane.b32.xlu0 %v4404, 18
  %v4449 = vpop.permute.xlu0 %4448
  %4450 = vrot.lane.b32.xlu0 %v4399, 18
  %v4451 = vpop.permute.xlu0 %4450
  %4452 = vrot.lane.b32.xlu0 %v4405, 18
  %v4453 = vpop.permute.xlu0 %4452
  %4454 = vrot.lane.b32.xlu0 %v4400, 18
  %v4455 = vpop.permute.xlu0 %4454
  %4456 = vrot.lane.b32.xlu0 %v4406, 18
  %v4457 = vpop.permute.xlu0 %4456
  %4458 = vrot.lane.b32.xlu0 %v4401, 18
  %v4459 = vpop.permute.xlu0 %4458
  %4460 = vrot.lane.b32.xlu0 %v4407, 18
  %v4461 = vpop.permute.xlu0 %4460
  %4462 = vrot.lane.b32.xlu0 %v4402, 18
  %v4463 = vpop.permute.xlu0 %4462
  %4464 = vrot.lane.b32.xlu0 %v4408, 18
  %v4465 = vpop.permute.xlu0 %4464
  %4466 = vrot.lane.b32.xlu0 %v4403, 18
  %v4467 = vpop.permute.xlu0 %4466
  %4468 = vrot.lane.b32.xlu0 %v4409, 18
  %v4469 = vpop.permute.xlu0 %4468
  %v4470 = vsel %vm138, %v4463, %v4467
  %v4471 = vsel %vm138, %v4465, %v4469
  %v4472 = vsel %vm138, %v4459, %v4463
  %v4473 = vsel %vm138, %v4461, %v4465
  %v4474 = vsel %vm138, %v4455, %v4459
  %v4475 = vsel %vm138, %v4457, %v4461
  %v4476 = vsel %vm138, %v4451, %v4455
  %v4477 = vsel %vm138, %v4453, %v4457
  %v4478 = vsel %vm138, %v4447, %v4451
  %v4479 = vsel %vm138, %v4449, %v4453
  %v4480 = vsel %vm138, %v4467, %v4447
  %v4481 = vsel %vm138, %v4469, %v4449
  %4482 = vrot.lane.b32.xlu0 %v4398, 17
  %v4483 = vpop.permute.xlu0 %4482
  %4484 = vrot.lane.b32.xlu0 %v4404, 17
  %v4485 = vpop.permute.xlu0 %4484
  %4486 = vrot.lane.b32.xlu0 %v4399, 17
  %v4487 = vpop.permute.xlu0 %4486
  %4488 = vrot.lane.b32.xlu0 %v4405, 17
  %v4489 = vpop.permute.xlu0 %4488
  %4490 = vrot.lane.b32.xlu0 %v4400, 17
  %v4491 = vpop.permute.xlu0 %4490
  %4492 = vrot.lane.b32.xlu0 %v4406, 17
  %v4493 = vpop.permute.xlu0 %4492
  %4494 = vrot.lane.b32.xlu0 %v4401, 17
  %v4495 = vpop.permute.xlu0 %4494
  %4496 = vrot.lane.b32.xlu0 %v4407, 17
  %v4497 = vpop.permute.xlu0 %4496
  %4498 = vrot.lane.b32.xlu0 %v4402, 17
  %v4499 = vpop.permute.xlu0 %4498
  %4500 = vrot.lane.b32.xlu0 %v4408, 17
  %v4501 = vpop.permute.xlu0 %4500
  %4502 = vrot.lane.b32.xlu0 %v4403, 17
  %v4503 = vpop.permute.xlu0 %4502
  %4504 = vrot.lane.b32.xlu0 %v4409, 17
  %v4505 = vpop.permute.xlu0 %4504
  %v4506 = vsel %vm175, %v4499, %v4503
  %v4507 = vsel %vm175, %v4501, %v4505
  %v4508 = vsel %vm175, %v4495, %v4499
  %v4509 = vsel %vm175, %v4497, %v4501
  %v4510 = vsel %vm175, %v4491, %v4495
  %v4511 = vsel %vm175, %v4493, %v4497
  %v4512 = vsel %vm175, %v4487, %v4491
  %v4513 = vsel %vm175, %v4489, %v4493
  %v4514 = vsel %vm175, %v4483, %v4487
  %v4515 = vsel %vm175, %v4485, %v4489
  %v4516 = vsel %vm175, %v4503, %v4483
  %v4517 = vsel %vm175, %v4505, %v4485
  %4518 = vrot.lane.b32.xlu0 %v4398, 1
  %v4519 = vpop.permute.xlu0 %4518
  %4520 = vrot.lane.b32.xlu0 %v4404, 1
  %v4521 = vpop.permute.xlu0 %4520
  %4522 = vrot.lane.b32.xlu0 %v4399, 1
  %v4523 = vpop.permute.xlu0 %4522
  %4524 = vrot.lane.b32.xlu0 %v4405, 1
  %v4525 = vpop.permute.xlu0 %4524
  %4526 = vrot.lane.b32.xlu0 %v4400, 1
  %v4527 = vpop.permute.xlu0 %4526
  %4528 = vrot.lane.b32.xlu0 %v4406, 1
  %v4529 = vpop.permute.xlu0 %4528
  %4530 = vrot.lane.b32.xlu0 %v4401, 1
  %v4531 = vpop.permute.xlu0 %4530
  %4532 = vrot.lane.b32.xlu0 %v4407, 1
  %v4533 = vpop.permute.xlu0 %4532
  %4534 = vrot.lane.b32.xlu0 %v4402, 1
  %v4535 = vpop.permute.xlu0 %4534
  %4536 = vrot.lane.b32.xlu0 %v4408, 1
  %v4537 = vpop.permute.xlu0 %4536
  %4538 = vrot.lane.b32.xlu0 %v4403, 1
  %v4539 = vpop.permute.xlu0 %4538
  %4540 = vrot.lane.b32.xlu0 %v4409, 1
  %v4541 = vpop.permute.xlu0 %4540
  %v4542 = vsel %vm212, %v4535, %v4539
  %v4543 = vsel %vm212, %v4537, %v4541
  %v4544 = vsel %vm212, %v4531, %v4535
  %v4545 = vsel %vm212, %v4533, %v4537
  %v4546 = vsel %vm212, %v4527, %v4531
  %v4547 = vsel %vm212, %v4529, %v4533
  %v4548 = vsel %vm212, %v4523, %v4527
  %v4549 = vsel %vm212, %v4525, %v4529
  %v4550 = vsel %vm212, %v4519, %v4523
  %v4551 = vsel %vm212, %v4521, %v4525
  %v4552 = vsel %vm212, %v4539, %v4519
  %v4553 = vsel %vm212, %v4541, %v4521
  %4554 = vrot.lane.b32.xlu0 %v4398, 127
  %v4555 = vpop.permute.xlu0 %4554
  %4556 = vrot.lane.b32.xlu0 %v4404, 127
  %v4557 = vpop.permute.xlu0 %4556
  %4558 = vrot.lane.b32.xlu0 %v4399, 127
  %v4559 = vpop.permute.xlu0 %4558
  %4560 = vrot.lane.b32.xlu0 %v4405, 127
  %v4561 = vpop.permute.xlu0 %4560
  %4562 = vrot.lane.b32.xlu0 %v4400, 127
  %v4563 = vpop.permute.xlu0 %4562
  %4564 = vrot.lane.b32.xlu0 %v4406, 127
  %v4565 = vpop.permute.xlu0 %4564
  %4566 = vrot.lane.b32.xlu0 %v4401, 127
  %v4567 = vpop.permute.xlu0 %4566
  %4568 = vrot.lane.b32.xlu0 %v4407, 127
  %v4569 = vpop.permute.xlu0 %4568
  %4570 = vrot.lane.b32.xlu0 %v4402, 127
  %v4571 = vpop.permute.xlu0 %4570
  %4572 = vrot.lane.b32.xlu0 %v4408, 127
  %v4573 = vpop.permute.xlu0 %4572
  %4574 = vrot.lane.b32.xlu0 %v4403, 127
  %v4575 = vpop.permute.xlu0 %4574
  %4576 = vrot.lane.b32.xlu0 %v4409, 127
  %v4577 = vpop.permute.xlu0 %4576
  %v4578 = vsel %vm249, %v4571, %v4575
  %v4579 = vsel %vm249, %v4573, %v4577
  %v4580 = vsel %vm249, %v4567, %v4571
  %v4581 = vsel %vm249, %v4569, %v4573
  %v4582 = vsel %vm249, %v4563, %v4567
  %v4583 = vsel %vm249, %v4565, %v4569
  %v4584 = vsel %vm249, %v4559, %v4563
  %v4585 = vsel %vm249, %v4561, %v4565
  %v4586 = vsel %vm249, %v4555, %v4559
  %v4587 = vsel %vm249, %v4557, %v4561
  %v4588 = vsel %vm249, %v4575, %v4555
  %v4589 = vsel %vm249, %v4577, %v4557
  %s4590 = scalar_lea.vmem %s2, 16
  %v4591 = vld [vmem:[%s4590] sm:$0xff]
  %s4592 = scalar_lea.vmem %s3, 16
  %v4593 = vld [vmem:[%s4592] sm:$0xff]
  %4595 = vset.pattern.permute.xlu0 0
  %4596 = vperm.xlu0 %4595, %v4593
  %v4597 = vpop.permute.xlu0 %4596
  %v4600 = vsel %vm269, %v4591, 0
  %4602 = vmatpush.msra.mxu0 0.0
  %4603 = vmatpush.msra.mxu0 0.0
  %4604 = vmatpush.msra.mxu0 0.0
  %4605 = vmatpush.msra.mxu0 0.0
  %v4606 = vand.u32 %v4587, 4294901760
  %4607 = vmatpush.msra.mxu0 %v4606
  %v4608 = vand.u32 %v4586, 4294901760
  %4609 = vmatpush.msra.mxu0 %v4608
  %v4610 = vand.u32 %v4404, 4294901760
  %4611 = vmatpush.msra.mxu0 %v4610
  %v4612 = vand.u32 %v4398, 4294901760
  %4613 = vmatpush.msra.mxu0 %v4612
  %v4614 = vand.u32 %v4553, 4294901760
  %4615 = vmatpush.msra.mxu0 %v4614
  %v4616 = vand.u32 %v4552, 4294901760
  %4617 = vmatpush.msra.mxu0 %v4616
  %v4618 = vand.u32 %v4517, 4294901760
  %4619 = vmatpush.msra.mxu0 %v4618
  %v4620 = vand.u32 %v4516, 4294901760
  %4621 = vmatpush.msra.mxu0 %v4620
  %v4622 = vand.u32 %v4481, 4294901760
  %4623 = vmatpush.msra.mxu0 %v4622
  %v4624 = vand.u32 %v4480, 4294901760
  %4625 = vmatpush.msra.mxu0 %v4624
  %v4626 = vand.u32 %v4445, 4294901760
  %4627 = vmatpush.msra.mxu0 %v4626
  %v4628 = vand.u32 %v4444, 4294901760
  %4629 = vmatpush.msra.mxu0 %v4628
  %v4630 = vand.u32 %v4600, 4294901760
  %v4631 = vsub.f32 %v4600, %v4630
  %v4632 = vand.u32 %v4631, 4294901760
  %v4633 = vsub.f32 %v4631, %v4632
  %v4634 = vand.u32 %v4633, 4294901760
  %4635 = vmatmul.f32.gmra.mxu0 %v4634
  %v4636 = vpop.f32.mrf.mxu0
  %v4637 = vadd.f32 %v4597, %v4636
  %4638 = vdwg.mxu0
  %4639 = vmatpush.msra.mxu0 0.0
  %4640 = vmatpush.msra.mxu0 0.0
  %4641 = vmatpush.msra.mxu0 0.0
  %4642 = vmatpush.msra.mxu0 0.0
  %v4643 = vand.u32 %v4587, 4294901760
  %v4644 = vsub.f32 %v4587, %v4643
  %v4645 = vand.u32 %v4644, 4294901760
  %v4646 = vsub.f32 %v4644, %v4645
  %v4647 = vand.u32 %v4646, 4294901760
  %4648 = vmatpush.msra.mxu0 %v4647
  %v4649 = vand.u32 %v4586, 4294901760
  %v4650 = vsub.f32 %v4586, %v4649
  %v4651 = vand.u32 %v4650, 4294901760
  %v4652 = vsub.f32 %v4650, %v4651
  %v4653 = vand.u32 %v4652, 4294901760
  %4654 = vmatpush.msra.mxu0 %v4653
  %v4655 = vand.u32 %v4404, 4294901760
  %v4656 = vsub.f32 %v4404, %v4655
  %v4657 = vand.u32 %v4656, 4294901760
  %v4658 = vsub.f32 %v4656, %v4657
  %v4659 = vand.u32 %v4658, 4294901760
  %4660 = vmatpush.msra.mxu0 %v4659
  %v4661 = vand.u32 %v4398, 4294901760
  %v4662 = vsub.f32 %v4398, %v4661
  %v4663 = vand.u32 %v4662, 4294901760
  %v4664 = vsub.f32 %v4662, %v4663
  %v4665 = vand.u32 %v4664, 4294901760
  %4666 = vmatpush.msra.mxu0 %v4665
  %v4667 = vand.u32 %v4553, 4294901760
  %v4668 = vsub.f32 %v4553, %v4667
  %v4669 = vand.u32 %v4668, 4294901760
  %v4670 = vsub.f32 %v4668, %v4669
  %v4671 = vand.u32 %v4670, 4294901760
  %4672 = vmatpush.msra.mxu0 %v4671
  %v4673 = vand.u32 %v4552, 4294901760
  %v4674 = vsub.f32 %v4552, %v4673
  %v4675 = vand.u32 %v4674, 4294901760
  %v4676 = vsub.f32 %v4674, %v4675
  %v4677 = vand.u32 %v4676, 4294901760
  %4678 = vmatpush.msra.mxu0 %v4677
  %v4679 = vand.u32 %v4517, 4294901760
  %v4680 = vsub.f32 %v4517, %v4679
  %v4681 = vand.u32 %v4680, 4294901760
  %v4682 = vsub.f32 %v4680, %v4681
  %v4683 = vand.u32 %v4682, 4294901760
  %4684 = vmatpush.msra.mxu0 %v4683
  %v4685 = vand.u32 %v4516, 4294901760
  %v4686 = vsub.f32 %v4516, %v4685
  %v4687 = vand.u32 %v4686, 4294901760
  %v4688 = vsub.f32 %v4686, %v4687
  %v4689 = vand.u32 %v4688, 4294901760
  %4690 = vmatpush.msra.mxu0 %v4689
  %v4691 = vand.u32 %v4481, 4294901760
  %v4692 = vsub.f32 %v4481, %v4691
  %v4693 = vand.u32 %v4692, 4294901760
  %v4694 = vsub.f32 %v4692, %v4693
  %v4695 = vand.u32 %v4694, 4294901760
  %4696 = vmatpush.msra.mxu0 %v4695
  %v4697 = vand.u32 %v4480, 4294901760
  %v4698 = vsub.f32 %v4480, %v4697
  %v4699 = vand.u32 %v4698, 4294901760
  %v4700 = vsub.f32 %v4698, %v4699
  %v4701 = vand.u32 %v4700, 4294901760
  %4702 = vmatpush.msra.mxu0 %v4701
  %v4703 = vand.u32 %v4445, 4294901760
  %v4704 = vsub.f32 %v4445, %v4703
  %v4705 = vand.u32 %v4704, 4294901760
  %v4706 = vsub.f32 %v4704, %v4705
  %v4707 = vand.u32 %v4706, 4294901760
  %4708 = vmatpush.msra.mxu0 %v4707
  %v4709 = vand.u32 %v4444, 4294901760
  %v4710 = vsub.f32 %v4444, %v4709
  %v4711 = vand.u32 %v4710, 4294901760
  %v4712 = vsub.f32 %v4710, %v4711
  %v4713 = vand.u32 %v4712, 4294901760
  %4714 = vmatpush.msra.mxu0 %v4713
  %v4715 = vand.u32 %v4600, 4294901760
  %4716 = vmatmul.f32.gmra.mxu0 %v4715
  %v4717 = vpop.f32.mrf.mxu0
  %v4718 = vadd.f32 %v4637, %v4717
  %4719 = vdwg.mxu0
  %4720 = vmatpush.msra.mxu0 0.0
  %4721 = vmatpush.msra.mxu0 0.0
  %4722 = vmatpush.msra.mxu0 0.0
  %4723 = vmatpush.msra.mxu0 0.0
  %v4724 = vand.u32 %v4587, 4294901760
  %v4725 = vsub.f32 %v4587, %v4724
  %4726 = vmatpush.msra.mxu0 %v4725
  %v4727 = vand.u32 %v4586, 4294901760
  %v4728 = vsub.f32 %v4586, %v4727
  %4729 = vmatpush.msra.mxu0 %v4728
  %v4730 = vand.u32 %v4404, 4294901760
  %v4731 = vsub.f32 %v4404, %v4730
  %4732 = vmatpush.msra.mxu0 %v4731
  %v4733 = vand.u32 %v4398, 4294901760
  %v4734 = vsub.f32 %v4398, %v4733
  %4735 = vmatpush.msra.mxu0 %v4734
  %v4736 = vand.u32 %v4553, 4294901760
  %v4737 = vsub.f32 %v4553, %v4736
  %4738 = vmatpush.msra.mxu0 %v4737
  %v4739 = vand.u32 %v4552, 4294901760
  %v4740 = vsub.f32 %v4552, %v4739
  %4741 = vmatpush.msra.mxu0 %v4740
  %v4742 = vand.u32 %v4517, 4294901760
  %v4743 = vsub.f32 %v4517, %v4742
  %4744 = vmatpush.msra.mxu0 %v4743
  %v4745 = vand.u32 %v4516, 4294901760
  %v4746 = vsub.f32 %v4516, %v4745
  %4747 = vmatpush.msra.mxu0 %v4746
  %v4748 = vand.u32 %v4481, 4294901760
  %v4749 = vsub.f32 %v4481, %v4748
  %4750 = vmatpush.msra.mxu0 %v4749
  %v4751 = vand.u32 %v4480, 4294901760
  %v4752 = vsub.f32 %v4480, %v4751
  %4753 = vmatpush.msra.mxu0 %v4752
  %v4754 = vand.u32 %v4445, 4294901760
  %v4755 = vsub.f32 %v4445, %v4754
  %4756 = vmatpush.msra.mxu0 %v4755
  %v4757 = vand.u32 %v4444, 4294901760
  %v4758 = vsub.f32 %v4444, %v4757
  %4759 = vmatpush.msra.mxu0 %v4758
  %v4760 = vand.u32 %v4600, 4294901760
  %v4761 = vsub.f32 %v4600, %v4760
  %4762 = vmatmul.f32.gmra.mxu0 %v4761
  %v4763 = vpop.f32.mrf.mxu0
  %v4764 = vadd.f32 %v4718, %v4763
  %4765 = vdwg.mxu0
  %4766 = vmatpush.msra.mxu0 0.0
  %4767 = vmatpush.msra.mxu0 0.0
  %4768 = vmatpush.msra.mxu0 0.0
  %4769 = vmatpush.msra.mxu0 0.0
  %v4770 = vand.u32 %v4587, 4294901760
  %4771 = vmatpush.msra.mxu0 %v4770
  %v4772 = vand.u32 %v4586, 4294901760
  %4773 = vmatpush.msra.mxu0 %v4772
  %v4774 = vand.u32 %v4404, 4294901760
  %4775 = vmatpush.msra.mxu0 %v4774
  %v4776 = vand.u32 %v4398, 4294901760
  %4777 = vmatpush.msra.mxu0 %v4776
  %v4778 = vand.u32 %v4553, 4294901760
  %4779 = vmatpush.msra.mxu0 %v4778
  %v4780 = vand.u32 %v4552, 4294901760
  %4781 = vmatpush.msra.mxu0 %v4780
  %v4782 = vand.u32 %v4517, 4294901760
  %4783 = vmatpush.msra.mxu0 %v4782
  %v4784 = vand.u32 %v4516, 4294901760
  %4785 = vmatpush.msra.mxu0 %v4784
  %v4786 = vand.u32 %v4481, 4294901760
  %4787 = vmatpush.msra.mxu0 %v4786
  %v4788 = vand.u32 %v4480, 4294901760
  %4789 = vmatpush.msra.mxu0 %v4788
  %v4790 = vand.u32 %v4445, 4294901760
  %4791 = vmatpush.msra.mxu0 %v4790
  %v4792 = vand.u32 %v4444, 4294901760
  %4793 = vmatpush.msra.mxu0 %v4792
  %v4794 = vand.u32 %v4600, 4294901760
  %v4795 = vsub.f32 %v4600, %v4794
  %v4796 = vand.u32 %v4795, 4294901760
  %4797 = vmatmul.f32.gmra.mxu0 %v4796
  %v4798 = vpop.f32.mrf.mxu0
  %v4799 = vadd.f32 %v4764, %v4798
  %4800 = vdwg.mxu0
  %4801 = vmatpush.msra.mxu0 0.0
  %4802 = vmatpush.msra.mxu0 0.0
  %4803 = vmatpush.msra.mxu0 0.0
  %4804 = vmatpush.msra.mxu0 0.0
  %v4805 = vand.u32 %v4587, 4294901760
  %v4806 = vsub.f32 %v4587, %v4805
  %v4807 = vand.u32 %v4806, 4294901760
  %4808 = vmatpush.msra.mxu0 %v4807
  %v4809 = vand.u32 %v4586, 4294901760
  %v4810 = vsub.f32 %v4586, %v4809
  %v4811 = vand.u32 %v4810, 4294901760
  %4812 = vmatpush.msra.mxu0 %v4811
  %v4813 = vand.u32 %v4404, 4294901760
  %v4814 = vsub.f32 %v4404, %v4813
  %v4815 = vand.u32 %v4814, 4294901760
  %4816 = vmatpush.msra.mxu0 %v4815
  %v4817 = vand.u32 %v4398, 4294901760
  %v4818 = vsub.f32 %v4398, %v4817
  %v4819 = vand.u32 %v4818, 4294901760
  %4820 = vmatpush.msra.mxu0 %v4819
  %v4821 = vand.u32 %v4553, 4294901760
  %v4822 = vsub.f32 %v4553, %v4821
  %v4823 = vand.u32 %v4822, 4294901760
  %4824 = vmatpush.msra.mxu0 %v4823
  %v4825 = vand.u32 %v4552, 4294901760
  %v4826 = vsub.f32 %v4552, %v4825
  %v4827 = vand.u32 %v4826, 4294901760
  %4828 = vmatpush.msra.mxu0 %v4827
  %v4829 = vand.u32 %v4517, 4294901760
  %v4830 = vsub.f32 %v4517, %v4829
  %v4831 = vand.u32 %v4830, 4294901760
  %4832 = vmatpush.msra.mxu0 %v4831
  %v4833 = vand.u32 %v4516, 4294901760
  %v4834 = vsub.f32 %v4516, %v4833
  %v4835 = vand.u32 %v4834, 4294901760
  %4836 = vmatpush.msra.mxu0 %v4835
  %v4837 = vand.u32 %v4481, 4294901760
  %v4838 = vsub.f32 %v4481, %v4837
  %v4839 = vand.u32 %v4838, 4294901760
  %4840 = vmatpush.msra.mxu0 %v4839
  %v4841 = vand.u32 %v4480, 4294901760
  %v4842 = vsub.f32 %v4480, %v4841
  %v4843 = vand.u32 %v4842, 4294901760
  %4844 = vmatpush.msra.mxu0 %v4843
  %v4845 = vand.u32 %v4445, 4294901760
  %v4846 = vsub.f32 %v4445, %v4845
  %v4847 = vand.u32 %v4846, 4294901760
  %4848 = vmatpush.msra.mxu0 %v4847
  %v4849 = vand.u32 %v4444, 4294901760
  %v4850 = vsub.f32 %v4444, %v4849
  %v4851 = vand.u32 %v4850, 4294901760
  %4852 = vmatpush.msra.mxu0 %v4851
  %v4853 = vand.u32 %v4600, 4294901760
  %4854 = vmatmul.f32.gmra.mxu0 %v4853
  %v4855 = vpop.f32.mrf.mxu0
  %v4856 = vadd.f32 %v4799, %v4855
  %4857 = vdwg.mxu0
  %4858 = vmatpush.msra.mxu0 0.0
  %4859 = vmatpush.msra.mxu0 0.0
  %4860 = vmatpush.msra.mxu0 0.0
  %4861 = vmatpush.msra.mxu0 0.0
  %v4862 = vand.u32 %v4587, 4294901760
  %4863 = vmatpush.msra.mxu0 %v4862
  %v4864 = vand.u32 %v4586, 4294901760
  %4865 = vmatpush.msra.mxu0 %v4864
  %v4866 = vand.u32 %v4404, 4294901760
  %4867 = vmatpush.msra.mxu0 %v4866
  %v4868 = vand.u32 %v4398, 4294901760
  %4869 = vmatpush.msra.mxu0 %v4868
  %v4870 = vand.u32 %v4553, 4294901760
  %4871 = vmatpush.msra.mxu0 %v4870
  %v4872 = vand.u32 %v4552, 4294901760
  %4873 = vmatpush.msra.mxu0 %v4872
  %v4874 = vand.u32 %v4517, 4294901760
  %4875 = vmatpush.msra.mxu0 %v4874
  %v4876 = vand.u32 %v4516, 4294901760
  %4877 = vmatpush.msra.mxu0 %v4876
  %v4878 = vand.u32 %v4481, 4294901760
  %4879 = vmatpush.msra.mxu0 %v4878
  %v4880 = vand.u32 %v4480, 4294901760
  %4881 = vmatpush.msra.mxu0 %v4880
  %v4882 = vand.u32 %v4445, 4294901760
  %4883 = vmatpush.msra.mxu0 %v4882
  %v4884 = vand.u32 %v4444, 4294901760
  %4885 = vmatpush.msra.mxu0 %v4884
  %v4886 = vand.u32 %v4600, 4294901760
  %4887 = vmatmul.f32.gmra.mxu0 %v4886
  %v4888 = vpop.f32.mrf.mxu0
  %v4889 = vadd.f32 %v4856, %v4888
  %4890 = vdwg.mxu0
  %4891 = vmatpush.msra.mxu0 0.0
  %4892 = vmatpush.msra.mxu0 0.0
  %4893 = vmatpush.msra.mxu0 0.0
  %4894 = vmatpush.msra.mxu0 0.0
  %v4895 = vand.u32 %v4585, 4294901760
  %4896 = vmatpush.msra.mxu0 %v4895
  %v4897 = vand.u32 %v4584, 4294901760
  %4898 = vmatpush.msra.mxu0 %v4897
  %v4899 = vand.u32 %v4405, 4294901760
  %4900 = vmatpush.msra.mxu0 %v4899
  %v4901 = vand.u32 %v4399, 4294901760
  %4902 = vmatpush.msra.mxu0 %v4901
  %v4903 = vand.u32 %v4551, 4294901760
  %4904 = vmatpush.msra.mxu0 %v4903
  %v4905 = vand.u32 %v4550, 4294901760
  %4906 = vmatpush.msra.mxu0 %v4905
  %v4907 = vand.u32 %v4515, 4294901760
  %4908 = vmatpush.msra.mxu0 %v4907
  %v4909 = vand.u32 %v4514, 4294901760
  %4910 = vmatpush.msra.mxu0 %v4909
  %v4911 = vand.u32 %v4479, 4294901760
  %4912 = vmatpush.msra.mxu0 %v4911
  %v4913 = vand.u32 %v4478, 4294901760
  %4914 = vmatpush.msra.mxu0 %v4913
  %v4915 = vand.u32 %v4443, 4294901760
  %4916 = vmatpush.msra.mxu0 %v4915
  %v4917 = vand.u32 %v4442, 4294901760
  %4918 = vmatpush.msra.mxu0 %v4917
  %v4919 = vand.u32 %v4600, 4294901760
  %v4920 = vsub.f32 %v4600, %v4919
  %v4921 = vand.u32 %v4920, 4294901760
  %v4922 = vsub.f32 %v4920, %v4921
  %v4923 = vand.u32 %v4922, 4294901760
  %4924 = vmatmul.f32.gmra.mxu0 %v4923
  %v4925 = vpop.f32.mrf.mxu0
  %v4926 = vadd.f32 %v4597, %v4925
  %4927 = vdwg.mxu0
  %4928 = vmatpush.msra.mxu0 0.0
  %4929 = vmatpush.msra.mxu0 0.0
  %4930 = vmatpush.msra.mxu0 0.0
  %4931 = vmatpush.msra.mxu0 0.0
  %v4932 = vand.u32 %v4585, 4294901760
  %v4933 = vsub.f32 %v4585, %v4932
  %v4934 = vand.u32 %v4933, 4294901760
  %v4935 = vsub.f32 %v4933, %v4934
  %v4936 = vand.u32 %v4935, 4294901760
  %4937 = vmatpush.msra.mxu0 %v4936
  %v4938 = vand.u32 %v4584, 4294901760
  %v4939 = vsub.f32 %v4584, %v4938
  %v4940 = vand.u32 %v4939, 4294901760
  %v4941 = vsub.f32 %v4939, %v4940
  %v4942 = vand.u32 %v4941, 4294901760
  %4943 = vmatpush.msra.mxu0 %v4942
  %v4944 = vand.u32 %v4405, 4294901760
  %v4945 = vsub.f32 %v4405, %v4944
  %v4946 = vand.u32 %v4945, 4294901760
  %v4947 = vsub.f32 %v4945, %v4946
  %v4948 = vand.u32 %v4947, 4294901760
  %4949 = vmatpush.msra.mxu0 %v4948
  %v4950 = vand.u32 %v4399, 4294901760
  %v4951 = vsub.f32 %v4399, %v4950
  %v4952 = vand.u32 %v4951, 4294901760
  %v4953 = vsub.f32 %v4951, %v4952
  %v4954 = vand.u32 %v4953, 4294901760
  %4955 = vmatpush.msra.mxu0 %v4954
  %v4956 = vand.u32 %v4551, 4294901760
  %v4957 = vsub.f32 %v4551, %v4956
  %v4958 = vand.u32 %v4957, 4294901760
  %v4959 = vsub.f32 %v4957, %v4958
  %v4960 = vand.u32 %v4959, 4294901760
  %4961 = vmatpush.msra.mxu0 %v4960
  %v4962 = vand.u32 %v4550, 4294901760
  %v4963 = vsub.f32 %v4550, %v4962
  %v4964 = vand.u32 %v4963, 4294901760
  %v4965 = vsub.f32 %v4963, %v4964
  %v4966 = vand.u32 %v4965, 4294901760
  %4967 = vmatpush.msra.mxu0 %v4966
  %v4968 = vand.u32 %v4515, 4294901760
  %v4969 = vsub.f32 %v4515, %v4968
  %v4970 = vand.u32 %v4969, 4294901760
  %v4971 = vsub.f32 %v4969, %v4970
  %v4972 = vand.u32 %v4971, 4294901760
  %4973 = vmatpush.msra.mxu0 %v4972
  %v4974 = vand.u32 %v4514, 4294901760
  %v4975 = vsub.f32 %v4514, %v4974
  %v4976 = vand.u32 %v4975, 4294901760
  %v4977 = vsub.f32 %v4975, %v4976
  %v4978 = vand.u32 %v4977, 4294901760
  %4979 = vmatpush.msra.mxu0 %v4978
  %v4980 = vand.u32 %v4479, 4294901760
  %v4981 = vsub.f32 %v4479, %v4980
  %v4982 = vand.u32 %v4981, 4294901760
  %v4983 = vsub.f32 %v4981, %v4982
  %v4984 = vand.u32 %v4983, 4294901760
  %4985 = vmatpush.msra.mxu0 %v4984
  %v4986 = vand.u32 %v4478, 4294901760
  %v4987 = vsub.f32 %v4478, %v4986
  %v4988 = vand.u32 %v4987, 4294901760
  %v4989 = vsub.f32 %v4987, %v4988
  %v4990 = vand.u32 %v4989, 4294901760
  %4991 = vmatpush.msra.mxu0 %v4990
  %v4992 = vand.u32 %v4443, 4294901760
  %v4993 = vsub.f32 %v4443, %v4992
  %v4994 = vand.u32 %v4993, 4294901760
  %v4995 = vsub.f32 %v4993, %v4994
  %v4996 = vand.u32 %v4995, 4294901760
  %4997 = vmatpush.msra.mxu0 %v4996
  %v4998 = vand.u32 %v4442, 4294901760
  %v4999 = vsub.f32 %v4442, %v4998
  %v5000 = vand.u32 %v4999, 4294901760
  %v5001 = vsub.f32 %v4999, %v5000
  %v5002 = vand.u32 %v5001, 4294901760
  %5003 = vmatpush.msra.mxu0 %v5002
  %v5004 = vand.u32 %v4600, 4294901760
  %5005 = vmatmul.f32.gmra.mxu0 %v5004
  %v5006 = vpop.f32.mrf.mxu0
  %v5007 = vadd.f32 %v4926, %v5006
  %5008 = vdwg.mxu0
  %5009 = vmatpush.msra.mxu0 0.0
  %5010 = vmatpush.msra.mxu0 0.0
  %5011 = vmatpush.msra.mxu0 0.0
  %5012 = vmatpush.msra.mxu0 0.0
  %v5013 = vand.u32 %v4585, 4294901760
  %v5014 = vsub.f32 %v4585, %v5013
  %5015 = vmatpush.msra.mxu0 %v5014
  %v5016 = vand.u32 %v4584, 4294901760
  %v5017 = vsub.f32 %v4584, %v5016
  %5018 = vmatpush.msra.mxu0 %v5017
  %v5019 = vand.u32 %v4405, 4294901760
  %v5020 = vsub.f32 %v4405, %v5019
  %5021 = vmatpush.msra.mxu0 %v5020
  %v5022 = vand.u32 %v4399, 4294901760
  %v5023 = vsub.f32 %v4399, %v5022
  %5024 = vmatpush.msra.mxu0 %v5023
  %v5025 = vand.u32 %v4551, 4294901760
  %v5026 = vsub.f32 %v4551, %v5025
  %5027 = vmatpush.msra.mxu0 %v5026
  %v5028 = vand.u32 %v4550, 4294901760
  %v5029 = vsub.f32 %v4550, %v5028
  %5030 = vmatpush.msra.mxu0 %v5029
  %v5031 = vand.u32 %v4515, 4294901760
  %v5032 = vsub.f32 %v4515, %v5031
  %5033 = vmatpush.msra.mxu0 %v5032
  %v5034 = vand.u32 %v4514, 4294901760
  %v5035 = vsub.f32 %v4514, %v5034
  %5036 = vmatpush.msra.mxu0 %v5035
  %v5037 = vand.u32 %v4479, 4294901760
  %v5038 = vsub.f32 %v4479, %v5037
  %5039 = vmatpush.msra.mxu0 %v5038
  %v5040 = vand.u32 %v4478, 4294901760
  %v5041 = vsub.f32 %v4478, %v5040
  %5042 = vmatpush.msra.mxu0 %v5041
  %v5043 = vand.u32 %v4443, 4294901760
  %v5044 = vsub.f32 %v4443, %v5043
  %5045 = vmatpush.msra.mxu0 %v5044
  %v5046 = vand.u32 %v4442, 4294901760
  %v5047 = vsub.f32 %v4442, %v5046
  %5048 = vmatpush.msra.mxu0 %v5047
  %v5049 = vand.u32 %v4600, 4294901760
  %v5050 = vsub.f32 %v4600, %v5049
  %5051 = vmatmul.f32.gmra.mxu0 %v5050
  %v5052 = vpop.f32.mrf.mxu0
  %v5053 = vadd.f32 %v5007, %v5052
  %5054 = vdwg.mxu0
  %5055 = vmatpush.msra.mxu0 0.0
  %5056 = vmatpush.msra.mxu0 0.0
  %5057 = vmatpush.msra.mxu0 0.0
  %5058 = vmatpush.msra.mxu0 0.0
  %v5059 = vand.u32 %v4585, 4294901760
  %5060 = vmatpush.msra.mxu0 %v5059
  %v5061 = vand.u32 %v4584, 4294901760
  %5062 = vmatpush.msra.mxu0 %v5061
  %v5063 = vand.u32 %v4405, 4294901760
  %5064 = vmatpush.msra.mxu0 %v5063
  %v5065 = vand.u32 %v4399, 4294901760
  %5066 = vmatpush.msra.mxu0 %v5065
  %v5067 = vand.u32 %v4551, 4294901760
  %5068 = vmatpush.msra.mxu0 %v5067
  %v5069 = vand.u32 %v4550, 4294901760
  %5070 = vmatpush.msra.mxu0 %v5069
  %v5071 = vand.u32 %v4515, 4294901760
  %5072 = vmatpush.msra.mxu0 %v5071
  %v5073 = vand.u32 %v4514, 4294901760
  %5074 = vmatpush.msra.mxu0 %v5073
  %v5075 = vand.u32 %v4479, 4294901760
  %5076 = vmatpush.msra.mxu0 %v5075
  %v5077 = vand.u32 %v4478, 4294901760
  %5078 = vmatpush.msra.mxu0 %v5077
  %v5079 = vand.u32 %v4443, 4294901760
  %5080 = vmatpush.msra.mxu0 %v5079
  %v5081 = vand.u32 %v4442, 4294901760
  %5082 = vmatpush.msra.mxu0 %v5081
  %v5083 = vand.u32 %v4600, 4294901760
  %v5084 = vsub.f32 %v4600, %v5083
  %v5085 = vand.u32 %v5084, 4294901760
  %5086 = vmatmul.f32.gmra.mxu0 %v5085
  %v5087 = vpop.f32.mrf.mxu0
  %v5088 = vadd.f32 %v5053, %v5087
  %5089 = vdwg.mxu0
  %5090 = vmatpush.msra.mxu0 0.0
  %5091 = vmatpush.msra.mxu0 0.0
  %5092 = vmatpush.msra.mxu0 0.0
  %5093 = vmatpush.msra.mxu0 0.0
  %v5094 = vand.u32 %v4585, 4294901760
  %v5095 = vsub.f32 %v4585, %v5094
  %v5096 = vand.u32 %v5095, 4294901760
  %5097 = vmatpush.msra.mxu0 %v5096
  %v5098 = vand.u32 %v4584, 4294901760
  %v5099 = vsub.f32 %v4584, %v5098
  %v5100 = vand.u32 %v5099, 4294901760
  %5101 = vmatpush.msra.mxu0 %v5100
  %v5102 = vand.u32 %v4405, 4294901760
  %v5103 = vsub.f32 %v4405, %v5102
  %v5104 = vand.u32 %v5103, 4294901760
  %5105 = vmatpush.msra.mxu0 %v5104
  %v5106 = vand.u32 %v4399, 4294901760
  %v5107 = vsub.f32 %v4399, %v5106
  %v5108 = vand.u32 %v5107, 4294901760
  %5109 = vmatpush.msra.mxu0 %v5108
  %v5110 = vand.u32 %v4551, 4294901760
  %v5111 = vsub.f32 %v4551, %v5110
  %v5112 = vand.u32 %v5111, 4294901760
  %5113 = vmatpush.msra.mxu0 %v5112
  %v5114 = vand.u32 %v4550, 4294901760
  %v5115 = vsub.f32 %v4550, %v5114
  %v5116 = vand.u32 %v5115, 4294901760
  %5117 = vmatpush.msra.mxu0 %v5116
  %v5118 = vand.u32 %v4515, 4294901760
  %v5119 = vsub.f32 %v4515, %v5118
  %v5120 = vand.u32 %v5119, 4294901760
  %5121 = vmatpush.msra.mxu0 %v5120
  %v5122 = vand.u32 %v4514, 4294901760
  %v5123 = vsub.f32 %v4514, %v5122
  %v5124 = vand.u32 %v5123, 4294901760
  %5125 = vmatpush.msra.mxu0 %v5124
  %v5126 = vand.u32 %v4479, 4294901760
  %v5127 = vsub.f32 %v4479, %v5126
  %v5128 = vand.u32 %v5127, 4294901760
  %5129 = vmatpush.msra.mxu0 %v5128
  %v5130 = vand.u32 %v4478, 4294901760
  %v5131 = vsub.f32 %v4478, %v5130
  %v5132 = vand.u32 %v5131, 4294901760
  %5133 = vmatpush.msra.mxu0 %v5132
  %v5134 = vand.u32 %v4443, 4294901760
  %v5135 = vsub.f32 %v4443, %v5134
  %v5136 = vand.u32 %v5135, 4294901760
  %5137 = vmatpush.msra.mxu0 %v5136
  %v5138 = vand.u32 %v4442, 4294901760
  %v5139 = vsub.f32 %v4442, %v5138
  %v5140 = vand.u32 %v5139, 4294901760
  %5141 = vmatpush.msra.mxu0 %v5140
  %v5142 = vand.u32 %v4600, 4294901760
  %5143 = vmatmul.f32.gmra.mxu0 %v5142
  %v5144 = vpop.f32.mrf.mxu0
  %v5145 = vadd.f32 %v5088, %v5144
  %5146 = vdwg.mxu0
  %5147 = vmatpush.msra.mxu0 0.0
  %5148 = vmatpush.msra.mxu0 0.0
  %5149 = vmatpush.msra.mxu0 0.0
  %5150 = vmatpush.msra.mxu0 0.0
  %v5151 = vand.u32 %v4585, 4294901760
  %5152 = vmatpush.msra.mxu0 %v5151
  %v5153 = vand.u32 %v4584, 4294901760
  %5154 = vmatpush.msra.mxu0 %v5153
  %v5155 = vand.u32 %v4405, 4294901760
  %5156 = vmatpush.msra.mxu0 %v5155
  %v5157 = vand.u32 %v4399, 4294901760
  %5158 = vmatpush.msra.mxu0 %v5157
  %v5159 = vand.u32 %v4551, 4294901760
  %5160 = vmatpush.msra.mxu0 %v5159
  %v5161 = vand.u32 %v4550, 4294901760
  %5162 = vmatpush.msra.mxu0 %v5161
  %v5163 = vand.u32 %v4515, 4294901760
  %5164 = vmatpush.msra.mxu0 %v5163
  %v5165 = vand.u32 %v4514, 4294901760
  %5166 = vmatpush.msra.mxu0 %v5165
  %v5167 = vand.u32 %v4479, 4294901760
  %5168 = vmatpush.msra.mxu0 %v5167
  %v5169 = vand.u32 %v4478, 4294901760
  %5170 = vmatpush.msra.mxu0 %v5169
  %v5171 = vand.u32 %v4443, 4294901760
  %5172 = vmatpush.msra.mxu0 %v5171
  %v5173 = vand.u32 %v4442, 4294901760
  %5174 = vmatpush.msra.mxu0 %v5173
  %v5175 = vand.u32 %v4600, 4294901760
  %5176 = vmatmul.f32.gmra.mxu0 %v5175
  %v5177 = vpop.f32.mrf.mxu0
  %v5178 = vadd.f32 %v5145, %v5177
  %5179 = vdwg.mxu0
  %5180 = vmatpush.msra.mxu0 0.0
  %5181 = vmatpush.msra.mxu0 0.0
  %5182 = vmatpush.msra.mxu0 0.0
  %5183 = vmatpush.msra.mxu0 0.0
  %v5184 = vand.u32 %v4583, 4294901760
  %5185 = vmatpush.msra.mxu0 %v5184
  %v5186 = vand.u32 %v4582, 4294901760
  %5187 = vmatpush.msra.mxu0 %v5186
  %v5188 = vand.u32 %v4406, 4294901760
  %5189 = vmatpush.msra.mxu0 %v5188
  %v5190 = vand.u32 %v4400, 4294901760
  %5191 = vmatpush.msra.mxu0 %v5190
  %v5192 = vand.u32 %v4549, 4294901760
  %5193 = vmatpush.msra.mxu0 %v5192
  %v5194 = vand.u32 %v4548, 4294901760
  %5195 = vmatpush.msra.mxu0 %v5194
  %v5196 = vand.u32 %v4513, 4294901760
  %5197 = vmatpush.msra.mxu0 %v5196
  %v5198 = vand.u32 %v4512, 4294901760
  %5199 = vmatpush.msra.mxu0 %v5198
  %v5200 = vand.u32 %v4477, 4294901760
  %5201 = vmatpush.msra.mxu0 %v5200
  %v5202 = vand.u32 %v4476, 4294901760
  %5203 = vmatpush.msra.mxu0 %v5202
  %v5204 = vand.u32 %v4441, 4294901760
  %5205 = vmatpush.msra.mxu0 %v5204
  %v5206 = vand.u32 %v4440, 4294901760
  %5207 = vmatpush.msra.mxu0 %v5206
  %v5208 = vand.u32 %v4600, 4294901760
  %v5209 = vsub.f32 %v4600, %v5208
  %v5210 = vand.u32 %v5209, 4294901760
  %v5211 = vsub.f32 %v5209, %v5210
  %v5212 = vand.u32 %v5211, 4294901760
  %5213 = vmatmul.f32.gmra.mxu0 %v5212
  %v5214 = vpop.f32.mrf.mxu0
  %v5215 = vadd.f32 %v4597, %v5214
  %5216 = vdwg.mxu0
  %5217 = vmatpush.msra.mxu0 0.0
  %5218 = vmatpush.msra.mxu0 0.0
  %5219 = vmatpush.msra.mxu0 0.0
  %5220 = vmatpush.msra.mxu0 0.0
  %v5221 = vand.u32 %v4583, 4294901760
  %v5222 = vsub.f32 %v4583, %v5221
  %v5223 = vand.u32 %v5222, 4294901760
  %v5224 = vsub.f32 %v5222, %v5223
  %v5225 = vand.u32 %v5224, 4294901760
  %5226 = vmatpush.msra.mxu0 %v5225
  %v5227 = vand.u32 %v4582, 4294901760
  %v5228 = vsub.f32 %v4582, %v5227
  %v5229 = vand.u32 %v5228, 4294901760
  %v5230 = vsub.f32 %v5228, %v5229
  %v5231 = vand.u32 %v5230, 4294901760
  %5232 = vmatpush.msra.mxu0 %v5231
  %v5233 = vand.u32 %v4406, 4294901760
  %v5234 = vsub.f32 %v4406, %v5233
  %v5235 = vand.u32 %v5234, 4294901760
  %v5236 = vsub.f32 %v5234, %v5235
  %v5237 = vand.u32 %v5236, 4294901760
  %5238 = vmatpush.msra.mxu0 %v5237
  %v5239 = vand.u32 %v4400, 4294901760
  %v5240 = vsub.f32 %v4400, %v5239
  %v5241 = vand.u32 %v5240, 4294901760
  %v5242 = vsub.f32 %v5240, %v5241
  %v5243 = vand.u32 %v5242, 4294901760
  %5244 = vmatpush.msra.mxu0 %v5243
  %v5245 = vand.u32 %v4549, 4294901760
  %v5246 = vsub.f32 %v4549, %v5245
  %v5247 = vand.u32 %v5246, 4294901760
  %v5248 = vsub.f32 %v5246, %v5247
  %v5249 = vand.u32 %v5248, 4294901760
  %5250 = vmatpush.msra.mxu0 %v5249
  %v5251 = vand.u32 %v4548, 4294901760
  %v5252 = vsub.f32 %v4548, %v5251
  %v5253 = vand.u32 %v5252, 4294901760
  %v5254 = vsub.f32 %v5252, %v5253
  %v5255 = vand.u32 %v5254, 4294901760
  %5256 = vmatpush.msra.mxu0 %v5255
  %v5257 = vand.u32 %v4513, 4294901760
  %v5258 = vsub.f32 %v4513, %v5257
  %v5259 = vand.u32 %v5258, 4294901760
  %v5260 = vsub.f32 %v5258, %v5259
  %v5261 = vand.u32 %v5260, 4294901760
  %5262 = vmatpush.msra.mxu0 %v5261
  %v5263 = vand.u32 %v4512, 4294901760
  %v5264 = vsub.f32 %v4512, %v5263
  %v5265 = vand.u32 %v5264, 4294901760
  %v5266 = vsub.f32 %v5264, %v5265
  %v5267 = vand.u32 %v5266, 4294901760
  %5268 = vmatpush.msra.mxu0 %v5267
  %v5269 = vand.u32 %v4477, 4294901760
  %v5270 = vsub.f32 %v4477, %v5269
  %v5271 = vand.u32 %v5270, 4294901760
  %v5272 = vsub.f32 %v5270, %v5271
  %v5273 = vand.u32 %v5272, 4294901760
  %5274 = vmatpush.msra.mxu0 %v5273
  %v5275 = vand.u32 %v4476, 4294901760
  %v5276 = vsub.f32 %v4476, %v5275
  %v5277 = vand.u32 %v5276, 4294901760
  %v5278 = vsub.f32 %v5276, %v5277
  %v5279 = vand.u32 %v5278, 4294901760
  %5280 = vmatpush.msra.mxu0 %v5279
  %v5281 = vand.u32 %v4441, 4294901760
  %v5282 = vsub.f32 %v4441, %v5281
  %v5283 = vand.u32 %v5282, 4294901760
  %v5284 = vsub.f32 %v5282, %v5283
  %v5285 = vand.u32 %v5284, 4294901760
  %5286 = vmatpush.msra.mxu0 %v5285
  %v5287 = vand.u32 %v4440, 4294901760
  %v5288 = vsub.f32 %v4440, %v5287
  %v5289 = vand.u32 %v5288, 4294901760
  %v5290 = vsub.f32 %v5288, %v5289
  %v5291 = vand.u32 %v5290, 4294901760
  %5292 = vmatpush.msra.mxu0 %v5291
  %v5293 = vand.u32 %v4600, 4294901760
  %5294 = vmatmul.f32.gmra.mxu0 %v5293
  %v5295 = vpop.f32.mrf.mxu0
  %v5296 = vadd.f32 %v5215, %v5295
  %5297 = vdwg.mxu0
  %5298 = vmatpush.msra.mxu0 0.0
  %5299 = vmatpush.msra.mxu0 0.0
  %5300 = vmatpush.msra.mxu0 0.0
  %5301 = vmatpush.msra.mxu0 0.0
  %v5302 = vand.u32 %v4583, 4294901760
  %v5303 = vsub.f32 %v4583, %v5302
  %5304 = vmatpush.msra.mxu0 %v5303
  %v5305 = vand.u32 %v4582, 4294901760
  %v5306 = vsub.f32 %v4582, %v5305
  %5307 = vmatpush.msra.mxu0 %v5306
  %v5308 = vand.u32 %v4406, 4294901760
  %v5309 = vsub.f32 %v4406, %v5308
  %5310 = vmatpush.msra.mxu0 %v5309
  %v5311 = vand.u32 %v4400, 4294901760
  %v5312 = vsub.f32 %v4400, %v5311
  %5313 = vmatpush.msra.mxu0 %v5312
  %v5314 = vand.u32 %v4549, 4294901760
  %v5315 = vsub.f32 %v4549, %v5314
  %5316 = vmatpush.msra.mxu0 %v5315
  %v5317 = vand.u32 %v4548, 4294901760
  %v5318 = vsub.f32 %v4548, %v5317
  %5319 = vmatpush.msra.mxu0 %v5318
  %v5320 = vand.u32 %v4513, 4294901760
  %v5321 = vsub.f32 %v4513, %v5320
  %5322 = vmatpush.msra.mxu0 %v5321
  %v5323 = vand.u32 %v4512, 4294901760
  %v5324 = vsub.f32 %v4512, %v5323
  %5325 = vmatpush.msra.mxu0 %v5324
  %v5326 = vand.u32 %v4477, 4294901760
  %v5327 = vsub.f32 %v4477, %v5326
  %5328 = vmatpush.msra.mxu0 %v5327
  %v5329 = vand.u32 %v4476, 4294901760
  %v5330 = vsub.f32 %v4476, %v5329
  %5331 = vmatpush.msra.mxu0 %v5330
  %v5332 = vand.u32 %v4441, 4294901760
  %v5333 = vsub.f32 %v4441, %v5332
  %5334 = vmatpush.msra.mxu0 %v5333
  %v5335 = vand.u32 %v4440, 4294901760
  %v5336 = vsub.f32 %v4440, %v5335
  %5337 = vmatpush.msra.mxu0 %v5336
  %v5338 = vand.u32 %v4600, 4294901760
  %v5339 = vsub.f32 %v4600, %v5338
  %5340 = vmatmul.f32.gmra.mxu0 %v5339
  %v5341 = vpop.f32.mrf.mxu0
  %v5342 = vadd.f32 %v5296, %v5341
  %5343 = vdwg.mxu0
  %5344 = vmatpush.msra.mxu0 0.0
  %5345 = vmatpush.msra.mxu0 0.0
  %5346 = vmatpush.msra.mxu0 0.0
  %5347 = vmatpush.msra.mxu0 0.0
  %v5348 = vand.u32 %v4583, 4294901760
  %5349 = vmatpush.msra.mxu0 %v5348
  %v5350 = vand.u32 %v4582, 4294901760
  %5351 = vmatpush.msra.mxu0 %v5350
  %v5352 = vand.u32 %v4406, 4294901760
  %5353 = vmatpush.msra.mxu0 %v5352
  %v5354 = vand.u32 %v4400, 4294901760
  %5355 = vmatpush.msra.mxu0 %v5354
  %v5356 = vand.u32 %v4549, 4294901760
  %5357 = vmatpush.msra.mxu0 %v5356
  %v5358 = vand.u32 %v4548, 4294901760
  %5359 = vmatpush.msra.mxu0 %v5358
  %v5360 = vand.u32 %v4513, 4294901760
  %5361 = vmatpush.msra.mxu0 %v5360
  %v5362 = vand.u32 %v4512, 4294901760
  %5363 = vmatpush.msra.mxu0 %v5362
  %v5364 = vand.u32 %v4477, 4294901760
  %5365 = vmatpush.msra.mxu0 %v5364
  %v5366 = vand.u32 %v4476, 4294901760
  %5367 = vmatpush.msra.mxu0 %v5366
  %v5368 = vand.u32 %v4441, 4294901760
  %5369 = vmatpush.msra.mxu0 %v5368
  %v5370 = vand.u32 %v4440, 4294901760
  %5371 = vmatpush.msra.mxu0 %v5370
  %v5372 = vand.u32 %v4600, 4294901760
  %v5373 = vsub.f32 %v4600, %v5372
  %v5374 = vand.u32 %v5373, 4294901760
  %5375 = vmatmul.f32.gmra.mxu0 %v5374
  %v5376 = vpop.f32.mrf.mxu0
  %v5377 = vadd.f32 %v5342, %v5376
  %5378 = vdwg.mxu0
  %5379 = vmatpush.msra.mxu0 0.0
  %5380 = vmatpush.msra.mxu0 0.0
  %5381 = vmatpush.msra.mxu0 0.0
  %5382 = vmatpush.msra.mxu0 0.0
  %v5383 = vand.u32 %v4583, 4294901760
  %v5384 = vsub.f32 %v4583, %v5383
  %v5385 = vand.u32 %v5384, 4294901760
  %5386 = vmatpush.msra.mxu0 %v5385
  %v5387 = vand.u32 %v4582, 4294901760
  %v5388 = vsub.f32 %v4582, %v5387
  %v5389 = vand.u32 %v5388, 4294901760
  %5390 = vmatpush.msra.mxu0 %v5389
  %v5391 = vand.u32 %v4406, 4294901760
  %v5392 = vsub.f32 %v4406, %v5391
  %v5393 = vand.u32 %v5392, 4294901760
  %5394 = vmatpush.msra.mxu0 %v5393
  %v5395 = vand.u32 %v4400, 4294901760
  %v5396 = vsub.f32 %v4400, %v5395
  %v5397 = vand.u32 %v5396, 4294901760
  %5398 = vmatpush.msra.mxu0 %v5397
  %v5399 = vand.u32 %v4549, 4294901760
  %v5400 = vsub.f32 %v4549, %v5399
  %v5401 = vand.u32 %v5400, 4294901760
  %5402 = vmatpush.msra.mxu0 %v5401
  %v5403 = vand.u32 %v4548, 4294901760
  %v5404 = vsub.f32 %v4548, %v5403
  %v5405 = vand.u32 %v5404, 4294901760
  %5406 = vmatpush.msra.mxu0 %v5405
  %v5407 = vand.u32 %v4513, 4294901760
  %v5408 = vsub.f32 %v4513, %v5407
  %v5409 = vand.u32 %v5408, 4294901760
  %5410 = vmatpush.msra.mxu0 %v5409
  %v5411 = vand.u32 %v4512, 4294901760
  %v5412 = vsub.f32 %v4512, %v5411
  %v5413 = vand.u32 %v5412, 4294901760
  %5414 = vmatpush.msra.mxu0 %v5413
  %v5415 = vand.u32 %v4477, 4294901760
  %v5416 = vsub.f32 %v4477, %v5415
  %v5417 = vand.u32 %v5416, 4294901760
  %5418 = vmatpush.msra.mxu0 %v5417
  %v5419 = vand.u32 %v4476, 4294901760
  %v5420 = vsub.f32 %v4476, %v5419
  %v5421 = vand.u32 %v5420, 4294901760
  %5422 = vmatpush.msra.mxu0 %v5421
  %v5423 = vand.u32 %v4441, 4294901760
  %v5424 = vsub.f32 %v4441, %v5423
  %v5425 = vand.u32 %v5424, 4294901760
  %5426 = vmatpush.msra.mxu0 %v5425
  %v5427 = vand.u32 %v4440, 4294901760
  %v5428 = vsub.f32 %v4440, %v5427
  %v5429 = vand.u32 %v5428, 4294901760
  %5430 = vmatpush.msra.mxu0 %v5429
  %v5431 = vand.u32 %v4600, 4294901760
  %5432 = vmatmul.f32.gmra.mxu0 %v5431
  %v5433 = vpop.f32.mrf.mxu0
  %v5434 = vadd.f32 %v5377, %v5433
  %5435 = vdwg.mxu0
  %5436 = vmatpush.msra.mxu0 0.0
  %5437 = vmatpush.msra.mxu0 0.0
  %5438 = vmatpush.msra.mxu0 0.0
  %5439 = vmatpush.msra.mxu0 0.0
  %v5440 = vand.u32 %v4583, 4294901760
  %5441 = vmatpush.msra.mxu0 %v5440
  %v5442 = vand.u32 %v4582, 4294901760
  %5443 = vmatpush.msra.mxu0 %v5442
  %v5444 = vand.u32 %v4406, 4294901760
  %5445 = vmatpush.msra.mxu0 %v5444
  %v5446 = vand.u32 %v4400, 4294901760
  %5447 = vmatpush.msra.mxu0 %v5446
  %v5448 = vand.u32 %v4549, 4294901760
  %5449 = vmatpush.msra.mxu0 %v5448
  %v5450 = vand.u32 %v4548, 4294901760
  %5451 = vmatpush.msra.mxu0 %v5450
  %v5452 = vand.u32 %v4513, 4294901760
  %5453 = vmatpush.msra.mxu0 %v5452
  %v5454 = vand.u32 %v4512, 4294901760
  %5455 = vmatpush.msra.mxu0 %v5454
  %v5456 = vand.u32 %v4477, 4294901760
  %5457 = vmatpush.msra.mxu0 %v5456
  %v5458 = vand.u32 %v4476, 4294901760
  %5459 = vmatpush.msra.mxu0 %v5458
  %v5460 = vand.u32 %v4441, 4294901760
  %5461 = vmatpush.msra.mxu0 %v5460
  %v5462 = vand.u32 %v4440, 4294901760
  %5463 = vmatpush.msra.mxu0 %v5462
  %v5464 = vand.u32 %v4600, 4294901760
  %5465 = vmatmul.f32.gmra.mxu0 %v5464
  %v5466 = vpop.f32.mrf.mxu0
  %v5467 = vadd.f32 %v5434, %v5466
  %5468 = vdwg.mxu0
  %5469 = vmatpush.msra.mxu0 0.0
  %5470 = vmatpush.msra.mxu0 0.0
  %5471 = vmatpush.msra.mxu0 0.0
  %5472 = vmatpush.msra.mxu0 0.0
  %v5473 = vand.u32 %v4581, 4294901760
  %5474 = vmatpush.msra.mxu0 %v5473
  %v5475 = vand.u32 %v4580, 4294901760
  %5476 = vmatpush.msra.mxu0 %v5475
  %v5477 = vand.u32 %v4407, 4294901760
  %5478 = vmatpush.msra.mxu0 %v5477
  %v5479 = vand.u32 %v4401, 4294901760
  %5480 = vmatpush.msra.mxu0 %v5479
  %v5481 = vand.u32 %v4547, 4294901760
  %5482 = vmatpush.msra.mxu0 %v5481
  %v5483 = vand.u32 %v4546, 4294901760
  %5484 = vmatpush.msra.mxu0 %v5483
  %v5485 = vand.u32 %v4511, 4294901760
  %5486 = vmatpush.msra.mxu0 %v5485
  %v5487 = vand.u32 %v4510, 4294901760
  %5488 = vmatpush.msra.mxu0 %v5487
  %v5489 = vand.u32 %v4475, 4294901760
  %5490 = vmatpush.msra.mxu0 %v5489
  %v5491 = vand.u32 %v4474, 4294901760
  %5492 = vmatpush.msra.mxu0 %v5491
  %v5493 = vand.u32 %v4439, 4294901760
  %5494 = vmatpush.msra.mxu0 %v5493
  %v5495 = vand.u32 %v4438, 4294901760
  %5496 = vmatpush.msra.mxu0 %v5495
  %v5497 = vand.u32 %v4600, 4294901760
  %v5498 = vsub.f32 %v4600, %v5497
  %v5499 = vand.u32 %v5498, 4294901760
  %v5500 = vsub.f32 %v5498, %v5499
  %v5501 = vand.u32 %v5500, 4294901760
  %5502 = vmatmul.f32.gmra.mxu0 %v5501
  %v5503 = vpop.f32.mrf.mxu0
  %v5504 = vadd.f32 %v4597, %v5503
  %5505 = vdwg.mxu0
  %5506 = vmatpush.msra.mxu0 0.0
  %5507 = vmatpush.msra.mxu0 0.0
  %5508 = vmatpush.msra.mxu0 0.0
  %5509 = vmatpush.msra.mxu0 0.0
  %v5510 = vand.u32 %v4581, 4294901760
  %v5511 = vsub.f32 %v4581, %v5510
  %v5512 = vand.u32 %v5511, 4294901760
  %v5513 = vsub.f32 %v5511, %v5512
  %v5514 = vand.u32 %v5513, 4294901760
  %5515 = vmatpush.msra.mxu0 %v5514
  %v5516 = vand.u32 %v4580, 4294901760
  %v5517 = vsub.f32 %v4580, %v5516
  %v5518 = vand.u32 %v5517, 4294901760
  %v5519 = vsub.f32 %v5517, %v5518
  %v5520 = vand.u32 %v5519, 4294901760
  %5521 = vmatpush.msra.mxu0 %v5520
  %v5522 = vand.u32 %v4407, 4294901760
  %v5523 = vsub.f32 %v4407, %v5522
  %v5524 = vand.u32 %v5523, 4294901760
  %v5525 = vsub.f32 %v5523, %v5524
  %v5526 = vand.u32 %v5525, 4294901760
  %5527 = vmatpush.msra.mxu0 %v5526
  %v5528 = vand.u32 %v4401, 4294901760
  %v5529 = vsub.f32 %v4401, %v5528
  %v5530 = vand.u32 %v5529, 4294901760
  %v5531 = vsub.f32 %v5529, %v5530
  %v5532 = vand.u32 %v5531, 4294901760
  %5533 = vmatpush.msra.mxu0 %v5532
  %v5534 = vand.u32 %v4547, 4294901760
  %v5535 = vsub.f32 %v4547, %v5534
  %v5536 = vand.u32 %v5535, 4294901760
  %v5537 = vsub.f32 %v5535, %v5536
  %v5538 = vand.u32 %v5537, 4294901760
  %5539 = vmatpush.msra.mxu0 %v5538
  %v5540 = vand.u32 %v4546, 4294901760
  %v5541 = vsub.f32 %v4546, %v5540
  %v5542 = vand.u32 %v5541, 4294901760
  %v5543 = vsub.f32 %v5541, %v5542
  %v5544 = vand.u32 %v5543, 4294901760
  %5545 = vmatpush.msra.mxu0 %v5544
  %v5546 = vand.u32 %v4511, 4294901760
  %v5547 = vsub.f32 %v4511, %v5546
  %v5548 = vand.u32 %v5547, 4294901760
  %v5549 = vsub.f32 %v5547, %v5548
  %v5550 = vand.u32 %v5549, 4294901760
  %5551 = vmatpush.msra.mxu0 %v5550
  %v5552 = vand.u32 %v4510, 4294901760
  %v5553 = vsub.f32 %v4510, %v5552
  %v5554 = vand.u32 %v5553, 4294901760
  %v5555 = vsub.f32 %v5553, %v5554
  %v5556 = vand.u32 %v5555, 4294901760
  %5557 = vmatpush.msra.mxu0 %v5556
  %v5558 = vand.u32 %v4475, 4294901760
  %v5559 = vsub.f32 %v4475, %v5558
  %v5560 = vand.u32 %v5559, 4294901760
  %v5561 = vsub.f32 %v5559, %v5560
  %v5562 = vand.u32 %v5561, 4294901760
  %5563 = vmatpush.msra.mxu0 %v5562
  %v5564 = vand.u32 %v4474, 4294901760
  %v5565 = vsub.f32 %v4474, %v5564
  %v5566 = vand.u32 %v5565, 4294901760
  %v5567 = vsub.f32 %v5565, %v5566
  %v5568 = vand.u32 %v5567, 4294901760
  %5569 = vmatpush.msra.mxu0 %v5568
  %v5570 = vand.u32 %v4439, 4294901760
  %v5571 = vsub.f32 %v4439, %v5570
  %v5572 = vand.u32 %v5571, 4294901760
  %v5573 = vsub.f32 %v5571, %v5572
  %v5574 = vand.u32 %v5573, 4294901760
  %5575 = vmatpush.msra.mxu0 %v5574
  %v5576 = vand.u32 %v4438, 4294901760
  %v5577 = vsub.f32 %v4438, %v5576
  %v5578 = vand.u32 %v5577, 4294901760
  %v5579 = vsub.f32 %v5577, %v5578
  %v5580 = vand.u32 %v5579, 4294901760
  %5581 = vmatpush.msra.mxu0 %v5580
  %v5582 = vand.u32 %v4600, 4294901760
  %5583 = vmatmul.f32.gmra.mxu0 %v5582
  %v5584 = vpop.f32.mrf.mxu0
  %v5585 = vadd.f32 %v5504, %v5584
  %5586 = vdwg.mxu0
  %5587 = vmatpush.msra.mxu0 0.0
  %5588 = vmatpush.msra.mxu0 0.0
  %5589 = vmatpush.msra.mxu0 0.0
  %5590 = vmatpush.msra.mxu0 0.0
  %v5591 = vand.u32 %v4581, 4294901760
  %v5592 = vsub.f32 %v4581, %v5591
  %5593 = vmatpush.msra.mxu0 %v5592
  %v5594 = vand.u32 %v4580, 4294901760
  %v5595 = vsub.f32 %v4580, %v5594
  %5596 = vmatpush.msra.mxu0 %v5595
  %v5597 = vand.u32 %v4407, 4294901760
  %v5598 = vsub.f32 %v4407, %v5597
  %5599 = vmatpush.msra.mxu0 %v5598
  %v5600 = vand.u32 %v4401, 4294901760
  %v5601 = vsub.f32 %v4401, %v5600
  %5602 = vmatpush.msra.mxu0 %v5601
  %v5603 = vand.u32 %v4547, 4294901760
  %v5604 = vsub.f32 %v4547, %v5603
  %5605 = vmatpush.msra.mxu0 %v5604
  %v5606 = vand.u32 %v4546, 4294901760
  %v5607 = vsub.f32 %v4546, %v5606
  %5608 = vmatpush.msra.mxu0 %v5607
  %v5609 = vand.u32 %v4511, 4294901760
  %v5610 = vsub.f32 %v4511, %v5609
  %5611 = vmatpush.msra.mxu0 %v5610
  %v5612 = vand.u32 %v4510, 4294901760
  %v5613 = vsub.f32 %v4510, %v5612
  %5614 = vmatpush.msra.mxu0 %v5613
  %v5615 = vand.u32 %v4475, 4294901760
  %v5616 = vsub.f32 %v4475, %v5615
  %5617 = vmatpush.msra.mxu0 %v5616
  %v5618 = vand.u32 %v4474, 4294901760
  %v5619 = vsub.f32 %v4474, %v5618
  %5620 = vmatpush.msra.mxu0 %v5619
  %v5621 = vand.u32 %v4439, 4294901760
  %v5622 = vsub.f32 %v4439, %v5621
  %5623 = vmatpush.msra.mxu0 %v5622
  %v5624 = vand.u32 %v4438, 4294901760
  %v5625 = vsub.f32 %v4438, %v5624
  %5626 = vmatpush.msra.mxu0 %v5625
  %v5627 = vand.u32 %v4600, 4294901760
  %v5628 = vsub.f32 %v4600, %v5627
  %5629 = vmatmul.f32.gmra.mxu0 %v5628
  %v5630 = vpop.f32.mrf.mxu0
  %v5631 = vadd.f32 %v5585, %v5630
  %5632 = vdwg.mxu0
  %5633 = vmatpush.msra.mxu0 0.0
  %5634 = vmatpush.msra.mxu0 0.0
  %5635 = vmatpush.msra.mxu0 0.0
  %5636 = vmatpush.msra.mxu0 0.0
  %v5637 = vand.u32 %v4581, 4294901760
  %5638 = vmatpush.msra.mxu0 %v5637
  %v5639 = vand.u32 %v4580, 4294901760
  %5640 = vmatpush.msra.mxu0 %v5639
  %v5641 = vand.u32 %v4407, 4294901760
  %5642 = vmatpush.msra.mxu0 %v5641
  %v5643 = vand.u32 %v4401, 4294901760
  %5644 = vmatpush.msra.mxu0 %v5643
  %v5645 = vand.u32 %v4547, 4294901760
  %5646 = vmatpush.msra.mxu0 %v5645
  %v5647 = vand.u32 %v4546, 4294901760
  %5648 = vmatpush.msra.mxu0 %v5647
  %v5649 = vand.u32 %v4511, 4294901760
  %5650 = vmatpush.msra.mxu0 %v5649
  %v5651 = vand.u32 %v4510, 4294901760
  %5652 = vmatpush.msra.mxu0 %v5651
  %v5653 = vand.u32 %v4475, 4294901760
  %5654 = vmatpush.msra.mxu0 %v5653
  %v5655 = vand.u32 %v4474, 4294901760
  %5656 = vmatpush.msra.mxu0 %v5655
  %v5657 = vand.u32 %v4439, 4294901760
  %5658 = vmatpush.msra.mxu0 %v5657
  %v5659 = vand.u32 %v4438, 4294901760
  %5660 = vmatpush.msra.mxu0 %v5659
  %v5661 = vand.u32 %v4600, 4294901760
  %v5662 = vsub.f32 %v4600, %v5661
  %v5663 = vand.u32 %v5662, 4294901760
  %5664 = vmatmul.f32.gmra.mxu0 %v5663
  %v5665 = vpop.f32.mrf.mxu0
  %v5666 = vadd.f32 %v5631, %v5665
  %5667 = vdwg.mxu0
  %5668 = vmatpush.msra.mxu0 0.0
  %5669 = vmatpush.msra.mxu0 0.0
  %5670 = vmatpush.msra.mxu0 0.0
  %5671 = vmatpush.msra.mxu0 0.0
  %v5672 = vand.u32 %v4581, 4294901760
  %v5673 = vsub.f32 %v4581, %v5672
  %v5674 = vand.u32 %v5673, 4294901760
  %5675 = vmatpush.msra.mxu0 %v5674
  %v5676 = vand.u32 %v4580, 4294901760
  %v5677 = vsub.f32 %v4580, %v5676
  %v5678 = vand.u32 %v5677, 4294901760
  %5679 = vmatpush.msra.mxu0 %v5678
  %v5680 = vand.u32 %v4407, 4294901760
  %v5681 = vsub.f32 %v4407, %v5680
  %v5682 = vand.u32 %v5681, 4294901760
  %5683 = vmatpush.msra.mxu0 %v5682
  %v5684 = vand.u32 %v4401, 4294901760
  %v5685 = vsub.f32 %v4401, %v5684
  %v5686 = vand.u32 %v5685, 4294901760
  %5687 = vmatpush.msra.mxu0 %v5686
  %v5688 = vand.u32 %v4547, 4294901760
  %v5689 = vsub.f32 %v4547, %v5688
  %v5690 = vand.u32 %v5689, 4294901760
  %5691 = vmatpush.msra.mxu0 %v5690
  %v5692 = vand.u32 %v4546, 4294901760
  %v5693 = vsub.f32 %v4546, %v5692
  %v5694 = vand.u32 %v5693, 4294901760
  %5695 = vmatpush.msra.mxu0 %v5694
  %v5696 = vand.u32 %v4511, 4294901760
  %v5697 = vsub.f32 %v4511, %v5696
  %v5698 = vand.u32 %v5697, 4294901760
  %5699 = vmatpush.msra.mxu0 %v5698
  %v5700 = vand.u32 %v4510, 4294901760
  %v5701 = vsub.f32 %v4510, %v5700
  %v5702 = vand.u32 %v5701, 4294901760
  %5703 = vmatpush.msra.mxu0 %v5702
  %v5704 = vand.u32 %v4475, 4294901760
  %v5705 = vsub.f32 %v4475, %v5704
  %v5706 = vand.u32 %v5705, 4294901760
  %5707 = vmatpush.msra.mxu0 %v5706
  %v5708 = vand.u32 %v4474, 4294901760
  %v5709 = vsub.f32 %v4474, %v5708
  %v5710 = vand.u32 %v5709, 4294901760
  %5711 = vmatpush.msra.mxu0 %v5710
  %v5712 = vand.u32 %v4439, 4294901760
  %v5713 = vsub.f32 %v4439, %v5712
  %v5714 = vand.u32 %v5713, 4294901760
  %5715 = vmatpush.msra.mxu0 %v5714
  %v5716 = vand.u32 %v4438, 4294901760
  %v5717 = vsub.f32 %v4438, %v5716
  %v5718 = vand.u32 %v5717, 4294901760
  %5719 = vmatpush.msra.mxu0 %v5718
  %v5720 = vand.u32 %v4600, 4294901760
  %5721 = vmatmul.f32.gmra.mxu0 %v5720
  %v5722 = vpop.f32.mrf.mxu0
  %v5723 = vadd.f32 %v5666, %v5722
  %5724 = vdwg.mxu0
  %5725 = vmatpush.msra.mxu0 0.0
  %5726 = vmatpush.msra.mxu0 0.0
  %5727 = vmatpush.msra.mxu0 0.0
  %5728 = vmatpush.msra.mxu0 0.0
  %v5729 = vand.u32 %v4581, 4294901760
  %5730 = vmatpush.msra.mxu0 %v5729
  %v5731 = vand.u32 %v4580, 4294901760
  %5732 = vmatpush.msra.mxu0 %v5731
  %v5733 = vand.u32 %v4407, 4294901760
  %5734 = vmatpush.msra.mxu0 %v5733
  %v5735 = vand.u32 %v4401, 4294901760
  %5736 = vmatpush.msra.mxu0 %v5735
  %v5737 = vand.u32 %v4547, 4294901760
  %5738 = vmatpush.msra.mxu0 %v5737
  %v5739 = vand.u32 %v4546, 4294901760
  %5740 = vmatpush.msra.mxu0 %v5739
  %v5741 = vand.u32 %v4511, 4294901760
  %5742 = vmatpush.msra.mxu0 %v5741
  %v5743 = vand.u32 %v4510, 4294901760
  %5744 = vmatpush.msra.mxu0 %v5743
  %v5745 = vand.u32 %v4475, 4294901760
  %5746 = vmatpush.msra.mxu0 %v5745
  %v5747 = vand.u32 %v4474, 4294901760
  %5748 = vmatpush.msra.mxu0 %v5747
  %v5749 = vand.u32 %v4439, 4294901760
  %5750 = vmatpush.msra.mxu0 %v5749
  %v5751 = vand.u32 %v4438, 4294901760
  %5752 = vmatpush.msra.mxu0 %v5751
  %v5753 = vand.u32 %v4600, 4294901760
  %5754 = vmatmul.f32.gmra.mxu0 %v5753
  %v5755 = vpop.f32.mrf.mxu0
  %v5756 = vadd.f32 %v5723, %v5755
  %5757 = vdwg.mxu0
  %5758 = vmatpush.msra.mxu0 0.0
  %5759 = vmatpush.msra.mxu0 0.0
  %5760 = vmatpush.msra.mxu0 0.0
  %5761 = vmatpush.msra.mxu0 0.0
  %v5762 = vand.u32 %v4579, 4294901760
  %5763 = vmatpush.msra.mxu0 %v5762
  %v5764 = vand.u32 %v4578, 4294901760
  %5765 = vmatpush.msra.mxu0 %v5764
  %v5766 = vand.u32 %v4408, 4294901760
  %5767 = vmatpush.msra.mxu0 %v5766
  %v5768 = vand.u32 %v4402, 4294901760
  %5769 = vmatpush.msra.mxu0 %v5768
  %v5770 = vand.u32 %v4545, 4294901760
  %5771 = vmatpush.msra.mxu0 %v5770
  %v5772 = vand.u32 %v4544, 4294901760
  %5773 = vmatpush.msra.mxu0 %v5772
  %v5774 = vand.u32 %v4509, 4294901760
  %5775 = vmatpush.msra.mxu0 %v5774
  %v5776 = vand.u32 %v4508, 4294901760
  %5777 = vmatpush.msra.mxu0 %v5776
  %v5778 = vand.u32 %v4473, 4294901760
  %5779 = vmatpush.msra.mxu0 %v5778
  %v5780 = vand.u32 %v4472, 4294901760
  %5781 = vmatpush.msra.mxu0 %v5780
  %v5782 = vand.u32 %v4437, 4294901760
  %5783 = vmatpush.msra.mxu0 %v5782
  %v5784 = vand.u32 %v4436, 4294901760
  %5785 = vmatpush.msra.mxu0 %v5784
  %v5786 = vand.u32 %v4600, 4294901760
  %v5787 = vsub.f32 %v4600, %v5786
  %v5788 = vand.u32 %v5787, 4294901760
  %v5789 = vsub.f32 %v5787, %v5788
  %v5790 = vand.u32 %v5789, 4294901760
  %5791 = vmatmul.f32.gmra.mxu0 %v5790
  %v5792 = vpop.f32.mrf.mxu0
  %v5793 = vadd.f32 %v4597, %v5792
  %5794 = vdwg.mxu0
  %5795 = vmatpush.msra.mxu0 0.0
  %5796 = vmatpush.msra.mxu0 0.0
  %5797 = vmatpush.msra.mxu0 0.0
  %5798 = vmatpush.msra.mxu0 0.0
  %v5799 = vand.u32 %v4579, 4294901760
  %v5800 = vsub.f32 %v4579, %v5799
  %v5801 = vand.u32 %v5800, 4294901760
  %v5802 = vsub.f32 %v5800, %v5801
  %v5803 = vand.u32 %v5802, 4294901760
  %5804 = vmatpush.msra.mxu0 %v5803
  %v5805 = vand.u32 %v4578, 4294901760
  %v5806 = vsub.f32 %v4578, %v5805
  %v5807 = vand.u32 %v5806, 4294901760
  %v5808 = vsub.f32 %v5806, %v5807
  %v5809 = vand.u32 %v5808, 4294901760
  %5810 = vmatpush.msra.mxu0 %v5809
  %v5811 = vand.u32 %v4408, 4294901760
  %v5812 = vsub.f32 %v4408, %v5811
  %v5813 = vand.u32 %v5812, 4294901760
  %v5814 = vsub.f32 %v5812, %v5813
  %v5815 = vand.u32 %v5814, 4294901760
  %5816 = vmatpush.msra.mxu0 %v5815
  %v5817 = vand.u32 %v4402, 4294901760
  %v5818 = vsub.f32 %v4402, %v5817
  %v5819 = vand.u32 %v5818, 4294901760
  %v5820 = vsub.f32 %v5818, %v5819
  %v5821 = vand.u32 %v5820, 4294901760
  %5822 = vmatpush.msra.mxu0 %v5821
  %v5823 = vand.u32 %v4545, 4294901760
  %v5824 = vsub.f32 %v4545, %v5823
  %v5825 = vand.u32 %v5824, 4294901760
  %v5826 = vsub.f32 %v5824, %v5825
  %v5827 = vand.u32 %v5826, 4294901760
  %5828 = vmatpush.msra.mxu0 %v5827
  %v5829 = vand.u32 %v4544, 4294901760
  %v5830 = vsub.f32 %v4544, %v5829
  %v5831 = vand.u32 %v5830, 4294901760
  %v5832 = vsub.f32 %v5830, %v5831
  %v5833 = vand.u32 %v5832, 4294901760
  %5834 = vmatpush.msra.mxu0 %v5833
  %v5835 = vand.u32 %v4509, 4294901760
  %v5836 = vsub.f32 %v4509, %v5835
  %v5837 = vand.u32 %v5836, 4294901760
  %v5838 = vsub.f32 %v5836, %v5837
  %v5839 = vand.u32 %v5838, 4294901760
  %5840 = vmatpush.msra.mxu0 %v5839
  %v5841 = vand.u32 %v4508, 4294901760
  %v5842 = vsub.f32 %v4508, %v5841
  %v5843 = vand.u32 %v5842, 4294901760
  %v5844 = vsub.f32 %v5842, %v5843
  %v5845 = vand.u32 %v5844, 4294901760
  %5846 = vmatpush.msra.mxu0 %v5845
  %v5847 = vand.u32 %v4473, 4294901760
  %v5848 = vsub.f32 %v4473, %v5847
  %v5849 = vand.u32 %v5848, 4294901760
  %v5850 = vsub.f32 %v5848, %v5849
  %v5851 = vand.u32 %v5850, 4294901760
  %5852 = vmatpush.msra.mxu0 %v5851
  %v5853 = vand.u32 %v4472, 4294901760
  %v5854 = vsub.f32 %v4472, %v5853
  %v5855 = vand.u32 %v5854, 4294901760
  %v5856 = vsub.f32 %v5854, %v5855
  %v5857 = vand.u32 %v5856, 4294901760
  %5858 = vmatpush.msra.mxu0 %v5857
  %v5859 = vand.u32 %v4437, 4294901760
  %v5860 = vsub.f32 %v4437, %v5859
  %v5861 = vand.u32 %v5860, 4294901760
  %v5862 = vsub.f32 %v5860, %v5861
  %v5863 = vand.u32 %v5862, 4294901760
  %5864 = vmatpush.msra.mxu0 %v5863
  %v5865 = vand.u32 %v4436, 4294901760
  %v5866 = vsub.f32 %v4436, %v5865
  %v5867 = vand.u32 %v5866, 4294901760
  %v5868 = vsub.f32 %v5866, %v5867
  %v5869 = vand.u32 %v5868, 4294901760
  %5870 = vmatpush.msra.mxu0 %v5869
  %v5871 = vand.u32 %v4600, 4294901760
  %5872 = vmatmul.f32.gmra.mxu0 %v5871
  %v5873 = vpop.f32.mrf.mxu0
  %v5874 = vadd.f32 %v5793, %v5873
  %5875 = vdwg.mxu0
  %5876 = vmatpush.msra.mxu0 0.0
  %5877 = vmatpush.msra.mxu0 0.0
  %5878 = vmatpush.msra.mxu0 0.0
  %5879 = vmatpush.msra.mxu0 0.0
  %v5880 = vand.u32 %v4579, 4294901760
  %v5881 = vsub.f32 %v4579, %v5880
  %5882 = vmatpush.msra.mxu0 %v5881
  %v5883 = vand.u32 %v4578, 4294901760
  %v5884 = vsub.f32 %v4578, %v5883
  %5885 = vmatpush.msra.mxu0 %v5884
  %v5886 = vand.u32 %v4408, 4294901760
  %v5887 = vsub.f32 %v4408, %v5886
  %5888 = vmatpush.msra.mxu0 %v5887
  %v5889 = vand.u32 %v4402, 4294901760
  %v5890 = vsub.f32 %v4402, %v5889
  %5891 = vmatpush.msra.mxu0 %v5890
  %v5892 = vand.u32 %v4545, 4294901760
  %v5893 = vsub.f32 %v4545, %v5892
  %5894 = vmatpush.msra.mxu0 %v5893
  %v5895 = vand.u32 %v4544, 4294901760
  %v5896 = vsub.f32 %v4544, %v5895
  %5897 = vmatpush.msra.mxu0 %v5896
  %v5898 = vand.u32 %v4509, 4294901760
  %v5899 = vsub.f32 %v4509, %v5898
  %5900 = vmatpush.msra.mxu0 %v5899
  %v5901 = vand.u32 %v4508, 4294901760
  %v5902 = vsub.f32 %v4508, %v5901
  %5903 = vmatpush.msra.mxu0 %v5902
  %v5904 = vand.u32 %v4473, 4294901760
  %v5905 = vsub.f32 %v4473, %v5904
  %5906 = vmatpush.msra.mxu0 %v5905
  %v5907 = vand.u32 %v4472, 4294901760
  %v5908 = vsub.f32 %v4472, %v5907
  %5909 = vmatpush.msra.mxu0 %v5908
  %v5910 = vand.u32 %v4437, 4294901760
  %v5911 = vsub.f32 %v4437, %v5910
  %5912 = vmatpush.msra.mxu0 %v5911
  %v5913 = vand.u32 %v4436, 4294901760
  %v5914 = vsub.f32 %v4436, %v5913
  %5915 = vmatpush.msra.mxu0 %v5914
  %v5916 = vand.u32 %v4600, 4294901760
  %v5917 = vsub.f32 %v4600, %v5916
  %5918 = vmatmul.f32.gmra.mxu0 %v5917
  %v5919 = vpop.f32.mrf.mxu0
  %v5920 = vadd.f32 %v5874, %v5919
  %5921 = vdwg.mxu0
  %5922 = vmatpush.msra.mxu0 0.0
  %5923 = vmatpush.msra.mxu0 0.0
  %5924 = vmatpush.msra.mxu0 0.0
  %5925 = vmatpush.msra.mxu0 0.0
  %v5926 = vand.u32 %v4579, 4294901760
  %5927 = vmatpush.msra.mxu0 %v5926
  %v5928 = vand.u32 %v4578, 4294901760
  %5929 = vmatpush.msra.mxu0 %v5928
  %v5930 = vand.u32 %v4408, 4294901760
  %5931 = vmatpush.msra.mxu0 %v5930
  %v5932 = vand.u32 %v4402, 4294901760
  %5933 = vmatpush.msra.mxu0 %v5932
  %v5934 = vand.u32 %v4545, 4294901760
  %5935 = vmatpush.msra.mxu0 %v5934
  %v5936 = vand.u32 %v4544, 4294901760
  %5937 = vmatpush.msra.mxu0 %v5936
  %v5938 = vand.u32 %v4509, 4294901760
  %5939 = vmatpush.msra.mxu0 %v5938
  %v5940 = vand.u32 %v4508, 4294901760
  %5941 = vmatpush.msra.mxu0 %v5940
  %v5942 = vand.u32 %v4473, 4294901760
  %5943 = vmatpush.msra.mxu0 %v5942
  %v5944 = vand.u32 %v4472, 4294901760
  %5945 = vmatpush.msra.mxu0 %v5944
  %v5946 = vand.u32 %v4437, 4294901760
  %5947 = vmatpush.msra.mxu0 %v5946
  %v5948 = vand.u32 %v4436, 4294901760
  %5949 = vmatpush.msra.mxu0 %v5948
  %v5950 = vand.u32 %v4600, 4294901760
  %v5951 = vsub.f32 %v4600, %v5950
  %v5952 = vand.u32 %v5951, 4294901760
  %5953 = vmatmul.f32.gmra.mxu0 %v5952
  %v5954 = vpop.f32.mrf.mxu0
  %v5955 = vadd.f32 %v5920, %v5954
  %5956 = vdwg.mxu0
  %5957 = vmatpush.msra.mxu0 0.0
  %5958 = vmatpush.msra.mxu0 0.0
  %5959 = vmatpush.msra.mxu0 0.0
  %5960 = vmatpush.msra.mxu0 0.0
  %v5961 = vand.u32 %v4579, 4294901760
  %v5962 = vsub.f32 %v4579, %v5961
  %v5963 = vand.u32 %v5962, 4294901760
  %5964 = vmatpush.msra.mxu0 %v5963
  %v5965 = vand.u32 %v4578, 4294901760
  %v5966 = vsub.f32 %v4578, %v5965
  %v5967 = vand.u32 %v5966, 4294901760
  %5968 = vmatpush.msra.mxu0 %v5967
  %v5969 = vand.u32 %v4408, 4294901760
  %v5970 = vsub.f32 %v4408, %v5969
  %v5971 = vand.u32 %v5970, 4294901760
  %5972 = vmatpush.msra.mxu0 %v5971
  %v5973 = vand.u32 %v4402, 4294901760
  %v5974 = vsub.f32 %v4402, %v5973
  %v5975 = vand.u32 %v5974, 4294901760
  %5976 = vmatpush.msra.mxu0 %v5975
  %v5977 = vand.u32 %v4545, 4294901760
  %v5978 = vsub.f32 %v4545, %v5977
  %v5979 = vand.u32 %v5978, 4294901760
  %5980 = vmatpush.msra.mxu0 %v5979
  %v5981 = vand.u32 %v4544, 4294901760
  %v5982 = vsub.f32 %v4544, %v5981
  %v5983 = vand.u32 %v5982, 4294901760
  %5984 = vmatpush.msra.mxu0 %v5983
  %v5985 = vand.u32 %v4509, 4294901760
  %v5986 = vsub.f32 %v4509, %v5985
  %v5987 = vand.u32 %v5986, 4294901760
  %5988 = vmatpush.msra.mxu0 %v5987
  %v5989 = vand.u32 %v4508, 4294901760
  %v5990 = vsub.f32 %v4508, %v5989
  %v5991 = vand.u32 %v5990, 4294901760
  %5992 = vmatpush.msra.mxu0 %v5991
  %v5993 = vand.u32 %v4473, 4294901760
  %v5994 = vsub.f32 %v4473, %v5993
  %v5995 = vand.u32 %v5994, 4294901760
  %5996 = vmatpush.msra.mxu0 %v5995
  %v5997 = vand.u32 %v4472, 4294901760
  %v5998 = vsub.f32 %v4472, %v5997
  %v5999 = vand.u32 %v5998, 4294901760
  %6000 = vmatpush.msra.mxu0 %v5999
  %v6001 = vand.u32 %v4437, 4294901760
  %v6002 = vsub.f32 %v4437, %v6001
  %v6003 = vand.u32 %v6002, 4294901760
  %6004 = vmatpush.msra.mxu0 %v6003
  %v6005 = vand.u32 %v4436, 4294901760
  %v6006 = vsub.f32 %v4436, %v6005
  %v6007 = vand.u32 %v6006, 4294901760
  %6008 = vmatpush.msra.mxu0 %v6007
  %v6009 = vand.u32 %v4600, 4294901760
  %6010 = vmatmul.f32.gmra.mxu0 %v6009
  %v6011 = vpop.f32.mrf.mxu0
  %v6012 = vadd.f32 %v5955, %v6011
  %6013 = vdwg.mxu0
  %6014 = vmatpush.msra.mxu0 0.0
  %6015 = vmatpush.msra.mxu0 0.0
  %6016 = vmatpush.msra.mxu0 0.0
  %6017 = vmatpush.msra.mxu0 0.0
  %v6018 = vand.u32 %v4579, 4294901760
  %6019 = vmatpush.msra.mxu0 %v6018
  %v6020 = vand.u32 %v4578, 4294901760
  %6021 = vmatpush.msra.mxu0 %v6020
  %v6022 = vand.u32 %v4408, 4294901760
  %6023 = vmatpush.msra.mxu0 %v6022
  %v6024 = vand.u32 %v4402, 4294901760
  %6025 = vmatpush.msra.mxu0 %v6024
  %v6026 = vand.u32 %v4545, 4294901760
  %6027 = vmatpush.msra.mxu0 %v6026
  %v6028 = vand.u32 %v4544, 4294901760
  %6029 = vmatpush.msra.mxu0 %v6028
  %v6030 = vand.u32 %v4509, 4294901760
  %6031 = vmatpush.msra.mxu0 %v6030
  %v6032 = vand.u32 %v4508, 4294901760
  %6033 = vmatpush.msra.mxu0 %v6032
  %v6034 = vand.u32 %v4473, 4294901760
  %6035 = vmatpush.msra.mxu0 %v6034
  %v6036 = vand.u32 %v4472, 4294901760
  %6037 = vmatpush.msra.mxu0 %v6036
  %v6038 = vand.u32 %v4437, 4294901760
  %6039 = vmatpush.msra.mxu0 %v6038
  %v6040 = vand.u32 %v4436, 4294901760
  %6041 = vmatpush.msra.mxu0 %v6040
  %v6042 = vand.u32 %v4600, 4294901760
  %6043 = vmatmul.f32.gmra.mxu0 %v6042
  %v6044 = vpop.f32.mrf.mxu0
  %v6045 = vadd.f32 %v6012, %v6044
  %6046 = vdwg.mxu0
  %6047 = vmatpush.msra.mxu0 0.0
  %6048 = vmatpush.msra.mxu0 0.0
  %6049 = vmatpush.msra.mxu0 0.0
  %6050 = vmatpush.msra.mxu0 0.0
  %v6051 = vand.u32 %v4589, 4294901760
  %6052 = vmatpush.msra.mxu0 %v6051
  %v6053 = vand.u32 %v4588, 4294901760
  %6054 = vmatpush.msra.mxu0 %v6053
  %v6055 = vand.u32 %v4409, 4294901760
  %6056 = vmatpush.msra.mxu0 %v6055
  %v6057 = vand.u32 %v4403, 4294901760
  %6058 = vmatpush.msra.mxu0 %v6057
  %v6059 = vand.u32 %v4543, 4294901760
  %6060 = vmatpush.msra.mxu0 %v6059
  %v6061 = vand.u32 %v4542, 4294901760
  %6062 = vmatpush.msra.mxu0 %v6061
  %v6063 = vand.u32 %v4507, 4294901760
  %6064 = vmatpush.msra.mxu0 %v6063
  %v6065 = vand.u32 %v4506, 4294901760
  %6066 = vmatpush.msra.mxu0 %v6065
  %v6067 = vand.u32 %v4471, 4294901760
  %6068 = vmatpush.msra.mxu0 %v6067
  %v6069 = vand.u32 %v4470, 4294901760
  %6070 = vmatpush.msra.mxu0 %v6069
  %v6071 = vand.u32 %v4435, 4294901760
  %6072 = vmatpush.msra.mxu0 %v6071
  %v6073 = vand.u32 %v4434, 4294901760
  %6074 = vmatpush.msra.mxu0 %v6073
  %v6075 = vand.u32 %v4600, 4294901760
  %v6076 = vsub.f32 %v4600, %v6075
  %v6077 = vand.u32 %v6076, 4294901760
  %v6078 = vsub.f32 %v6076, %v6077
  %v6079 = vand.u32 %v6078, 4294901760
  %6080 = vmatmul.f32.gmra.mxu0 %v6079
  %v6081 = vpop.f32.mrf.mxu0
  %v6082 = vadd.f32 %v4597, %v6081
  %6083 = vdwg.mxu0
  %6084 = vmatpush.msra.mxu0 0.0
  %6085 = vmatpush.msra.mxu0 0.0
  %6086 = vmatpush.msra.mxu0 0.0
  %6087 = vmatpush.msra.mxu0 0.0
  %v6088 = vand.u32 %v4589, 4294901760
  %v6089 = vsub.f32 %v4589, %v6088
  %v6090 = vand.u32 %v6089, 4294901760
  %v6091 = vsub.f32 %v6089, %v6090
  %v6092 = vand.u32 %v6091, 4294901760
  %6093 = vmatpush.msra.mxu0 %v6092
  %v6094 = vand.u32 %v4588, 4294901760
  %v6095 = vsub.f32 %v4588, %v6094
  %v6096 = vand.u32 %v6095, 4294901760
  %v6097 = vsub.f32 %v6095, %v6096
  %v6098 = vand.u32 %v6097, 4294901760
  %6099 = vmatpush.msra.mxu0 %v6098
  %v6100 = vand.u32 %v4409, 4294901760
  %v6101 = vsub.f32 %v4409, %v6100
  %v6102 = vand.u32 %v6101, 4294901760
  %v6103 = vsub.f32 %v6101, %v6102
  %v6104 = vand.u32 %v6103, 4294901760
  %6105 = vmatpush.msra.mxu0 %v6104
  %v6106 = vand.u32 %v4403, 4294901760
  %v6107 = vsub.f32 %v4403, %v6106
  %v6108 = vand.u32 %v6107, 4294901760
  %v6109 = vsub.f32 %v6107, %v6108
  %v6110 = vand.u32 %v6109, 4294901760
  %6111 = vmatpush.msra.mxu0 %v6110
  %v6112 = vand.u32 %v4543, 4294901760
  %v6113 = vsub.f32 %v4543, %v6112
  %v6114 = vand.u32 %v6113, 4294901760
  %v6115 = vsub.f32 %v6113, %v6114
  %v6116 = vand.u32 %v6115, 4294901760
  %6117 = vmatpush.msra.mxu0 %v6116
  %v6118 = vand.u32 %v4542, 4294901760
  %v6119 = vsub.f32 %v4542, %v6118
  %v6120 = vand.u32 %v6119, 4294901760
  %v6121 = vsub.f32 %v6119, %v6120
  %v6122 = vand.u32 %v6121, 4294901760
  %6123 = vmatpush.msra.mxu0 %v6122
  %v6124 = vand.u32 %v4507, 4294901760
  %v6125 = vsub.f32 %v4507, %v6124
  %v6126 = vand.u32 %v6125, 4294901760
  %v6127 = vsub.f32 %v6125, %v6126
  %v6128 = vand.u32 %v6127, 4294901760
  %6129 = vmatpush.msra.mxu0 %v6128
  %v6130 = vand.u32 %v4506, 4294901760
  %v6131 = vsub.f32 %v4506, %v6130
  %v6132 = vand.u32 %v6131, 4294901760
  %v6133 = vsub.f32 %v6131, %v6132
  %v6134 = vand.u32 %v6133, 4294901760
  %6135 = vmatpush.msra.mxu0 %v6134
  %v6136 = vand.u32 %v4471, 4294901760
  %v6137 = vsub.f32 %v4471, %v6136
  %v6138 = vand.u32 %v6137, 4294901760
  %v6139 = vsub.f32 %v6137, %v6138
  %v6140 = vand.u32 %v6139, 4294901760
  %6141 = vmatpush.msra.mxu0 %v6140
  %v6142 = vand.u32 %v4470, 4294901760
  %v6143 = vsub.f32 %v4470, %v6142
  %v6144 = vand.u32 %v6143, 4294901760
  %v6145 = vsub.f32 %v6143, %v6144
  %v6146 = vand.u32 %v6145, 4294901760
  %6147 = vmatpush.msra.mxu0 %v6146
  %v6148 = vand.u32 %v4435, 4294901760
  %v6149 = vsub.f32 %v4435, %v6148
  %v6150 = vand.u32 %v6149, 4294901760
  %v6151 = vsub.f32 %v6149, %v6150
  %v6152 = vand.u32 %v6151, 4294901760
  %6153 = vmatpush.msra.mxu0 %v6152
  %v6154 = vand.u32 %v4434, 4294901760
  %v6155 = vsub.f32 %v4434, %v6154
  %v6156 = vand.u32 %v6155, 4294901760
  %v6157 = vsub.f32 %v6155, %v6156
  %v6158 = vand.u32 %v6157, 4294901760
  %6159 = vmatpush.msra.mxu0 %v6158
  %v6160 = vand.u32 %v4600, 4294901760
  %6161 = vmatmul.f32.gmra.mxu0 %v6160
  %v6162 = vpop.f32.mrf.mxu0
  %v6163 = vadd.f32 %v6082, %v6162
  %6164 = vdwg.mxu0
  %6165 = vmatpush.msra.mxu0 0.0
  %6166 = vmatpush.msra.mxu0 0.0
  %6167 = vmatpush.msra.mxu0 0.0
  %6168 = vmatpush.msra.mxu0 0.0
  %v6169 = vand.u32 %v4589, 4294901760
  %v6170 = vsub.f32 %v4589, %v6169
  %6171 = vmatpush.msra.mxu0 %v6170
  %v6172 = vand.u32 %v4588, 4294901760
  %v6173 = vsub.f32 %v4588, %v6172
  %6174 = vmatpush.msra.mxu0 %v6173
  %v6175 = vand.u32 %v4409, 4294901760
  %v6176 = vsub.f32 %v4409, %v6175
  %6177 = vmatpush.msra.mxu0 %v6176
  %v6178 = vand.u32 %v4403, 4294901760
  %v6179 = vsub.f32 %v4403, %v6178
  %6180 = vmatpush.msra.mxu0 %v6179
  %v6181 = vand.u32 %v4543, 4294901760
  %v6182 = vsub.f32 %v4543, %v6181
  %6183 = vmatpush.msra.mxu0 %v6182
  %v6184 = vand.u32 %v4542, 4294901760
  %v6185 = vsub.f32 %v4542, %v6184
  %6186 = vmatpush.msra.mxu0 %v6185
  %v6187 = vand.u32 %v4507, 4294901760
  %v6188 = vsub.f32 %v4507, %v6187
  %6189 = vmatpush.msra.mxu0 %v6188
  %v6190 = vand.u32 %v4506, 4294901760
  %v6191 = vsub.f32 %v4506, %v6190
  %6192 = vmatpush.msra.mxu0 %v6191
  %v6193 = vand.u32 %v4471, 4294901760
  %v6194 = vsub.f32 %v4471, %v6193
  %6195 = vmatpush.msra.mxu0 %v6194
  %v6196 = vand.u32 %v4470, 4294901760
  %v6197 = vsub.f32 %v4470, %v6196
  %6198 = vmatpush.msra.mxu0 %v6197
  %v6199 = vand.u32 %v4435, 4294901760
  %v6200 = vsub.f32 %v4435, %v6199
  %6201 = vmatpush.msra.mxu0 %v6200
  %v6202 = vand.u32 %v4434, 4294901760
  %v6203 = vsub.f32 %v4434, %v6202
  %6204 = vmatpush.msra.mxu0 %v6203
  %v6205 = vand.u32 %v4600, 4294901760
  %v6206 = vsub.f32 %v4600, %v6205
  %6207 = vmatmul.f32.gmra.mxu0 %v6206
  %v6208 = vpop.f32.mrf.mxu0
  %v6209 = vadd.f32 %v6163, %v6208
  %6210 = vdwg.mxu0
  %6211 = vmatpush.msra.mxu0 0.0
  %6212 = vmatpush.msra.mxu0 0.0
  %6213 = vmatpush.msra.mxu0 0.0
  %6214 = vmatpush.msra.mxu0 0.0
  %v6215 = vand.u32 %v4589, 4294901760
  %6216 = vmatpush.msra.mxu0 %v6215
  %v6217 = vand.u32 %v4588, 4294901760
  %6218 = vmatpush.msra.mxu0 %v6217
  %v6219 = vand.u32 %v4409, 4294901760
  %6220 = vmatpush.msra.mxu0 %v6219
  %v6221 = vand.u32 %v4403, 4294901760
  %6222 = vmatpush.msra.mxu0 %v6221
  %v6223 = vand.u32 %v4543, 4294901760
  %6224 = vmatpush.msra.mxu0 %v6223
  %v6225 = vand.u32 %v4542, 4294901760
  %6226 = vmatpush.msra.mxu0 %v6225
  %v6227 = vand.u32 %v4507, 4294901760
  %6228 = vmatpush.msra.mxu0 %v6227
  %v6229 = vand.u32 %v4506, 4294901760
  %6230 = vmatpush.msra.mxu0 %v6229
  %v6231 = vand.u32 %v4471, 4294901760
  %6232 = vmatpush.msra.mxu0 %v6231
  %v6233 = vand.u32 %v4470, 4294901760
  %6234 = vmatpush.msra.mxu0 %v6233
  %v6235 = vand.u32 %v4435, 4294901760
  %6236 = vmatpush.msra.mxu0 %v6235
  %v6237 = vand.u32 %v4434, 4294901760
  %6238 = vmatpush.msra.mxu0 %v6237
  %v6239 = vand.u32 %v4600, 4294901760
  %v6240 = vsub.f32 %v4600, %v6239
  %v6241 = vand.u32 %v6240, 4294901760
  %6242 = vmatmul.f32.gmra.mxu0 %v6241
  %v6243 = vpop.f32.mrf.mxu0
  %v6244 = vadd.f32 %v6209, %v6243
  %6245 = vdwg.mxu0
  %6246 = vmatpush.msra.mxu0 0.0
  %6247 = vmatpush.msra.mxu0 0.0
  %6248 = vmatpush.msra.mxu0 0.0
  %6249 = vmatpush.msra.mxu0 0.0
  %v6250 = vand.u32 %v4589, 4294901760
  %v6251 = vsub.f32 %v4589, %v6250
  %v6252 = vand.u32 %v6251, 4294901760
  %6253 = vmatpush.msra.mxu0 %v6252
  %v6254 = vand.u32 %v4588, 4294901760
  %v6255 = vsub.f32 %v4588, %v6254
  %v6256 = vand.u32 %v6255, 4294901760
  %6257 = vmatpush.msra.mxu0 %v6256
  %v6258 = vand.u32 %v4409, 4294901760
  %v6259 = vsub.f32 %v4409, %v6258
  %v6260 = vand.u32 %v6259, 4294901760
  %6261 = vmatpush.msra.mxu0 %v6260
  %v6262 = vand.u32 %v4403, 4294901760
  %v6263 = vsub.f32 %v4403, %v6262
  %v6264 = vand.u32 %v6263, 4294901760
  %6265 = vmatpush.msra.mxu0 %v6264
  %v6266 = vand.u32 %v4543, 4294901760
  %v6267 = vsub.f32 %v4543, %v6266
  %v6268 = vand.u32 %v6267, 4294901760
  %6269 = vmatpush.msra.mxu0 %v6268
  %v6270 = vand.u32 %v4542, 4294901760
  %v6271 = vsub.f32 %v4542, %v6270
  %v6272 = vand.u32 %v6271, 4294901760
  %6273 = vmatpush.msra.mxu0 %v6272
  %v6274 = vand.u32 %v4507, 4294901760
  %v6275 = vsub.f32 %v4507, %v6274
  %v6276 = vand.u32 %v6275, 4294901760
  %6277 = vmatpush.msra.mxu0 %v6276
  %v6278 = vand.u32 %v4506, 4294901760
  %v6279 = vsub.f32 %v4506, %v6278
  %v6280 = vand.u32 %v6279, 4294901760
  %6281 = vmatpush.msra.mxu0 %v6280
  %v6282 = vand.u32 %v4471, 4294901760
  %v6283 = vsub.f32 %v4471, %v6282
  %v6284 = vand.u32 %v6283, 4294901760
  %6285 = vmatpush.msra.mxu0 %v6284
  %v6286 = vand.u32 %v4470, 4294901760
  %v6287 = vsub.f32 %v4470, %v6286
  %v6288 = vand.u32 %v6287, 4294901760
  %6289 = vmatpush.msra.mxu0 %v6288
  %v6290 = vand.u32 %v4435, 4294901760
  %v6291 = vsub.f32 %v4435, %v6290
  %v6292 = vand.u32 %v6291, 4294901760
  %6293 = vmatpush.msra.mxu0 %v6292
  %v6294 = vand.u32 %v4434, 4294901760
  %v6295 = vsub.f32 %v4434, %v6294
  %v6296 = vand.u32 %v6295, 4294901760
  %6297 = vmatpush.msra.mxu0 %v6296
  %v6298 = vand.u32 %v4600, 4294901760
  %6299 = vmatmul.f32.gmra.mxu0 %v6298
  %v6300 = vpop.f32.mrf.mxu0
  %v6301 = vadd.f32 %v6244, %v6300
  %6302 = vdwg.mxu0
  %6303 = vmatpush.msra.mxu0 0.0
  %6304 = vmatpush.msra.mxu0 0.0
  %6305 = vmatpush.msra.mxu0 0.0
  %6306 = vmatpush.msra.mxu0 0.0
  %v6307 = vand.u32 %v4589, 4294901760
  %6308 = vmatpush.msra.mxu0 %v6307
  %v6309 = vand.u32 %v4588, 4294901760
  %6310 = vmatpush.msra.mxu0 %v6309
  %v6311 = vand.u32 %v4409, 4294901760
  %6312 = vmatpush.msra.mxu0 %v6311
  %v6313 = vand.u32 %v4403, 4294901760
  %6314 = vmatpush.msra.mxu0 %v6313
  %v6315 = vand.u32 %v4543, 4294901760
  %6316 = vmatpush.msra.mxu0 %v6315
  %v6317 = vand.u32 %v4542, 4294901760
  %6318 = vmatpush.msra.mxu0 %v6317
  %v6319 = vand.u32 %v4507, 4294901760
  %6320 = vmatpush.msra.mxu0 %v6319
  %v6321 = vand.u32 %v4506, 4294901760
  %6322 = vmatpush.msra.mxu0 %v6321
  %v6323 = vand.u32 %v4471, 4294901760
  %6324 = vmatpush.msra.mxu0 %v6323
  %v6325 = vand.u32 %v4470, 4294901760
  %6326 = vmatpush.msra.mxu0 %v6325
  %v6327 = vand.u32 %v4435, 4294901760
  %6328 = vmatpush.msra.mxu0 %v6327
  %v6329 = vand.u32 %v4434, 4294901760
  %6330 = vmatpush.msra.mxu0 %v6329
  %v6331 = vand.u32 %v4600, 4294901760
  %6332 = vmatmul.f32.gmra.mxu0 %v6331
  %v6333 = vpop.f32.mrf.mxu0
  %v6334 = vadd.f32 %v6301, %v6333
  %6335 = vdwg.mxu0
  %vm6336 = vcmp.gt.f32.partialorder %v4889, 0.0
  %vm6337 = vcmp.gt.f32.partialorder %v5178, 0.0
  %vm6338 = vcmp.gt.f32.partialorder %v5467, 0.0
  %vm6339 = vcmp.gt.f32.partialorder %v5756, 0.0
  %vm6340 = vcmp.gt.f32.partialorder %v6045, 0.0
  %vm6341 = vcmp.gt.f32.partialorder %v6334, 0.0
  %v6342 = vmin.f32 %v4889, 0.0
  %v6343 = vmin.f32 %v5178, 0.0
  %v6344 = vmin.f32 %v5467, 0.0
  %v6345 = vmin.f32 %v5756, 0.0
  %v6346 = vmin.f32 %v6045, 0.0
  %v6347 = vmin.f32 %v6334, 0.0
  %v6348 = vmul.f32 %v6342, 1.442695
  %v6349 = vpow.pop %v6348
  %v6350 = vmul.f32 %v6343, 1.442695
  %v6351 = vpow.pop %v6350
  %v6352 = vmul.f32 %v6344, 1.442695
  %v6353 = vpow.pop %v6352
  %v6354 = vmul.f32 %v6345, 1.442695
  %v6355 = vpow.pop %v6354
  %v6356 = vmul.f32 %v6346, 1.442695
  %v6357 = vpow.pop %v6356
  %v6358 = vmul.f32 %v6347, 1.442695
  %v6359 = vpow.pop %v6358
  %v6360 = vsub.f32 %v6349, 1.0
  %v6361 = vsub.f32 %v6351, 1.0
  %v6362 = vsub.f32 %v6353, 1.0
  %v6363 = vsub.f32 %v6355, 1.0
  %v6364 = vsub.f32 %v6357, 1.0
  %v6365 = vsub.f32 %v6359, 1.0
  %v6366 = vsel %vm6336, %v4889, %v6360
  %v6367 = vsel %vm6337, %v5178, %v6361
  %v6368 = vsel %vm6338, %v5467, %v6362
  %v6369 = vsel %vm6339, %v5756, %v6363
  %v6370 = vsel %vm6340, %v6045, %v6364
  %v6371 = vsel %vm6341, %v6334, %v6365
  %v6372 = vmul.f32 %v6366, %v6366
  %v6373 = vmul.f32 %v6367, %v6367
  %v6374 = vmul.f32 %v6368, %v6368
  %v6375 = vmul.f32 %v6369, %v6369
  %v6376 = vmul.f32 %v6370, %v6370
  %v6377 = vmul.f32 %v6371, %v6371
  %v6378 = vmul.f32 %v6366, %v2050
  %v6379 = vmul.f32 %v6367, %v2051
  %v6380 = vmul.f32 %v6368, %v2052
  %v6381 = vmul.f32 %v6369, %v2053
  %v6382 = vmul.f32 %v6370, %v2054
  %v6383 = vmul.f32 %v6371, %v2055
  %v6384 = vadd.f32 %v6378, %v6379
  %v6385 = vadd.f32 %v6384, %v6380
  %v6386 = vadd.f32 %v6385, %v6381
  %v6387 = vadd.f32 %v6386, %v6382
  %v6388 = vadd.f32 %v6387, %v6383
  %6389 = vadd.xlane.f32.xlu0 %v6388
  %v6390 = vpop.xlane.xlu0 %6389
  %v6391 = vmul.f32 %v6372, %v2050
  %v6392 = vmul.f32 %v6373, %v2051
  %v6393 = vmul.f32 %v6374, %v2052
  %v6394 = vmul.f32 %v6375, %v2053
  %v6395 = vmul.f32 %v6376, %v2054
  %v6396 = vmul.f32 %v6377, %v2055
  %v6397 = vadd.f32 %v6391, %v6392
  %v6398 = vadd.f32 %v6397, %v6393
  %v6399 = vadd.f32 %v6398, %v6394
  %v6400 = vadd.f32 %v6399, %v6395
  %v6401 = vadd.f32 %v6400, %v6396
  %6402 = vadd.xlane.f32.xlu0 %v6401
  %v6403 = vpop.xlane.xlu0 %6402
  %v6404 = vmul.f32 %v6390, 0.0036764706
  %v6405 = vmul.f32 %v6403, 0.0036764706
  %v6406 = vmul.f32 %v6404, %v6404
  %v6407 = vsub.f32 %v6405, %v6406
  %v6408 = vadd.f32 %v6407, 1e-05
  %v6409 = vrsqrt.pop %v6408
  %v6410 = vmul.f32 %v6409, %v6408
  %v6411 = vmul.f32 %v6410, %v6409
  %v6412 = vmul.f32 0.5, %v6411
  %v6413 = vsub.f32 1.5, %v6412
  %v6414 = vmul.f32 %v6409, %v6413
  %vm6415 = vweird.f32 %v6408
  %vm6416 = vweird.f32 %v6409
  %vm6417 = vmor %vm6415, %vm6416
  %v6418 = vsel %vm6417, %v6409, %v6414
  %v6419 = vmul.f32 %v2050, %v6418
  %v6420 = vmul.f32 %v2051, %v6418
  %v6421 = vmul.f32 %v2052, %v6418
  %v6422 = vmul.f32 %v2053, %v6418
  %v6423 = vmul.f32 %v2054, %v6418
  %v6424 = vmul.f32 %v2055, %v6418
  %v6425 = vadd.f32 %v6419, 0.0
  %v6426 = vadd.f32 %v6420, 0.0
  %v6427 = vadd.f32 %v6421, 0.0
  %v6428 = vadd.f32 %v6422, 0.0
  %v6429 = vadd.f32 %v6423, 0.0
  %v6430 = vadd.f32 %v6424, 0.0
  %v6431 = vmul.f32 %v6404, %v6418
  %v6432 = vmul.f32 %v2050, %v6431
  %v6433 = vmul.f32 %v2051, %v6431
  %v6434 = vmul.f32 %v2052, %v6431
  %v6435 = vmul.f32 %v2053, %v6431
  %v6436 = vmul.f32 %v2054, %v6431
  %v6437 = vmul.f32 %v2055, %v6431
  %v6438 = vsub.f32 0.0, %v6432
  %v6439 = vsub.f32 0.0, %v6433
  %v6440 = vsub.f32 0.0, %v6434
  %v6441 = vsub.f32 0.0, %v6435
  %v6442 = vsub.f32 0.0, %v6436
  %v6443 = vsub.f32 0.0, %v6437
  %v6444 = vmul.f32 %v6366, %v2129
  %v6445 = vmul.f32 %v6367, %v2130
  %v6446 = vmul.f32 %v6368, %v2131
  %v6447 = vmul.f32 %v6369, %v2132
  %v6448 = vmul.f32 %v6370, %v2133
  %v6449 = vmul.f32 %v6371, %v2134
  %v6450 = vadd.f32 %v6444, %v6445
  %v6451 = vadd.f32 %v6450, %v6446
  %v6452 = vadd.f32 %v6451, %v6447
  %v6453 = vadd.f32 %v6452, %v6448
  %v6454 = vadd.f32 %v6453, %v6449
  %6455 = vadd.xlane.f32.xlu0 %v6454
  %v6456 = vpop.xlane.xlu0 %6455
  %v6457 = vmul.f32 %v6372, %v2129
  %v6458 = vmul.f32 %v6373, %v2130
  %v6459 = vmul.f32 %v6374, %v2131
  %v6460 = vmul.f32 %v6375, %v2132
  %v6461 = vmul.f32 %v6376, %v2133
  %v6462 = vmul.f32 %v6377, %v2134
  %v6463 = vadd.f32 %v6457, %v6458
  %v6464 = vadd.f32 %v6463, %v6459
  %v6465 = vadd.f32 %v6464, %v6460
  %v6466 = vadd.f32 %v6465, %v6461
  %v6467 = vadd.f32 %v6466, %v6462
  %6468 = vadd.xlane.f32.xlu0 %v6467
  %v6469 = vpop.xlane.xlu0 %6468
  %v6470 = vmul.f32 %v6456, 0.0036764706
  %v6471 = vmul.f32 %v6469, 0.0036764706
  %v6472 = vmul.f32 %v6470, %v6470
  %v6473 = vsub.f32 %v6471, %v6472
  %v6474 = vadd.f32 %v6473, 1e-05
  %v6475 = vrsqrt.pop %v6474
  %v6476 = vmul.f32 %v6475, %v6474
  %v6477 = vmul.f32 %v6476, %v6475
  %v6478 = vmul.f32 0.5, %v6477
  %v6479 = vsub.f32 1.5, %v6478
  %v6480 = vmul.f32 %v6475, %v6479
  %vm6481 = vweird.f32 %v6474
  %vm6482 = vweird.f32 %v6475
  %vm6483 = vmor %vm6481, %vm6482
  %v6484 = vsel %vm6483, %v6475, %v6480
  %v6485 = vmul.f32 %v2129, %v6484
  %v6486 = vmul.f32 %v2130, %v6484
  %v6487 = vmul.f32 %v2131, %v6484
  %v6488 = vmul.f32 %v2132, %v6484
  %v6489 = vmul.f32 %v2133, %v6484
  %v6490 = vmul.f32 %v2134, %v6484
  %v6491 = vadd.f32 %v6425, %v6485
  %v6492 = vadd.f32 %v6426, %v6486
  %v6493 = vadd.f32 %v6427, %v6487
  %v6494 = vadd.f32 %v6428, %v6488
  %v6495 = vadd.f32 %v6429, %v6489
  %v6496 = vadd.f32 %v6430, %v6490
  %v6497 = vmul.f32 %v6470, %v6484
  %v6498 = vmul.f32 %v2129, %v6497
  %v6499 = vmul.f32 %v2130, %v6497
  %v6500 = vmul.f32 %v2131, %v6497
  %v6501 = vmul.f32 %v2132, %v6497
  %v6502 = vmul.f32 %v2133, %v6497
  %v6503 = vmul.f32 %v2134, %v6497
  %v6504 = vsub.f32 %v6438, %v6498
  %v6505 = vsub.f32 %v6439, %v6499
  %v6506 = vsub.f32 %v6440, %v6500
  %v6507 = vsub.f32 %v6441, %v6501
  %v6508 = vsub.f32 %v6442, %v6502
  %v6509 = vsub.f32 %v6443, %v6503
  %v6510 = vmul.f32 %v6366, %v6491
  %v6511 = vmul.f32 %v6367, %v6492
  %v6512 = vmul.f32 %v6368, %v6493
  %v6513 = vmul.f32 %v6369, %v6494
  %v6514 = vmul.f32 %v6370, %v6495
  %v6515 = vmul.f32 %v6371, %v6496
  %v6516 = vadd.f32 %v6510, %v6504
  %v6517 = vadd.f32 %v6511, %v6505
  %v6518 = vadd.f32 %v6512, %v6506
  %v6519 = vadd.f32 %v6513, %v6507
  %v6520 = vadd.f32 %v6514, %v6508
  %v6521 = vadd.f32 %v6515, %v6509
  %v6522 = vmul.f32 %v2220, %v6516
  %v6523 = vmul.f32 %v2221, %v6517
  %v6524 = vmul.f32 %v2222, %v6518
  %v6525 = vmul.f32 %v2223, %v6519
  %v6526 = vmul.f32 %v2224, %v6520
  %v6527 = vmul.f32 %v2225, %v6521
  %v6534 = vrot.slane %v6522, 4
  %v6535 = vrot.slane %v6523, 4
  %v6536 = vrot.slane %v6524, 4
  %v6537 = vrot.slane %v6525, 4
  %v6538 = vrot.slane %v6526, 4
  %v6539 = vrot.slane %v6527, 4
  %6546 = vst [vmem:[#allocation2 + $0x30] sm:$0xf0] %v6534
  %6547 = vst [vmem:[#allocation2 + $0x38] sm:$0xf0] %v6535
  %6548 = vst [vmem:[#allocation2 + $0x40] sm:$0xf0] %v6536
  %6549 = vst [vmem:[#allocation2 + $0x48] sm:$0xf0] %v6537
  %6550 = vst [vmem:[#allocation2 + $0x50] sm:$0xf0] %v6538
  %6551 = vst [vmem:[#allocation2 + $0x58] sm:$0xf0] %v6539
  %v6552 = vld [vmem:[#allocation2] sm:$0xff]
  %v6553 = vld [vmem:[#allocation2 + $0x8] sm:$0xff]
  %v6554 = vld [vmem:[#allocation2 + $0x10] sm:$0xff]
  %v6555 = vld [vmem:[#allocation2 + $0x18] sm:$0xff]
  %v6556 = vld [vmem:[#allocation2 + $0x20] sm:$0xff]
  %v6557 = vld [vmem:[#allocation2 + $0x28] sm:$0xff]
  %v6558 = vld [vmem:[#allocation2 + $0x30] sm:$0xff]
  %v6559 = vld [vmem:[#allocation2 + $0x38] sm:$0xff]
  %v6560 = vld [vmem:[#allocation2 + $0x40] sm:$0xff]
  %v6561 = vld [vmem:[#allocation2 + $0x48] sm:$0xff]
  %v6562 = vld [vmem:[#allocation2 + $0x50] sm:$0xff]
  %v6563 = vld [vmem:[#allocation2 + $0x58] sm:$0xff]
  %6564 = vrot.lane.b32.xlu0 %v6552, 19
  %v6565 = vpop.permute.xlu0 %6564
  %6566 = vrot.lane.b32.xlu0 %v6558, 19
  %v6567 = vpop.permute.xlu0 %6566
  %6568 = vrot.lane.b32.xlu0 %v6553, 19
  %v6569 = vpop.permute.xlu0 %6568
  %6570 = vrot.lane.b32.xlu0 %v6559, 19
  %v6571 = vpop.permute.xlu0 %6570
  %6572 = vrot.lane.b32.xlu0 %v6554, 19
  %v6573 = vpop.permute.xlu0 %6572
  %6574 = vrot.lane.b32.xlu0 %v6560, 19
  %v6575 = vpop.permute.xlu0 %6574
  %6576 = vrot.lane.b32.xlu0 %v6555, 19
  %v6577 = vpop.permute.xlu0 %6576
  %6578 = vrot.lane.b32.xlu0 %v6561, 19
  %v6579 = vpop.permute.xlu0 %6578
  %6580 = vrot.lane.b32.xlu0 %v6556, 19
  %v6581 = vpop.permute.xlu0 %6580
  %6582 = vrot.lane.b32.xlu0 %v6562, 19
  %v6583 = vpop.permute.xlu0 %6582
  %6584 = vrot.lane.b32.xlu0 %v6557, 19
  %v6585 = vpop.permute.xlu0 %6584
  %6586 = vrot.lane.b32.xlu0 %v6563, 19
  %v6587 = vpop.permute.xlu0 %6586
  %v6588 = vsel %vm101, %v6581, %v6585
  %v6589 = vsel %vm101, %v6583, %v6587
  %v6590 = vsel %vm101, %v6577, %v6581
  %v6591 = vsel %vm101, %v6579, %v6583
  %v6592 = vsel %vm101, %v6573, %v6577
  %v6593 = vsel %vm101, %v6575, %v6579
  %v6594 = vsel %vm101, %v6569, %v6573
  %v6595 = vsel %vm101, %v6571, %v6575
  %v6596 = vsel %vm101, %v6565, %v6569
  %v6597 = vsel %vm101, %v6567, %v6571
  %v6598 = vsel %vm101, %v6585, %v6565
  %v6599 = vsel %vm101, %v6587, %v6567
  %6600 = vrot.lane.b32.xlu0 %v6552, 18
  %v6601 = vpop.permute.xlu0 %6600
  %6602 = vrot.lane.b32.xlu0 %v6558, 18
  %v6603 = vpop.permute.xlu0 %6602
  %6604 = vrot.lane.b32.xlu0 %v6553, 18
  %v6605 = vpop.permute.xlu0 %6604
  %6606 = vrot.lane.b32.xlu0 %v6559, 18
  %v6607 = vpop.permute.xlu0 %6606
  %6608 = vrot.lane.b32.xlu0 %v6554, 18
  %v6609 = vpop.permute.xlu0 %6608
  %6610 = vrot.lane.b32.xlu0 %v6560, 18
  %v6611 = vpop.permute.xlu0 %6610
  %6612 = vrot.lane.b32.xlu0 %v6555, 18
  %v6613 = vpop.permute.xlu0 %6612
  %6614 = vrot.lane.b32.xlu0 %v6561, 18
  %v6615 = vpop.permute.xlu0 %6614
  %6616 = vrot.lane.b32.xlu0 %v6556, 18
  %v6617 = vpop.permute.xlu0 %6616
  %6618 = vrot.lane.b32.xlu0 %v6562, 18
  %v6619 = vpop.permute.xlu0 %6618
  %6620 = vrot.lane.b32.xlu0 %v6557, 18
  %v6621 = vpop.permute.xlu0 %6620
  %6622 = vrot.lane.b32.xlu0 %v6563, 18
  %v6623 = vpop.permute.xlu0 %6622
  %v6624 = vsel %vm138, %v6617, %v6621
  %v6625 = vsel %vm138, %v6619, %v6623
  %v6626 = vsel %vm138, %v6613, %v6617
  %v6627 = vsel %vm138, %v6615, %v6619
  %v6628 = vsel %vm138, %v6609, %v6613
  %v6629 = vsel %vm138, %v6611, %v6615
  %v6630 = vsel %vm138, %v6605, %v6609
  %v6631 = vsel %vm138, %v6607, %v6611
  %v6632 = vsel %vm138, %v6601, %v6605
  %v6633 = vsel %vm138, %v6603, %v6607
  %v6634 = vsel %vm138, %v6621, %v6601
  %v6635 = vsel %vm138, %v6623, %v6603
  %6636 = vrot.lane.b32.xlu0 %v6552, 17
  %v6637 = vpop.permute.xlu0 %6636
  %6638 = vrot.lane.b32.xlu0 %v6558, 17
  %v6639 = vpop.permute.xlu0 %6638
  %6640 = vrot.lane.b32.xlu0 %v6553, 17
  %v6641 = vpop.permute.xlu0 %6640
  %6642 = vrot.lane.b32.xlu0 %v6559, 17
  %v6643 = vpop.permute.xlu0 %6642
  %6644 = vrot.lane.b32.xlu0 %v6554, 17
  %v6645 = vpop.permute.xlu0 %6644
  %6646 = vrot.lane.b32.xlu0 %v6560, 17
  %v6647 = vpop.permute.xlu0 %6646
  %6648 = vrot.lane.b32.xlu0 %v6555, 17
  %v6649 = vpop.permute.xlu0 %6648
  %6650 = vrot.lane.b32.xlu0 %v6561, 17
  %v6651 = vpop.permute.xlu0 %6650
  %6652 = vrot.lane.b32.xlu0 %v6556, 17
  %v6653 = vpop.permute.xlu0 %6652
  %6654 = vrot.lane.b32.xlu0 %v6562, 17
  %v6655 = vpop.permute.xlu0 %6654
  %6656 = vrot.lane.b32.xlu0 %v6557, 17
  %v6657 = vpop.permute.xlu0 %6656
  %6658 = vrot.lane.b32.xlu0 %v6563, 17
  %v6659 = vpop.permute.xlu0 %6658
  %v6660 = vsel %vm175, %v6653, %v6657
  %v6661 = vsel %vm175, %v6655, %v6659
  %v6662 = vsel %vm175, %v6649, %v6653
  %v6663 = vsel %vm175, %v6651, %v6655
  %v6664 = vsel %vm175, %v6645, %v6649
  %v6665 = vsel %vm175, %v6647, %v6651
  %v6666 = vsel %vm175, %v6641, %v6645
  %v6667 = vsel %vm175, %v6643, %v6647
  %v6668 = vsel %vm175, %v6637, %v6641
  %v6669 = vsel %vm175, %v6639, %v6643
  %v6670 = vsel %vm175, %v6657, %v6637
  %v6671 = vsel %vm175, %v6659, %v6639
  %6672 = vrot.lane.b32.xlu0 %v6552, 1
  %v6673 = vpop.permute.xlu0 %6672
  %6674 = vrot.lane.b32.xlu0 %v6558, 1
  %v6675 = vpop.permute.xlu0 %6674
  %6676 = vrot.lane.b32.xlu0 %v6553, 1
  %v6677 = vpop.permute.xlu0 %6676
  %6678 = vrot.lane.b32.xlu0 %v6559, 1
  %v6679 = vpop.permute.xlu0 %6678
  %6680 = vrot.lane.b32.xlu0 %v6554, 1
  %v6681 = vpop.permute.xlu0 %6680
  %6682 = vrot.lane.b32.xlu0 %v6560, 1
  %v6683 = vpop.permute.xlu0 %6682
  %6684 = vrot.lane.b32.xlu0 %v6555, 1
  %v6685 = vpop.permute.xlu0 %6684
  %6686 = vrot.lane.b32.xlu0 %v6561, 1
  %v6687 = vpop.permute.xlu0 %6686
  %6688 = vrot.lane.b32.xlu0 %v6556, 1
  %v6689 = vpop.permute.xlu0 %6688
  %6690 = vrot.lane.b32.xlu0 %v6562, 1
  %v6691 = vpop.permute.xlu0 %6690
  %6692 = vrot.lane.b32.xlu0 %v6557, 1
  %v6693 = vpop.permute.xlu0 %6692
  %6694 = vrot.lane.b32.xlu0 %v6563, 1
  %v6695 = vpop.permute.xlu0 %6694
  %v6696 = vsel %vm212, %v6689, %v6693
  %v6697 = vsel %vm212, %v6691, %v6695
  %v6698 = vsel %vm212, %v6685, %v6689
  %v6699 = vsel %vm212, %v6687, %v6691
  %v6700 = vsel %vm212, %v6681, %v6685
  %v6701 = vsel %vm212, %v6683, %v6687
  %v6702 = vsel %vm212, %v6677, %v6681
  %v6703 = vsel %vm212, %v6679, %v6683
  %v6704 = vsel %vm212, %v6673, %v6677
  %v6705 = vsel %vm212, %v6675, %v6679
  %v6706 = vsel %vm212, %v6693, %v6673
  %v6707 = vsel %vm212, %v6695, %v6675
  %6708 = vrot.lane.b32.xlu0 %v6552, 127
  %v6709 = vpop.permute.xlu0 %6708
  %6710 = vrot.lane.b32.xlu0 %v6558, 127
  %v6711 = vpop.permute.xlu0 %6710
  %6712 = vrot.lane.b32.xlu0 %v6553, 127
  %v6713 = vpop.permute.xlu0 %6712
  %6714 = vrot.lane.b32.xlu0 %v6559, 127
  %v6715 = vpop.permute.xlu0 %6714
  %6716 = vrot.lane.b32.xlu0 %v6554, 127
  %v6717 = vpop.permute.xlu0 %6716
  %6718 = vrot.lane.b32.xlu0 %v6560, 127
  %v6719 = vpop.permute.xlu0 %6718
  %6720 = vrot.lane.b32.xlu0 %v6555, 127
  %v6721 = vpop.permute.xlu0 %6720
  %6722 = vrot.lane.b32.xlu0 %v6561, 127
  %v6723 = vpop.permute.xlu0 %6722
  %6724 = vrot.lane.b32.xlu0 %v6556, 127
  %v6725 = vpop.permute.xlu0 %6724
  %6726 = vrot.lane.b32.xlu0 %v6562, 127
  %v6727 = vpop.permute.xlu0 %6726
  %6728 = vrot.lane.b32.xlu0 %v6557, 127
  %v6729 = vpop.permute.xlu0 %6728
  %6730 = vrot.lane.b32.xlu0 %v6563, 127
  %v6731 = vpop.permute.xlu0 %6730
  %v6732 = vsel %vm249, %v6725, %v6729
  %v6733 = vsel %vm249, %v6727, %v6731
  %v6734 = vsel %vm249, %v6721, %v6725
  %v6735 = vsel %vm249, %v6723, %v6727
  %v6736 = vsel %vm249, %v6717, %v6721
  %v6737 = vsel %vm249, %v6719, %v6723
  %v6738 = vsel %vm249, %v6713, %v6717
  %v6739 = vsel %vm249, %v6715, %v6719
  %v6740 = vsel %vm249, %v6709, %v6713
  %v6741 = vsel %vm249, %v6711, %v6715
  %v6742 = vsel %vm249, %v6729, %v6709
  %v6743 = vsel %vm249, %v6731, %v6711
  %s6744 = scalar_lea.vmem %s2, 24
  %v6745 = vld [vmem:[%s6744] sm:$0xff]
  %s6746 = scalar_lea.vmem %s3, 24
  %v6747 = vld [vmem:[%s6746] sm:$0xff]
  %6749 = vset.pattern.permute.xlu0 0
  %6750 = vperm.xlu0 %6749, %v6747
  %v6751 = vpop.permute.xlu0 %6750
  %v6754 = vsel %vm269, %v6745, 0
  %6756 = vmatpush.msra.mxu0 0.0
  %6757 = vmatpush.msra.mxu0 0.0
  %6758 = vmatpush.msra.mxu0 0.0
  %6759 = vmatpush.msra.mxu0 0.0
  %v6760 = vand.u32 %v6741, 4294901760
  %6761 = vmatpush.msra.mxu0 %v6760
  %v6762 = vand.u32 %v6740, 4294901760
  %6763 = vmatpush.msra.mxu0 %v6762
  %v6764 = vand.u32 %v6558, 4294901760
  %6765 = vmatpush.msra.mxu0 %v6764
  %v6766 = vand.u32 %v6552, 4294901760
  %6767 = vmatpush.msra.mxu0 %v6766
  %v6768 = vand.u32 %v6707, 4294901760
  %6769 = vmatpush.msra.mxu0 %v6768
  %v6770 = vand.u32 %v6706, 4294901760
  %6771 = vmatpush.msra.mxu0 %v6770
  %v6772 = vand.u32 %v6671, 4294901760
  %6773 = vmatpush.msra.mxu0 %v6772
  %v6774 = vand.u32 %v6670, 4294901760
  %6775 = vmatpush.msra.mxu0 %v6774
  %v6776 = vand.u32 %v6635, 4294901760
  %6777 = vmatpush.msra.mxu0 %v6776
  %v6778 = vand.u32 %v6634, 4294901760
  %6779 = vmatpush.msra.mxu0 %v6778
  %v6780 = vand.u32 %v6599, 4294901760
  %6781 = vmatpush.msra.mxu0 %v6780
  %v6782 = vand.u32 %v6598, 4294901760
  %6783 = vmatpush.msra.mxu0 %v6782
  %v6784 = vand.u32 %v6754, 4294901760
  %v6785 = vsub.f32 %v6754, %v6784
  %v6786 = vand.u32 %v6785, 4294901760
  %v6787 = vsub.f32 %v6785, %v6786
  %v6788 = vand.u32 %v6787, 4294901760
  %6789 = vmatmul.f32.gmra.mxu0 %v6788
  %v6790 = vpop.f32.mrf.mxu0
  %v6791 = vadd.f32 %v6751, %v6790
  %6792 = vdwg.mxu0
  %6793 = vmatpush.msra.mxu0 0.0
  %6794 = vmatpush.msra.mxu0 0.0
  %6795 = vmatpush.msra.mxu0 0.0
  %6796 = vmatpush.msra.mxu0 0.0
  %v6797 = vand.u32 %v6741, 4294901760
  %v6798 = vsub.f32 %v6741, %v6797
  %v6799 = vand.u32 %v6798, 4294901760
  %v6800 = vsub.f32 %v6798, %v6799
  %v6801 = vand.u32 %v6800, 4294901760
  %6802 = vmatpush.msra.mxu0 %v6801
  %v6803 = vand.u32 %v6740, 4294901760
  %v6804 = vsub.f32 %v6740, %v6803
  %v6805 = vand.u32 %v6804, 4294901760
  %v6806 = vsub.f32 %v6804, %v6805
  %v6807 = vand.u32 %v6806, 4294901760
  %6808 = vmatpush.msra.mxu0 %v6807
  %v6809 = vand.u32 %v6558, 4294901760
  %v6810 = vsub.f32 %v6558, %v6809
  %v6811 = vand.u32 %v6810, 4294901760
  %v6812 = vsub.f32 %v6810, %v6811
  %v6813 = vand.u32 %v6812, 4294901760
  %6814 = vmatpush.msra.mxu0 %v6813
  %v6815 = vand.u32 %v6552, 4294901760
  %v6816 = vsub.f32 %v6552, %v6815
  %v6817 = vand.u32 %v6816, 4294901760
  %v6818 = vsub.f32 %v6816, %v6817
  %v6819 = vand.u32 %v6818, 4294901760
  %6820 = vmatpush.msra.mxu0 %v6819
  %v6821 = vand.u32 %v6707, 4294901760
  %v6822 = vsub.f32 %v6707, %v6821
  %v6823 = vand.u32 %v6822, 4294901760
  %v6824 = vsub.f32 %v6822, %v6823
  %v6825 = vand.u32 %v6824, 4294901760
  %6826 = vmatpush.msra.mxu0 %v6825
  %v6827 = vand.u32 %v6706, 4294901760
  %v6828 = vsub.f32 %v6706, %v6827
  %v6829 = vand.u32 %v6828, 4294901760
  %v6830 = vsub.f32 %v6828, %v6829
  %v6831 = vand.u32 %v6830, 4294901760
  %6832 = vmatpush.msra.mxu0 %v6831
  %v6833 = vand.u32 %v6671, 4294901760
  %v6834 = vsub.f32 %v6671, %v6833
  %v6835 = vand.u32 %v6834, 4294901760
  %v6836 = vsub.f32 %v6834, %v6835
  %v6837 = vand.u32 %v6836, 4294901760
  %6838 = vmatpush.msra.mxu0 %v6837
  %v6839 = vand.u32 %v6670, 4294901760
  %v6840 = vsub.f32 %v6670, %v6839
  %v6841 = vand.u32 %v6840, 4294901760
  %v6842 = vsub.f32 %v6840, %v6841
  %v6843 = vand.u32 %v6842, 4294901760
  %6844 = vmatpush.msra.mxu0 %v6843
  %v6845 = vand.u32 %v6635, 4294901760
  %v6846 = vsub.f32 %v6635, %v6845
  %v6847 = vand.u32 %v6846, 4294901760
  %v6848 = vsub.f32 %v6846, %v6847
  %v6849 = vand.u32 %v6848, 4294901760
  %6850 = vmatpush.msra.mxu0 %v6849
  %v6851 = vand.u32 %v6634, 4294901760
  %v6852 = vsub.f32 %v6634, %v6851
  %v6853 = vand.u32 %v6852, 4294901760
  %v6854 = vsub.f32 %v6852, %v6853
  %v6855 = vand.u32 %v6854, 4294901760
  %6856 = vmatpush.msra.mxu0 %v6855
  %v6857 = vand.u32 %v6599, 4294901760
  %v6858 = vsub.f32 %v6599, %v6857
  %v6859 = vand.u32 %v6858, 4294901760
  %v6860 = vsub.f32 %v6858, %v6859
  %v6861 = vand.u32 %v6860, 4294901760
  %6862 = vmatpush.msra.mxu0 %v6861
  %v6863 = vand.u32 %v6598, 4294901760
  %v6864 = vsub.f32 %v6598, %v6863
  %v6865 = vand.u32 %v6864, 4294901760
  %v6866 = vsub.f32 %v6864, %v6865
  %v6867 = vand.u32 %v6866, 4294901760
  %6868 = vmatpush.msra.mxu0 %v6867
  %v6869 = vand.u32 %v6754, 4294901760
  %6870 = vmatmul.f32.gmra.mxu0 %v6869
  %v6871 = vpop.f32.mrf.mxu0
  %v6872 = vadd.f32 %v6791, %v6871
  %6873 = vdwg.mxu0
  %6874 = vmatpush.msra.mxu0 0.0
  %6875 = vmatpush.msra.mxu0 0.0
  %6876 = vmatpush.msra.mxu0 0.0
  %6877 = vmatpush.msra.mxu0 0.0
  %v6878 = vand.u32 %v6741, 4294901760
  %v6879 = vsub.f32 %v6741, %v6878
  %6880 = vmatpush.msra.mxu0 %v6879
  %v6881 = vand.u32 %v6740, 4294901760
  %v6882 = vsub.f32 %v6740, %v6881
  %6883 = vmatpush.msra.mxu0 %v6882
  %v6884 = vand.u32 %v6558, 4294901760
  %v6885 = vsub.f32 %v6558, %v6884
  %6886 = vmatpush.msra.mxu0 %v6885
  %v6887 = vand.u32 %v6552, 4294901760
  %v6888 = vsub.f32 %v6552, %v6887
  %6889 = vmatpush.msra.mxu0 %v6888
  %v6890 = vand.u32 %v6707, 4294901760
  %v6891 = vsub.f32 %v6707, %v6890
  %6892 = vmatpush.msra.mxu0 %v6891
  %v6893 = vand.u32 %v6706, 4294901760
  %v6894 = vsub.f32 %v6706, %v6893
  %6895 = vmatpush.msra.mxu0 %v6894
  %v6896 = vand.u32 %v6671, 4294901760
  %v6897 = vsub.f32 %v6671, %v6896
  %6898 = vmatpush.msra.mxu0 %v6897
  %v6899 = vand.u32 %v6670, 4294901760
  %v6900 = vsub.f32 %v6670, %v6899
  %6901 = vmatpush.msra.mxu0 %v6900
  %v6902 = vand.u32 %v6635, 4294901760
  %v6903 = vsub.f32 %v6635, %v6902
  %6904 = vmatpush.msra.mxu0 %v6903
  %v6905 = vand.u32 %v6634, 4294901760
  %v6906 = vsub.f32 %v6634, %v6905
  %6907 = vmatpush.msra.mxu0 %v6906
  %v6908 = vand.u32 %v6599, 4294901760
  %v6909 = vsub.f32 %v6599, %v6908
  %6910 = vmatpush.msra.mxu0 %v6909
  %v6911 = vand.u32 %v6598, 4294901760
  %v6912 = vsub.f32 %v6598, %v6911
  %6913 = vmatpush.msra.mxu0 %v6912
  %v6914 = vand.u32 %v6754, 4294901760
  %v6915 = vsub.f32 %v6754, %v6914
  %6916 = vmatmul.f32.gmra.mxu0 %v6915
  %v6917 = vpop.f32.mrf.mxu0
  %v6918 = vadd.f32 %v6872, %v6917
  %6919 = vdwg.mxu0
  %6920 = vmatpush.msra.mxu0 0.0
  %6921 = vmatpush.msra.mxu0 0.0
  %6922 = vmatpush.msra.mxu0 0.0
  %6923 = vmatpush.msra.mxu0 0.0
  %v6924 = vand.u32 %v6741, 4294901760
  %6925 = vmatpush.msra.mxu0 %v6924
  %v6926 = vand.u32 %v6740, 4294901760
  %6927 = vmatpush.msra.mxu0 %v6926
  %v6928 = vand.u32 %v6558, 4294901760
  %6929 = vmatpush.msra.mxu0 %v6928
  %v6930 = vand.u32 %v6552, 4294901760
  %6931 = vmatpush.msra.mxu0 %v6930
  %v6932 = vand.u32 %v6707, 4294901760
  %6933 = vmatpush.msra.mxu0 %v6932
  %v6934 = vand.u32 %v6706, 4294901760
  %6935 = vmatpush.msra.mxu0 %v6934
  %v6936 = vand.u32 %v6671, 4294901760
  %6937 = vmatpush.msra.mxu0 %v6936
  %v6938 = vand.u32 %v6670, 4294901760
  %6939 = vmatpush.msra.mxu0 %v6938
  %v6940 = vand.u32 %v6635, 4294901760
  %6941 = vmatpush.msra.mxu0 %v6940
  %v6942 = vand.u32 %v6634, 4294901760
  %6943 = vmatpush.msra.mxu0 %v6942
  %v6944 = vand.u32 %v6599, 4294901760
  %6945 = vmatpush.msra.mxu0 %v6944
  %v6946 = vand.u32 %v6598, 4294901760
  %6947 = vmatpush.msra.mxu0 %v6946
  %v6948 = vand.u32 %v6754, 4294901760
  %v6949 = vsub.f32 %v6754, %v6948
  %v6950 = vand.u32 %v6949, 4294901760
  %6951 = vmatmul.f32.gmra.mxu0 %v6950
  %v6952 = vpop.f32.mrf.mxu0
  %v6953 = vadd.f32 %v6918, %v6952
  %6954 = vdwg.mxu0
  %6955 = vmatpush.msra.mxu0 0.0
  %6956 = vmatpush.msra.mxu0 0.0
  %6957 = vmatpush.msra.mxu0 0.0
  %6958 = vmatpush.msra.mxu0 0.0
  %v6959 = vand.u32 %v6741, 4294901760
  %v6960 = vsub.f32 %v6741, %v6959
  %v6961 = vand.u32 %v6960, 4294901760
  %6962 = vmatpush.msra.mxu0 %v6961
  %v6963 = vand.u32 %v6740, 4294901760
  %v6964 = vsub.f32 %v6740, %v6963
  %v6965 = vand.u32 %v6964, 4294901760
  %6966 = vmatpush.msra.mxu0 %v6965
  %v6967 = vand.u32 %v6558, 4294901760
  %v6968 = vsub.f32 %v6558, %v6967
  %v6969 = vand.u32 %v6968, 4294901760
  %6970 = vmatpush.msra.mxu0 %v6969
  %v6971 = vand.u32 %v6552, 4294901760
  %v6972 = vsub.f32 %v6552, %v6971
  %v6973 = vand.u32 %v6972, 4294901760
  %6974 = vmatpush.msra.mxu0 %v6973
  %v6975 = vand.u32 %v6707, 4294901760
  %v6976 = vsub.f32 %v6707, %v6975
  %v6977 = vand.u32 %v6976, 4294901760
  %6978 = vmatpush.msra.mxu0 %v6977
  %v6979 = vand.u32 %v6706, 4294901760
  %v6980 = vsub.f32 %v6706, %v6979
  %v6981 = vand.u32 %v6980, 4294901760
  %6982 = vmatpush.msra.mxu0 %v6981
  %v6983 = vand.u32 %v6671, 4294901760
  %v6984 = vsub.f32 %v6671, %v6983
  %v6985 = vand.u32 %v6984, 4294901760
  %6986 = vmatpush.msra.mxu0 %v6985
  %v6987 = vand.u32 %v6670, 4294901760
  %v6988 = vsub.f32 %v6670, %v6987
  %v6989 = vand.u32 %v6988, 4294901760
  %6990 = vmatpush.msra.mxu0 %v6989
  %v6991 = vand.u32 %v6635, 4294901760
  %v6992 = vsub.f32 %v6635, %v6991
  %v6993 = vand.u32 %v6992, 4294901760
  %6994 = vmatpush.msra.mxu0 %v6993
  %v6995 = vand.u32 %v6634, 4294901760
  %v6996 = vsub.f32 %v6634, %v6995
  %v6997 = vand.u32 %v6996, 4294901760
  %6998 = vmatpush.msra.mxu0 %v6997
  %v6999 = vand.u32 %v6599, 4294901760
  %v7000 = vsub.f32 %v6599, %v6999
  %v7001 = vand.u32 %v7000, 4294901760
  %7002 = vmatpush.msra.mxu0 %v7001
  %v7003 = vand.u32 %v6598, 4294901760
  %v7004 = vsub.f32 %v6598, %v7003
  %v7005 = vand.u32 %v7004, 4294901760
  %7006 = vmatpush.msra.mxu0 %v7005
  %v7007 = vand.u32 %v6754, 4294901760
  %7008 = vmatmul.f32.gmra.mxu0 %v7007
  %v7009 = vpop.f32.mrf.mxu0
  %v7010 = vadd.f32 %v6953, %v7009
  %7011 = vdwg.mxu0
  %7012 = vmatpush.msra.mxu0 0.0
  %7013 = vmatpush.msra.mxu0 0.0
  %7014 = vmatpush.msra.mxu0 0.0
  %7015 = vmatpush.msra.mxu0 0.0
  %v7016 = vand.u32 %v6741, 4294901760
  %7017 = vmatpush.msra.mxu0 %v7016
  %v7018 = vand.u32 %v6740, 4294901760
  %7019 = vmatpush.msra.mxu0 %v7018
  %v7020 = vand.u32 %v6558, 4294901760
  %7021 = vmatpush.msra.mxu0 %v7020
  %v7022 = vand.u32 %v6552, 4294901760
  %7023 = vmatpush.msra.mxu0 %v7022
  %v7024 = vand.u32 %v6707, 4294901760
  %7025 = vmatpush.msra.mxu0 %v7024
  %v7026 = vand.u32 %v6706, 4294901760
  %7027 = vmatpush.msra.mxu0 %v7026
  %v7028 = vand.u32 %v6671, 4294901760
  %7029 = vmatpush.msra.mxu0 %v7028
  %v7030 = vand.u32 %v6670, 4294901760
  %7031 = vmatpush.msra.mxu0 %v7030
  %v7032 = vand.u32 %v6635, 4294901760
  %7033 = vmatpush.msra.mxu0 %v7032
  %v7034 = vand.u32 %v6634, 4294901760
  %7035 = vmatpush.msra.mxu0 %v7034
  %v7036 = vand.u32 %v6599, 4294901760
  %7037 = vmatpush.msra.mxu0 %v7036
  %v7038 = vand.u32 %v6598, 4294901760
  %7039 = vmatpush.msra.mxu0 %v7038
  %v7040 = vand.u32 %v6754, 4294901760
  %7041 = vmatmul.f32.gmra.mxu0 %v7040
  %v7042 = vpop.f32.mrf.mxu0
  %v7043 = vadd.f32 %v7010, %v7042
  %7044 = vdwg.mxu0
  %7045 = vmatpush.msra.mxu0 0.0
  %7046 = vmatpush.msra.mxu0 0.0
  %7047 = vmatpush.msra.mxu0 0.0
  %7048 = vmatpush.msra.mxu0 0.0
  %v7049 = vand.u32 %v6739, 4294901760
  %7050 = vmatpush.msra.mxu0 %v7049
  %v7051 = vand.u32 %v6738, 4294901760
  %7052 = vmatpush.msra.mxu0 %v7051
  %v7053 = vand.u32 %v6559, 4294901760
  %7054 = vmatpush.msra.mxu0 %v7053
  %v7055 = vand.u32 %v6553, 4294901760
  %7056 = vmatpush.msra.mxu0 %v7055
  %v7057 = vand.u32 %v6705, 4294901760
  %7058 = vmatpush.msra.mxu0 %v7057
  %v7059 = vand.u32 %v6704, 4294901760
  %7060 = vmatpush.msra.mxu0 %v7059
  %v7061 = vand.u32 %v6669, 4294901760
  %7062 = vmatpush.msra.mxu0 %v7061
  %v7063 = vand.u32 %v6668, 4294901760
  %7064 = vmatpush.msra.mxu0 %v7063
  %v7065 = vand.u32 %v6633, 4294901760
  %7066 = vmatpush.msra.mxu0 %v7065
  %v7067 = vand.u32 %v6632, 4294901760
  %7068 = vmatpush.msra.mxu0 %v7067
  %v7069 = vand.u32 %v6597, 4294901760
  %7070 = vmatpush.msra.mxu0 %v7069
  %v7071 = vand.u32 %v6596, 4294901760
  %7072 = vmatpush.msra.mxu0 %v7071
  %v7073 = vand.u32 %v6754, 4294901760
  %v7074 = vsub.f32 %v6754, %v7073
  %v7075 = vand.u32 %v7074, 4294901760
  %v7076 = vsub.f32 %v7074, %v7075
  %v7077 = vand.u32 %v7076, 4294901760
  %7078 = vmatmul.f32.gmra.mxu0 %v7077
  %v7079 = vpop.f32.mrf.mxu0
  %v7080 = vadd.f32 %v6751, %v7079
  %7081 = vdwg.mxu0
  %7082 = vmatpush.msra.mxu0 0.0
  %7083 = vmatpush.msra.mxu0 0.0
  %7084 = vmatpush.msra.mxu0 0.0
  %7085 = vmatpush.msra.mxu0 0.0
  %v7086 = vand.u32 %v6739, 4294901760
  %v7087 = vsub.f32 %v6739, %v7086
  %v7088 = vand.u32 %v7087, 4294901760
  %v7089 = vsub.f32 %v7087, %v7088
  %v7090 = vand.u32 %v7089, 4294901760
  %7091 = vmatpush.msra.mxu0 %v7090
  %v7092 = vand.u32 %v6738, 4294901760
  %v7093 = vsub.f32 %v6738, %v7092
  %v7094 = vand.u32 %v7093, 4294901760
  %v7095 = vsub.f32 %v7093, %v7094
  %v7096 = vand.u32 %v7095, 4294901760
  %7097 = vmatpush.msra.mxu0 %v7096
  %v7098 = vand.u32 %v6559, 4294901760
  %v7099 = vsub.f32 %v6559, %v7098
  %v7100 = vand.u32 %v7099, 4294901760
  %v7101 = vsub.f32 %v7099, %v7100
  %v7102 = vand.u32 %v7101, 4294901760
  %7103 = vmatpush.msra.mxu0 %v7102
  %v7104 = vand.u32 %v6553, 4294901760
  %v7105 = vsub.f32 %v6553, %v7104
  %v7106 = vand.u32 %v7105, 4294901760
  %v7107 = vsub.f32 %v7105, %v7106
  %v7108 = vand.u32 %v7107, 4294901760
  %7109 = vmatpush.msra.mxu0 %v7108
  %v7110 = vand.u32 %v6705, 4294901760
  %v7111 = vsub.f32 %v6705, %v7110
  %v7112 = vand.u32 %v7111, 4294901760
  %v7113 = vsub.f32 %v7111, %v7112
  %v7114 = vand.u32 %v7113, 4294901760
  %7115 = vmatpush.msra.mxu0 %v7114
  %v7116 = vand.u32 %v6704, 4294901760
  %v7117 = vsub.f32 %v6704, %v7116
  %v7118 = vand.u32 %v7117, 4294901760
  %v7119 = vsub.f32 %v7117, %v7118
  %v7120 = vand.u32 %v7119, 4294901760
  %7121 = vmatpush.msra.mxu0 %v7120
  %v7122 = vand.u32 %v6669, 4294901760
  %v7123 = vsub.f32 %v6669, %v7122
  %v7124 = vand.u32 %v7123, 4294901760
  %v7125 = vsub.f32 %v7123, %v7124
  %v7126 = vand.u32 %v7125, 4294901760
  %7127 = vmatpush.msra.mxu0 %v7126
  %v7128 = vand.u32 %v6668, 4294901760
  %v7129 = vsub.f32 %v6668, %v7128
  %v7130 = vand.u32 %v7129, 4294901760
  %v7131 = vsub.f32 %v7129, %v7130
  %v7132 = vand.u32 %v7131, 4294901760
  %7133 = vmatpush.msra.mxu0 %v7132
  %v7134 = vand.u32 %v6633, 4294901760
  %v7135 = vsub.f32 %v6633, %v7134
  %v7136 = vand.u32 %v7135, 4294901760
  %v7137 = vsub.f32 %v7135, %v7136
  %v7138 = vand.u32 %v7137, 4294901760
  %7139 = vmatpush.msra.mxu0 %v7138
  %v7140 = vand.u32 %v6632, 4294901760
  %v7141 = vsub.f32 %v6632, %v7140
  %v7142 = vand.u32 %v7141, 4294901760
  %v7143 = vsub.f32 %v7141, %v7142
  %v7144 = vand.u32 %v7143, 4294901760
  %7145 = vmatpush.msra.mxu0 %v7144
  %v7146 = vand.u32 %v6597, 4294901760
  %v7147 = vsub.f32 %v6597, %v7146
  %v7148 = vand.u32 %v7147, 4294901760
  %v7149 = vsub.f32 %v7147, %v7148
  %v7150 = vand.u32 %v7149, 4294901760
  %7151 = vmatpush.msra.mxu0 %v7150
  %v7152 = vand.u32 %v6596, 4294901760
  %v7153 = vsub.f32 %v6596, %v7152
  %v7154 = vand.u32 %v7153, 4294901760
  %v7155 = vsub.f32 %v7153, %v7154
  %v7156 = vand.u32 %v7155, 4294901760
  %7157 = vmatpush.msra.mxu0 %v7156
  %v7158 = vand.u32 %v6754, 4294901760
  %7159 = vmatmul.f32.gmra.mxu0 %v7158
  %v7160 = vpop.f32.mrf.mxu0
  %v7161 = vadd.f32 %v7080, %v7160
  %7162 = vdwg.mxu0
  %7163 = vmatpush.msra.mxu0 0.0
  %7164 = vmatpush.msra.mxu0 0.0
  %7165 = vmatpush.msra.mxu0 0.0
  %7166 = vmatpush.msra.mxu0 0.0
  %v7167 = vand.u32 %v6739, 4294901760
  %v7168 = vsub.f32 %v6739, %v7167
  %7169 = vmatpush.msra.mxu0 %v7168
  %v7170 = vand.u32 %v6738, 4294901760
  %v7171 = vsub.f32 %v6738, %v7170
  %7172 = vmatpush.msra.mxu0 %v7171
  %v7173 = vand.u32 %v6559, 4294901760
  %v7174 = vsub.f32 %v6559, %v7173
  %7175 = vmatpush.msra.mxu0 %v7174
  %v7176 = vand.u32 %v6553, 4294901760
  %v7177 = vsub.f32 %v6553, %v7176
  %7178 = vmatpush.msra.mxu0 %v7177
  %v7179 = vand.u32 %v6705, 4294901760
  %v7180 = vsub.f32 %v6705, %v7179
  %7181 = vmatpush.msra.mxu0 %v7180
  %v7182 = vand.u32 %v6704, 4294901760
  %v7183 = vsub.f32 %v6704, %v7182
  %7184 = vmatpush.msra.mxu0 %v7183
  %v7185 = vand.u32 %v6669, 4294901760
  %v7186 = vsub.f32 %v6669, %v7185
  %7187 = vmatpush.msra.mxu0 %v7186
  %v7188 = vand.u32 %v6668, 4294901760
  %v7189 = vsub.f32 %v6668, %v7188
  %7190 = vmatpush.msra.mxu0 %v7189
  %v7191 = vand.u32 %v6633, 4294901760
  %v7192 = vsub.f32 %v6633, %v7191
  %7193 = vmatpush.msra.mxu0 %v7192
  %v7194 = vand.u32 %v6632, 4294901760
  %v7195 = vsub.f32 %v6632, %v7194
  %7196 = vmatpush.msra.mxu0 %v7195
  %v7197 = vand.u32 %v6597, 4294901760
  %v7198 = vsub.f32 %v6597, %v7197
  %7199 = vmatpush.msra.mxu0 %v7198
  %v7200 = vand.u32 %v6596, 4294901760
  %v7201 = vsub.f32 %v6596, %v7200
  %7202 = vmatpush.msra.mxu0 %v7201
  %v7203 = vand.u32 %v6754, 4294901760
  %v7204 = vsub.f32 %v6754, %v7203
  %7205 = vmatmul.f32.gmra.mxu0 %v7204
  %v7206 = vpop.f32.mrf.mxu0
  %v7207 = vadd.f32 %v7161, %v7206
  %7208 = vdwg.mxu0
  %7209 = vmatpush.msra.mxu0 0.0
  %7210 = vmatpush.msra.mxu0 0.0
  %7211 = vmatpush.msra.mxu0 0.0
  %7212 = vmatpush.msra.mxu0 0.0
  %v7213 = vand.u32 %v6739, 4294901760
  %7214 = vmatpush.msra.mxu0 %v7213
  %v7215 = vand.u32 %v6738, 4294901760
  %7216 = vmatpush.msra.mxu0 %v7215
  %v7217 = vand.u32 %v6559, 4294901760
  %7218 = vmatpush.msra.mxu0 %v7217
  %v7219 = vand.u32 %v6553, 4294901760
  %7220 = vmatpush.msra.mxu0 %v7219
  %v7221 = vand.u32 %v6705, 4294901760
  %7222 = vmatpush.msra.mxu0 %v7221
  %v7223 = vand.u32 %v6704, 4294901760
  %7224 = vmatpush.msra.mxu0 %v7223
  %v7225 = vand.u32 %v6669, 4294901760
  %7226 = vmatpush.msra.mxu0 %v7225
  %v7227 = vand.u32 %v6668, 4294901760
  %7228 = vmatpush.msra.mxu0 %v7227
  %v7229 = vand.u32 %v6633, 4294901760
  %7230 = vmatpush.msra.mxu0 %v7229
  %v7231 = vand.u32 %v6632, 4294901760
  %7232 = vmatpush.msra.mxu0 %v7231
  %v7233 = vand.u32 %v6597, 4294901760
  %7234 = vmatpush.msra.mxu0 %v7233
  %v7235 = vand.u32 %v6596, 4294901760
  %7236 = vmatpush.msra.mxu0 %v7235
  %v7237 = vand.u32 %v6754, 4294901760
  %v7238 = vsub.f32 %v6754, %v7237
  %v7239 = vand.u32 %v7238, 4294901760
  %7240 = vmatmul.f32.gmra.mxu0 %v7239
  %v7241 = vpop.f32.mrf.mxu0
  %v7242 = vadd.f32 %v7207, %v7241
  %7243 = vdwg.mxu0
  %7244 = vmatpush.msra.mxu0 0.0
  %7245 = vmatpush.msra.mxu0 0.0
  %7246 = vmatpush.msra.mxu0 0.0
  %7247 = vmatpush.msra.mxu0 0.0
  %v7248 = vand.u32 %v6739, 4294901760
  %v7249 = vsub.f32 %v6739, %v7248
  %v7250 = vand.u32 %v7249, 4294901760
  %7251 = vmatpush.msra.mxu0 %v7250
  %v7252 = vand.u32 %v6738, 4294901760
  %v7253 = vsub.f32 %v6738, %v7252
  %v7254 = vand.u32 %v7253, 4294901760
  %7255 = vmatpush.msra.mxu0 %v7254
  %v7256 = vand.u32 %v6559, 4294901760
  %v7257 = vsub.f32 %v6559, %v7256
  %v7258 = vand.u32 %v7257, 4294901760
  %7259 = vmatpush.msra.mxu0 %v7258
  %v7260 = vand.u32 %v6553, 4294901760
  %v7261 = vsub.f32 %v6553, %v7260
  %v7262 = vand.u32 %v7261, 4294901760
  %7263 = vmatpush.msra.mxu0 %v7262
  %v7264 = vand.u32 %v6705, 4294901760
  %v7265 = vsub.f32 %v6705, %v7264
  %v7266 = vand.u32 %v7265, 4294901760
  %7267 = vmatpush.msra.mxu0 %v7266
  %v7268 = vand.u32 %v6704, 4294901760
  %v7269 = vsub.f32 %v6704, %v7268
  %v7270 = vand.u32 %v7269, 4294901760
  %7271 = vmatpush.msra.mxu0 %v7270
  %v7272 = vand.u32 %v6669, 4294901760
  %v7273 = vsub.f32 %v6669, %v7272
  %v7274 = vand.u32 %v7273, 4294901760
  %7275 = vmatpush.msra.mxu0 %v7274
  %v7276 = vand.u32 %v6668, 4294901760
  %v7277 = vsub.f32 %v6668, %v7276
  %v7278 = vand.u32 %v7277, 4294901760
  %7279 = vmatpush.msra.mxu0 %v7278
  %v7280 = vand.u32 %v6633, 4294901760
  %v7281 = vsub.f32 %v6633, %v7280
  %v7282 = vand.u32 %v7281, 4294901760
  %7283 = vmatpush.msra.mxu0 %v7282
  %v7284 = vand.u32 %v6632, 4294901760
  %v7285 = vsub.f32 %v6632, %v7284
  %v7286 = vand.u32 %v7285, 4294901760
  %7287 = vmatpush.msra.mxu0 %v7286
  %v7288 = vand.u32 %v6597, 4294901760
  %v7289 = vsub.f32 %v6597, %v7288
  %v7290 = vand.u32 %v7289, 4294901760
  %7291 = vmatpush.msra.mxu0 %v7290
  %v7292 = vand.u32 %v6596, 4294901760
  %v7293 = vsub.f32 %v6596, %v7292
  %v7294 = vand.u32 %v7293, 4294901760
  %7295 = vmatpush.msra.mxu0 %v7294
  %v7296 = vand.u32 %v6754, 4294901760
  %7297 = vmatmul.f32.gmra.mxu0 %v7296
  %v7298 = vpop.f32.mrf.mxu0
  %v7299 = vadd.f32 %v7242, %v7298
  %7300 = vdwg.mxu0
  %7301 = vmatpush.msra.mxu0 0.0
  %7302 = vmatpush.msra.mxu0 0.0
  %7303 = vmatpush.msra.mxu0 0.0
  %7304 = vmatpush.msra.mxu0 0.0
  %v7305 = vand.u32 %v6739, 4294901760
  %7306 = vmatpush.msra.mxu0 %v7305
  %v7307 = vand.u32 %v6738, 4294901760
  %7308 = vmatpush.msra.mxu0 %v7307
  %v7309 = vand.u32 %v6559, 4294901760
  %7310 = vmatpush.msra.mxu0 %v7309
  %v7311 = vand.u32 %v6553, 4294901760
  %7312 = vmatpush.msra.mxu0 %v7311
  %v7313 = vand.u32 %v6705, 4294901760
  %7314 = vmatpush.msra.mxu0 %v7313
  %v7315 = vand.u32 %v6704, 4294901760
  %7316 = vmatpush.msra.mxu0 %v7315
  %v7317 = vand.u32 %v6669, 4294901760
  %7318 = vmatpush.msra.mxu0 %v7317
  %v7319 = vand.u32 %v6668, 4294901760
  %7320 = vmatpush.msra.mxu0 %v7319
  %v7321 = vand.u32 %v6633, 4294901760
  %7322 = vmatpush.msra.mxu0 %v7321
  %v7323 = vand.u32 %v6632, 4294901760
  %7324 = vmatpush.msra.mxu0 %v7323
  %v7325 = vand.u32 %v6597, 4294901760
  %7326 = vmatpush.msra.mxu0 %v7325
  %v7327 = vand.u32 %v6596, 4294901760
  %7328 = vmatpush.msra.mxu0 %v7327
  %v7329 = vand.u32 %v6754, 4294901760
  %7330 = vmatmul.f32.gmra.mxu0 %v7329
  %v7331 = vpop.f32.mrf.mxu0
  %v7332 = vadd.f32 %v7299, %v7331
  %7333 = vdwg.mxu0
  %7334 = vmatpush.msra.mxu0 0.0
  %7335 = vmatpush.msra.mxu0 0.0
  %7336 = vmatpush.msra.mxu0 0.0
  %7337 = vmatpush.msra.mxu0 0.0
  %v7338 = vand.u32 %v6737, 4294901760
  %7339 = vmatpush.msra.mxu0 %v7338
  %v7340 = vand.u32 %v6736, 4294901760
  %7341 = vmatpush.msra.mxu0 %v7340
  %v7342 = vand.u32 %v6560, 4294901760
  %7343 = vmatpush.msra.mxu0 %v7342
  %v7344 = vand.u32 %v6554, 4294901760
  %7345 = vmatpush.msra.mxu0 %v7344
  %v7346 = vand.u32 %v6703, 4294901760
  %7347 = vmatpush.msra.mxu0 %v7346
  %v7348 = vand.u32 %v6702, 4294901760
  %7349 = vmatpush.msra.mxu0 %v7348
  %v7350 = vand.u32 %v6667, 4294901760
  %7351 = vmatpush.msra.mxu0 %v7350
  %v7352 = vand.u32 %v6666, 4294901760
  %7353 = vmatpush.msra.mxu0 %v7352
  %v7354 = vand.u32 %v6631, 4294901760
  %7355 = vmatpush.msra.mxu0 %v7354
  %v7356 = vand.u32 %v6630, 4294901760
  %7357 = vmatpush.msra.mxu0 %v7356
  %v7358 = vand.u32 %v6595, 4294901760
  %7359 = vmatpush.msra.mxu0 %v7358
  %v7360 = vand.u32 %v6594, 4294901760
  %7361 = vmatpush.msra.mxu0 %v7360
  %v7362 = vand.u32 %v6754, 4294901760
  %v7363 = vsub.f32 %v6754, %v7362
  %v7364 = vand.u32 %v7363, 4294901760
  %v7365 = vsub.f32 %v7363, %v7364
  %v7366 = vand.u32 %v7365, 4294901760
  %7367 = vmatmul.f32.gmra.mxu0 %v7366
  %v7368 = vpop.f32.mrf.mxu0
  %v7369 = vadd.f32 %v6751, %v7368
  %7370 = vdwg.mxu0
  %7371 = vmatpush.msra.mxu0 0.0
  %7372 = vmatpush.msra.mxu0 0.0
  %7373 = vmatpush.msra.mxu0 0.0
  %7374 = vmatpush.msra.mxu0 0.0
  %v7375 = vand.u32 %v6737, 4294901760
  %v7376 = vsub.f32 %v6737, %v7375
  %v7377 = vand.u32 %v7376, 4294901760
  %v7378 = vsub.f32 %v7376, %v7377
  %v7379 = vand.u32 %v7378, 4294901760
  %7380 = vmatpush.msra.mxu0 %v7379
  %v7381 = vand.u32 %v6736, 4294901760
  %v7382 = vsub.f32 %v6736, %v7381
  %v7383 = vand.u32 %v7382, 4294901760
  %v7384 = vsub.f32 %v7382, %v7383
  %v7385 = vand.u32 %v7384, 4294901760
  %7386 = vmatpush.msra.mxu0 %v7385
  %v7387 = vand.u32 %v6560, 4294901760
  %v7388 = vsub.f32 %v6560, %v7387
  %v7389 = vand.u32 %v7388, 4294901760
  %v7390 = vsub.f32 %v7388, %v7389
  %v7391 = vand.u32 %v7390, 4294901760
  %7392 = vmatpush.msra.mxu0 %v7391
  %v7393 = vand.u32 %v6554, 4294901760
  %v7394 = vsub.f32 %v6554, %v7393
  %v7395 = vand.u32 %v7394, 4294901760
  %v7396 = vsub.f32 %v7394, %v7395
  %v7397 = vand.u32 %v7396, 4294901760
  %7398 = vmatpush.msra.mxu0 %v7397
  %v7399 = vand.u32 %v6703, 4294901760
  %v7400 = vsub.f32 %v6703, %v7399
  %v7401 = vand.u32 %v7400, 4294901760
  %v7402 = vsub.f32 %v7400, %v7401
  %v7403 = vand.u32 %v7402, 4294901760
  %7404 = vmatpush.msra.mxu0 %v7403
  %v7405 = vand.u32 %v6702, 4294901760
  %v7406 = vsub.f32 %v6702, %v7405
  %v7407 = vand.u32 %v7406, 4294901760
  %v7408 = vsub.f32 %v7406, %v7407
  %v7409 = vand.u32 %v7408, 4294901760
  %7410 = vmatpush.msra.mxu0 %v7409
  %v7411 = vand.u32 %v6667, 4294901760
  %v7412 = vsub.f32 %v6667, %v7411
  %v7413 = vand.u32 %v7412, 4294901760
  %v7414 = vsub.f32 %v7412, %v7413
  %v7415 = vand.u32 %v7414, 4294901760
  %7416 = vmatpush.msra.mxu0 %v7415
  %v7417 = vand.u32 %v6666, 4294901760
  %v7418 = vsub.f32 %v6666, %v7417
  %v7419 = vand.u32 %v7418, 4294901760
  %v7420 = vsub.f32 %v7418, %v7419
  %v7421 = vand.u32 %v7420, 4294901760
  %7422 = vmatpush.msra.mxu0 %v7421
  %v7423 = vand.u32 %v6631, 4294901760
  %v7424 = vsub.f32 %v6631, %v7423
  %v7425 = vand.u32 %v7424, 4294901760
  %v7426 = vsub.f32 %v7424, %v7425
  %v7427 = vand.u32 %v7426, 4294901760
  %7428 = vmatpush.msra.mxu0 %v7427
  %v7429 = vand.u32 %v6630, 4294901760
  %v7430 = vsub.f32 %v6630, %v7429
  %v7431 = vand.u32 %v7430, 4294901760
  %v7432 = vsub.f32 %v7430, %v7431
  %v7433 = vand.u32 %v7432, 4294901760
  %7434 = vmatpush.msra.mxu0 %v7433
  %v7435 = vand.u32 %v6595, 4294901760
  %v7436 = vsub.f32 %v6595, %v7435
  %v7437 = vand.u32 %v7436, 4294901760
  %v7438 = vsub.f32 %v7436, %v7437
  %v7439 = vand.u32 %v7438, 4294901760
  %7440 = vmatpush.msra.mxu0 %v7439
  %v7441 = vand.u32 %v6594, 4294901760
  %v7442 = vsub.f32 %v6594, %v7441
  %v7443 = vand.u32 %v7442, 4294901760
  %v7444 = vsub.f32 %v7442, %v7443
  %v7445 = vand.u32 %v7444, 4294901760
  %7446 = vmatpush.msra.mxu0 %v7445
  %v7447 = vand.u32 %v6754, 4294901760
  %7448 = vmatmul.f32.gmra.mxu0 %v7447
  %v7449 = vpop.f32.mrf.mxu0
  %v7450 = vadd.f32 %v7369, %v7449
  %7451 = vdwg.mxu0
  %7452 = vmatpush.msra.mxu0 0.0
  %7453 = vmatpush.msra.mxu0 0.0
  %7454 = vmatpush.msra.mxu0 0.0
  %7455 = vmatpush.msra.mxu0 0.0
  %v7456 = vand.u32 %v6737, 4294901760
  %v7457 = vsub.f32 %v6737, %v7456
  %7458 = vmatpush.msra.mxu0 %v7457
  %v7459 = vand.u32 %v6736, 4294901760
  %v7460 = vsub.f32 %v6736, %v7459
  %7461 = vmatpush.msra.mxu0 %v7460
  %v7462 = vand.u32 %v6560, 4294901760
  %v7463 = vsub.f32 %v6560, %v7462
  %7464 = vmatpush.msra.mxu0 %v7463
  %v7465 = vand.u32 %v6554, 4294901760
  %v7466 = vsub.f32 %v6554, %v7465
  %7467 = vmatpush.msra.mxu0 %v7466
  %v7468 = vand.u32 %v6703, 4294901760
  %v7469 = vsub.f32 %v6703, %v7468
  %7470 = vmatpush.msra.mxu0 %v7469
  %v7471 = vand.u32 %v6702, 4294901760
  %v7472 = vsub.f32 %v6702, %v7471
  %7473 = vmatpush.msra.mxu0 %v7472
  %v7474 = vand.u32 %v6667, 4294901760
  %v7475 = vsub.f32 %v6667, %v7474
  %7476 = vmatpush.msra.mxu0 %v7475
  %v7477 = vand.u32 %v6666, 4294901760
  %v7478 = vsub.f32 %v6666, %v7477
  %7479 = vmatpush.msra.mxu0 %v7478
  %v7480 = vand.u32 %v6631, 4294901760
  %v7481 = vsub.f32 %v6631, %v7480
  %7482 = vmatpush.msra.mxu0 %v7481
  %v7483 = vand.u32 %v6630, 4294901760
  %v7484 = vsub.f32 %v6630, %v7483
  %7485 = vmatpush.msra.mxu0 %v7484
  %v7486 = vand.u32 %v6595, 4294901760
  %v7487 = vsub.f32 %v6595, %v7486
  %7488 = vmatpush.msra.mxu0 %v7487
  %v7489 = vand.u32 %v6594, 4294901760
  %v7490 = vsub.f32 %v6594, %v7489
  %7491 = vmatpush.msra.mxu0 %v7490
  %v7492 = vand.u32 %v6754, 4294901760
  %v7493 = vsub.f32 %v6754, %v7492
  %7494 = vmatmul.f32.gmra.mxu0 %v7493
  %v7495 = vpop.f32.mrf.mxu0
  %v7496 = vadd.f32 %v7450, %v7495
  %7497 = vdwg.mxu0
  %7498 = vmatpush.msra.mxu0 0.0
  %7499 = vmatpush.msra.mxu0 0.0
  %7500 = vmatpush.msra.mxu0 0.0
  %7501 = vmatpush.msra.mxu0 0.0
  %v7502 = vand.u32 %v6737, 4294901760
  %7503 = vmatpush.msra.mxu0 %v7502
  %v7504 = vand.u32 %v6736, 4294901760
  %7505 = vmatpush.msra.mxu0 %v7504
  %v7506 = vand.u32 %v6560, 4294901760
  %7507 = vmatpush.msra.mxu0 %v7506
  %v7508 = vand.u32 %v6554, 4294901760
  %7509 = vmatpush.msra.mxu0 %v7508
  %v7510 = vand.u32 %v6703, 4294901760
  %7511 = vmatpush.msra.mxu0 %v7510
  %v7512 = vand.u32 %v6702, 4294901760
  %7513 = vmatpush.msra.mxu0 %v7512
  %v7514 = vand.u32 %v6667, 4294901760
  %7515 = vmatpush.msra.mxu0 %v7514
  %v7516 = vand.u32 %v6666, 4294901760
  %7517 = vmatpush.msra.mxu0 %v7516
  %v7518 = vand.u32 %v6631, 4294901760
  %7519 = vmatpush.msra.mxu0 %v7518
  %v7520 = vand.u32 %v6630, 4294901760
  %7521 = vmatpush.msra.mxu0 %v7520
  %v7522 = vand.u32 %v6595, 4294901760
  %7523 = vmatpush.msra.mxu0 %v7522
  %v7524 = vand.u32 %v6594, 4294901760
  %7525 = vmatpush.msra.mxu0 %v7524
  %v7526 = vand.u32 %v6754, 4294901760
  %v7527 = vsub.f32 %v6754, %v7526
  %v7528 = vand.u32 %v7527, 4294901760
  %7529 = vmatmul.f32.gmra.mxu0 %v7528
  %v7530 = vpop.f32.mrf.mxu0
  %v7531 = vadd.f32 %v7496, %v7530
  %7532 = vdwg.mxu0
  %7533 = vmatpush.msra.mxu0 0.0
  %7534 = vmatpush.msra.mxu0 0.0
  %7535 = vmatpush.msra.mxu0 0.0
  %7536 = vmatpush.msra.mxu0 0.0
  %v7537 = vand.u32 %v6737, 4294901760
  %v7538 = vsub.f32 %v6737, %v7537
  %v7539 = vand.u32 %v7538, 4294901760
  %7540 = vmatpush.msra.mxu0 %v7539
  %v7541 = vand.u32 %v6736, 4294901760
  %v7542 = vsub.f32 %v6736, %v7541
  %v7543 = vand.u32 %v7542, 4294901760
  %7544 = vmatpush.msra.mxu0 %v7543
  %v7545 = vand.u32 %v6560, 4294901760
  %v7546 = vsub.f32 %v6560, %v7545
  %v7547 = vand.u32 %v7546, 4294901760
  %7548 = vmatpush.msra.mxu0 %v7547
  %v7549 = vand.u32 %v6554, 4294901760
  %v7550 = vsub.f32 %v6554, %v7549
  %v7551 = vand.u32 %v7550, 4294901760
  %7552 = vmatpush.msra.mxu0 %v7551
  %v7553 = vand.u32 %v6703, 4294901760
  %v7554 = vsub.f32 %v6703, %v7553
  %v7555 = vand.u32 %v7554, 4294901760
  %7556 = vmatpush.msra.mxu0 %v7555
  %v7557 = vand.u32 %v6702, 4294901760
  %v7558 = vsub.f32 %v6702, %v7557
  %v7559 = vand.u32 %v7558, 4294901760
  %7560 = vmatpush.msra.mxu0 %v7559
  %v7561 = vand.u32 %v6667, 4294901760
  %v7562 = vsub.f32 %v6667, %v7561
  %v7563 = vand.u32 %v7562, 4294901760
  %7564 = vmatpush.msra.mxu0 %v7563
  %v7565 = vand.u32 %v6666, 4294901760
  %v7566 = vsub.f32 %v6666, %v7565
  %v7567 = vand.u32 %v7566, 4294901760
  %7568 = vmatpush.msra.mxu0 %v7567
  %v7569 = vand.u32 %v6631, 4294901760
  %v7570 = vsub.f32 %v6631, %v7569
  %v7571 = vand.u32 %v7570, 4294901760
  %7572 = vmatpush.msra.mxu0 %v7571
  %v7573 = vand.u32 %v6630, 4294901760
  %v7574 = vsub.f32 %v6630, %v7573
  %v7575 = vand.u32 %v7574, 4294901760
  %7576 = vmatpush.msra.mxu0 %v7575
  %v7577 = vand.u32 %v6595, 4294901760
  %v7578 = vsub.f32 %v6595, %v7577
  %v7579 = vand.u32 %v7578, 4294901760
  %7580 = vmatpush.msra.mxu0 %v7579
  %v7581 = vand.u32 %v6594, 4294901760
  %v7582 = vsub.f32 %v6594, %v7581
  %v7583 = vand.u32 %v7582, 4294901760
  %7584 = vmatpush.msra.mxu0 %v7583
  %v7585 = vand.u32 %v6754, 4294901760
  %7586 = vmatmul.f32.gmra.mxu0 %v7585
  %v7587 = vpop.f32.mrf.mxu0
  %v7588 = vadd.f32 %v7531, %v7587
  %7589 = vdwg.mxu0
  %7590 = vmatpush.msra.mxu0 0.0
  %7591 = vmatpush.msra.mxu0 0.0
  %7592 = vmatpush.msra.mxu0 0.0
  %7593 = vmatpush.msra.mxu0 0.0
  %v7594 = vand.u32 %v6737, 4294901760
  %7595 = vmatpush.msra.mxu0 %v7594
  %v7596 = vand.u32 %v6736, 4294901760
  %7597 = vmatpush.msra.mxu0 %v7596
  %v7598 = vand.u32 %v6560, 4294901760
  %7599 = vmatpush.msra.mxu0 %v7598
  %v7600 = vand.u32 %v6554, 4294901760
  %7601 = vmatpush.msra.mxu0 %v7600
  %v7602 = vand.u32 %v6703, 4294901760
  %7603 = vmatpush.msra.mxu0 %v7602
  %v7604 = vand.u32 %v6702, 4294901760
  %7605 = vmatpush.msra.mxu0 %v7604
  %v7606 = vand.u32 %v6667, 4294901760
  %7607 = vmatpush.msra.mxu0 %v7606
  %v7608 = vand.u32 %v6666, 4294901760
  %7609 = vmatpush.msra.mxu0 %v7608
  %v7610 = vand.u32 %v6631, 4294901760
  %7611 = vmatpush.msra.mxu0 %v7610
  %v7612 = vand.u32 %v6630, 4294901760
  %7613 = vmatpush.msra.mxu0 %v7612
  %v7614 = vand.u32 %v6595, 4294901760
  %7615 = vmatpush.msra.mxu0 %v7614
  %v7616 = vand.u32 %v6594, 4294901760
  %7617 = vmatpush.msra.mxu0 %v7616
  %v7618 = vand.u32 %v6754, 4294901760
  %7619 = vmatmul.f32.gmra.mxu0 %v7618
  %v7620 = vpop.f32.mrf.mxu0
  %v7621 = vadd.f32 %v7588, %v7620
  %7622 = vdwg.mxu0
  %7623 = vmatpush.msra.mxu0 0.0
  %7624 = vmatpush.msra.mxu0 0.0
  %7625 = vmatpush.msra.mxu0 0.0
  %7626 = vmatpush.msra.mxu0 0.0
  %v7627 = vand.u32 %v6735, 4294901760
  %7628 = vmatpush.msra.mxu0 %v7627
  %v7629 = vand.u32 %v6734, 4294901760
  %7630 = vmatpush.msra.mxu0 %v7629
  %v7631 = vand.u32 %v6561, 4294901760
  %7632 = vmatpush.msra.mxu0 %v7631
  %v7633 = vand.u32 %v6555, 4294901760
  %7634 = vmatpush.msra.mxu0 %v7633
  %v7635 = vand.u32 %v6701, 4294901760
  %7636 = vmatpush.msra.mxu0 %v7635
  %v7637 = vand.u32 %v6700, 4294901760
  %7638 = vmatpush.msra.mxu0 %v7637
  %v7639 = vand.u32 %v6665, 4294901760
  %7640 = vmatpush.msra.mxu0 %v7639
  %v7641 = vand.u32 %v6664, 4294901760
  %7642 = vmatpush.msra.mxu0 %v7641
  %v7643 = vand.u32 %v6629, 4294901760
  %7644 = vmatpush.msra.mxu0 %v7643
  %v7645 = vand.u32 %v6628, 4294901760
  %7646 = vmatpush.msra.mxu0 %v7645
  %v7647 = vand.u32 %v6593, 4294901760
  %7648 = vmatpush.msra.mxu0 %v7647
  %v7649 = vand.u32 %v6592, 4294901760
  %7650 = vmatpush.msra.mxu0 %v7649
  %v7651 = vand.u32 %v6754, 4294901760
  %v7652 = vsub.f32 %v6754, %v7651
  %v7653 = vand.u32 %v7652, 4294901760
  %v7654 = vsub.f32 %v7652, %v7653
  %v7655 = vand.u32 %v7654, 4294901760
  %7656 = vmatmul.f32.gmra.mxu0 %v7655
  %v7657 = vpop.f32.mrf.mxu0
  %v7658 = vadd.f32 %v6751, %v7657
  %7659 = vdwg.mxu0
  %7660 = vmatpush.msra.mxu0 0.0
  %7661 = vmatpush.msra.mxu0 0.0
  %7662 = vmatpush.msra.mxu0 0.0
  %7663 = vmatpush.msra.mxu0 0.0
  %v7664 = vand.u32 %v6735, 4294901760
  %v7665 = vsub.f32 %v6735, %v7664
  %v7666 = vand.u32 %v7665, 4294901760
  %v7667 = vsub.f32 %v7665, %v7666
  %v7668 = vand.u32 %v7667, 4294901760
  %7669 = vmatpush.msra.mxu0 %v7668
  %v7670 = vand.u32 %v6734, 4294901760
  %v7671 = vsub.f32 %v6734, %v7670
  %v7672 = vand.u32 %v7671, 4294901760
  %v7673 = vsub.f32 %v7671, %v7672
  %v7674 = vand.u32 %v7673, 4294901760
  %7675 = vmatpush.msra.mxu0 %v7674
  %v7676 = vand.u32 %v6561, 4294901760
  %v7677 = vsub.f32 %v6561, %v7676
  %v7678 = vand.u32 %v7677, 4294901760
  %v7679 = vsub.f32 %v7677, %v7678
  %v7680 = vand.u32 %v7679, 4294901760
  %7681 = vmatpush.msra.mxu0 %v7680
  %v7682 = vand.u32 %v6555, 4294901760
  %v7683 = vsub.f32 %v6555, %v7682
  %v7684 = vand.u32 %v7683, 4294901760
  %v7685 = vsub.f32 %v7683, %v7684
  %v7686 = vand.u32 %v7685, 4294901760
  %7687 = vmatpush.msra.mxu0 %v7686
  %v7688 = vand.u32 %v6701, 4294901760
  %v7689 = vsub.f32 %v6701, %v7688
  %v7690 = vand.u32 %v7689, 4294901760
  %v7691 = vsub.f32 %v7689, %v7690
  %v7692 = vand.u32 %v7691, 4294901760
  %7693 = vmatpush.msra.mxu0 %v7692
  %v7694 = vand.u32 %v6700, 4294901760
  %v7695 = vsub.f32 %v6700, %v7694
  %v7696 = vand.u32 %v7695, 4294901760
  %v7697 = vsub.f32 %v7695, %v7696
  %v7698 = vand.u32 %v7697, 4294901760
  %7699 = vmatpush.msra.mxu0 %v7698
  %v7700 = vand.u32 %v6665, 4294901760
  %v7701 = vsub.f32 %v6665, %v7700
  %v7702 = vand.u32 %v7701, 4294901760
  %v7703 = vsub.f32 %v7701, %v7702
  %v7704 = vand.u32 %v7703, 4294901760
  %7705 = vmatpush.msra.mxu0 %v7704
  %v7706 = vand.u32 %v6664, 4294901760
  %v7707 = vsub.f32 %v6664, %v7706
  %v7708 = vand.u32 %v7707, 4294901760
  %v7709 = vsub.f32 %v7707, %v7708
  %v7710 = vand.u32 %v7709, 4294901760
  %7711 = vmatpush.msra.mxu0 %v7710
  %v7712 = vand.u32 %v6629, 4294901760
  %v7713 = vsub.f32 %v6629, %v7712
  %v7714 = vand.u32 %v7713, 4294901760
  %v7715 = vsub.f32 %v7713, %v7714
  %v7716 = vand.u32 %v7715, 4294901760
  %7717 = vmatpush.msra.mxu0 %v7716
  %v7718 = vand.u32 %v6628, 4294901760
  %v7719 = vsub.f32 %v6628, %v7718
  %v7720 = vand.u32 %v7719, 4294901760
  %v7721 = vsub.f32 %v7719, %v7720
  %v7722 = vand.u32 %v7721, 4294901760
  %7723 = vmatpush.msra.mxu0 %v7722
  %v7724 = vand.u32 %v6593, 4294901760
  %v7725 = vsub.f32 %v6593, %v7724
  %v7726 = vand.u32 %v7725, 4294901760
  %v7727 = vsub.f32 %v7725, %v7726
  %v7728 = vand.u32 %v7727, 4294901760
  %7729 = vmatpush.msra.mxu0 %v7728
  %v7730 = vand.u32 %v6592, 4294901760
  %v7731 = vsub.f32 %v6592, %v7730
  %v7732 = vand.u32 %v7731, 4294901760
  %v7733 = vsub.f32 %v7731, %v7732
  %v7734 = vand.u32 %v7733, 4294901760
  %7735 = vmatpush.msra.mxu0 %v7734
  %v7736 = vand.u32 %v6754, 4294901760
  %7737 = vmatmul.f32.gmra.mxu0 %v7736
  %v7738 = vpop.f32.mrf.mxu0
  %v7739 = vadd.f32 %v7658, %v7738
  %7740 = vdwg.mxu0
  %7741 = vmatpush.msra.mxu0 0.0
  %7742 = vmatpush.msra.mxu0 0.0
  %7743 = vmatpush.msra.mxu0 0.0
  %7744 = vmatpush.msra.mxu0 0.0
  %v7745 = vand.u32 %v6735, 4294901760
  %v7746 = vsub.f32 %v6735, %v7745
  %7747 = vmatpush.msra.mxu0 %v7746
  %v7748 = vand.u32 %v6734, 4294901760
  %v7749 = vsub.f32 %v6734, %v7748
  %7750 = vmatpush.msra.mxu0 %v7749
  %v7751 = vand.u32 %v6561, 4294901760
  %v7752 = vsub.f32 %v6561, %v7751
  %7753 = vmatpush.msra.mxu0 %v7752
  %v7754 = vand.u32 %v6555, 4294901760
  %v7755 = vsub.f32 %v6555, %v7754
  %7756 = vmatpush.msra.mxu0 %v7755
  %v7757 = vand.u32 %v6701, 4294901760
  %v7758 = vsub.f32 %v6701, %v7757
  %7759 = vmatpush.msra.mxu0 %v7758
  %v7760 = vand.u32 %v6700, 4294901760
  %v7761 = vsub.f32 %v6700, %v7760
  %7762 = vmatpush.msra.mxu0 %v7761
  %v7763 = vand.u32 %v6665, 4294901760
  %v7764 = vsub.f32 %v6665, %v7763
  %7765 = vmatpush.msra.mxu0 %v7764
  %v7766 = vand.u32 %v6664, 4294901760
  %v7767 = vsub.f32 %v6664, %v7766
  %7768 = vmatpush.msra.mxu0 %v7767
  %v7769 = vand.u32 %v6629, 4294901760
  %v7770 = vsub.f32 %v6629, %v7769
  %7771 = vmatpush.msra.mxu0 %v7770
  %v7772 = vand.u32 %v6628, 4294901760
  %v7773 = vsub.f32 %v6628, %v7772
  %7774 = vmatpush.msra.mxu0 %v7773
  %v7775 = vand.u32 %v6593, 4294901760
  %v7776 = vsub.f32 %v6593, %v7775
  %7777 = vmatpush.msra.mxu0 %v7776
  %v7778 = vand.u32 %v6592, 4294901760
  %v7779 = vsub.f32 %v6592, %v7778
  %7780 = vmatpush.msra.mxu0 %v7779
  %v7781 = vand.u32 %v6754, 4294901760
  %v7782 = vsub.f32 %v6754, %v7781
  %7783 = vmatmul.f32.gmra.mxu0 %v7782
  %v7784 = vpop.f32.mrf.mxu0
  %v7785 = vadd.f32 %v7739, %v7784
  %7786 = vdwg.mxu0
  %7787 = vmatpush.msra.mxu0 0.0
  %7788 = vmatpush.msra.mxu0 0.0
  %7789 = vmatpush.msra.mxu0 0.0
  %7790 = vmatpush.msra.mxu0 0.0
  %v7791 = vand.u32 %v6735, 4294901760
  %7792 = vmatpush.msra.mxu0 %v7791
  %v7793 = vand.u32 %v6734, 4294901760
  %7794 = vmatpush.msra.mxu0 %v7793
  %v7795 = vand.u32 %v6561, 4294901760
  %7796 = vmatpush.msra.mxu0 %v7795
  %v7797 = vand.u32 %v6555, 4294901760
  %7798 = vmatpush.msra.mxu0 %v7797
  %v7799 = vand.u32 %v6701, 4294901760
  %7800 = vmatpush.msra.mxu0 %v7799
  %v7801 = vand.u32 %v6700, 4294901760
  %7802 = vmatpush.msra.mxu0 %v7801
  %v7803 = vand.u32 %v6665, 4294901760
  %7804 = vmatpush.msra.mxu0 %v7803
  %v7805 = vand.u32 %v6664, 4294901760
  %7806 = vmatpush.msra.mxu0 %v7805
  %v7807 = vand.u32 %v6629, 4294901760
  %7808 = vmatpush.msra.mxu0 %v7807
  %v7809 = vand.u32 %v6628, 4294901760
  %7810 = vmatpush.msra.mxu0 %v7809
  %v7811 = vand.u32 %v6593, 4294901760
  %7812 = vmatpush.msra.mxu0 %v7811
  %v7813 = vand.u32 %v6592, 4294901760
  %7814 = vmatpush.msra.mxu0 %v7813
  %v7815 = vand.u32 %v6754, 4294901760
  %v7816 = vsub.f32 %v6754, %v7815
  %v7817 = vand.u32 %v7816, 4294901760
  %7818 = vmatmul.f32.gmra.mxu0 %v7817
  %v7819 = vpop.f32.mrf.mxu0
  %v7820 = vadd.f32 %v7785, %v7819
  %7821 = vdwg.mxu0
  %7822 = vmatpush.msra.mxu0 0.0
  %7823 = vmatpush.msra.mxu0 0.0
  %7824 = vmatpush.msra.mxu0 0.0
  %7825 = vmatpush.msra.mxu0 0.0
  %v7826 = vand.u32 %v6735, 4294901760
  %v7827 = vsub.f32 %v6735, %v7826
  %v7828 = vand.u32 %v7827, 4294901760
  %7829 = vmatpush.msra.mxu0 %v7828
  %v7830 = vand.u32 %v6734, 4294901760
  %v7831 = vsub.f32 %v6734, %v7830
  %v7832 = vand.u32 %v7831, 4294901760
  %7833 = vmatpush.msra.mxu0 %v7832
  %v7834 = vand.u32 %v6561, 4294901760
  %v7835 = vsub.f32 %v6561, %v7834
  %v7836 = vand.u32 %v7835, 4294901760
  %7837 = vmatpush.msra.mxu0 %v7836
  %v7838 = vand.u32 %v6555, 4294901760
  %v7839 = vsub.f32 %v6555, %v7838
  %v7840 = vand.u32 %v7839, 4294901760
  %7841 = vmatpush.msra.mxu0 %v7840
  %v7842 = vand.u32 %v6701, 4294901760
  %v7843 = vsub.f32 %v6701, %v7842
  %v7844 = vand.u32 %v7843, 4294901760
  %7845 = vmatpush.msra.mxu0 %v7844
  %v7846 = vand.u32 %v6700, 4294901760
  %v7847 = vsub.f32 %v6700, %v7846
  %v7848 = vand.u32 %v7847, 4294901760
  %7849 = vmatpush.msra.mxu0 %v7848
  %v7850 = vand.u32 %v6665, 4294901760
  %v7851 = vsub.f32 %v6665, %v7850
  %v7852 = vand.u32 %v7851, 4294901760
  %7853 = vmatpush.msra.mxu0 %v7852
  %v7854 = vand.u32 %v6664, 4294901760
  %v7855 = vsub.f32 %v6664, %v7854
  %v7856 = vand.u32 %v7855, 4294901760
  %7857 = vmatpush.msra.mxu0 %v7856
  %v7858 = vand.u32 %v6629, 4294901760
  %v7859 = vsub.f32 %v6629, %v7858
  %v7860 = vand.u32 %v7859, 4294901760
  %7861 = vmatpush.msra.mxu0 %v7860
  %v7862 = vand.u32 %v6628, 4294901760
  %v7863 = vsub.f32 %v6628, %v7862
  %v7864 = vand.u32 %v7863, 4294901760
  %7865 = vmatpush.msra.mxu0 %v7864
  %v7866 = vand.u32 %v6593, 4294901760
  %v7867 = vsub.f32 %v6593, %v7866
  %v7868 = vand.u32 %v7867, 4294901760
  %7869 = vmatpush.msra.mxu0 %v7868
  %v7870 = vand.u32 %v6592, 4294901760
  %v7871 = vsub.f32 %v6592, %v7870
  %v7872 = vand.u32 %v7871, 4294901760
  %7873 = vmatpush.msra.mxu0 %v7872
  %v7874 = vand.u32 %v6754, 4294901760
  %7875 = vmatmul.f32.gmra.mxu0 %v7874
  %v7876 = vpop.f32.mrf.mxu0
  %v7877 = vadd.f32 %v7820, %v7876
  %7878 = vdwg.mxu0
  %7879 = vmatpush.msra.mxu0 0.0
  %7880 = vmatpush.msra.mxu0 0.0
  %7881 = vmatpush.msra.mxu0 0.0
  %7882 = vmatpush.msra.mxu0 0.0
  %v7883 = vand.u32 %v6735, 4294901760
  %7884 = vmatpush.msra.mxu0 %v7883
  %v7885 = vand.u32 %v6734, 4294901760
  %7886 = vmatpush.msra.mxu0 %v7885
  %v7887 = vand.u32 %v6561, 4294901760
  %7888 = vmatpush.msra.mxu0 %v7887
  %v7889 = vand.u32 %v6555, 4294901760
  %7890 = vmatpush.msra.mxu0 %v7889
  %v7891 = vand.u32 %v6701, 4294901760
  %7892 = vmatpush.msra.mxu0 %v7891
  %v7893 = vand.u32 %v6700, 4294901760
  %7894 = vmatpush.msra.mxu0 %v7893
  %v7895 = vand.u32 %v6665, 4294901760
  %7896 = vmatpush.msra.mxu0 %v7895
  %v7897 = vand.u32 %v6664, 4294901760
  %7898 = vmatpush.msra.mxu0 %v7897
  %v7899 = vand.u32 %v6629, 4294901760
  %7900 = vmatpush.msra.mxu0 %v7899
  %v7901 = vand.u32 %v6628, 4294901760
  %7902 = vmatpush.msra.mxu0 %v7901
  %v7903 = vand.u32 %v6593, 4294901760
  %7904 = vmatpush.msra.mxu0 %v7903
  %v7905 = vand.u32 %v6592, 4294901760
  %7906 = vmatpush.msra.mxu0 %v7905
  %v7907 = vand.u32 %v6754, 4294901760
  %7908 = vmatmul.f32.gmra.mxu0 %v7907
  %v7909 = vpop.f32.mrf.mxu0
  %v7910 = vadd.f32 %v7877, %v7909
  %7911 = vdwg.mxu0
  %7912 = vmatpush.msra.mxu0 0.0
  %7913 = vmatpush.msra.mxu0 0.0
  %7914 = vmatpush.msra.mxu0 0.0
  %7915 = vmatpush.msra.mxu0 0.0
  %v7916 = vand.u32 %v6733, 4294901760
  %7917 = vmatpush.msra.mxu0 %v7916
  %v7918 = vand.u32 %v6732, 4294901760
  %7919 = vmatpush.msra.mxu0 %v7918
  %v7920 = vand.u32 %v6562, 4294901760
  %7921 = vmatpush.msra.mxu0 %v7920
  %v7922 = vand.u32 %v6556, 4294901760
  %7923 = vmatpush.msra.mxu0 %v7922
  %v7924 = vand.u32 %v6699, 4294901760
  %7925 = vmatpush.msra.mxu0 %v7924
  %v7926 = vand.u32 %v6698, 4294901760
  %7927 = vmatpush.msra.mxu0 %v7926
  %v7928 = vand.u32 %v6663, 4294901760
  %7929 = vmatpush.msra.mxu0 %v7928
  %v7930 = vand.u32 %v6662, 4294901760
  %7931 = vmatpush.msra.mxu0 %v7930
  %v7932 = vand.u32 %v6627, 4294901760
  %7933 = vmatpush.msra.mxu0 %v7932
  %v7934 = vand.u32 %v6626, 4294901760
  %7935 = vmatpush.msra.mxu0 %v7934
  %v7936 = vand.u32 %v6591, 4294901760
  %7937 = vmatpush.msra.mxu0 %v7936
  %v7938 = vand.u32 %v6590, 4294901760
  %7939 = vmatpush.msra.mxu0 %v7938
  %v7940 = vand.u32 %v6754, 4294901760
  %v7941 = vsub.f32 %v6754, %v7940
  %v7942 = vand.u32 %v7941, 4294901760
  %v7943 = vsub.f32 %v7941, %v7942
  %v7944 = vand.u32 %v7943, 4294901760
  %7945 = vmatmul.f32.gmra.mxu0 %v7944
  %v7946 = vpop.f32.mrf.mxu0
  %v7947 = vadd.f32 %v6751, %v7946
  %7948 = vdwg.mxu0
  %7949 = vmatpush.msra.mxu0 0.0
  %7950 = vmatpush.msra.mxu0 0.0
  %7951 = vmatpush.msra.mxu0 0.0
  %7952 = vmatpush.msra.mxu0 0.0
  %v7953 = vand.u32 %v6733, 4294901760
  %v7954 = vsub.f32 %v6733, %v7953
  %v7955 = vand.u32 %v7954, 4294901760
  %v7956 = vsub.f32 %v7954, %v7955
  %v7957 = vand.u32 %v7956, 4294901760
  %7958 = vmatpush.msra.mxu0 %v7957
  %v7959 = vand.u32 %v6732, 4294901760
  %v7960 = vsub.f32 %v6732, %v7959
  %v7961 = vand.u32 %v7960, 4294901760
  %v7962 = vsub.f32 %v7960, %v7961
  %v7963 = vand.u32 %v7962, 4294901760
  %7964 = vmatpush.msra.mxu0 %v7963
  %v7965 = vand.u32 %v6562, 4294901760
  %v7966 = vsub.f32 %v6562, %v7965
  %v7967 = vand.u32 %v7966, 4294901760
  %v7968 = vsub.f32 %v7966, %v7967
  %v7969 = vand.u32 %v7968, 4294901760
  %7970 = vmatpush.msra.mxu0 %v7969
  %v7971 = vand.u32 %v6556, 4294901760
  %v7972 = vsub.f32 %v6556, %v7971
  %v7973 = vand.u32 %v7972, 4294901760
  %v7974 = vsub.f32 %v7972, %v7973
  %v7975 = vand.u32 %v7974, 4294901760
  %7976 = vmatpush.msra.mxu0 %v7975
  %v7977 = vand.u32 %v6699, 4294901760
  %v7978 = vsub.f32 %v6699, %v7977
  %v7979 = vand.u32 %v7978, 4294901760
  %v7980 = vsub.f32 %v7978, %v7979
  %v7981 = vand.u32 %v7980, 4294901760
  %7982 = vmatpush.msra.mxu0 %v7981
  %v7983 = vand.u32 %v6698, 4294901760
  %v7984 = vsub.f32 %v6698, %v7983
  %v7985 = vand.u32 %v7984, 4294901760
  %v7986 = vsub.f32 %v7984, %v7985
  %v7987 = vand.u32 %v7986, 4294901760
  %7988 = vmatpush.msra.mxu0 %v7987
  %v7989 = vand.u32 %v6663, 4294901760
  %v7990 = vsub.f32 %v6663, %v7989
  %v7991 = vand.u32 %v7990, 4294901760
  %v7992 = vsub.f32 %v7990, %v7991
  %v7993 = vand.u32 %v7992, 4294901760
  %7994 = vmatpush.msra.mxu0 %v7993
  %v7995 = vand.u32 %v6662, 4294901760
  %v7996 = vsub.f32 %v6662, %v7995
  %v7997 = vand.u32 %v7996, 4294901760
  %v7998 = vsub.f32 %v7996, %v7997
  %v7999 = vand.u32 %v7998, 4294901760
  %8000 = vmatpush.msra.mxu0 %v7999
  %v8001 = vand.u32 %v6627, 4294901760
  %v8002 = vsub.f32 %v6627, %v8001
  %v8003 = vand.u32 %v8002, 4294901760
  %v8004 = vsub.f32 %v8002, %v8003
  %v8005 = vand.u32 %v8004, 4294901760
  %8006 = vmatpush.msra.mxu0 %v8005
  %v8007 = vand.u32 %v6626, 4294901760
  %v8008 = vsub.f32 %v6626, %v8007
  %v8009 = vand.u32 %v8008, 4294901760
  %v8010 = vsub.f32 %v8008, %v8009
  %v8011 = vand.u32 %v8010, 4294901760
  %8012 = vmatpush.msra.mxu0 %v8011
  %v8013 = vand.u32 %v6591, 4294901760
  %v8014 = vsub.f32 %v6591, %v8013
  %v8015 = vand.u32 %v8014, 4294901760
  %v8016 = vsub.f32 %v8014, %v8015
  %v8017 = vand.u32 %v8016, 4294901760
  %8018 = vmatpush.msra.mxu0 %v8017
  %v8019 = vand.u32 %v6590, 4294901760
  %v8020 = vsub.f32 %v6590, %v8019
  %v8021 = vand.u32 %v8020, 4294901760
  %v8022 = vsub.f32 %v8020, %v8021
  %v8023 = vand.u32 %v8022, 4294901760
  %8024 = vmatpush.msra.mxu0 %v8023
  %v8025 = vand.u32 %v6754, 4294901760
  %8026 = vmatmul.f32.gmra.mxu0 %v8025
  %v8027 = vpop.f32.mrf.mxu0
  %v8028 = vadd.f32 %v7947, %v8027
  %8029 = vdwg.mxu0
  %8030 = vmatpush.msra.mxu0 0.0
  %8031 = vmatpush.msra.mxu0 0.0
  %8032 = vmatpush.msra.mxu0 0.0
  %8033 = vmatpush.msra.mxu0 0.0
  %v8034 = vand.u32 %v6733, 4294901760
  %v8035 = vsub.f32 %v6733, %v8034
  %8036 = vmatpush.msra.mxu0 %v8035
  %v8037 = vand.u32 %v6732, 4294901760
  %v8038 = vsub.f32 %v6732, %v8037
  %8039 = vmatpush.msra.mxu0 %v8038
  %v8040 = vand.u32 %v6562, 4294901760
  %v8041 = vsub.f32 %v6562, %v8040
  %8042 = vmatpush.msra.mxu0 %v8041
  %v8043 = vand.u32 %v6556, 4294901760
  %v8044 = vsub.f32 %v6556, %v8043
  %8045 = vmatpush.msra.mxu0 %v8044
  %v8046 = vand.u32 %v6699, 4294901760
  %v8047 = vsub.f32 %v6699, %v8046
  %8048 = vmatpush.msra.mxu0 %v8047
  %v8049 = vand.u32 %v6698, 4294901760
  %v8050 = vsub.f32 %v6698, %v8049
  %8051 = vmatpush.msra.mxu0 %v8050
  %v8052 = vand.u32 %v6663, 4294901760
  %v8053 = vsub.f32 %v6663, %v8052
  %8054 = vmatpush.msra.mxu0 %v8053
  %v8055 = vand.u32 %v6662, 4294901760
  %v8056 = vsub.f32 %v6662, %v8055
  %8057 = vmatpush.msra.mxu0 %v8056
  %v8058 = vand.u32 %v6627, 4294901760
  %v8059 = vsub.f32 %v6627, %v8058
  %8060 = vmatpush.msra.mxu0 %v8059
  %v8061 = vand.u32 %v6626, 4294901760
  %v8062 = vsub.f32 %v6626, %v8061
  %8063 = vmatpush.msra.mxu0 %v8062
  %v8064 = vand.u32 %v6591, 4294901760
  %v8065 = vsub.f32 %v6591, %v8064
  %8066 = vmatpush.msra.mxu0 %v8065
  %v8067 = vand.u32 %v6590, 4294901760
  %v8068 = vsub.f32 %v6590, %v8067
  %8069 = vmatpush.msra.mxu0 %v8068
  %v8070 = vand.u32 %v6754, 4294901760
  %v8071 = vsub.f32 %v6754, %v8070
  %8072 = vmatmul.f32.gmra.mxu0 %v8071
  %v8073 = vpop.f32.mrf.mxu0
  %v8074 = vadd.f32 %v8028, %v8073
  %8075 = vdwg.mxu0
  %8076 = vmatpush.msra.mxu0 0.0
  %8077 = vmatpush.msra.mxu0 0.0
  %8078 = vmatpush.msra.mxu0 0.0
  %8079 = vmatpush.msra.mxu0 0.0
  %v8080 = vand.u32 %v6733, 4294901760
  %8081 = vmatpush.msra.mxu0 %v8080
  %v8082 = vand.u32 %v6732, 4294901760
  %8083 = vmatpush.msra.mxu0 %v8082
  %v8084 = vand.u32 %v6562, 4294901760
  %8085 = vmatpush.msra.mxu0 %v8084
  %v8086 = vand.u32 %v6556, 4294901760
  %8087 = vmatpush.msra.mxu0 %v8086
  %v8088 = vand.u32 %v6699, 4294901760
  %8089 = vmatpush.msra.mxu0 %v8088
  %v8090 = vand.u32 %v6698, 4294901760
  %8091 = vmatpush.msra.mxu0 %v8090
  %v8092 = vand.u32 %v6663, 4294901760
  %8093 = vmatpush.msra.mxu0 %v8092
  %v8094 = vand.u32 %v6662, 4294901760
  %8095 = vmatpush.msra.mxu0 %v8094
  %v8096 = vand.u32 %v6627, 4294901760
  %8097 = vmatpush.msra.mxu0 %v8096
  %v8098 = vand.u32 %v6626, 4294901760
  %8099 = vmatpush.msra.mxu0 %v8098
  %v8100 = vand.u32 %v6591, 4294901760
  %8101 = vmatpush.msra.mxu0 %v8100
  %v8102 = vand.u32 %v6590, 4294901760
  %8103 = vmatpush.msra.mxu0 %v8102
  %v8104 = vand.u32 %v6754, 4294901760
  %v8105 = vsub.f32 %v6754, %v8104
  %v8106 = vand.u32 %v8105, 4294901760
  %8107 = vmatmul.f32.gmra.mxu0 %v8106
  %v8108 = vpop.f32.mrf.mxu0
  %v8109 = vadd.f32 %v8074, %v8108
  %8110 = vdwg.mxu0
  %8111 = vmatpush.msra.mxu0 0.0
  %8112 = vmatpush.msra.mxu0 0.0
  %8113 = vmatpush.msra.mxu0 0.0
  %8114 = vmatpush.msra.mxu0 0.0
  %v8115 = vand.u32 %v6733, 4294901760
  %v8116 = vsub.f32 %v6733, %v8115
  %v8117 = vand.u32 %v8116, 4294901760
  %8118 = vmatpush.msra.mxu0 %v8117
  %v8119 = vand.u32 %v6732, 4294901760
  %v8120 = vsub.f32 %v6732, %v8119
  %v8121 = vand.u32 %v8120, 4294901760
  %8122 = vmatpush.msra.mxu0 %v8121
  %v8123 = vand.u32 %v6562, 4294901760
  %v8124 = vsub.f32 %v6562, %v8123
  %v8125 = vand.u32 %v8124, 4294901760
  %8126 = vmatpush.msra.mxu0 %v8125
  %v8127 = vand.u32 %v6556, 4294901760
  %v8128 = vsub.f32 %v6556, %v8127
  %v8129 = vand.u32 %v8128, 4294901760
  %8130 = vmatpush.msra.mxu0 %v8129
  %v8131 = vand.u32 %v6699, 4294901760
  %v8132 = vsub.f32 %v6699, %v8131
  %v8133 = vand.u32 %v8132, 4294901760
  %8134 = vmatpush.msra.mxu0 %v8133
  %v8135 = vand.u32 %v6698, 4294901760
  %v8136 = vsub.f32 %v6698, %v8135
  %v8137 = vand.u32 %v8136, 4294901760
  %8138 = vmatpush.msra.mxu0 %v8137
  %v8139 = vand.u32 %v6663, 4294901760
  %v8140 = vsub.f32 %v6663, %v8139
  %v8141 = vand.u32 %v8140, 4294901760
  %8142 = vmatpush.msra.mxu0 %v8141
  %v8143 = vand.u32 %v6662, 4294901760
  %v8144 = vsub.f32 %v6662, %v8143
  %v8145 = vand.u32 %v8144, 4294901760
  %8146 = vmatpush.msra.mxu0 %v8145
  %v8147 = vand.u32 %v6627, 4294901760
  %v8148 = vsub.f32 %v6627, %v8147
  %v8149 = vand.u32 %v8148, 4294901760
  %8150 = vmatpush.msra.mxu0 %v8149
  %v8151 = vand.u32 %v6626, 4294901760
  %v8152 = vsub.f32 %v6626, %v8151
  %v8153 = vand.u32 %v8152, 4294901760
  %8154 = vmatpush.msra.mxu0 %v8153
  %v8155 = vand.u32 %v6591, 4294901760
  %v8156 = vsub.f32 %v6591, %v8155
  %v8157 = vand.u32 %v8156, 4294901760
  %8158 = vmatpush.msra.mxu0 %v8157
  %v8159 = vand.u32 %v6590, 4294901760
  %v8160 = vsub.f32 %v6590, %v8159
  %v8161 = vand.u32 %v8160, 4294901760
  %8162 = vmatpush.msra.mxu0 %v8161
  %v8163 = vand.u32 %v6754, 4294901760
  %8164 = vmatmul.f32.gmra.mxu0 %v8163
  %v8165 = vpop.f32.mrf.mxu0
  %v8166 = vadd.f32 %v8109, %v8165
  %8167 = vdwg.mxu0
  %8168 = vmatpush.msra.mxu0 0.0
  %8169 = vmatpush.msra.mxu0 0.0
  %8170 = vmatpush.msra.mxu0 0.0
  %8171 = vmatpush.msra.mxu0 0.0
  %v8172 = vand.u32 %v6733, 4294901760
  %8173 = vmatpush.msra.mxu0 %v8172
  %v8174 = vand.u32 %v6732, 4294901760
  %8175 = vmatpush.msra.mxu0 %v8174
  %v8176 = vand.u32 %v6562, 4294901760
  %8177 = vmatpush.msra.mxu0 %v8176
  %v8178 = vand.u32 %v6556, 4294901760
  %8179 = vmatpush.msra.mxu0 %v8178
  %v8180 = vand.u32 %v6699, 4294901760
  %8181 = vmatpush.msra.mxu0 %v8180
  %v8182 = vand.u32 %v6698, 4294901760
  %8183 = vmatpush.msra.mxu0 %v8182
  %v8184 = vand.u32 %v6663, 4294901760
  %8185 = vmatpush.msra.mxu0 %v8184
  %v8186 = vand.u32 %v6662, 4294901760
  %8187 = vmatpush.msra.mxu0 %v8186
  %v8188 = vand.u32 %v6627, 4294901760
  %8189 = vmatpush.msra.mxu0 %v8188
  %v8190 = vand.u32 %v6626, 4294901760
  %8191 = vmatpush.msra.mxu0 %v8190
  %v8192 = vand.u32 %v6591, 4294901760
  %8193 = vmatpush.msra.mxu0 %v8192
  %v8194 = vand.u32 %v6590, 4294901760
  %8195 = vmatpush.msra.mxu0 %v8194
  %v8196 = vand.u32 %v6754, 4294901760
  %8197 = vmatmul.f32.gmra.mxu0 %v8196
  %v8198 = vpop.f32.mrf.mxu0
  %v8199 = vadd.f32 %v8166, %v8198
  %8200 = vdwg.mxu0
  %8201 = vmatpush.msra.mxu0 0.0
  %8202 = vmatpush.msra.mxu0 0.0
  %8203 = vmatpush.msra.mxu0 0.0
  %8204 = vmatpush.msra.mxu0 0.0
  %v8205 = vand.u32 %v6743, 4294901760
  %8206 = vmatpush.msra.mxu0 %v8205
  %v8207 = vand.u32 %v6742, 4294901760
  %8208 = vmatpush.msra.mxu0 %v8207
  %v8209 = vand.u32 %v6563, 4294901760
  %8210 = vmatpush.msra.mxu0 %v8209
  %v8211 = vand.u32 %v6557, 4294901760
  %8212 = vmatpush.msra.mxu0 %v8211
  %v8213 = vand.u32 %v6697, 4294901760
  %8214 = vmatpush.msra.mxu0 %v8213
  %v8215 = vand.u32 %v6696, 4294901760
  %8216 = vmatpush.msra.mxu0 %v8215
  %v8217 = vand.u32 %v6661, 4294901760
  %8218 = vmatpush.msra.mxu0 %v8217
  %v8219 = vand.u32 %v6660, 4294901760
  %8220 = vmatpush.msra.mxu0 %v8219
  %v8221 = vand.u32 %v6625, 4294901760
  %8222 = vmatpush.msra.mxu0 %v8221
  %v8223 = vand.u32 %v6624, 4294901760
  %8224 = vmatpush.msra.mxu0 %v8223
  %v8225 = vand.u32 %v6589, 4294901760
  %8226 = vmatpush.msra.mxu0 %v8225
  %v8227 = vand.u32 %v6588, 4294901760
  %8228 = vmatpush.msra.mxu0 %v8227
  %v8229 = vand.u32 %v6754, 4294901760
  %v8230 = vsub.f32 %v6754, %v8229
  %v8231 = vand.u32 %v8230, 4294901760
  %v8232 = vsub.f32 %v8230, %v8231
  %v8233 = vand.u32 %v8232, 4294901760
  %8234 = vmatmul.f32.gmra.mxu0 %v8233
  %v8235 = vpop.f32.mrf.mxu0
  %v8236 = vadd.f32 %v6751, %v8235
  %8237 = vdwg.mxu0
  %8238 = vmatpush.msra.mxu0 0.0
  %8239 = vmatpush.msra.mxu0 0.0
  %8240 = vmatpush.msra.mxu0 0.0
  %8241 = vmatpush.msra.mxu0 0.0
  %v8242 = vand.u32 %v6743, 4294901760
  %v8243 = vsub.f32 %v6743, %v8242
  %v8244 = vand.u32 %v8243, 4294901760
  %v8245 = vsub.f32 %v8243, %v8244
  %v8246 = vand.u32 %v8245, 4294901760
  %8247 = vmatpush.msra.mxu0 %v8246
  %v8248 = vand.u32 %v6742, 4294901760
  %v8249 = vsub.f32 %v6742, %v8248
  %v8250 = vand.u32 %v8249, 4294901760
  %v8251 = vsub.f32 %v8249, %v8250
  %v8252 = vand.u32 %v8251, 4294901760
  %8253 = vmatpush.msra.mxu0 %v8252
  %v8254 = vand.u32 %v6563, 4294901760
  %v8255 = vsub.f32 %v6563, %v8254
  %v8256 = vand.u32 %v8255, 4294901760
  %v8257 = vsub.f32 %v8255, %v8256
  %v8258 = vand.u32 %v8257, 4294901760
  %8259 = vmatpush.msra.mxu0 %v8258
  %v8260 = vand.u32 %v6557, 4294901760
  %v8261 = vsub.f32 %v6557, %v8260
  %v8262 = vand.u32 %v8261, 4294901760
  %v8263 = vsub.f32 %v8261, %v8262
  %v8264 = vand.u32 %v8263, 4294901760
  %8265 = vmatpush.msra.mxu0 %v8264
  %v8266 = vand.u32 %v6697, 4294901760
  %v8267 = vsub.f32 %v6697, %v8266
  %v8268 = vand.u32 %v8267, 4294901760
  %v8269 = vsub.f32 %v8267, %v8268
  %v8270 = vand.u32 %v8269, 4294901760
  %8271 = vmatpush.msra.mxu0 %v8270
  %v8272 = vand.u32 %v6696, 4294901760
  %v8273 = vsub.f32 %v6696, %v8272
  %v8274 = vand.u32 %v8273, 4294901760
  %v8275 = vsub.f32 %v8273, %v8274
  %v8276 = vand.u32 %v8275, 4294901760
  %8277 = vmatpush.msra.mxu0 %v8276
  %v8278 = vand.u32 %v6661, 4294901760
  %v8279 = vsub.f32 %v6661, %v8278
  %v8280 = vand.u32 %v8279, 4294901760
  %v8281 = vsub.f32 %v8279, %v8280
  %v8282 = vand.u32 %v8281, 4294901760
  %8283 = vmatpush.msra.mxu0 %v8282
  %v8284 = vand.u32 %v6660, 4294901760
  %v8285 = vsub.f32 %v6660, %v8284
  %v8286 = vand.u32 %v8285, 4294901760
  %v8287 = vsub.f32 %v8285, %v8286
  %v8288 = vand.u32 %v8287, 4294901760
  %8289 = vmatpush.msra.mxu0 %v8288
  %v8290 = vand.u32 %v6625, 4294901760
  %v8291 = vsub.f32 %v6625, %v8290
  %v8292 = vand.u32 %v8291, 4294901760
  %v8293 = vsub.f32 %v8291, %v8292
  %v8294 = vand.u32 %v8293, 4294901760
  %8295 = vmatpush.msra.mxu0 %v8294
  %v8296 = vand.u32 %v6624, 4294901760
  %v8297 = vsub.f32 %v6624, %v8296
  %v8298 = vand.u32 %v8297, 4294901760
  %v8299 = vsub.f32 %v8297, %v8298
  %v8300 = vand.u32 %v8299, 4294901760
  %8301 = vmatpush.msra.mxu0 %v8300
  %v8302 = vand.u32 %v6589, 4294901760
  %v8303 = vsub.f32 %v6589, %v8302
  %v8304 = vand.u32 %v8303, 4294901760
  %v8305 = vsub.f32 %v8303, %v8304
  %v8306 = vand.u32 %v8305, 4294901760
  %8307 = vmatpush.msra.mxu0 %v8306
  %v8308 = vand.u32 %v6588, 4294901760
  %v8309 = vsub.f32 %v6588, %v8308
  %v8310 = vand.u32 %v8309, 4294901760
  %v8311 = vsub.f32 %v8309, %v8310
  %v8312 = vand.u32 %v8311, 4294901760
  %8313 = vmatpush.msra.mxu0 %v8312
  %v8314 = vand.u32 %v6754, 4294901760
  %8315 = vmatmul.f32.gmra.mxu0 %v8314
  %v8316 = vpop.f32.mrf.mxu0
  %v8317 = vadd.f32 %v8236, %v8316
  %8318 = vdwg.mxu0
  %8319 = vmatpush.msra.mxu0 0.0
  %8320 = vmatpush.msra.mxu0 0.0
  %8321 = vmatpush.msra.mxu0 0.0
  %8322 = vmatpush.msra.mxu0 0.0
  %v8323 = vand.u32 %v6743, 4294901760
  %v8324 = vsub.f32 %v6743, %v8323
  %8325 = vmatpush.msra.mxu0 %v8324
  %v8326 = vand.u32 %v6742, 4294901760
  %v8327 = vsub.f32 %v6742, %v8326
  %8328 = vmatpush.msra.mxu0 %v8327
  %v8329 = vand.u32 %v6563, 4294901760
  %v8330 = vsub.f32 %v6563, %v8329
  %8331 = vmatpush.msra.mxu0 %v8330
  %v8332 = vand.u32 %v6557, 4294901760
  %v8333 = vsub.f32 %v6557, %v8332
  %8334 = vmatpush.msra.mxu0 %v8333
  %v8335 = vand.u32 %v6697, 4294901760
  %v8336 = vsub.f32 %v6697, %v8335
  %8337 = vmatpush.msra.mxu0 %v8336
  %v8338 = vand.u32 %v6696, 4294901760
  %v8339 = vsub.f32 %v6696, %v8338
  %8340 = vmatpush.msra.mxu0 %v8339
  %v8341 = vand.u32 %v6661, 4294901760
  %v8342 = vsub.f32 %v6661, %v8341
  %8343 = vmatpush.msra.mxu0 %v8342
  %v8344 = vand.u32 %v6660, 4294901760
  %v8345 = vsub.f32 %v6660, %v8344
  %8346 = vmatpush.msra.mxu0 %v8345
  %v8347 = vand.u32 %v6625, 4294901760
  %v8348 = vsub.f32 %v6625, %v8347
  %8349 = vmatpush.msra.mxu0 %v8348
  %v8350 = vand.u32 %v6624, 4294901760
  %v8351 = vsub.f32 %v6624, %v8350
  %8352 = vmatpush.msra.mxu0 %v8351
  %v8353 = vand.u32 %v6589, 4294901760
  %v8354 = vsub.f32 %v6589, %v8353
  %8355 = vmatpush.msra.mxu0 %v8354
  %v8356 = vand.u32 %v6588, 4294901760
  %v8357 = vsub.f32 %v6588, %v8356
  %8358 = vmatpush.msra.mxu0 %v8357
  %v8359 = vand.u32 %v6754, 4294901760
  %v8360 = vsub.f32 %v6754, %v8359
  %8361 = vmatmul.f32.gmra.mxu0 %v8360
  %v8362 = vpop.f32.mrf.mxu0
  %v8363 = vadd.f32 %v8317, %v8362
  %8364 = vdwg.mxu0
  %8365 = vmatpush.msra.mxu0 0.0
  %8366 = vmatpush.msra.mxu0 0.0
  %8367 = vmatpush.msra.mxu0 0.0
  %8368 = vmatpush.msra.mxu0 0.0
  %v8369 = vand.u32 %v6743, 4294901760
  %8370 = vmatpush.msra.mxu0 %v8369
  %v8371 = vand.u32 %v6742, 4294901760
  %8372 = vmatpush.msra.mxu0 %v8371
  %v8373 = vand.u32 %v6563, 4294901760
  %8374 = vmatpush.msra.mxu0 %v8373
  %v8375 = vand.u32 %v6557, 4294901760
  %8376 = vmatpush.msra.mxu0 %v8375
  %v8377 = vand.u32 %v6697, 4294901760
  %8378 = vmatpush.msra.mxu0 %v8377
  %v8379 = vand.u32 %v6696, 4294901760
  %8380 = vmatpush.msra.mxu0 %v8379
  %v8381 = vand.u32 %v6661, 4294901760
  %8382 = vmatpush.msra.mxu0 %v8381
  %v8383 = vand.u32 %v6660, 4294901760
  %8384 = vmatpush.msra.mxu0 %v8383
  %v8385 = vand.u32 %v6625, 4294901760
  %8386 = vmatpush.msra.mxu0 %v8385
  %v8387 = vand.u32 %v6624, 4294901760
  %8388 = vmatpush.msra.mxu0 %v8387
  %v8389 = vand.u32 %v6589, 4294901760
  %8390 = vmatpush.msra.mxu0 %v8389
  %v8391 = vand.u32 %v6588, 4294901760
  %8392 = vmatpush.msra.mxu0 %v8391
  %v8393 = vand.u32 %v6754, 4294901760
  %v8394 = vsub.f32 %v6754, %v8393
  %v8395 = vand.u32 %v8394, 4294901760
  %8396 = vmatmul.f32.gmra.mxu0 %v8395
  %v8397 = vpop.f32.mrf.mxu0
  %v8398 = vadd.f32 %v8363, %v8397
  %8399 = vdwg.mxu0
  %8400 = vmatpush.msra.mxu0 0.0
  %8401 = vmatpush.msra.mxu0 0.0
  %8402 = vmatpush.msra.mxu0 0.0
  %8403 = vmatpush.msra.mxu0 0.0
  %v8404 = vand.u32 %v6743, 4294901760
  %v8405 = vsub.f32 %v6743, %v8404
  %v8406 = vand.u32 %v8405, 4294901760
  %8407 = vmatpush.msra.mxu0 %v8406
  %v8408 = vand.u32 %v6742, 4294901760
  %v8409 = vsub.f32 %v6742, %v8408
  %v8410 = vand.u32 %v8409, 4294901760
  %8411 = vmatpush.msra.mxu0 %v8410
  %v8412 = vand.u32 %v6563, 4294901760
  %v8413 = vsub.f32 %v6563, %v8412
  %v8414 = vand.u32 %v8413, 4294901760
  %8415 = vmatpush.msra.mxu0 %v8414
  %v8416 = vand.u32 %v6557, 4294901760
  %v8417 = vsub.f32 %v6557, %v8416
  %v8418 = vand.u32 %v8417, 4294901760
  %8419 = vmatpush.msra.mxu0 %v8418
  %v8420 = vand.u32 %v6697, 4294901760
  %v8421 = vsub.f32 %v6697, %v8420
  %v8422 = vand.u32 %v8421, 4294901760
  %8423 = vmatpush.msra.mxu0 %v8422
  %v8424 = vand.u32 %v6696, 4294901760
  %v8425 = vsub.f32 %v6696, %v8424
  %v8426 = vand.u32 %v8425, 4294901760
  %8427 = vmatpush.msra.mxu0 %v8426
  %v8428 = vand.u32 %v6661, 4294901760
  %v8429 = vsub.f32 %v6661, %v8428
  %v8430 = vand.u32 %v8429, 4294901760
  %8431 = vmatpush.msra.mxu0 %v8430
  %v8432 = vand.u32 %v6660, 4294901760
  %v8433 = vsub.f32 %v6660, %v8432
  %v8434 = vand.u32 %v8433, 4294901760
  %8435 = vmatpush.msra.mxu0 %v8434
  %v8436 = vand.u32 %v6625, 4294901760
  %v8437 = vsub.f32 %v6625, %v8436
  %v8438 = vand.u32 %v8437, 4294901760
  %8439 = vmatpush.msra.mxu0 %v8438
  %v8440 = vand.u32 %v6624, 4294901760
  %v8441 = vsub.f32 %v6624, %v8440
  %v8442 = vand.u32 %v8441, 4294901760
  %8443 = vmatpush.msra.mxu0 %v8442
  %v8444 = vand.u32 %v6589, 4294901760
  %v8445 = vsub.f32 %v6589, %v8444
  %v8446 = vand.u32 %v8445, 4294901760
  %8447 = vmatpush.msra.mxu0 %v8446
  %v8448 = vand.u32 %v6588, 4294901760
  %v8449 = vsub.f32 %v6588, %v8448
  %v8450 = vand.u32 %v8449, 4294901760
  %8451 = vmatpush.msra.mxu0 %v8450
  %v8452 = vand.u32 %v6754, 4294901760
  %8453 = vmatmul.f32.gmra.mxu0 %v8452
  %v8454 = vpop.f32.mrf.mxu0
  %v8455 = vadd.f32 %v8398, %v8454
  %8456 = vdwg.mxu0
  %8457 = vmatpush.msra.mxu0 0.0
  %8458 = vmatpush.msra.mxu0 0.0
  %8459 = vmatpush.msra.mxu0 0.0
  %8460 = vmatpush.msra.mxu0 0.0
  %v8461 = vand.u32 %v6743, 4294901760
  %8462 = vmatpush.msra.mxu0 %v8461
  %v8463 = vand.u32 %v6742, 4294901760
  %8464 = vmatpush.msra.mxu0 %v8463
  %v8465 = vand.u32 %v6563, 4294901760
  %8466 = vmatpush.msra.mxu0 %v8465
  %v8467 = vand.u32 %v6557, 4294901760
  %8468 = vmatpush.msra.mxu0 %v8467
  %v8469 = vand.u32 %v6697, 4294901760
  %8470 = vmatpush.msra.mxu0 %v8469
  %v8471 = vand.u32 %v6696, 4294901760
  %8472 = vmatpush.msra.mxu0 %v8471
  %v8473 = vand.u32 %v6661, 4294901760
  %8474 = vmatpush.msra.mxu0 %v8473
  %v8475 = vand.u32 %v6660, 4294901760
  %8476 = vmatpush.msra.mxu0 %v8475
  %v8477 = vand.u32 %v6625, 4294901760
  %8478 = vmatpush.msra.mxu0 %v8477
  %v8479 = vand.u32 %v6624, 4294901760
  %8480 = vmatpush.msra.mxu0 %v8479
  %v8481 = vand.u32 %v6589, 4294901760
  %8482 = vmatpush.msra.mxu0 %v8481
  %v8483 = vand.u32 %v6588, 4294901760
  %8484 = vmatpush.msra.mxu0 %v8483
  %v8485 = vand.u32 %v6754, 4294901760
  %8486 = vmatmul.f32.gmra.mxu0 %v8485
  %v8487 = vpop.f32.mrf.mxu0
  %v8488 = vadd.f32 %v8455, %v8487
  %8489 = vdwg.mxu0
  %vm8490 = vcmp.gt.f32.partialorder %v7043, 0.0
  %vm8491 = vcmp.gt.f32.partialorder %v7332, 0.0
  %vm8492 = vcmp.gt.f32.partialorder %v7621, 0.0
  %vm8493 = vcmp.gt.f32.partialorder %v7910, 0.0
  %vm8494 = vcmp.gt.f32.partialorder %v8199, 0.0
  %vm8495 = vcmp.gt.f32.partialorder %v8488, 0.0
  %v8496 = vmin.f32 %v7043, 0.0
  %v8497 = vmin.f32 %v7332, 0.0
  %v8498 = vmin.f32 %v7621, 0.0
  %v8499 = vmin.f32 %v7910, 0.0
  %v8500 = vmin.f32 %v8199, 0.0
  %v8501 = vmin.f32 %v8488, 0.0
  %v8502 = vmul.f32 %v8496, 1.442695
  %v8503 = vpow.pop %v8502
  %v8504 = vmul.f32 %v8497, 1.442695
  %v8505 = vpow.pop %v8504
  %v8506 = vmul.f32 %v8498, 1.442695
  %v8507 = vpow.pop %v8506
  %v8508 = vmul.f32 %v8499, 1.442695
  %v8509 = vpow.pop %v8508
  %v8510 = vmul.f32 %v8500, 1.442695
  %v8511 = vpow.pop %v8510
  %v8512 = vmul.f32 %v8501, 1.442695
  %v8513 = vpow.pop %v8512
  %v8514 = vsub.f32 %v8503, 1.0
  %v8515 = vsub.f32 %v8505, 1.0
  %v8516 = vsub.f32 %v8507, 1.0
  %v8517 = vsub.f32 %v8509, 1.0
  %v8518 = vsub.f32 %v8511, 1.0
  %v8519 = vsub.f32 %v8513, 1.0
  %v8520 = vsel %vm8490, %v7043, %v8514
  %v8521 = vsel %vm8491, %v7332, %v8515
  %v8522 = vsel %vm8492, %v7621, %v8516
  %v8523 = vsel %vm8493, %v7910, %v8517
  %v8524 = vsel %vm8494, %v8199, %v8518
  %v8525 = vsel %vm8495, %v8488, %v8519
  %v8526 = vmul.f32 %v8520, %v8520
  %v8527 = vmul.f32 %v8521, %v8521
  %v8528 = vmul.f32 %v8522, %v8522
  %v8529 = vmul.f32 %v8523, %v8523
  %v8530 = vmul.f32 %v8524, %v8524
  %v8531 = vmul.f32 %v8525, %v8525
  %v8532 = vmul.f32 %v8520, %v2050
  %v8533 = vmul.f32 %v8521, %v2051
  %v8534 = vmul.f32 %v8522, %v2052
  %v8535 = vmul.f32 %v8523, %v2053
  %v8536 = vmul.f32 %v8524, %v2054
  %v8537 = vmul.f32 %v8525, %v2055
  %v8538 = vadd.f32 %v8532, %v8533
  %v8539 = vadd.f32 %v8538, %v8534
  %v8540 = vadd.f32 %v8539, %v8535
  %v8541 = vadd.f32 %v8540, %v8536
  %v8542 = vadd.f32 %v8541, %v8537
  %8543 = vadd.xlane.f32.xlu0 %v8542
  %v8544 = vpop.xlane.xlu0 %8543
  %v8545 = vmul.f32 %v8526, %v2050
  %v8546 = vmul.f32 %v8527, %v2051
  %v8547 = vmul.f32 %v8528, %v2052
  %v8548 = vmul.f32 %v8529, %v2053
  %v8549 = vmul.f32 %v8530, %v2054
  %v8550 = vmul.f32 %v8531, %v2055
  %v8551 = vadd.f32 %v8545, %v8546
  %v8552 = vadd.f32 %v8551, %v8547
  %v8553 = vadd.f32 %v8552, %v8548
  %v8554 = vadd.f32 %v8553, %v8549
  %v8555 = vadd.f32 %v8554, %v8550
  %8556 = vadd.xlane.f32.xlu0 %v8555
  %v8557 = vpop.xlane.xlu0 %8556
  %v8558 = vmul.f32 %v8544, 0.0036764706
  %v8559 = vmul.f32 %v8557, 0.0036764706
  %v8560 = vmul.f32 %v8558, %v8558
  %v8561 = vsub.f32 %v8559, %v8560
  %v8562 = vadd.f32 %v8561, 1e-05
  %v8563 = vrsqrt.pop %v8562
  %v8564 = vmul.f32 %v8563, %v8562
  %v8565 = vmul.f32 %v8564, %v8563
  %v8566 = vmul.f32 0.5, %v8565
  %v8567 = vsub.f32 1.5, %v8566
  %v8568 = vmul.f32 %v8563, %v8567
  %vm8569 = vweird.f32 %v8562
  %vm8570 = vweird.f32 %v8563
  %vm8571 = vmor %vm8569, %vm8570
  %v8572 = vsel %vm8571, %v8563, %v8568
  %v8573 = vmul.f32 %v2050, %v8572
  %v8574 = vmul.f32 %v2051, %v8572
  %v8575 = vmul.f32 %v2052, %v8572
  %v8576 = vmul.f32 %v2053, %v8572
  %v8577 = vmul.f32 %v2054, %v8572
  %v8578 = vmul.f32 %v2055, %v8572
  %v8579 = vadd.f32 %v8573, 0.0
  %v8580 = vadd.f32 %v8574, 0.0
  %v8581 = vadd.f32 %v8575, 0.0
  %v8582 = vadd.f32 %v8576, 0.0
  %v8583 = vadd.f32 %v8577, 0.0
  %v8584 = vadd.f32 %v8578, 0.0
  %v8585 = vmul.f32 %v8558, %v8572
  %v8586 = vmul.f32 %v2050, %v8585
  %v8587 = vmul.f32 %v2051, %v8585
  %v8588 = vmul.f32 %v2052, %v8585
  %v8589 = vmul.f32 %v2053, %v8585
  %v8590 = vmul.f32 %v2054, %v8585
  %v8591 = vmul.f32 %v2055, %v8585
  %v8592 = vsub.f32 0.0, %v8586
  %v8593 = vsub.f32 0.0, %v8587
  %v8594 = vsub.f32 0.0, %v8588
  %v8595 = vsub.f32 0.0, %v8589
  %v8596 = vsub.f32 0.0, %v8590
  %v8597 = vsub.f32 0.0, %v8591
  %v8598 = vmul.f32 %v8520, %v2129
  %v8599 = vmul.f32 %v8521, %v2130
  %v8600 = vmul.f32 %v8522, %v2131
  %v8601 = vmul.f32 %v8523, %v2132
  %v8602 = vmul.f32 %v8524, %v2133
  %v8603 = vmul.f32 %v8525, %v2134
  %v8604 = vadd.f32 %v8598, %v8599
  %v8605 = vadd.f32 %v8604, %v8600
  %v8606 = vadd.f32 %v8605, %v8601
  %v8607 = vadd.f32 %v8606, %v8602
  %v8608 = vadd.f32 %v8607, %v8603
  %8609 = vadd.xlane.f32.xlu0 %v8608
  %v8610 = vpop.xlane.xlu0 %8609
  %v8611 = vmul.f32 %v8526, %v2129
  %v8612 = vmul.f32 %v8527, %v2130
  %v8613 = vmul.f32 %v8528, %v2131
  %v8614 = vmul.f32 %v8529, %v2132
  %v8615 = vmul.f32 %v8530, %v2133
  %v8616 = vmul.f32 %v8531, %v2134
  %v8617 = vadd.f32 %v8611, %v8612
  %v8618 = vadd.f32 %v8617, %v8613
  %v8619 = vadd.f32 %v8618, %v8614
  %v8620 = vadd.f32 %v8619, %v8615
  %v8621 = vadd.f32 %v8620, %v8616
  %8622 = vadd.xlane.f32.xlu0 %v8621
  %v8623 = vpop.xlane.xlu0 %8622
  %v8624 = vmul.f32 %v8610, 0.0036764706
  %v8625 = vmul.f32 %v8623, 0.0036764706
  %v8626 = vmul.f32 %v8624, %v8624
  %v8627 = vsub.f32 %v8625, %v8626
  %v8628 = vadd.f32 %v8627, 1e-05
  %v8629 = vrsqrt.pop %v8628
  %v8630 = vmul.f32 %v8629, %v8628
  %v8631 = vmul.f32 %v8630, %v8629
  %v8632 = vmul.f32 0.5, %v8631
  %v8633 = vsub.f32 1.5, %v8632
  %v8634 = vmul.f32 %v8629, %v8633
  %vm8635 = vweird.f32 %v8628
  %vm8636 = vweird.f32 %v8629
  %vm8637 = vmor %vm8635, %vm8636
  %v8638 = vsel %vm8637, %v8629, %v8634
  %v8639 = vmul.f32 %v2129, %v8638
  %v8640 = vmul.f32 %v2130, %v8638
  %v8641 = vmul.f32 %v2131, %v8638
  %v8642 = vmul.f32 %v2132, %v8638
  %v8643 = vmul.f32 %v2133, %v8638
  %v8644 = vmul.f32 %v2134, %v8638
  %v8645 = vadd.f32 %v8579, %v8639
  %v8646 = vadd.f32 %v8580, %v8640
  %v8647 = vadd.f32 %v8581, %v8641
  %v8648 = vadd.f32 %v8582, %v8642
  %v8649 = vadd.f32 %v8583, %v8643
  %v8650 = vadd.f32 %v8584, %v8644
  %v8651 = vmul.f32 %v8624, %v8638
  %v8652 = vmul.f32 %v2129, %v8651
  %v8653 = vmul.f32 %v2130, %v8651
  %v8654 = vmul.f32 %v2131, %v8651
  %v8655 = vmul.f32 %v2132, %v8651
  %v8656 = vmul.f32 %v2133, %v8651
  %v8657 = vmul.f32 %v2134, %v8651
  %v8658 = vsub.f32 %v8592, %v8652
  %v8659 = vsub.f32 %v8593, %v8653
  %v8660 = vsub.f32 %v8594, %v8654
  %v8661 = vsub.f32 %v8595, %v8655
  %v8662 = vsub.f32 %v8596, %v8656
  %v8663 = vsub.f32 %v8597, %v8657
  %v8664 = vmul.f32 %v8520, %v8645
  %v8665 = vmul.f32 %v8521, %v8646
  %v8666 = vmul.f32 %v8522, %v8647
  %v8667 = vmul.f32 %v8523, %v8648
  %v8668 = vmul.f32 %v8524, %v8649
  %v8669 = vmul.f32 %v8525, %v8650
  %v8670 = vadd.f32 %v8664, %v8658
  %v8671 = vadd.f32 %v8665, %v8659
  %v8672 = vadd.f32 %v8666, %v8660
  %v8673 = vadd.f32 %v8667, %v8661
  %v8674 = vadd.f32 %v8668, %v8662
  %v8675 = vadd.f32 %v8669, %v8663
  %8676 = vst [vmem:[%s4] sm:$0xff] %v8670
  %8677 = vst [vmem:[%s4 + $0x8] sm:$0xff] %v8671
  %8678 = vst [vmem:[%s4 + $0x10] sm:$0xff] %v8672
  %8679 = vst [vmem:[%s4 + $0x18] sm:$0xff] %v8673
  %8680 = vst [vmem:[%s4 + $0x20] sm:$0xff] %v8674
  %8681 = vst [vmem:[%s4 + $0x28] sm:$0xff] %v8675
  // Predicated region
  $region18: #{dense_block_forward.1} parent=0 // pred_check
    _
  $region19: #{dense_block_forward.1} parent=0 // pred_check_branch
    %8683 = sbr.rel (0) target = $region21
  $region20: #{dense_block_forward.1} parent=0 // pred_region
    _
  $region21: #{dense_block_forward.1} parent=0 // pred_fallthru
    _
  // Predicated region
  $region22: #{dense_block_forward.1} parent=0 // pred_check
    _
  $region23: #{dense_block_forward.1} parent=0 // pred_check_branch
    %8685 = sbr.rel (0) target = $region25
  $region24: #{dense_block_forward.1} parent=0 // pred_region
    _
  $region25: #{dense_block_forward.1} parent=0 // pred_fallthru
    _

</llo_original>
